<compile_context>
chip_gen: v6e
topology: v6e:2x2x1
jax: 0.10.0
libtpu: 0.0.40
codegen_flags: <defaults>
</compile_context>

<pallas_src>
import functools
import math

import jax
import jax.numpy as jnp
from jax import lax
from jax.experimental import pallas as pl
from jax.experimental.pallas import tpu as pltpu


# ---------------------------------------------------------------------------
# Small helpers.
# ---------------------------------------------------------------------------
def _round_up(x, m):
    return (x + m - 1) // m * m


@functools.lru_cache(maxsize=1)
def _vmem_bytes():
    try:
        return int(pltpu.get_tpu_info().vmem_capacity_bytes)
    except Exception:
        return 64 * 1024 * 1024          # conservative (v7x-sized) fallback


def _choose_tm(m):
    """Lane tile (multiple of 128), sized per TPU generation's VMEM."""
    cap = 1024 if _vmem_bytes() >= 96 * 1024 * 1024 else 512   # v5e/v6e vs v7x
    return int(min(cap, _round_up(max(m, 1), 128)))


# ---------------------------------------------------------------------------
# Core Pallas kernel: channels-major im2col GEMM, one (batch, M-tile) per step.
# ---------------------------------------------------------------------------
def _conv_gemm_kernel(x_ref, w_ref, b_ref, o_ref, *, tm, offsets, multi_tile):
    """x_ref : (1, Cin, Mx)   bf16  channels on sublanes, padded spatial on lanes
       w_ref : (Cout, T*Cin)  bf16  taps stacked along the contraction axis
       b_ref : (Cout, 1)      f32
       o_ref : (1, Cout, TM)  f32   lane-dense output tile
    """
    if multi_tile:
        # TM is a multiple of 128, so the dynamic part of every tap's lane
        # offset is vreg-aligned; each tap's residue is a static constant.
        base = pl.multiple_of(pl.program_id(1) * tm, 128)
    else:
        base = 0                              # single tile: purely static slices
    taps = [x_ref[0, :, pl.ds(base + off, tm)] for off in offsets]
    # Sublane-axis stack of the taps (Cin padded to a multiple of 16 => the
    # bf16 concat is tile-aligned copies, no lane repacking).
    patch = taps[0] if len(taps) == 1 else jnp.concatenate(taps, axis=0)
    acc = jnp.dot(w_ref[...], patch, preferred_element_type=jnp.float32)
    o_ref[0] = acc + b_ref[...]               # fused bias


def _conv_gemm(x_flat, w_ck, bias, *, m_padded, tm, offsets):
    """x_flat: (B, Cin, Mx) bf16; w_ck: (Cout, K) bf16 -> (B, Cout, m_padded) f32."""
    B, Cin, Mx = x_flat.shape
    Cout, K = w_ck.shape
    nt = m_padded // tm
    b = (jnp.zeros((Cout,), jnp.float32) if bias is None
         else bias.astype(jnp.float32)).reshape(Cout, 1)
    kernel = functools.partial(_conv_gemm_kernel, tm=tm, offsets=tuple(offsets),
                               multi_tile=nt > 1)
    vmem_limit = int(min(_vmem_bytes() * 0.75, 100 * 1024 * 1024))
    return pl.pallas_call(
        kernel,
        out_shape=jax.ShapeDtypeStruct((B, Cout, m_padded), jnp.float32),
        grid_spec=pltpu.PrefetchScalarGridSpec(
            num_scalar_prefetch=0,
            grid=(B, nt),
            in_specs=[
                # Padded per-batch image stays resident across its M tiles
                # (block index only changes with b -> one DMA per batch elem).
                # TODO(synk): halo-windowed input blocks per M tile would cut
                # the resident footprint further at very large resolutions.
                pl.BlockSpec((1, Cin, Mx), lambda b_, j: (b_, 0, 0)),
                pl.BlockSpec((Cout, K), lambda b_, j: (0, 0)),
                pl.BlockSpec((Cout, 1), lambda b_, j: (0, 0)),
            ],
            out_specs=pl.BlockSpec((1, Cout, tm), lambda b_, j: (b_, 0, j)),
        ),
        compiler_params=pltpu.CompilerParams(
            dimension_semantics=("parallel", "parallel"),
            vmem_limit_bytes=vmem_limit),
    )(x_flat, w_ck, b)


# ---------------------------------------------------------------------------
# Pallas-backed conv wrappers (NCHW activations, PyTorch weight layouts).
# ---------------------------------------------------------------------------
def conv2d_same_pallas(x, w_oihw, bias=None, *, dilation=1):
    """Stride-1 conv with PyTorch padding = dilation * (k // 2).  1x1 included."""
    B, Cin, H, W = x.shape
    Cout, _, kh, kw = w_oihw.shape
    d = dilation
    ph, pw = d * (kh // 2), d * (kw // 2)
    Wp = W + 2 * pw
    M = H * Wp                              # output rows incl. 2*pw garbage cols/row
    offsets = tuple(ky * d * Wp + kx * d for ky in range(kh) for kx in range(kw))
    tm = _choose_tm(M)
    m_padded = _round_up(M, tm)
    cin16 = _round_up(Cin, 16)              # bf16 sublane-tile aligned taps
    # ONE pad: bf16 cast + channel pad + spatial pad + extra bottom rows that
    # cover the last tile's halo (folds the old separate tail pad in here).
    hp_ext = -(-(m_padded + max(offsets)) // Wp)
    xp = jnp.pad(x.astype(jnp.bfloat16),
                 ((0, 0), (0, cin16 - Cin), (ph, hp_ext - H - ph), (pw, pw)))
    xf = xp.reshape(B, cin16, hp_ext * Wp)
    w = jnp.transpose(w_oihw, (0, 2, 3, 1))                     # (Cout, kh, kw, Cin)
    w = jnp.pad(w, ((0, 0), (0, 0), (0, 0), (0, cin16 - Cin)))
    w_ck = w.reshape(Cout, kh * kw * cin16).astype(jnp.bfloat16)
    out = _conv_gemm(xf, w_ck, bias, m_padded=m_padded, tm=tm, offsets=offsets)
    # TODO(synk): keeping the Wp-wide slab as the inter-op working layout would
    # avoid this slice; GN/SE need the exact spatial extent, so slice here.
    return out[:, :, :M].reshape(B, Cout, H, Wp)[:, :, :, :W]


def conv2d_stride2_pallas(x, w_oihw, bias):
    """2x2 / stride-2 / no-padding conv (the 'down' convs): space-to-depth + 1x1."""
    B, C, H, W = x.shape
    Cout = w_oihw.shape[0]
    Ho, Wo = H // 2, W // 2
    # TODO(synk): the space-to-depth gather is still one XLA transpose pass;
    # fusing it into the kernel's input reads (strided lane loads) is future work.
    xs = x.reshape(B, C, Ho, 2, Wo, 2).transpose(0, 3, 5, 1, 2, 4)
    xs = xs.reshape(B, 4 * C, Ho, Wo)
    w1 = jnp.transpose(w_oihw, (0, 2, 3, 1)).reshape(Cout, 4 * C, 1, 1)
    return conv2d_same_pallas(xs, w1, bias)


def conv_transpose2_pallas(x, w_iohw, bias):
    """ConvTranspose2d(kernel=2, stride=2); PyTorch weight (Cin, Cout, 2, 2)."""
    B, Cin, H, W = x.shape
    Cout = w_iohw.shape[1]
    w1 = jnp.transpose(w_iohw, (2, 3, 1, 0)).reshape(4 * Cout, Cin, 1, 1)
    b1 = None if bias is None else jnp.tile(bias, 4)
    y = conv2d_same_pallas(x, w1, b1)                           # (B, 4*Cout, H, W)
    # TODO(synk): depth-to-space pixel shuffle stays as one XLA transpose pass.
    y = y.reshape(B, 2, 2, Cout, H, W).transpose(0, 3, 4, 1, 5, 2)
    return y.reshape(B, Cout, 2 * H, 2 * W)


# ---------------------------------------------------------------------------
# Plain-JAX reference convs (same bf16 operand rounding, f32 accumulate).
# ---------------------------------------------------------------------------
def _round_bf16(a):
    return a.astype(jnp.bfloat16).astype(jnp.float32)


def conv2d_same_ref(x, w_oihw, bias=None, *, dilation=1):
    kh, kw = w_oihw.shape[2], w_oihw.shape[3]
    ph, pw = dilation * (kh // 2), dilation * (kw // 2)
    out = lax.conv_general_dilated(
        _round_bf16(x), _round_bf16(w_oihw), window_strides=(1, 1),
        padding=((ph, ph), (pw, pw)), rhs_dilation=(dilation, dilation),
        dimension_numbers=("NCHW", "OIHW", "NCHW"))
    return out if bias is None else out + bias.reshape(1, -1, 1, 1)


def conv2d_stride2_ref(x, w_oihw, bias):
    out = lax.conv_general_dilated(
        _round_bf16(x), _round_bf16(w_oihw), window_strides=(2, 2),
        padding="VALID", dimension_numbers=("NCHW", "OIHW", "NCHW"))
    return out + bias.reshape(1, -1, 1, 1)


def conv_transpose2_ref(x, w_iohw, bias):
    B, Cin, H, W = x.shape
    Cout = w_iohw.shape[1]
    out = jnp.einsum("bihw,iopq->bohpwq", _round_bf16(x), _round_bf16(w_iohw))
    return out.reshape(B, Cout, 2 * H, 2 * W) + bias.reshape(1, -1, 1, 1)


# ---------------------------------------------------------------------------
# Shared model glue (identical for Pallas and reference paths, NCHW).
# ---------------------------------------------------------------------------
def gelu(x):
    return jax.nn.gelu(x, approximate=False)        # matches nn.GELU() (erf)


def group_norm(x, gamma, beta, groups, eps=1e-5):
    B, C, H, W = x.shape
    xg = x.reshape(B, groups, C // groups, H, W)
    mean = jnp.mean(xg, axis=(2, 3, 4), keepdims=True)
    var = jnp.mean(jnp.square(xg - mean), axis=(2, 3, 4), keepdims=True)
    xg = (xg - mean) * lax.rsqrt(var + eps)
    return (xg.reshape(B, C, H, W) * gamma.reshape(1, C, 1, 1)
            + beta.reshape(1, C, 1, 1))


def se_block(x, p):
    # TODO(synk): SE squeeze-excite stays in plain JAX (tiny (B, C) matmuls).
    s = jnp.mean(x, axis=(2, 3))                                 # (B, C)
    s = jax.nn.relu(s @ p["w1"][:, :, 0, 0].T + p["b1"])
    s = jax.nn.sigmoid(s @ p["w2"][:, :, 0, 0].T + p["b2"])
    return x * s[:, :, None, None]


def residual_se_block(x, p, conv_same, *, dilation=1):
    out_c = p["gn1_g"].shape[0]
    groups = max(1, min(8, out_c // 2))             # matches the PyTorch spec
    if "skip_w" in p:
        identity = group_norm(conv_same(x, p["skip_w"]),
                              p["skip_gn_g"], p["skip_gn_b"], groups)
    else:
        identity = x
    out = gelu(group_norm(conv_same(x, p["w1"], dilation=dilation),
                          p["gn1_g"], p["gn1_b"], groups))
    out = group_norm(conv_same(out, p["w2"], dilation=dilation),
                     p["gn2_g"], p["gn2_b"], groups)
    out = se_block(out, p["se"])
    return gelu(out + identity)


def coord_conv(x, p, conv_same):
    B, C, H, W = x.shape
    ys = jnp.broadcast_to(
        jnp.linspace(-1.0, 1.0, H, dtype=x.dtype).reshape(1, 1, H, 1),
        (B, 1, H, W))
    xs = jnp.broadcast_to(
        jnp.linspace(-1.0, 1.0, W, dtype=x.dtype).reshape(1, 1, 1, W),
        (B, 1, H, W))
    return conv_same(jnp.concatenate([x, ys, xs], axis=1), p["w"])


def enhanced_climate_unet(params, x, *, conv_same, conv_down, conv_up):
    x = x.astype(jnp.float32)                 # activations stay NCHW throughout
    skips = []
    for i, (enc, down) in enumerate(zip(params["enc"], params["down"])):
        x = coord_conv(x, enc, conv_same) if i == 0 else \
            residual_se_block(x, enc, conv_same)
        skips.append(x)
        x = conv_down(x, down["w"], down["b"])
    for blk, dil in zip(params["bottleneck"], (1, 2, 4)):
        x = residual_se_block(x, blk, conv_same, dilation=dil)
    # TODO(synk): Dropout2d is identity here (inference semantics).
    for up, dec, skip in zip(params["up"], params["dec"], reversed(skips)):
        x = conv_up(x, up["w"], up["b"])
        # TODO(synk): F.interpolate bilinear fallback not implemented; spatial
        # sizes always match for power-of-two inputs so that branch never runs.
        x = residual_se_block(jnp.concatenate([x, skip], axis=1), dec, conv_same)
    return conv_same(x, params["final"]["w"], params["final"]["b"])


# ---------------------------------------------------------------------------
# Deterministic parameter construction (PyTorch weight layouts).
# ---------------------------------------------------------------------------
def _conv_w(key, out_c, in_c, kh, kw):
    return jax.random.normal(key, (out_c, in_c, kh, kw),
                             jnp.float32) / math.sqrt(in_c * kh * kw)


def _init_rsb(key, in_c, out_c):
    ks = jax.random.split(key, 8)
    p = {
        "w1": _conv_w(ks[0], out_c, in_c, 3, 3),
        "gn1_g": jnp.ones((out_c,), jnp.float32),
        "gn1_b": jnp.zeros((out_c,), jnp.float32),
        "w2": _conv_w(ks[1], out_c, out_c, 3, 3),
        "gn2_g": jnp.ones((out_c,), jnp.float32),
        "gn2_b": jnp.zeros((out_c,), jnp.float32),
        "se": {
            "w1": _conv_w(ks[2], out_c // 8, out_c, 1, 1),
            "b1": 0.1 * jax.random.normal(ks[3], (out_c // 8,), jnp.float32),
            "w2": _conv_w(ks[4], out_c, out_c // 8, 1, 1),
            "b2": 0.1 * jax.random.normal(ks[5], (out_c,), jnp.float32),
        },
    }
    if in_c != out_c:
        p["skip_w"] = _conv_w(ks[6], out_c, in_c, 1, 1)
        p["skip_gn_g"] = jnp.ones((out_c,), jnp.float32)
        p["skip_gn_b"] = jnp.zeros((out_c,), jnp.float32)
    return p


def init_params(key, n_in, n_out, init_dim, depth):
    ks = iter(jax.random.split(key, 64))
    params = {"enc": [], "down": [], "bottleneck": [], "up": [], "dec": []}
    prev = n_in
    for i in range(depth):
        out_c = init_dim * 2 ** i
        if i == 0:
            params["enc"].append({"w": _conv_w(next(ks), out_c, prev + 2, 3, 3)})
        else:
            params["enc"].append(_init_rsb(next(ks), prev, out_c))
        params["down"].append({
            "w": _conv_w(next(ks), out_c, out_c, 2, 2),
            "b": 0.1 * jax.random.normal(next(ks), (out_c,), jnp.float32)})
        prev = out_c
    bott = prev * 2
    params["bottleneck"].append(_init_rsb(next(ks), prev, bott))
    params["bottleneck"].append(_init_rsb(next(ks), bott, bott))
    params["bottleneck"].append(_init_rsb(next(ks), bott, bott))
    prev = bott
    for i in reversed(range(depth)):
        out_c = init_dim * 2 ** i
        params["up"].append({
            "w": jax.random.normal(next(ks), (prev, out_c, 2, 2),
                                   jnp.float32) / math.sqrt(prev * 4),
            "b": 0.1 * jax.random.normal(next(ks), (out_c,), jnp.float32)})
        params["dec"].append(_init_rsb(next(ks), out_c * 2, out_c))
        prev = out_c
    params["final"] = {
        "w": _conv_w(next(ks), n_out, init_dim, 1, 1),
        "b": 0.1 * jax.random.normal(next(ks), (n_out,), jnp.float32)}
    return params


# ---------------------------------------------------------------------------
if __name__ == "__main__":
    B, C_IN, C_OUT, H, W = 2, 4, 3, 16, 16
    INIT_DIM, DEPTH = 16, 2

    key = jax.random.PRNGKey(0)
    kx, kp = jax.random.split(key)
    x = jax.random.normal(kx, (B, C_IN, H, W), jnp.float32)
    params = init_params(kp, C_IN, C_OUT, INIT_DIM, DEPTH)

    pallas_model = jax.jit(functools.partial(
        enhanced_climate_unet, conv_same=conv2d_same_pallas,
        conv_down=conv2d_stride2_pallas, conv_up=conv_transpose2_pallas))
    ref_model = jax.jit(functools.partial(
        enhanced_climate_unet, conv_same=conv2d_same_ref,
        conv_down=conv2d_stride2_ref, conv_up=conv_transpose2_ref))

    out = pallas_model(params, x)
    jax.block_until_ready(out)

    out_ref = ref_model(params, x)
    jax.block_until_ready(out_ref)

    assert out.shape == (B, C_OUT, H, W), out.shape
    assert bool(jnp.all(jnp.isfinite(out)))
    max_err = float(jnp.max(jnp.abs(out - out_ref)))
    assert jnp.allclose(out, out_ref, atol=3e-2, rtol=3e-2), max_err

    print("KERNEL_OK")
</pallas_src>

<mosaic_0001>
module attributes {stable_mosaic.version = 11 : i64} {
  func.func @_conv_gemm_kernel(%arg0: i32, %arg1: i32, %arg2: memref<1x16x432xbf16, #tpu.memory_space<vmem>>, %arg3: memref<16x144xbf16, #tpu.memory_space<vmem>>, %arg4: memref<16x1xf32, #tpu.memory_space<vmem>>, %arg5: memref<1x16x384xf32, #tpu.memory_space<vmem>>) attributes {dimension_semantics = [#tpu.dimension_semantics<parallel>, #tpu.dimension_semantics<parallel>], iteration_bounds = array<i64: 2, 1>, scalar_prefetch = 0 : i64, scratch_operands = 0 : i64, tpu.core_type = #tpu.core_type<tc>, window_params = [{transform_indices = @transform_0, window_bounds = array<i64: 1, 16, 432>}, {pipeline_mode = #tpu.pipeline_mode<synchronous>, transform_indices = @transform_1, window_bounds = array<i64: 16, 144>}, {pipeline_mode = #tpu.pipeline_mode<synchronous>, transform_indices = @transform_2, window_bounds = array<i64: 16, 1>}, {transform_indices = @transform_3, window_bounds = array<i64: 1, 16, 384>}]} {
    %c0 = arith.constant 0 : index
    %c0_0 = arith.constant 0 : index
    %c0_1 = arith.constant 0 : index
    %0 = vector.load %arg2[%c0, %c0_0, %c0_1] : memref<1x16x432xbf16, #tpu.memory_space<vmem>>, vector<1x16x384xbf16>
    %1 = vector.shape_cast %0 : vector<1x16x384xbf16> to vector<16x384xbf16>
    %c0_2 = arith.constant 0 : index
    %c0_3 = arith.constant 0 : index
    %c1 = arith.constant 1 : index
    %2 = vector.load %arg2[%c0_2, %c0_3, %c1] : memref<1x16x432xbf16, #tpu.memory_space<vmem>>, vector<1x16x384xbf16>
    %3 = vector.shape_cast %2 : vector<1x16x384xbf16> to vector<16x384xbf16>
    %c0_4 = arith.constant 0 : index
    %c0_5 = arith.constant 0 : index
    %c2 = arith.constant 2 : index
    %4 = vector.load %arg2[%c0_4, %c0_5, %c2] : memref<1x16x432xbf16, #tpu.memory_space<vmem>>, vector<1x16x384xbf16>
    %5 = vector.shape_cast %4 : vector<1x16x384xbf16> to vector<16x384xbf16>
    %c0_6 = arith.constant 0 : index
    %c0_7 = arith.constant 0 : index
    %c18 = arith.constant 18 : index
    %6 = vector.load %arg2[%c0_6, %c0_7, %c18] : memref<1x16x432xbf16, #tpu.memory_space<vmem>>, vector<1x16x384xbf16>
    %7 = vector.shape_cast %6 : vector<1x16x384xbf16> to vector<16x384xbf16>
    %c0_8 = arith.constant 0 : index
    %c0_9 = arith.constant 0 : index
    %c19 = arith.constant 19 : index
    %8 = vector.load %arg2[%c0_8, %c0_9, %c19] : memref<1x16x432xbf16, #tpu.memory_space<vmem>>, vector<1x16x384xbf16>
    %9 = vector.shape_cast %8 : vector<1x16x384xbf16> to vector<16x384xbf16>
    %c0_10 = arith.constant 0 : index
    %c0_11 = arith.constant 0 : index
    %c20 = arith.constant 20 : index
    %10 = vector.load %arg2[%c0_10, %c0_11, %c20] : memref<1x16x432xbf16, #tpu.memory_space<vmem>>, vector<1x16x384xbf16>
    %11 = vector.shape_cast %10 : vector<1x16x384xbf16> to vector<16x384xbf16>
    %c0_12 = arith.constant 0 : index
    %c0_13 = arith.constant 0 : index
    %c36 = arith.constant 36 : index
    %12 = vector.load %arg2[%c0_12, %c0_13, %c36] : memref<1x16x432xbf16, #tpu.memory_space<vmem>>, vector<1x16x384xbf16>
    %13 = vector.shape_cast %12 : vector<1x16x384xbf16> to vector<16x384xbf16>
    %c0_14 = arith.constant 0 : index
    %c0_15 = arith.constant 0 : index
    %c37 = arith.constant 37 : index
    %14 = vector.load %arg2[%c0_14, %c0_15, %c37] : memref<1x16x432xbf16, #tpu.memory_space<vmem>>, vector<1x16x384xbf16>
    %15 = vector.shape_cast %14 : vector<1x16x384xbf16> to vector<16x384xbf16>
    %c0_16 = arith.constant 0 : index
    %c0_17 = arith.constant 0 : index
    %c38 = arith.constant 38 : index
    %16 = vector.load %arg2[%c0_16, %c0_17, %c38] : memref<1x16x432xbf16, #tpu.memory_space<vmem>>, vector<1x16x384xbf16>
    %17 = vector.shape_cast %16 : vector<1x16x384xbf16> to vector<16x384xbf16>
    %18 = tpu.concatenate %1, %3, %5, %7, %9, %11, %13, %15, %17 in 0 : vector<16x384xbf16>, vector<16x384xbf16>, vector<16x384xbf16>, vector<16x384xbf16>, vector<16x384xbf16>, vector<16x384xbf16>, vector<16x384xbf16>, vector<16x384xbf16>, vector<16x384xbf16> -> vector<144x384xbf16>
    %c0_18 = arith.constant 0 : index
    %c0_19 = arith.constant 0 : index
    %19 = vector.load %arg3[%c0_18, %c0_19] : memref<16x144xbf16, #tpu.memory_space<vmem>>, vector<16x144xbf16>
    %cst = arith.constant dense<0.000000e+00> : vector<16x384xf32>
    %20 = tpu.matmul %19, %18, %cst {dimension_numbers = #tpu.dot_dimension_numbers<[1], [0], [0], [1], [0, 0, 1, 1], [], []>} : vector<16x144xbf16>, vector<144x384xbf16>, vector<16x384xf32> -> vector<16x384xf32>
    %c0_20 = arith.constant 0 : index
    %c0_21 = arith.constant 0 : index
    %21 = vector.load %arg4[%c0_20, %c0_21] : memref<16x1xf32, #tpu.memory_space<vmem>>, vector<16x1xf32>
    %22 = vector.broadcast %21 : vector<16x1xf32> to vector<16x384xf32>
    %23 = arith.addf %20, %22 : vector<16x384xf32>
    %c0_22 = arith.constant 0 : index
    %c0_23 = arith.constant 0 : index
    %c0_24 = arith.constant 0 : index
    %24 = vector.load %arg5[%c0_22, %c0_23, %c0_24] : memref<1x16x384xf32, #tpu.memory_space<vmem>>, vector<1x16x384xf32>
    %25 = vector.shape_cast %24 : vector<1x16x384xf32> to vector<16x384xf32>
    %26 = vector.shape_cast %23 : vector<16x384xf32> to vector<1x16x384xf32>
    tpu.vector_store %arg5[%c0_22, %c0_23, %c0_24], %26 {strides = array<i32>} : memref<1x16x384xf32, #tpu.memory_space<vmem>>, vector<1x16x384xf32>,
    return
  }
  func.func @transform_0(%arg0: i32, %arg1: i32) -> (i32, i32, i32) {
    %c0_i32 = arith.constant 0 : i32
    %c0_i32_0 = arith.constant 0 : i32
    %c0_i32_1 = arith.constant 0 : i32
    return %arg0, %c0_i32, %c0_i32_0 : i32, i32, i32
  }
  func.func @transform_1(%arg0: i32, %arg1: i32) -> (i32, i32) {
    %c0_i32 = arith.constant 0 : i32
    %c0_i32_0 = arith.constant 0 : i32
    %c0_i32_1 = arith.constant 0 : i32
    return %c0_i32, %c0_i32_0 : i32, i32
  }
  func.func @transform_2(%arg0: i32, %arg1: i32) -> (i32, i32) {
    %c0_i32 = arith.constant 0 : i32
    %c0_i32_0 = arith.constant 0 : i32
    %c0_i32_1 = arith.constant 0 : i32
    return %c0_i32, %c0_i32_0 : i32, i32
  }
  func.func @transform_3(%arg0: i32, %arg1: i32) -> (i32, i32, i32) {
    %c0_i32 = arith.constant 0 : i32
    %c0_i32_0 = arith.constant 0 : i32
    return %arg0, %c0_i32, %arg1 : i32, i32, i32
  }
}

module attributes {stable_mosaic.version = 11 : i64} {
  func.func @_conv_gemm_kernel(%arg0: i32, %arg1: i32, %arg2: memref<1x64x128xbf16, #tpu.memory_space<vmem>>, %arg3: memref<16x64xbf16, #tpu.memory_space<vmem>>, %arg4: memref<16x1xf32, #tpu.memory_space<vmem>>, %arg5: memref<1x16x128xf32, #tpu.memory_space<vmem>>) attributes {dimension_semantics = [#tpu.dimension_semantics<parallel>, #tpu.dimension_semantics<parallel>], iteration_bounds = array<i64: 2, 1>, scalar_prefetch = 0 : i64, scratch_operands = 0 : i64, tpu.core_type = #tpu.core_type<tc>, window_params = [{transform_indices = @transform_0, window_bounds = array<i64: 1, 64, 128>}, {pipeline_mode = #tpu.pipeline_mode<synchronous>, transform_indices = @transform_1, window_bounds = array<i64: 16, 64>}, {pipeline_mode = #tpu.pipeline_mode<synchronous>, transform_indices = @transform_2, window_bounds = array<i64: 16, 1>}, {transform_indices = @transform_3, window_bounds = array<i64: 1, 16, 128>}]} {
    %c0 = arith.constant 0 : index
    %c0_0 = arith.constant 0 : index
    %c0_1 = arith.constant 0 : index
    %0 = vector.load %arg2[%c0, %c0_0, %c0_1] : memref<1x64x128xbf16, #tpu.memory_space<vmem>>, vector<1x64x128xbf16>
    %1 = vector.shape_cast %0 : vector<1x64x128xbf16> to vector<64x128xbf16>
    %c0_2 = arith.constant 0 : index
    %c0_3 = arith.constant 0 : index
    %2 = vector.load %arg3[%c0_2, %c0_3] : memref<16x64xbf16, #tpu.memory_space<vmem>>, vector<16x64xbf16>
    %cst = arith.constant dense<0.000000e+00> : vector<16x128xf32>
    %3 = tpu.matmul %2, %1, %cst {dimension_numbers = #tpu.dot_dimension_numbers<[1], [0], [0], [1], [0, 0, 1, 1], [], []>} : vector<16x64xbf16>, vector<64x128xbf16>, vector<16x128xf32> -> vector<16x128xf32>
    %c0_4 = arith.constant 0 : index
    %c0_5 = arith.constant 0 : index
    %4 = vector.load %arg4[%c0_4, %c0_5] : memref<16x1xf32, #tpu.memory_space<vmem>>, vector<16x1xf32>
    %5 = vector.broadcast %4 : vector<16x1xf32> to vector<16x128xf32>
    %6 = arith.addf %3, %5 : vector<16x128xf32>
    %c0_6 = arith.constant 0 : index
    %c0_7 = arith.constant 0 : index
    %c0_8 = arith.constant 0 : index
    %7 = vector.load %arg5[%c0_6, %c0_7, %c0_8] : memref<1x16x128xf32, #tpu.memory_space<vmem>>, vector<1x16x128xf32>
    %8 = vector.shape_cast %7 : vector<1x16x128xf32> to vector<16x128xf32>
    %9 = vector.shape_cast %6 : vector<16x128xf32> to vector<1x16x128xf32>
    tpu.vector_store %arg5[%c0_6, %c0_7, %c0_8], %9 {strides = array<i32>} : memref<1x16x128xf32, #tpu.memory_space<vmem>>, vector<1x16x128xf32>,
    return
  }
  func.func @transform_0(%arg0: i32, %arg1: i32) -> (i32, i32, i32) {
    %c0_i32 = arith.constant 0 : i32
    %c0_i32_0 = arith.constant 0 : i32
    %c0_i32_1 = arith.constant 0 : i32
    return %arg0, %c0_i32, %c0_i32_0 : i32, i32, i32
  }
  func.func @transform_1(%arg0: i32, %arg1: i32) -> (i32, i32) {
    %c0_i32 = arith.constant 0 : i32
    %c0_i32_0 = arith.constant 0 : i32
    %c0_i32_1 = arith.constant 0 : i32
    return %c0_i32, %c0_i32_0 : i32, i32
  }
  func.func @transform_2(%arg0: i32, %arg1: i32) -> (i32, i32) {
    %c0_i32 = arith.constant 0 : i32
    %c0_i32_0 = arith.constant 0 : i32
    %c0_i32_1 = arith.constant 0 : i32
    return %c0_i32, %c0_i32_0 : i32, i32
  }
  func.func @transform_3(%arg0: i32, %arg1: i32) -> (i32, i32, i32) {
    %c0_i32 = arith.constant 0 : i32
    %c0_i32_0 = arith.constant 0 : i32
    return %arg0, %c0_i32, %arg1 : i32, i32, i32
  }
}

module attributes {stable_mosaic.version = 11 : i64} {
  func.func @_conv_gemm_kernel(%arg0: i32, %arg1: i32, %arg2: memref<1x16x150xbf16, #tpu.memory_space<vmem>>, %arg3: memref<32x144xbf16, #tpu.memory_space<vmem>>, %arg4: memref<32x1xf32, #tpu.memory_space<vmem>>, %arg5: memref<1x32x128xf32, #tpu.memory_space<vmem>>) attributes {dimension_semantics = [#tpu.dimension_semantics<parallel>, #tpu.dimension_semantics<parallel>], iteration_bounds = array<i64: 2, 1>, scalar_prefetch = 0 : i64, scratch_operands = 0 : i64, tpu.core_type = #tpu.core_type<tc>, window_params = [{transform_indices = @transform_0, window_bounds = array<i64: 1, 16, 150>}, {pipeline_mode = #tpu.pipeline_mode<synchronous>, transform_indices = @transform_1, window_bounds = array<i64: 32, 144>}, {pipeline_mode = #tpu.pipeline_mode<synchronous>, transform_indices = @transform_2, window_bounds = array<i64: 32, 1>}, {transform_indices = @transform_3, window_bounds = array<i64: 1, 32, 128>}]} {
    %c0 = arith.constant 0 : index
    %c0_0 = arith.constant 0 : index
    %c0_1 = arith.constant 0 : index
    %0 = vector.load %arg2[%c0, %c0_0, %c0_1] : memref<1x16x150xbf16, #tpu.memory_space<vmem>>, vector<1x16x128xbf16>
    %1 = vector.shape_cast %0 : vector<1x16x128xbf16> to vector<16x128xbf16>
    %c0_2 = arith.constant 0 : index
    %c0_3 = arith.constant 0 : index
    %c1 = arith.constant 1 : index
    %2 = vector.load %arg2[%c0_2, %c0_3, %c1] : memref<1x16x150xbf16, #tpu.memory_space<vmem>>, vector<1x16x128xbf16>
    %3 = vector.shape_cast %2 : vector<1x16x128xbf16> to vector<16x128xbf16>
    %c0_4 = arith.constant 0 : index
    %c0_5 = arith.constant 0 : index
    %c2 = arith.constant 2 : index
    %4 = vector.load %arg2[%c0_4, %c0_5, %c2] : memref<1x16x150xbf16, #tpu.memory_space<vmem>>, vector<1x16x128xbf16>
    %5 = vector.shape_cast %4 : vector<1x16x128xbf16> to vector<16x128xbf16>
    %c0_6 = arith.constant 0 : index
    %c0_7 = arith.constant 0 : index
    %c10 = arith.constant 10 : index
    %6 = vector.load %arg2[%c0_6, %c0_7, %c10] : memref<1x16x150xbf16, #tpu.memory_space<vmem>>, vector<1x16x128xbf16>
    %7 = vector.shape_cast %6 : vector<1x16x128xbf16> to vector<16x128xbf16>
    %c0_8 = arith.constant 0 : index
    %c0_9 = arith.constant 0 : index
    %c11 = arith.constant 11 : index
    %8 = vector.load %arg2[%c0_8, %c0_9, %c11] : memref<1x16x150xbf16, #tpu.memory_space<vmem>>, vector<1x16x128xbf16>
    %9 = vector.shape_cast %8 : vector<1x16x128xbf16> to vector<16x128xbf16>
    %c0_10 = arith.constant 0 : index
    %c0_11 = arith.constant 0 : index
    %c12 = arith.constant 12 : index
    %10 = vector.load %arg2[%c0_10, %c0_11, %c12] : memref<1x16x150xbf16, #tpu.memory_space<vmem>>, vector<1x16x128xbf16>
    %11 = vector.shape_cast %10 : vector<1x16x128xbf16> to vector<16x128xbf16>
    %c0_12 = arith.constant 0 : index
    %c0_13 = arith.constant 0 : index
    %c20 = arith.constant 20 : index
    %12 = vector.load %arg2[%c0_12, %c0_13, %c20] : memref<1x16x150xbf16, #tpu.memory_space<vmem>>, vector<1x16x128xbf16>
    %13 = vector.shape_cast %12 : vector<1x16x128xbf16> to vector<16x128xbf16>
    %c0_14 = arith.constant 0 : index
    %c0_15 = arith.constant 0 : index
    %c21 = arith.constant 21 : index
    %14 = vector.load %arg2[%c0_14, %c0_15, %c21] : memref<1x16x150xbf16, #tpu.memory_space<vmem>>, vector<1x16x128xbf16>
    %15 = vector.shape_cast %14 : vector<1x16x128xbf16> to vector<16x128xbf16>
    %c0_16 = arith.constant 0 : index
    %c0_17 = arith.constant 0 : index
    %c22 = arith.constant 22 : index
    %16 = vector.load %arg2[%c0_16, %c0_17, %c22] : memref<1x16x150xbf16, #tpu.memory_space<vmem>>, vector<1x16x128xbf16>
    %17 = vector.shape_cast %16 : vector<1x16x128xbf16> to vector<16x128xbf16>
    %18 = tpu.concatenate %1, %3, %5, %7, %9, %11, %13, %15, %17 in 0 : vector<16x128xbf16>, vector<16x128xbf16>, vector<16x128xbf16>, vector<16x128xbf16>, vector<16x128xbf16>, vector<16x128xbf16>, vector<16x128xbf16>, vector<16x128xbf16>, vector<16x128xbf16> -> vector<144x128xbf16>
    %c0_18 = arith.constant 0 : index
    %c0_19 = arith.constant 0 : index
    %19 = vector.load %arg3[%c0_18, %c0_19] : memref<32x144xbf16, #tpu.memory_space<vmem>>, vector<32x144xbf16>
    %cst = arith.constant dense<0.000000e+00> : vector<32x128xf32>
    %20 = tpu.matmul %19, %18, %cst {dimension_numbers = #tpu.dot_dimension_numbers<[1], [0], [0], [1], [0, 0, 1, 1], [], []>} : vector<32x144xbf16>, vector<144x128xbf16>, vector<32x128xf32> -> vector<32x128xf32>
    %c0_20 = arith.constant 0 : index
    %c0_21 = arith.constant 0 : index
    %21 = vector.load %arg4[%c0_20, %c0_21] : memref<32x1xf32, #tpu.memory_space<vmem>>, vector<32x1xf32>
    %22 = vector.broadcast %21 : vector<32x1xf32> to vector<32x128xf32>
    %23 = arith.addf %20, %22 : vector<32x128xf32>
    %c0_22 = arith.constant 0 : index
    %c0_23 = arith.constant 0 : index
    %c0_24 = arith.constant 0 : index
    %24 = vector.load %arg5[%c0_22, %c0_23, %c0_24] : memref<1x32x128xf32, #tpu.memory_space<vmem>>, vector<1x32x128xf32>
    %25 = vector.shape_cast %24 : vector<1x32x128xf32> to vector<32x128xf32>
    %26 = vector.shape_cast %23 : vector<32x128xf32> to vector<1x32x128xf32>
    tpu.vector_store %arg5[%c0_22, %c0_23, %c0_24], %26 {strides = array<i32>} : memref<1x32x128xf32, #tpu.memory_space<vmem>>, vector<1x32x128xf32>,
    return
  }
  func.func @transform_0(%arg0: i32, %arg1: i32) -> (i32, i32, i32) {
    %c0_i32 = arith.constant 0 : i32
    %c0_i32_0 = arith.constant 0 : i32
    %c0_i32_1 = arith.constant 0 : i32
    return %arg0, %c0_i32, %c0_i32_0 : i32, i32, i32
  }
  func.func @transform_1(%arg0: i32, %arg1: i32) -> (i32, i32) {
    %c0_i32 = arith.constant 0 : i32
    %c0_i32_0 = arith.constant 0 : i32
    %c0_i32_1 = arith.constant 0 : i32
    return %c0_i32, %c0_i32_0 : i32, i32
  }
  func.func @transform_2(%arg0: i32, %arg1: i32) -> (i32, i32) {
    %c0_i32 = arith.constant 0 : i32
    %c0_i32_0 = arith.constant 0 : i32
    %c0_i32_1 = arith.constant 0 : i32
    return %c0_i32, %c0_i32_0 : i32, i32
  }
  func.func @transform_3(%arg0: i32, %arg1: i32) -> (i32, i32, i32) {
    %c0_i32 = arith.constant 0 : i32
    %c0_i32_0 = arith.constant 0 : i32
    return %arg0, %c0_i32, %arg1 : i32, i32, i32
  }
}

module attributes {stable_mosaic.version = 11 : i64} {
  func.func @_conv_gemm_kernel(%arg0: i32, %arg1: i32, %arg2: memref<1x32x150xbf16, #tpu.memory_space<vmem>>, %arg3: memref<32x288xbf16, #tpu.memory_space<vmem>>, %arg4: memref<32x1xf32, #tpu.memory_space<vmem>>, %arg5: memref<1x32x128xf32, #tpu.memory_space<vmem>>) attributes {dimension_semantics = [#tpu.dimension_semantics<parallel>, #tpu.dimension_semantics<parallel>], iteration_bounds = array<i64: 2, 1>, scalar_prefetch = 0 : i64, scratch_operands = 0 : i64, tpu.core_type = #tpu.core_type<tc>, window_params = [{transform_indices = @transform_0, window_bounds = array<i64: 1, 32, 150>}, {pipeline_mode = #tpu.pipeline_mode<synchronous>, transform_indices = @transform_1, window_bounds = array<i64: 32, 288>}, {pipeline_mode = #tpu.pipeline_mode<synchronous>, transform_indices = @transform_2, window_bounds = array<i64: 32, 1>}, {transform_indices = @transform_3, window_bounds = array<i64: 1, 32, 128>}]} {
    %c0 = arith.constant 0 : index
    %c0_0 = arith.constant 0 : index
    %c0_1 = arith.constant 0 : index
    %0 = vector.load %arg2[%c0, %c0_0, %c0_1] : memref<1x32x150xbf16, #tpu.memory_space<vmem>>, vector<1x32x128xbf16>
    %1 = vector.shape_cast %0 : vector<1x32x128xbf16> to vector<32x128xbf16>
    %c0_2 = arith.constant 0 : index
    %c0_3 = arith.constant 0 : index
    %c1 = arith.constant 1 : index
    %2 = vector.load %arg2[%c0_2, %c0_3, %c1] : memref<1x32x150xbf16, #tpu.memory_space<vmem>>, vector<1x32x128xbf16>
    %3 = vector.shape_cast %2 : vector<1x32x128xbf16> to vector<32x128xbf16>
    %c0_4 = arith.constant 0 : index
    %c0_5 = arith.constant 0 : index
    %c2 = arith.constant 2 : index
    %4 = vector.load %arg2[%c0_4, %c0_5, %c2] : memref<1x32x150xbf16, #tpu.memory_space<vmem>>, vector<1x32x128xbf16>
    %5 = vector.shape_cast %4 : vector<1x32x128xbf16> to vector<32x128xbf16>
    %c0_6 = arith.constant 0 : index
    %c0_7 = arith.constant 0 : index
    %c10 = arith.constant 10 : index
    %6 = vector.load %arg2[%c0_6, %c0_7, %c10] : memref<1x32x150xbf16, #tpu.memory_space<vmem>>, vector<1x32x128xbf16>
    %7 = vector.shape_cast %6 : vector<1x32x128xbf16> to vector<32x128xbf16>
    %c0_8 = arith.constant 0 : index
    %c0_9 = arith.constant 0 : index
    %c11 = arith.constant 11 : index
    %8 = vector.load %arg2[%c0_8, %c0_9, %c11] : memref<1x32x150xbf16, #tpu.memory_space<vmem>>, vector<1x32x128xbf16>
    %9 = vector.shape_cast %8 : vector<1x32x128xbf16> to vector<32x128xbf16>
    %c0_10 = arith.constant 0 : index
    %c0_11 = arith.constant 0 : index
    %c12 = arith.constant 12 : index
    %10 = vector.load %arg2[%c0_10, %c0_11, %c12] : memref<1x32x150xbf16, #tpu.memory_space<vmem>>, vector<1x32x128xbf16>
    %11 = vector.shape_cast %10 : vector<1x32x128xbf16> to vector<32x128xbf16>
    %c0_12 = arith.constant 0 : index
    %c0_13 = arith.constant 0 : index
    %c20 = arith.constant 20 : index
    %12 = vector.load %arg2[%c0_12, %c0_13, %c20] : memref<1x32x150xbf16, #tpu.memory_space<vmem>>, vector<1x32x128xbf16>
    %13 = vector.shape_cast %12 : vector<1x32x128xbf16> to vector<32x128xbf16>
    %c0_14 = arith.constant 0 : index
    %c0_15 = arith.constant 0 : index
    %c21 = arith.constant 21 : index
    %14 = vector.load %arg2[%c0_14, %c0_15, %c21] : memref<1x32x150xbf16, #tpu.memory_space<vmem>>, vector<1x32x128xbf16>
    %15 = vector.shape_cast %14 : vector<1x32x128xbf16> to vector<32x128xbf16>
    %c0_16 = arith.constant 0 : index
    %c0_17 = arith.constant 0 : index
    %c22 = arith.constant 22 : index
    %16 = vector.load %arg2[%c0_16, %c0_17, %c22] : memref<1x32x150xbf16, #tpu.memory_space<vmem>>, vector<1x32x128xbf16>
    %17 = vector.shape_cast %16 : vector<1x32x128xbf16> to vector<32x128xbf16>
    %18 = tpu.concatenate %1, %3, %5, %7, %9, %11, %13, %15, %17 in 0 : vector<32x128xbf16>, vector<32x128xbf16>, vector<32x128xbf16>, vector<32x128xbf16>, vector<32x128xbf16>, vector<32x128xbf16>, vector<32x128xbf16>, vector<32x128xbf16>, vector<32x128xbf16> -> vector<288x128xbf16>
    %c0_18 = arith.constant 0 : index
    %c0_19 = arith.constant 0 : index
    %19 = vector.load %arg3[%c0_18, %c0_19] : memref<32x288xbf16, #tpu.memory_space<vmem>>, vector<32x288xbf16>
    %cst = arith.constant dense<0.000000e+00> : vector<32x128xf32>
    %20 = tpu.matmul %19, %18, %cst {dimension_numbers = #tpu.dot_dimension_numbers<[1], [0], [0], [1], [0, 0, 1, 1], [], []>} : vector<32x288xbf16>, vector<288x128xbf16>, vector<32x128xf32> -> vector<32x128xf32>
    %c0_20 = arith.constant 0 : index
    %c0_21 = arith.constant 0 : index
    %21 = vector.load %arg4[%c0_20, %c0_21] : memref<32x1xf32, #tpu.memory_space<vmem>>, vector<32x1xf32>
    %22 = vector.broadcast %21 : vector<32x1xf32> to vector<32x128xf32>
    %23 = arith.addf %20, %22 : vector<32x128xf32>
    %c0_22 = arith.constant 0 : index
    %c0_23 = arith.constant 0 : index
    %c0_24 = arith.constant 0 : index
    %24 = vector.load %arg5[%c0_22, %c0_23, %c0_24] : memref<1x32x128xf32, #tpu.memory_space<vmem>>, vector<1x32x128xf32>
    %25 = vector.shape_cast %24 : vector<1x32x128xf32> to vector<32x128xf32>
    %26 = vector.shape_cast %23 : vector<32x128xf32> to vector<1x32x128xf32>
    tpu.vector_store %arg5[%c0_22, %c0_23, %c0_24], %26 {strides = array<i32>} : memref<1x32x128xf32, #tpu.memory_space<vmem>>, vector<1x32x128xf32>,
    return
  }
  func.func @transform_0(%arg0: i32, %arg1: i32) -> (i32, i32, i32) {
    %c0_i32 = arith.constant 0 : i32
    %c0_i32_0 = arith.constant 0 : i32
    %c0_i32_1 = arith.constant 0 : i32
    return %arg0, %c0_i32, %c0_i32_0 : i32, i32, i32
  }
  func.func @transform_1(%arg0: i32, %arg1: i32) -> (i32, i32) {
    %c0_i32 = arith.constant 0 : i32
    %c0_i32_0 = arith.constant 0 : i32
    %c0_i32_1 = arith.constant 0 : i32
    return %c0_i32, %c0_i32_0 : i32, i32
  }
  func.func @transform_2(%arg0: i32, %arg1: i32) -> (i32, i32) {
    %c0_i32 = arith.constant 0 : i32
    %c0_i32_0 = arith.constant 0 : i32
    %c0_i32_1 = arith.constant 0 : i32
    return %c0_i32, %c0_i32_0 : i32, i32
  }
  func.func @transform_3(%arg0: i32, %arg1: i32) -> (i32, i32, i32) {
    %c0_i32 = arith.constant 0 : i32
    %c0_i32_0 = arith.constant 0 : i32
    return %arg0, %c0_i32, %arg1 : i32, i32, i32
  }
}

module attributes {stable_mosaic.version = 11 : i64} {
  func.func @_conv_gemm_kernel(%arg0: i32, %arg1: i32, %arg2: memref<1x16x128xbf16, #tpu.memory_space<vmem>>, %arg3: memref<32x16xbf16, #tpu.memory_space<vmem>>, %arg4: memref<32x1xf32, #tpu.memory_space<vmem>>, %arg5: memref<1x32x128xf32, #tpu.memory_space<vmem>>) attributes {dimension_semantics = [#tpu.dimension_semantics<parallel>, #tpu.dimension_semantics<parallel>], iteration_bounds = array<i64: 2, 1>, scalar_prefetch = 0 : i64, scratch_operands = 0 : i64, tpu.core_type = #tpu.core_type<tc>, window_params = [{transform_indices = @transform_0, window_bounds = array<i64: 1, 16, 128>}, {pipeline_mode = #tpu.pipeline_mode<synchronous>, transform_indices = @transform_1, window_bounds = array<i64: 32, 16>}, {pipeline_mode = #tpu.pipeline_mode<synchronous>, transform_indices = @transform_2, window_bounds = array<i64: 32, 1>}, {transform_indices = @transform_3, window_bounds = array<i64: 1, 32, 128>}]} {
    %c0 = arith.constant 0 : index
    %c0_0 = arith.constant 0 : index
    %c0_1 = arith.constant 0 : index
    %0 = vector.load %arg2[%c0, %c0_0, %c0_1] : memref<1x16x128xbf16, #tpu.memory_space<vmem>>, vector<1x16x128xbf16>
    %1 = vector.shape_cast %0 : vector<1x16x128xbf16> to vector<16x128xbf16>
    %c0_2 = arith.constant 0 : index
    %c0_3 = arith.constant 0 : index
    %2 = vector.load %arg3[%c0_2, %c0_3] : memref<32x16xbf16, #tpu.memory_space<vmem>>, vector<32x16xbf16>
    %cst = arith.constant dense<0.000000e+00> : vector<32x128xf32>
    %3 = tpu.matmul %2, %1, %cst {dimension_numbers = #tpu.dot_dimension_numbers<[1], [0], [0], [1], [0, 0, 1, 1], [], []>} : vector<32x16xbf16>, vector<16x128xbf16>, vector<32x128xf32> -> vector<32x128xf32>
    %c0_4 = arith.constant 0 : index
    %c0_5 = arith.constant 0 : index
    %4 = vector.load %arg4[%c0_4, %c0_5] : memref<32x1xf32, #tpu.memory_space<vmem>>, vector<32x1xf32>
    %5 = vector.broadcast %4 : vector<32x1xf32> to vector<32x128xf32>
    %6 = arith.addf %3, %5 : vector<32x128xf32>
    %c0_6 = arith.constant 0 : index
    %c0_7 = arith.constant 0 : index
    %c0_8 = arith.constant 0 : index
    %7 = vector.load %arg5[%c0_6, %c0_7, %c0_8] : memref<1x32x128xf32, #tpu.memory_space<vmem>>, vector<1x32x128xf32>
    %8 = vector.shape_cast %7 : vector<1x32x128xf32> to vector<32x128xf32>
    %9 = vector.shape_cast %6 : vector<32x128xf32> to vector<1x32x128xf32>
    tpu.vector_store %arg5[%c0_6, %c0_7, %c0_8], %9 {strides = array<i32>} : memref<1x32x128xf32, #tpu.memory_space<vmem>>, vector<1x32x128xf32>,
    return
  }
  func.func @transform_0(%arg0: i32, %arg1: i32) -> (i32, i32, i32) {
    %c0_i32 = arith.constant 0 : i32
    %c0_i32_0 = arith.constant 0 : i32
    %c0_i32_1 = arith.constant 0 : i32
    return %arg0, %c0_i32, %c0_i32_0 : i32, i32, i32
  }
  func.func @transform_1(%arg0: i32, %arg1: i32) -> (i32, i32) {
    %c0_i32 = arith.constant 0 : i32
    %c0_i32_0 = arith.constant 0 : i32
    %c0_i32_1 = arith.constant 0 : i32
    return %c0_i32, %c0_i32_0 : i32, i32
  }
  func.func @transform_2(%arg0: i32, %arg1: i32) -> (i32, i32) {
    %c0_i32 = arith.constant 0 : i32
    %c0_i32_0 = arith.constant 0 : i32
    %c0_i32_1 = arith.constant 0 : i32
    return %c0_i32, %c0_i32_0 : i32, i32
  }
  func.func @transform_3(%arg0: i32, %arg1: i32) -> (i32, i32, i32) {
    %c0_i32 = arith.constant 0 : i32
    %c0_i32_0 = arith.constant 0 : i32
    return %arg0, %c0_i32, %arg1 : i32, i32, i32
  }
}

module attributes {stable_mosaic.version = 11 : i64} {
  func.func @_conv_gemm_kernel(%arg0: i32, %arg1: i32, %arg2: memref<1x128x128xbf16, #tpu.memory_space<vmem>>, %arg3: memref<32x128xbf16, #tpu.memory_space<vmem>>, %arg4: memref<32x1xf32, #tpu.memory_space<vmem>>, %arg5: memref<1x32x128xf32, #tpu.memory_space<vmem>>) attributes {dimension_semantics = [#tpu.dimension_semantics<parallel>, #tpu.dimension_semantics<parallel>], iteration_bounds = array<i64: 2, 1>, scalar_prefetch = 0 : i64, scratch_operands = 0 : i64, tpu.core_type = #tpu.core_type<tc>, window_params = [{transform_indices = @transform_0, window_bounds = array<i64: 1, 128, 128>}, {pipeline_mode = #tpu.pipeline_mode<synchronous>, transform_indices = @transform_1, window_bounds = array<i64: 32, 128>}, {pipeline_mode = #tpu.pipeline_mode<synchronous>, transform_indices = @transform_2, window_bounds = array<i64: 32, 1>}, {transform_indices = @transform_3, window_bounds = array<i64: 1, 32, 128>}]} {
    %c0 = arith.constant 0 : index
    %c0_0 = arith.constant 0 : index
    %c0_1 = arith.constant 0 : index
    %0 = vector.load %arg2[%c0, %c0_0, %c0_1] : memref<1x128x128xbf16, #tpu.memory_space<vmem>>, vector<1x128x128xbf16>
    %1 = vector.shape_cast %0 : vector<1x128x128xbf16> to vector<128x128xbf16>
    %c0_2 = arith.constant 0 : index
    %c0_3 = arith.constant 0 : index
    %2 = vector.load %arg3[%c0_2, %c0_3] : memref<32x128xbf16, #tpu.memory_space<vmem>>, vector<32x128xbf16>
    %cst = arith.constant dense<0.000000e+00> : vector<32x128xf32>
    %3 = tpu.matmul %2, %1, %cst {dimension_numbers = #tpu.dot_dimension_numbers<[1], [0], [0], [1], [0, 0, 1, 1], [], []>} : vector<32x128xbf16>, vector<128x128xbf16>, vector<32x128xf32> -> vector<32x128xf32>
    %c0_4 = arith.constant 0 : index
    %c0_5 = arith.constant 0 : index
    %4 = vector.load %arg4[%c0_4, %c0_5] : memref<32x1xf32, #tpu.memory_space<vmem>>, vector<32x1xf32>
    %5 = vector.broadcast %4 : vector<32x1xf32> to vector<32x128xf32>
    %6 = arith.addf %3, %5 : vector<32x128xf32>
    %c0_6 = arith.constant 0 : index
    %c0_7 = arith.constant 0 : index
    %c0_8 = arith.constant 0 : index
    %7 = vector.load %arg5[%c0_6, %c0_7, %c0_8] : memref<1x32x128xf32, #tpu.memory_space<vmem>>, vector<1x32x128xf32>
    %8 = vector.shape_cast %7 : vector<1x32x128xf32> to vector<32x128xf32>
    %9 = vector.shape_cast %6 : vector<32x128xf32> to vector<1x32x128xf32>
    tpu.vector_store %arg5[%c0_6, %c0_7, %c0_8], %9 {strides = array<i32>} : memref<1x32x128xf32, #tpu.memory_space<vmem>>, vector<1x32x128xf32>,
    return
  }
  func.func @transform_0(%arg0: i32, %arg1: i32) -> (i32, i32, i32) {
    %c0_i32 = arith.constant 0 : i32
    %c0_i32_0 = arith.constant 0 : i32
    %c0_i32_1 = arith.constant 0 : i32
    return %arg0, %c0_i32, %c0_i32_0 : i32, i32, i32
  }
  func.func @transform_1(%arg0: i32, %arg1: i32) -> (i32, i32) {
    %c0_i32 = arith.constant 0 : i32
    %c0_i32_0 = arith.constant 0 : i32
    %c0_i32_1 = arith.constant 0 : i32
    return %c0_i32, %c0_i32_0 : i32, i32
  }
  func.func @transform_2(%arg0: i32, %arg1: i32) -> (i32, i32) {
    %c0_i32 = arith.constant 0 : i32
    %c0_i32_0 = arith.constant 0 : i32
    %c0_i32_1 = arith.constant 0 : i32
    return %c0_i32, %c0_i32_0 : i32, i32
  }
  func.func @transform_3(%arg0: i32, %arg1: i32) -> (i32, i32, i32) {
    %c0_i32 = arith.constant 0 : i32
    %c0_i32_0 = arith.constant 0 : i32
    return %arg0, %c0_i32, %arg1 : i32, i32, i32
  }
}

module attributes {stable_mosaic.version = 11 : i64} {
  func.func @_conv_gemm_kernel(%arg0: i32, %arg1: i32, %arg2: memref<1x32x144xbf16, #tpu.memory_space<vmem>>, %arg3: memref<64x288xbf16, #tpu.memory_space<vmem>>, %arg4: memref<64x1xf32, #tpu.memory_space<vmem>>, %arg5: memref<1x64x128xf32, #tpu.memory_space<vmem>>) attributes {dimension_semantics = [#tpu.dimension_semantics<parallel>, #tpu.dimension_semantics<parallel>], iteration_bounds = array<i64: 2, 1>, scalar_prefetch = 0 : i64, scratch_operands = 0 : i64, tpu.core_type = #tpu.core_type<tc>, window_params = [{transform_indices = @transform_0, window_bounds = array<i64: 1, 32, 144>}, {pipeline_mode = #tpu.pipeline_mode<synchronous>, transform_indices = @transform_1, window_bounds = array<i64: 64, 288>}, {pipeline_mode = #tpu.pipeline_mode<synchronous>, transform_indices = @transform_2, window_bounds = array<i64: 64, 1>}, {transform_indices = @transform_3, window_bounds = array<i64: 1, 64, 128>}]} {
    %c0 = arith.constant 0 : index
    %c0_0 = arith.constant 0 : index
    %c0_1 = arith.constant 0 : index
    %0 = vector.load %arg2[%c0, %c0_0, %c0_1] : memref<1x32x144xbf16, #tpu.memory_space<vmem>>, vector<1x32x128xbf16>
    %1 = vector.shape_cast %0 : vector<1x32x128xbf16> to vector<32x128xbf16>
    %c0_2 = arith.constant 0 : index
    %c0_3 = arith.constant 0 : index
    %c1 = arith.constant 1 : index
    %2 = vector.load %arg2[%c0_2, %c0_3, %c1] : memref<1x32x144xbf16, #tpu.memory_space<vmem>>, vector<1x32x128xbf16>
    %3 = vector.shape_cast %2 : vector<1x32x128xbf16> to vector<32x128xbf16>
    %c0_4 = arith.constant 0 : index
    %c0_5 = arith.constant 0 : index
    %c2 = arith.constant 2 : index
    %4 = vector.load %arg2[%c0_4, %c0_5, %c2] : memref<1x32x144xbf16, #tpu.memory_space<vmem>>, vector<1x32x128xbf16>
    %5 = vector.shape_cast %4 : vector<1x32x128xbf16> to vector<32x128xbf16>
    %c0_6 = arith.constant 0 : index
    %c0_7 = arith.constant 0 : index
    %c6 = arith.constant 6 : index
    %6 = vector.load %arg2[%c0_6, %c0_7, %c6] : memref<1x32x144xbf16, #tpu.memory_space<vmem>>, vector<1x32x128xbf16>
    %7 = vector.shape_cast %6 : vector<1x32x128xbf16> to vector<32x128xbf16>
    %c0_8 = arith.constant 0 : index
    %c0_9 = arith.constant 0 : index
    %c7 = arith.constant 7 : index
    %8 = vector.load %arg2[%c0_8, %c0_9, %c7] : memref<1x32x144xbf16, #tpu.memory_space<vmem>>, vector<1x32x128xbf16>
    %9 = vector.shape_cast %8 : vector<1x32x128xbf16> to vector<32x128xbf16>
    %c0_10 = arith.constant 0 : index
    %c0_11 = arith.constant 0 : index
    %c8 = arith.constant 8 : index
    %10 = vector.load %arg2[%c0_10, %c0_11, %c8] : memref<1x32x144xbf16, #tpu.memory_space<vmem>>, vector<1x32x128xbf16>
    %11 = vector.shape_cast %10 : vector<1x32x128xbf16> to vector<32x128xbf16>
    %c0_12 = arith.constant 0 : index
    %c0_13 = arith.constant 0 : index
    %c12 = arith.constant 12 : index
    %12 = vector.load %arg2[%c0_12, %c0_13, %c12] : memref<1x32x144xbf16, #tpu.memory_space<vmem>>, vector<1x32x128xbf16>
    %13 = vector.shape_cast %12 : vector<1x32x128xbf16> to vector<32x128xbf16>
    %c0_14 = arith.constant 0 : index
    %c0_15 = arith.constant 0 : index
    %c13 = arith.constant 13 : index
    %14 = vector.load %arg2[%c0_14, %c0_15, %c13] : memref<1x32x144xbf16, #tpu.memory_space<vmem>>, vector<1x32x128xbf16>
    %15 = vector.shape_cast %14 : vector<1x32x128xbf16> to vector<32x128xbf16>
    %c0_16 = arith.constant 0 : index
    %c0_17 = arith.constant 0 : index
    %c14 = arith.constant 14 : index
    %16 = vector.load %arg2[%c0_16, %c0_17, %c14] : memref<1x32x144xbf16, #tpu.memory_space<vmem>>, vector<1x32x128xbf16>
    %17 = vector.shape_cast %16 : vector<1x32x128xbf16> to vector<32x128xbf16>
    %18 = tpu.concatenate %1, %3, %5, %7, %9, %11, %13, %15, %17 in 0 : vector<32x128xbf16>, vector<32x128xbf16>, vector<32x128xbf16>, vector<32x128xbf16>, vector<32x128xbf16>, vector<32x128xbf16>, vector<32x128xbf16>, vector<32x128xbf16>, vector<32x128xbf16> -> vector<288x128xbf16>
    %c0_18 = arith.constant 0 : index
    %c0_19 = arith.constant 0 : index
    %19 = vector.load %arg3[%c0_18, %c0_19] : memref<64x288xbf16, #tpu.memory_space<vmem>>, vector<64x288xbf16>
    %cst = arith.constant dense<0.000000e+00> : vector<64x128xf32>
    %20 = tpu.matmul %19, %18, %cst {dimension_numbers = #tpu.dot_dimension_numbers<[1], [0], [0], [1], [0, 0, 1, 1], [], []>} : vector<64x288xbf16>, vector<288x128xbf16>, vector<64x128xf32> -> vector<64x128xf32>
    %c0_20 = arith.constant 0 : index
    %c0_21 = arith.constant 0 : index
    %21 = vector.load %arg4[%c0_20, %c0_21] : memref<64x1xf32, #tpu.memory_space<vmem>>, vector<64x1xf32>
    %22 = vector.broadcast %21 : vector<64x1xf32> to vector<64x128xf32>
    %23 = arith.addf %20, %22 : vector<64x128xf32>
    %c0_22 = arith.constant 0 : index
    %c0_23 = arith.constant 0 : index
    %c0_24 = arith.constant 0 : index
    %24 = vector.load %arg5[%c0_22, %c0_23, %c0_24] : memref<1x64x128xf32, #tpu.memory_space<vmem>>, vector<1x64x128xf32>
    %25 = vector.shape_cast %24 : vector<1x64x128xf32> to vector<64x128xf32>
    %26 = vector.shape_cast %23 : vector<64x128xf32> to vector<1x64x128xf32>
    tpu.vector_store %arg5[%c0_22, %c0_23, %c0_24], %26 {strides = array<i32>} : memref<1x64x128xf32, #tpu.memory_space<vmem>>, vector<1x64x128xf32>,
    return
  }
  func.func @transform_0(%arg0: i32, %arg1: i32) -> (i32, i32, i32) {
    %c0_i32 = arith.constant 0 : i32
    %c0_i32_0 = arith.constant 0 : i32
    %c0_i32_1 = arith.constant 0 : i32
    return %arg0, %c0_i32, %c0_i32_0 : i32, i32, i32
  }
  func.func @transform_1(%arg0: i32, %arg1: i32) -> (i32, i32) {
    %c0_i32 = arith.constant 0 : i32
    %c0_i32_0 = arith.constant 0 : i32
    %c0_i32_1 = arith.constant 0 : i32
    return %c0_i32, %c0_i32_0 : i32, i32
  }
  func.func @transform_2(%arg0: i32, %arg1: i32) -> (i32, i32) {
    %c0_i32 = arith.constant 0 : i32
    %c0_i32_0 = arith.constant 0 : i32
    %c0_i32_1 = arith.constant 0 : i32
    return %c0_i32, %c0_i32_0 : i32, i32
  }
  func.func @transform_3(%arg0: i32, %arg1: i32) -> (i32, i32, i32) {
    %c0_i32 = arith.constant 0 : i32
    %c0_i32_0 = arith.constant 0 : i32
    return %arg0, %c0_i32, %arg1 : i32, i32, i32
  }
}

module attributes {stable_mosaic.version = 11 : i64} {
  func.func @_conv_gemm_kernel(%arg0: i32, %arg1: i32, %arg2: memref<1x64x144xbf16, #tpu.memory_space<vmem>>, %arg3: memref<64x576xbf16, #tpu.memory_space<vmem>>, %arg4: memref<64x1xf32, #tpu.memory_space<vmem>>, %arg5: memref<1x64x128xf32, #tpu.memory_space<vmem>>) attributes {dimension_semantics = [#tpu.dimension_semantics<parallel>, #tpu.dimension_semantics<parallel>], iteration_bounds = array<i64: 2, 1>, scalar_prefetch = 0 : i64, scratch_operands = 0 : i64, tpu.core_type = #tpu.core_type<tc>, window_params = [{transform_indices = @transform_0, window_bounds = array<i64: 1, 64, 144>}, {pipeline_mode = #tpu.pipeline_mode<synchronous>, transform_indices = @transform_1, window_bounds = array<i64: 64, 576>}, {pipeline_mode = #tpu.pipeline_mode<synchronous>, transform_indices = @transform_2, window_bounds = array<i64: 64, 1>}, {transform_indices = @transform_3, window_bounds = array<i64: 1, 64, 128>}]} {
    %c0 = arith.constant 0 : index
    %c0_0 = arith.constant 0 : index
    %c0_1 = arith.constant 0 : index
    %0 = vector.load %arg2[%c0, %c0_0, %c0_1] : memref<1x64x144xbf16, #tpu.memory_space<vmem>>, vector<1x64x128xbf16>
    %1 = vector.shape_cast %0 : vector<1x64x128xbf16> to vector<64x128xbf16>
    %c0_2 = arith.constant 0 : index
    %c0_3 = arith.constant 0 : index
    %c1 = arith.constant 1 : index
    %2 = vector.load %arg2[%c0_2, %c0_3, %c1] : memref<1x64x144xbf16, #tpu.memory_space<vmem>>, vector<1x64x128xbf16>
    %3 = vector.shape_cast %2 : vector<1x64x128xbf16> to vector<64x128xbf16>
    %c0_4 = arith.constant 0 : index
    %c0_5 = arith.constant 0 : index
    %c2 = arith.constant 2 : index
    %4 = vector.load %arg2[%c0_4, %c0_5, %c2] : memref<1x64x144xbf16, #tpu.memory_space<vmem>>, vector<1x64x128xbf16>
    %5 = vector.shape_cast %4 : vector<1x64x128xbf16> to vector<64x128xbf16>
    %c0_6 = arith.constant 0 : index
    %c0_7 = arith.constant 0 : index
    %c6 = arith.constant 6 : index
    %6 = vector.load %arg2[%c0_6, %c0_7, %c6] : memref<1x64x144xbf16, #tpu.memory_space<vmem>>, vector<1x64x128xbf16>
    %7 = vector.shape_cast %6 : vector<1x64x128xbf16> to vector<64x128xbf16>
    %c0_8 = arith.constant 0 : index
    %c0_9 = arith.constant 0 : index
    %c7 = arith.constant 7 : index
    %8 = vector.load %arg2[%c0_8, %c0_9, %c7] : memref<1x64x144xbf16, #tpu.memory_space<vmem>>, vector<1x64x128xbf16>
    %9 = vector.shape_cast %8 : vector<1x64x128xbf16> to vector<64x128xbf16>
    %c0_10 = arith.constant 0 : index
    %c0_11 = arith.constant 0 : index
    %c8 = arith.constant 8 : index
    %10 = vector.load %arg2[%c0_10, %c0_11, %c8] : memref<1x64x144xbf16, #tpu.memory_space<vmem>>, vector<1x64x128xbf16>
    %11 = vector.shape_cast %10 : vector<1x64x128xbf16> to vector<64x128xbf16>
    %c0_12 = arith.constant 0 : index
    %c0_13 = arith.constant 0 : index
    %c12 = arith.constant 12 : index
    %12 = vector.load %arg2[%c0_12, %c0_13, %c12] : memref<1x64x144xbf16, #tpu.memory_space<vmem>>, vector<1x64x128xbf16>
    %13 = vector.shape_cast %12 : vector<1x64x128xbf16> to vector<64x128xbf16>
    %c0_14 = arith.constant 0 : index
    %c0_15 = arith.constant 0 : index
    %c13 = arith.constant 13 : index
    %14 = vector.load %arg2[%c0_14, %c0_15, %c13] : memref<1x64x144xbf16, #tpu.memory_space<vmem>>, vector<1x64x128xbf16>
    %15 = vector.shape_cast %14 : vector<1x64x128xbf16> to vector<64x128xbf16>
    %c0_16 = arith.constant 0 : index
    %c0_17 = arith.constant 0 : index
    %c14 = arith.constant 14 : index
    %16 = vector.load %arg2[%c0_16, %c0_17, %c14] : memref<1x64x144xbf16, #tpu.memory_space<vmem>>, vector<1x64x128xbf16>
    %17 = vector.shape_cast %16 : vector<1x64x128xbf16> to vector<64x128xbf16>
    %18 = tpu.concatenate %1, %3, %5, %7, %9, %11, %13, %15, %17 in 0 : vector<64x128xbf16>, vector<64x128xbf16>, vector<64x128xbf16>, vector<64x128xbf16>, vector<64x128xbf16>, vector<64x128xbf16>, vector<64x128xbf16>, vector<64x128xbf16>, vector<64x128xbf16> -> vector<576x128xbf16>
    %c0_18 = arith.constant 0 : index
    %c0_19 = arith.constant 0 : index
    %19 = vector.load %arg3[%c0_18, %c0_19] : memref<64x576xbf16, #tpu.memory_space<vmem>>, vector<64x576xbf16>
    %cst = arith.constant dense<0.000000e+00> : vector<64x128xf32>
    %20 = tpu.matmul %19, %18, %cst {dimension_numbers = #tpu.dot_dimension_numbers<[1], [0], [0], [1], [0, 0, 1, 1], [], []>} : vector<64x576xbf16>, vector<576x128xbf16>, vector<64x128xf32> -> vector<64x128xf32>
    %c0_20 = arith.constant 0 : index
    %c0_21 = arith.constant 0 : index
    %21 = vector.load %arg4[%c0_20, %c0_21] : memref<64x1xf32, #tpu.memory_space<vmem>>, vector<64x1xf32>
    %22 = vector.broadcast %21 : vector<64x1xf32> to vector<64x128xf32>
    %23 = arith.addf %20, %22 : vector<64x128xf32>
    %c0_22 = arith.constant 0 : index
    %c0_23 = arith.constant 0 : index
    %c0_24 = arith.constant 0 : index
    %24 = vector.load %arg5[%c0_22, %c0_23, %c0_24] : memref<1x64x128xf32, #tpu.memory_space<vmem>>, vector<1x64x128xf32>
    %25 = vector.shape_cast %24 : vector<1x64x128xf32> to vector<64x128xf32>
    %26 = vector.shape_cast %23 : vector<64x128xf32> to vector<1x64x128xf32>
    tpu.vector_store %arg5[%c0_22, %c0_23, %c0_24], %26 {strides = array<i32>} : memref<1x64x128xf32, #tpu.memory_space<vmem>>, vector<1x64x128xf32>,
    return
  }
  func.func @transform_0(%arg0: i32, %arg1: i32) -> (i32, i32, i32) {
    %c0_i32 = arith.constant 0 : i32
    %c0_i32_0 = arith.constant 0 : i32
    %c0_i32_1 = arith.constant 0 : i32
    return %arg0, %c0_i32, %c0_i32_0 : i32, i32, i32
  }
  func.func @transform_1(%arg0: i32, %arg1: i32) -> (i32, i32) {
    %c0_i32 = arith.constant 0 : i32
    %c0_i32_0 = arith.constant 0 : i32
    %c0_i32_1 = arith.constant 0 : i32
    return %c0_i32, %c0_i32_0 : i32, i32
  }
  func.func @transform_2(%arg0: i32, %arg1: i32) -> (i32, i32) {
    %c0_i32 = arith.constant 0 : i32
    %c0_i32_0 = arith.constant 0 : i32
    %c0_i32_1 = arith.constant 0 : i32
    return %c0_i32, %c0_i32_0 : i32, i32
  }
  func.func @transform_3(%arg0: i32, %arg1: i32) -> (i32, i32, i32) {
    %c0_i32 = arith.constant 0 : i32
    %c0_i32_0 = arith.constant 0 : i32
    return %arg0, %c0_i32, %arg1 : i32, i32, i32
  }
}

module attributes {stable_mosaic.version = 11 : i64} {
  func.func @_conv_gemm_kernel(%arg0: i32, %arg1: i32, %arg2: memref<1x32x128xbf16, #tpu.memory_space<vmem>>, %arg3: memref<64x32xbf16, #tpu.memory_space<vmem>>, %arg4: memref<64x1xf32, #tpu.memory_space<vmem>>, %arg5: memref<1x64x128xf32, #tpu.memory_space<vmem>>) attributes {dimension_semantics = [#tpu.dimension_semantics<parallel>, #tpu.dimension_semantics<parallel>], iteration_bounds = array<i64: 2, 1>, scalar_prefetch = 0 : i64, scratch_operands = 0 : i64, tpu.core_type = #tpu.core_type<tc>, window_params = [{transform_indices = @transform_0, window_bounds = array<i64: 1, 32, 128>}, {pipeline_mode = #tpu.pipeline_mode<synchronous>, transform_indices = @transform_1, window_bounds = array<i64: 64, 32>}, {pipeline_mode = #tpu.pipeline_mode<synchronous>, transform_indices = @transform_2, window_bounds = array<i64: 64, 1>}, {transform_indices = @transform_3, window_bounds = array<i64: 1, 64, 128>}]} {
    %c0 = arith.constant 0 : index
    %c0_0 = arith.constant 0 : index
    %c0_1 = arith.constant 0 : index
    %0 = vector.load %arg2[%c0, %c0_0, %c0_1] : memref<1x32x128xbf16, #tpu.memory_space<vmem>>, vector<1x32x128xbf16>
    %1 = vector.shape_cast %0 : vector<1x32x128xbf16> to vector<32x128xbf16>
    %c0_2 = arith.constant 0 : index
    %c0_3 = arith.constant 0 : index
    %2 = vector.load %arg3[%c0_2, %c0_3] : memref<64x32xbf16, #tpu.memory_space<vmem>>, vector<64x32xbf16>
    %cst = arith.constant dense<0.000000e+00> : vector<64x128xf32>
    %3 = tpu.matmul %2, %1, %cst {dimension_numbers = #tpu.dot_dimension_numbers<[1], [0], [0], [1], [0, 0, 1, 1], [], []>} : vector<64x32xbf16>, vector<32x128xbf16>, vector<64x128xf32> -> vector<64x128xf32>
    %c0_4 = arith.constant 0 : index
    %c0_5 = arith.constant 0 : index
    %4 = vector.load %arg4[%c0_4, %c0_5] : memref<64x1xf32, #tpu.memory_space<vmem>>, vector<64x1xf32>
    %5 = vector.broadcast %4 : vector<64x1xf32> to vector<64x128xf32>
    %6 = arith.addf %3, %5 : vector<64x128xf32>
    %c0_6 = arith.constant 0 : index
    %c0_7 = arith.constant 0 : index
    %c0_8 = arith.constant 0 : index
    %7 = vector.load %arg5[%c0_6, %c0_7, %c0_8] : memref<1x64x128xf32, #tpu.memory_space<vmem>>, vector<1x64x128xf32>
    %8 = vector.shape_cast %7 : vector<1x64x128xf32> to vector<64x128xf32>
    %9 = vector.shape_cast %6 : vector<64x128xf32> to vector<1x64x128xf32>
    tpu.vector_store %arg5[%c0_6, %c0_7, %c0_8], %9 {strides = array<i32>} : memref<1x64x128xf32, #tpu.memory_space<vmem>>, vector<1x64x128xf32>,
    return
  }
  func.func @transform_0(%arg0: i32, %arg1: i32) -> (i32, i32, i32) {
    %c0_i32 = arith.constant 0 : i32
    %c0_i32_0 = arith.constant 0 : i32
    %c0_i32_1 = arith.constant 0 : i32
    return %arg0, %c0_i32, %c0_i32_0 : i32, i32, i32
  }
  func.func @transform_1(%arg0: i32, %arg1: i32) -> (i32, i32) {
    %c0_i32 = arith.constant 0 : i32
    %c0_i32_0 = arith.constant 0 : i32
    %c0_i32_1 = arith.constant 0 : i32
    return %c0_i32, %c0_i32_0 : i32, i32
  }
  func.func @transform_2(%arg0: i32, %arg1: i32) -> (i32, i32) {
    %c0_i32 = arith.constant 0 : i32
    %c0_i32_0 = arith.constant 0 : i32
    %c0_i32_1 = arith.constant 0 : i32
    return %c0_i32, %c0_i32_0 : i32, i32
  }
  func.func @transform_3(%arg0: i32, %arg1: i32) -> (i32, i32, i32) {
    %c0_i32 = arith.constant 0 : i32
    %c0_i32_0 = arith.constant 0 : i32
    return %arg0, %c0_i32, %arg1 : i32, i32, i32
  }
}

module attributes {stable_mosaic.version = 11 : i64} {
  func.func @_conv_gemm_kernel(%arg0: i32, %arg1: i32, %arg2: memref<1x64x168xbf16, #tpu.memory_space<vmem>>, %arg3: memref<64x576xbf16, #tpu.memory_space<vmem>>, %arg4: memref<64x1xf32, #tpu.memory_space<vmem>>, %arg5: memref<1x64x128xf32, #tpu.memory_space<vmem>>) attributes {dimension_semantics = [#tpu.dimension_semantics<parallel>, #tpu.dimension_semantics<parallel>], iteration_bounds = array<i64: 2, 1>, scalar_prefetch = 0 : i64, scratch_operands = 0 : i64, tpu.core_type = #tpu.core_type<tc>, window_params = [{transform_indices = @transform_0, window_bounds = array<i64: 1, 64, 168>}, {pipeline_mode = #tpu.pipeline_mode<synchronous>, transform_indices = @transform_1, window_bounds = array<i64: 64, 576>}, {pipeline_mode = #tpu.pipeline_mode<synchronous>, transform_indices = @transform_2, window_bounds = array<i64: 64, 1>}, {transform_indices = @transform_3, window_bounds = array<i64: 1, 64, 128>}]} {
    %c0 = arith.constant 0 : index
    %c0_0 = arith.constant 0 : index
    %c0_1 = arith.constant 0 : index
    %0 = vector.load %arg2[%c0, %c0_0, %c0_1] : memref<1x64x168xbf16, #tpu.memory_space<vmem>>, vector<1x64x128xbf16>
    %1 = vector.shape_cast %0 : vector<1x64x128xbf16> to vector<64x128xbf16>
    %c0_2 = arith.constant 0 : index
    %c0_3 = arith.constant 0 : index
    %c2 = arith.constant 2 : index
    %2 = vector.load %arg2[%c0_2, %c0_3, %c2] : memref<1x64x168xbf16, #tpu.memory_space<vmem>>, vector<1x64x128xbf16>
    %3 = vector.shape_cast %2 : vector<1x64x128xbf16> to vector<64x128xbf16>
    %c0_4 = arith.constant 0 : index
    %c0_5 = arith.constant 0 : index
    %c4 = arith.constant 4 : index
    %4 = vector.load %arg2[%c0_4, %c0_5, %c4] : memref<1x64x168xbf16, #tpu.memory_space<vmem>>, vector<1x64x128xbf16>
    %5 = vector.shape_cast %4 : vector<1x64x128xbf16> to vector<64x128xbf16>
    %c0_6 = arith.constant 0 : index
    %c0_7 = arith.constant 0 : index
    %c16 = arith.constant 16 : index
    %6 = vector.load %arg2[%c0_6, %c0_7, %c16] : memref<1x64x168xbf16, #tpu.memory_space<vmem>>, vector<1x64x128xbf16>
    %7 = vector.shape_cast %6 : vector<1x64x128xbf16> to vector<64x128xbf16>
    %c0_8 = arith.constant 0 : index
    %c0_9 = arith.constant 0 : index
    %c18 = arith.constant 18 : index
    %8 = vector.load %arg2[%c0_8, %c0_9, %c18] : memref<1x64x168xbf16, #tpu.memory_space<vmem>>, vector<1x64x128xbf16>
    %9 = vector.shape_cast %8 : vector<1x64x128xbf16> to vector<64x128xbf16>
    %c0_10 = arith.constant 0 : index
    %c0_11 = arith.constant 0 : index
    %c20 = arith.constant 20 : index
    %10 = vector.load %arg2[%c0_10, %c0_11, %c20] : memref<1x64x168xbf16, #tpu.memory_space<vmem>>, vector<1x64x128xbf16>
    %11 = vector.shape_cast %10 : vector<1x64x128xbf16> to vector<64x128xbf16>
    %c0_12 = arith.constant 0 : index
    %c0_13 = arith.constant 0 : index
    %c32 = arith.constant 32 : index
    %12 = vector.load %arg2[%c0_12, %c0_13, %c32] : memref<1x64x168xbf16, #tpu.memory_space<vmem>>, vector<1x64x128xbf16>
    %13 = vector.shape_cast %12 : vector<1x64x128xbf16> to vector<64x128xbf16>
    %c0_14 = arith.constant 0 : index
    %c0_15 = arith.constant 0 : index
    %c34 = arith.constant 34 : index
    %14 = vector.load %arg2[%c0_14, %c0_15, %c34] : memref<1x64x168xbf16, #tpu.memory_space<vmem>>, vector<1x64x128xbf16>
    %15 = vector.shape_cast %14 : vector<1x64x128xbf16> to vector<64x128xbf16>
    %c0_16 = arith.constant 0 : index
    %c0_17 = arith.constant 0 : index
    %c36 = arith.constant 36 : index
    %16 = vector.load %arg2[%c0_16, %c0_17, %c36] : memref<1x64x168xbf16, #tpu.memory_space<vmem>>, vector<1x64x128xbf16>
    %17 = vector.shape_cast %16 : vector<1x64x128xbf16> to vector<64x128xbf16>
    %18 = tpu.concatenate %1, %3, %5, %7, %9, %11, %13, %15, %17 in 0 : vector<64x128xbf16>, vector<64x128xbf16>, vector<64x128xbf16>, vector<64x128xbf16>, vector<64x128xbf16>, vector<64x128xbf16>, vector<64x128xbf16>, vector<64x128xbf16>, vector<64x128xbf16> -> vector<576x128xbf16>
    %c0_18 = arith.constant 0 : index
    %c0_19 = arith.constant 0 : index
    %19 = vector.load %arg3[%c0_18, %c0_19] : memref<64x576xbf16, #tpu.memory_space<vmem>>, vector<64x576xbf16>
    %cst = arith.constant dense<0.000000e+00> : vector<64x128xf32>
    %20 = tpu.matmul %19, %18, %cst {dimension_numbers = #tpu.dot_dimension_numbers<[1], [0], [0], [1], [0, 0, 1, 1], [], []>} : vector<64x576xbf16>, vector<576x128xbf16>, vector<64x128xf32> -> vector<64x128xf32>
    %c0_20 = arith.constant 0 : index
    %c0_21 = arith.constant 0 : index
    %21 = vector.load %arg4[%c0_20, %c0_21] : memref<64x1xf32, #tpu.memory_space<vmem>>, vector<64x1xf32>
    %22 = vector.broadcast %21 : vector<64x1xf32> to vector<64x128xf32>
    %23 = arith.addf %20, %22 : vector<64x128xf32>
    %c0_22 = arith.constant 0 : index
    %c0_23 = arith.constant 0 : index
    %c0_24 = arith.constant 0 : index
    %24 = vector.load %arg5[%c0_22, %c0_23, %c0_24] : memref<1x64x128xf32, #tpu.memory_space<vmem>>, vector<1x64x128xf32>
    %25 = vector.shape_cast %24 : vector<1x64x128xf32> to vector<64x128xf32>
    %26 = vector.shape_cast %23 : vector<64x128xf32> to vector<1x64x128xf32>
    tpu.vector_store %arg5[%c0_22, %c0_23, %c0_24], %26 {strides = array<i32>} : memref<1x64x128xf32, #tpu.memory_space<vmem>>, vector<1x64x128xf32>,
    return
  }
  func.func @transform_0(%arg0: i32, %arg1: i32) -> (i32, i32, i32) {
    %c0_i32 = arith.constant 0 : i32
    %c0_i32_0 = arith.constant 0 : i32
    %c0_i32_1 = arith.constant 0 : i32
    return %arg0, %c0_i32, %c0_i32_0 : i32, i32, i32
  }
  func.func @transform_1(%arg0: i32, %arg1: i32) -> (i32, i32) {
    %c0_i32 = arith.constant 0 : i32
    %c0_i32_0 = arith.constant 0 : i32
    %c0_i32_1 = arith.constant 0 : i32
    return %c0_i32, %c0_i32_0 : i32, i32
  }
  func.func @transform_2(%arg0: i32, %arg1: i32) -> (i32, i32) {
    %c0_i32 = arith.constant 0 : i32
    %c0_i32_0 = arith.constant 0 : i32
    %c0_i32_1 = arith.constant 0 : i32
    return %c0_i32, %c0_i32_0 : i32, i32
  }
  func.func @transform_3(%arg0: i32, %arg1: i32) -> (i32, i32, i32) {
    %c0_i32 = arith.constant 0 : i32
    %c0_i32_0 = arith.constant 0 : i32
    return %arg0, %c0_i32, %arg1 : i32, i32, i32
  }
}

module attributes {stable_mosaic.version = 11 : i64} {
  func.func @_conv_gemm_kernel(%arg0: i32, %arg1: i32, %arg2: memref<1x64x240xbf16, #tpu.memory_space<vmem>>, %arg3: memref<64x576xbf16, #tpu.memory_space<vmem>>, %arg4: memref<64x1xf32, #tpu.memory_space<vmem>>, %arg5: memref<1x64x128xf32, #tpu.memory_space<vmem>>) attributes {dimension_semantics = [#tpu.dimension_semantics<parallel>, #tpu.dimension_semantics<parallel>], iteration_bounds = array<i64: 2, 1>, scalar_prefetch = 0 : i64, scratch_operands = 0 : i64, tpu.core_type = #tpu.core_type<tc>, window_params = [{transform_indices = @transform_0, window_bounds = array<i64: 1, 64, 240>}, {pipeline_mode = #tpu.pipeline_mode<synchronous>, transform_indices = @transform_1, window_bounds = array<i64: 64, 576>}, {pipeline_mode = #tpu.pipeline_mode<synchronous>, transform_indices = @transform_2, window_bounds = array<i64: 64, 1>}, {transform_indices = @transform_3, window_bounds = array<i64: 1, 64, 128>}]} {
    %c0 = arith.constant 0 : index
    %c0_0 = arith.constant 0 : index
    %c0_1 = arith.constant 0 : index
    %0 = vector.load %arg2[%c0, %c0_0, %c0_1] : memref<1x64x240xbf16, #tpu.memory_space<vmem>>, vector<1x64x128xbf16>
    %1 = vector.shape_cast %0 : vector<1x64x128xbf16> to vector<64x128xbf16>
    %c0_2 = arith.constant 0 : index
    %c0_3 = arith.constant 0 : index
    %c4 = arith.constant 4 : index
    %2 = vector.load %arg2[%c0_2, %c0_3, %c4] : memref<1x64x240xbf16, #tpu.memory_space<vmem>>, vector<1x64x128xbf16>
    %3 = vector.shape_cast %2 : vector<1x64x128xbf16> to vector<64x128xbf16>
    %c0_4 = arith.constant 0 : index
    %c0_5 = arith.constant 0 : index
    %c8 = arith.constant 8 : index
    %4 = vector.load %arg2[%c0_4, %c0_5, %c8] : memref<1x64x240xbf16, #tpu.memory_space<vmem>>, vector<1x64x128xbf16>
    %5 = vector.shape_cast %4 : vector<1x64x128xbf16> to vector<64x128xbf16>
    %c0_6 = arith.constant 0 : index
    %c0_7 = arith.constant 0 : index
    %c48 = arith.constant 48 : index
    %6 = vector.load %arg2[%c0_6, %c0_7, %c48] : memref<1x64x240xbf16, #tpu.memory_space<vmem>>, vector<1x64x128xbf16>
    %7 = vector.shape_cast %6 : vector<1x64x128xbf16> to vector<64x128xbf16>
    %c0_8 = arith.constant 0 : index
    %c0_9 = arith.constant 0 : index
    %c52 = arith.constant 52 : index
    %8 = vector.load %arg2[%c0_8, %c0_9, %c52] : memref<1x64x240xbf16, #tpu.memory_space<vmem>>, vector<1x64x128xbf16>
    %9 = vector.shape_cast %8 : vector<1x64x128xbf16> to vector<64x128xbf16>
    %c0_10 = arith.constant 0 : index
    %c0_11 = arith.constant 0 : index
    %c56 = arith.constant 56 : index
    %10 = vector.load %arg2[%c0_10, %c0_11, %c56] : memref<1x64x240xbf16, #tpu.memory_space<vmem>>, vector<1x64x128xbf16>
    %11 = vector.shape_cast %10 : vector<1x64x128xbf16> to vector<64x128xbf16>
    %c0_12 = arith.constant 0 : index
    %c0_13 = arith.constant 0 : index
    %c96 = arith.constant 96 : index
    %12 = vector.load %arg2[%c0_12, %c0_13, %c96] : memref<1x64x240xbf16, #tpu.memory_space<vmem>>, vector<1x64x128xbf16>
    %13 = vector.shape_cast %12 : vector<1x64x128xbf16> to vector<64x128xbf16>
    %c0_14 = arith.constant 0 : index
    %c0_15 = arith.constant 0 : index
    %c100 = arith.constant 100 : index
    %14 = vector.load %arg2[%c0_14, %c0_15, %c100] : memref<1x64x240xbf16, #tpu.memory_space<vmem>>, vector<1x64x128xbf16>
    %15 = vector.shape_cast %14 : vector<1x64x128xbf16> to vector<64x128xbf16>
    %c0_16 = arith.constant 0 : index
    %c0_17 = arith.constant 0 : index
    %c104 = arith.constant 104 : index
    %16 = vector.load %arg2[%c0_16, %c0_17, %c104] : memref<1x64x240xbf16, #tpu.memory_space<vmem>>, vector<1x64x128xbf16>
    %17 = vector.shape_cast %16 : vector<1x64x128xbf16> to vector<64x128xbf16>
    %18 = tpu.concatenate %1, %3, %5, %7, %9, %11, %13, %15, %17 in 0 : vector<64x128xbf16>, vector<64x128xbf16>, vector<64x128xbf16>, vector<64x128xbf16>, vector<64x128xbf16>, vector<64x128xbf16>, vector<64x128xbf16>, vector<64x128xbf16>, vector<64x128xbf16> -> vector<576x128xbf16>
    %c0_18 = arith.constant 0 : index
    %c0_19 = arith.constant 0 : index
    %19 = vector.load %arg3[%c0_18, %c0_19] : memref<64x576xbf16, #tpu.memory_space<vmem>>, vector<64x576xbf16>
    %cst = arith.constant dense<0.000000e+00> : vector<64x128xf32>
    %20 = tpu.matmul %19, %18, %cst {dimension_numbers = #tpu.dot_dimension_numbers<[1], [0], [0], [1], [0, 0, 1, 1], [], []>} : vector<64x576xbf16>, vector<576x128xbf16>, vector<64x128xf32> -> vector<64x128xf32>
    %c0_20 = arith.constant 0 : index
    %c0_21 = arith.constant 0 : index
    %21 = vector.load %arg4[%c0_20, %c0_21] : memref<64x1xf32, #tpu.memory_space<vmem>>, vector<64x1xf32>
    %22 = vector.broadcast %21 : vector<64x1xf32> to vector<64x128xf32>
    %23 = arith.addf %20, %22 : vector<64x128xf32>
    %c0_22 = arith.constant 0 : index
    %c0_23 = arith.constant 0 : index
    %c0_24 = arith.constant 0 : index
    %24 = vector.load %arg5[%c0_22, %c0_23, %c0_24] : memref<1x64x128xf32, #tpu.memory_space<vmem>>, vector<1x64x128xf32>
    %25 = vector.shape_cast %24 : vector<1x64x128xf32> to vector<64x128xf32>
    %26 = vector.shape_cast %23 : vector<64x128xf32> to vector<1x64x128xf32>
    tpu.vector_store %arg5[%c0_22, %c0_23, %c0_24], %26 {strides = array<i32>} : memref<1x64x128xf32, #tpu.memory_space<vmem>>, vector<1x64x128xf32>,
    return
  }
  func.func @transform_0(%arg0: i32, %arg1: i32) -> (i32, i32, i32) {
    %c0_i32 = arith.constant 0 : i32
    %c0_i32_0 = arith.constant 0 : i32
    %c0_i32_1 = arith.constant 0 : i32
    return %arg0, %c0_i32, %c0_i32_0 : i32, i32, i32
  }
  func.func @transform_1(%arg0: i32, %arg1: i32) -> (i32, i32) {
    %c0_i32 = arith.constant 0 : i32
    %c0_i32_0 = arith.constant 0 : i32
    %c0_i32_1 = arith.constant 0 : i32
    return %c0_i32, %c0_i32_0 : i32, i32
  }
  func.func @transform_2(%arg0: i32, %arg1: i32) -> (i32, i32) {
    %c0_i32 = arith.constant 0 : i32
    %c0_i32_0 = arith.constant 0 : i32
    %c0_i32_1 = arith.constant 0 : i32
    return %c0_i32, %c0_i32_0 : i32, i32
  }
  func.func @transform_3(%arg0: i32, %arg1: i32) -> (i32, i32, i32) {
    %c0_i32 = arith.constant 0 : i32
    %c0_i32_0 = arith.constant 0 : i32
    return %arg0, %c0_i32, %arg1 : i32, i32, i32
  }
}

module attributes {stable_mosaic.version = 11 : i64} {
  func.func @_conv_gemm_kernel(%arg0: i32, %arg1: i32, %arg2: memref<1x64x128xbf16, #tpu.memory_space<vmem>>, %arg3: memref<128x64xbf16, #tpu.memory_space<vmem>>, %arg4: memref<128x1xf32, #tpu.memory_space<vmem>>, %arg5: memref<1x128x128xf32, #tpu.memory_space<vmem>>) attributes {dimension_semantics = [#tpu.dimension_semantics<parallel>, #tpu.dimension_semantics<parallel>], iteration_bounds = array<i64: 2, 1>, scalar_prefetch = 0 : i64, scratch_operands = 0 : i64, tpu.core_type = #tpu.core_type<tc>, window_params = [{transform_indices = @transform_0, window_bounds = array<i64: 1, 64, 128>}, {pipeline_mode = #tpu.pipeline_mode<synchronous>, transform_indices = @transform_1, window_bounds = array<i64: 128, 64>}, {pipeline_mode = #tpu.pipeline_mode<synchronous>, transform_indices = @transform_2, window_bounds = array<i64: 128, 1>}, {transform_indices = @transform_3, window_bounds = array<i64: 1, 128, 128>}]} {
    %c0 = arith.constant 0 : index
    %c0_0 = arith.constant 0 : index
    %c0_1 = arith.constant 0 : index
    %0 = vector.load %arg2[%c0, %c0_0, %c0_1] : memref<1x64x128xbf16, #tpu.memory_space<vmem>>, vector<1x64x128xbf16>
    %1 = vector.shape_cast %0 : vector<1x64x128xbf16> to vector<64x128xbf16>
    %c0_2 = arith.constant 0 : index
    %c0_3 = arith.constant 0 : index
    %2 = vector.load %arg3[%c0_2, %c0_3] : memref<128x64xbf16, #tpu.memory_space<vmem>>, vector<128x64xbf16>
    %cst = arith.constant dense<0.000000e+00> : vector<128x128xf32>
    %3 = tpu.matmul %2, %1, %cst {dimension_numbers = #tpu.dot_dimension_numbers<[1], [0], [0], [1], [0, 0, 1, 1], [], []>} : vector<128x64xbf16>, vector<64x128xbf16>, vector<128x128xf32> -> vector<128x128xf32>
    %c0_4 = arith.constant 0 : index
    %c0_5 = arith.constant 0 : index
    %4 = vector.load %arg4[%c0_4, %c0_5] : memref<128x1xf32, #tpu.memory_space<vmem>>, vector<128x1xf32>
    %5 = vector.broadcast %4 : vector<128x1xf32> to vector<128x128xf32>
    %6 = arith.addf %3, %5 : vector<128x128xf32>
    %c0_6 = arith.constant 0 : index
    %c0_7 = arith.constant 0 : index
    %c0_8 = arith.constant 0 : index
    %7 = vector.load %arg5[%c0_6, %c0_7, %c0_8] : memref<1x128x128xf32, #tpu.memory_space<vmem>>, vector<1x128x128xf32>
    %8 = vector.shape_cast %7 : vector<1x128x128xf32> to vector<128x128xf32>
    %9 = vector.shape_cast %6 : vector<128x128xf32> to vector<1x128x128xf32>
    tpu.vector_store %arg5[%c0_6, %c0_7, %c0_8], %9 {strides = array<i32>} : memref<1x128x128xf32, #tpu.memory_space<vmem>>, vector<1x128x128xf32>,
    return
  }
  func.func @transform_0(%arg0: i32, %arg1: i32) -> (i32, i32, i32) {
    %c0_i32 = arith.constant 0 : i32
    %c0_i32_0 = arith.constant 0 : i32
    %c0_i32_1 = arith.constant 0 : i32
    return %arg0, %c0_i32, %c0_i32_0 : i32, i32, i32
  }
  func.func @transform_1(%arg0: i32, %arg1: i32) -> (i32, i32) {
    %c0_i32 = arith.constant 0 : i32
    %c0_i32_0 = arith.constant 0 : i32
    %c0_i32_1 = arith.constant 0 : i32
    return %c0_i32, %c0_i32_0 : i32, i32
  }
  func.func @transform_2(%arg0: i32, %arg1: i32) -> (i32, i32) {
    %c0_i32 = arith.constant 0 : i32
    %c0_i32_0 = arith.constant 0 : i32
    %c0_i32_1 = arith.constant 0 : i32
    return %c0_i32, %c0_i32_0 : i32, i32
  }
  func.func @transform_3(%arg0: i32, %arg1: i32) -> (i32, i32, i32) {
    %c0_i32 = arith.constant 0 : i32
    %c0_i32_0 = arith.constant 0 : i32
    return %arg0, %c0_i32, %arg1 : i32, i32, i32
  }
}

module attributes {stable_mosaic.version = 11 : i64} {
  func.func @_conv_gemm_kernel(%arg0: i32, %arg1: i32, %arg2: memref<1x64x128xbf16, #tpu.memory_space<vmem>>, %arg3: memref<32x64xbf16, #tpu.memory_space<vmem>>, %arg4: memref<32x1xf32, #tpu.memory_space<vmem>>, %arg5: memref<1x32x128xf32, #tpu.memory_space<vmem>>) attributes {dimension_semantics = [#tpu.dimension_semantics<parallel>, #tpu.dimension_semantics<parallel>], iteration_bounds = array<i64: 2, 1>, scalar_prefetch = 0 : i64, scratch_operands = 0 : i64, tpu.core_type = #tpu.core_type<tc>, window_params = [{transform_indices = @transform_0, window_bounds = array<i64: 1, 64, 128>}, {pipeline_mode = #tpu.pipeline_mode<synchronous>, transform_indices = @transform_1, window_bounds = array<i64: 32, 64>}, {pipeline_mode = #tpu.pipeline_mode<synchronous>, transform_indices = @transform_2, window_bounds = array<i64: 32, 1>}, {transform_indices = @transform_3, window_bounds = array<i64: 1, 32, 128>}]} {
    %c0 = arith.constant 0 : index
    %c0_0 = arith.constant 0 : index
    %c0_1 = arith.constant 0 : index
    %0 = vector.load %arg2[%c0, %c0_0, %c0_1] : memref<1x64x128xbf16, #tpu.memory_space<vmem>>, vector<1x64x128xbf16>
    %1 = vector.shape_cast %0 : vector<1x64x128xbf16> to vector<64x128xbf16>
    %c0_2 = arith.constant 0 : index
    %c0_3 = arith.constant 0 : index
    %2 = vector.load %arg3[%c0_2, %c0_3] : memref<32x64xbf16, #tpu.memory_space<vmem>>, vector<32x64xbf16>
    %cst = arith.constant dense<0.000000e+00> : vector<32x128xf32>
    %3 = tpu.matmul %2, %1, %cst {dimension_numbers = #tpu.dot_dimension_numbers<[1], [0], [0], [1], [0, 0, 1, 1], [], []>} : vector<32x64xbf16>, vector<64x128xbf16>, vector<32x128xf32> -> vector<32x128xf32>
    %c0_4 = arith.constant 0 : index
    %c0_5 = arith.constant 0 : index
    %4 = vector.load %arg4[%c0_4, %c0_5] : memref<32x1xf32, #tpu.memory_space<vmem>>, vector<32x1xf32>
    %5 = vector.broadcast %4 : vector<32x1xf32> to vector<32x128xf32>
    %6 = arith.addf %3, %5 : vector<32x128xf32>
    %c0_6 = arith.constant 0 : index
    %c0_7 = arith.constant 0 : index
    %c0_8 = arith.constant 0 : index
    %7 = vector.load %arg5[%c0_6, %c0_7, %c0_8] : memref<1x32x128xf32, #tpu.memory_space<vmem>>, vector<1x32x128xf32>
    %8 = vector.shape_cast %7 : vector<1x32x128xf32> to vector<32x128xf32>
    %9 = vector.shape_cast %6 : vector<32x128xf32> to vector<1x32x128xf32>
    tpu.vector_store %arg5[%c0_6, %c0_7, %c0_8], %9 {strides = array<i32>} : memref<1x32x128xf32, #tpu.memory_space<vmem>>, vector<1x32x128xf32>,
    return
  }
  func.func @transform_0(%arg0: i32, %arg1: i32) -> (i32, i32, i32) {
    %c0_i32 = arith.constant 0 : i32
    %c0_i32_0 = arith.constant 0 : i32
    %c0_i32_1 = arith.constant 0 : i32
    return %arg0, %c0_i32, %c0_i32_0 : i32, i32, i32
  }
  func.func @transform_1(%arg0: i32, %arg1: i32) -> (i32, i32) {
    %c0_i32 = arith.constant 0 : i32
    %c0_i32_0 = arith.constant 0 : i32
    %c0_i32_1 = arith.constant 0 : i32
    return %c0_i32, %c0_i32_0 : i32, i32
  }
  func.func @transform_2(%arg0: i32, %arg1: i32) -> (i32, i32) {
    %c0_i32 = arith.constant 0 : i32
    %c0_i32_0 = arith.constant 0 : i32
    %c0_i32_1 = arith.constant 0 : i32
    return %c0_i32, %c0_i32_0 : i32, i32
  }
  func.func @transform_3(%arg0: i32, %arg1: i32) -> (i32, i32, i32) {
    %c0_i32 = arith.constant 0 : i32
    %c0_i32_0 = arith.constant 0 : i32
    return %arg0, %c0_i32, %arg1 : i32, i32, i32
  }
}

module attributes {stable_mosaic.version = 11 : i64} {
  func.func @_conv_gemm_kernel(%arg0: i32, %arg1: i32, %arg2: memref<1x64x150xbf16, #tpu.memory_space<vmem>>, %arg3: memref<32x576xbf16, #tpu.memory_space<vmem>>, %arg4: memref<32x1xf32, #tpu.memory_space<vmem>>, %arg5: memref<1x32x128xf32, #tpu.memory_space<vmem>>) attributes {dimension_semantics = [#tpu.dimension_semantics<parallel>, #tpu.dimension_semantics<parallel>], iteration_bounds = array<i64: 2, 1>, scalar_prefetch = 0 : i64, scratch_operands = 0 : i64, tpu.core_type = #tpu.core_type<tc>, window_params = [{transform_indices = @transform_0, window_bounds = array<i64: 1, 64, 150>}, {pipeline_mode = #tpu.pipeline_mode<synchronous>, transform_indices = @transform_1, window_bounds = array<i64: 32, 576>}, {pipeline_mode = #tpu.pipeline_mode<synchronous>, transform_indices = @transform_2, window_bounds = array<i64: 32, 1>}, {transform_indices = @transform_3, window_bounds = array<i64: 1, 32, 128>}]} {
    %c0 = arith.constant 0 : index
    %c0_0 = arith.constant 0 : index
    %c0_1 = arith.constant 0 : index
    %0 = vector.load %arg2[%c0, %c0_0, %c0_1] : memref<1x64x150xbf16, #tpu.memory_space<vmem>>, vector<1x64x128xbf16>
    %1 = vector.shape_cast %0 : vector<1x64x128xbf16> to vector<64x128xbf16>
    %c0_2 = arith.constant 0 : index
    %c0_3 = arith.constant 0 : index
    %c1 = arith.constant 1 : index
    %2 = vector.load %arg2[%c0_2, %c0_3, %c1] : memref<1x64x150xbf16, #tpu.memory_space<vmem>>, vector<1x64x128xbf16>
    %3 = vector.shape_cast %2 : vector<1x64x128xbf16> to vector<64x128xbf16>
    %c0_4 = arith.constant 0 : index
    %c0_5 = arith.constant 0 : index
    %c2 = arith.constant 2 : index
    %4 = vector.load %arg2[%c0_4, %c0_5, %c2] : memref<1x64x150xbf16, #tpu.memory_space<vmem>>, vector<1x64x128xbf16>
    %5 = vector.shape_cast %4 : vector<1x64x128xbf16> to vector<64x128xbf16>
    %c0_6 = arith.constant 0 : index
    %c0_7 = arith.constant 0 : index
    %c10 = arith.constant 10 : index
    %6 = vector.load %arg2[%c0_6, %c0_7, %c10] : memref<1x64x150xbf16, #tpu.memory_space<vmem>>, vector<1x64x128xbf16>
    %7 = vector.shape_cast %6 : vector<1x64x128xbf16> to vector<64x128xbf16>
    %c0_8 = arith.constant 0 : index
    %c0_9 = arith.constant 0 : index
    %c11 = arith.constant 11 : index
    %8 = vector.load %arg2[%c0_8, %c0_9, %c11] : memref<1x64x150xbf16, #tpu.memory_space<vmem>>, vector<1x64x128xbf16>
    %9 = vector.shape_cast %8 : vector<1x64x128xbf16> to vector<64x128xbf16>
    %c0_10 = arith.constant 0 : index
    %c0_11 = arith.constant 0 : index
    %c12 = arith.constant 12 : index
    %10 = vector.load %arg2[%c0_10, %c0_11, %c12] : memref<1x64x150xbf16, #tpu.memory_space<vmem>>, vector<1x64x128xbf16>
    %11 = vector.shape_cast %10 : vector<1x64x128xbf16> to vector<64x128xbf16>
    %c0_12 = arith.constant 0 : index
    %c0_13 = arith.constant 0 : index
    %c20 = arith.constant 20 : index
    %12 = vector.load %arg2[%c0_12, %c0_13, %c20] : memref<1x64x150xbf16, #tpu.memory_space<vmem>>, vector<1x64x128xbf16>
    %13 = vector.shape_cast %12 : vector<1x64x128xbf16> to vector<64x128xbf16>
    %c0_14 = arith.constant 0 : index
    %c0_15 = arith.constant 0 : index
    %c21 = arith.constant 21 : index
    %14 = vector.load %arg2[%c0_14, %c0_15, %c21] : memref<1x64x150xbf16, #tpu.memory_space<vmem>>, vector<1x64x128xbf16>
    %15 = vector.shape_cast %14 : vector<1x64x128xbf16> to vector<64x128xbf16>
    %c0_16 = arith.constant 0 : index
    %c0_17 = arith.constant 0 : index
    %c22 = arith.constant 22 : index
    %16 = vector.load %arg2[%c0_16, %c0_17, %c22] : memref<1x64x150xbf16, #tpu.memory_space<vmem>>, vector<1x64x128xbf16>
    %17 = vector.shape_cast %16 : vector<1x64x128xbf16> to vector<64x128xbf16>
    %18 = tpu.concatenate %1, %3, %5, %7, %9, %11, %13, %15, %17 in 0 : vector<64x128xbf16>, vector<64x128xbf16>, vector<64x128xbf16>, vector<64x128xbf16>, vector<64x128xbf16>, vector<64x128xbf16>, vector<64x128xbf16>, vector<64x128xbf16>, vector<64x128xbf16> -> vector<576x128xbf16>
    %c0_18 = arith.constant 0 : index
    %c0_19 = arith.constant 0 : index
    %19 = vector.load %arg3[%c0_18, %c0_19] : memref<32x576xbf16, #tpu.memory_space<vmem>>, vector<32x576xbf16>
    %cst = arith.constant dense<0.000000e+00> : vector<32x128xf32>
    %20 = tpu.matmul %19, %18, %cst {dimension_numbers = #tpu.dot_dimension_numbers<[1], [0], [0], [1], [0, 0, 1, 1], [], []>} : vector<32x576xbf16>, vector<576x128xbf16>, vector<32x128xf32> -> vector<32x128xf32>
    %c0_20 = arith.constant 0 : index
    %c0_21 = arith.constant 0 : index
    %21 = vector.load %arg4[%c0_20, %c0_21] : memref<32x1xf32, #tpu.memory_space<vmem>>, vector<32x1xf32>
    %22 = vector.broadcast %21 : vector<32x1xf32> to vector<32x128xf32>
    %23 = arith.addf %20, %22 : vector<32x128xf32>
    %c0_22 = arith.constant 0 : index
    %c0_23 = arith.constant 0 : index
    %c0_24 = arith.constant 0 : index
    %24 = vector.load %arg5[%c0_22, %c0_23, %c0_24] : memref<1x32x128xf32, #tpu.memory_space<vmem>>, vector<1x32x128xf32>
    %25 = vector.shape_cast %24 : vector<1x32x128xf32> to vector<32x128xf32>
    %26 = vector.shape_cast %23 : vector<32x128xf32> to vector<1x32x128xf32>
    tpu.vector_store %arg5[%c0_22, %c0_23, %c0_24], %26 {strides = array<i32>} : memref<1x32x128xf32, #tpu.memory_space<vmem>>, vector<1x32x128xf32>,
    return
  }
  func.func @transform_0(%arg0: i32, %arg1: i32) -> (i32, i32, i32) {
    %c0_i32 = arith.constant 0 : i32
    %c0_i32_0 = arith.constant 0 : i32
    %c0_i32_1 = arith.constant 0 : i32
    return %arg0, %c0_i32, %c0_i32_0 : i32, i32, i32
  }
  func.func @transform_1(%arg0: i32, %arg1: i32) -> (i32, i32) {
    %c0_i32 = arith.constant 0 : i32
    %c0_i32_0 = arith.constant 0 : i32
    %c0_i32_1 = arith.constant 0 : i32
    return %c0_i32, %c0_i32_0 : i32, i32
  }
  func.func @transform_2(%arg0: i32, %arg1: i32) -> (i32, i32) {
    %c0_i32 = arith.constant 0 : i32
    %c0_i32_0 = arith.constant 0 : i32
    %c0_i32_1 = arith.constant 0 : i32
    return %c0_i32, %c0_i32_0 : i32, i32
  }
  func.func @transform_3(%arg0: i32, %arg1: i32) -> (i32, i32, i32) {
    %c0_i32 = arith.constant 0 : i32
    %c0_i32_0 = arith.constant 0 : i32
    return %arg0, %c0_i32, %arg1 : i32, i32, i32
  }
}

module attributes {stable_mosaic.version = 11 : i64} {
  func.func @_conv_gemm_kernel(%arg0: i32, %arg1: i32, %arg2: memref<1x32x256xbf16, #tpu.memory_space<vmem>>, %arg3: memref<16x32xbf16, #tpu.memory_space<vmem>>, %arg4: memref<16x1xf32, #tpu.memory_space<vmem>>, %arg5: memref<1x16x256xf32, #tpu.memory_space<vmem>>) attributes {dimension_semantics = [#tpu.dimension_semantics<parallel>, #tpu.dimension_semantics<parallel>], iteration_bounds = array<i64: 2, 1>, scalar_prefetch = 0 : i64, scratch_operands = 0 : i64, tpu.core_type = #tpu.core_type<tc>, window_params = [{transform_indices = @transform_0, window_bounds = array<i64: 1, 32, 256>}, {pipeline_mode = #tpu.pipeline_mode<synchronous>, transform_indices = @transform_1, window_bounds = array<i64: 16, 32>}, {pipeline_mode = #tpu.pipeline_mode<synchronous>, transform_indices = @transform_2, window_bounds = array<i64: 16, 1>}, {transform_indices = @transform_3, window_bounds = array<i64: 1, 16, 256>}]} {
    %c0 = arith.constant 0 : index
    %c0_0 = arith.constant 0 : index
    %c0_1 = arith.constant 0 : index
    %0 = vector.load %arg2[%c0, %c0_0, %c0_1] : memref<1x32x256xbf16, #tpu.memory_space<vmem>>, vector<1x32x256xbf16>
    %1 = vector.shape_cast %0 : vector<1x32x256xbf16> to vector<32x256xbf16>
    %c0_2 = arith.constant 0 : index
    %c0_3 = arith.constant 0 : index
    %2 = vector.load %arg3[%c0_2, %c0_3] : memref<16x32xbf16, #tpu.memory_space<vmem>>, vector<16x32xbf16>
    %cst = arith.constant dense<0.000000e+00> : vector<16x256xf32>
    %3 = tpu.matmul %2, %1, %cst {dimension_numbers = #tpu.dot_dimension_numbers<[1], [0], [0], [1], [0, 0, 1, 1], [], []>} : vector<16x32xbf16>, vector<32x256xbf16>, vector<16x256xf32> -> vector<16x256xf32>
    %c0_4 = arith.constant 0 : index
    %c0_5 = arith.constant 0 : index
    %4 = vector.load %arg4[%c0_4, %c0_5] : memref<16x1xf32, #tpu.memory_space<vmem>>, vector<16x1xf32>
    %5 = vector.broadcast %4 : vector<16x1xf32> to vector<16x256xf32>
    %6 = arith.addf %3, %5 : vector<16x256xf32>
    %c0_6 = arith.constant 0 : index
    %c0_7 = arith.constant 0 : index
    %c0_8 = arith.constant 0 : index
    %7 = vector.load %arg5[%c0_6, %c0_7, %c0_8] : memref<1x16x256xf32, #tpu.memory_space<vmem>>, vector<1x16x256xf32>
    %8 = vector.shape_cast %7 : vector<1x16x256xf32> to vector<16x256xf32>
    %9 = vector.shape_cast %6 : vector<16x256xf32> to vector<1x16x256xf32>
    tpu.vector_store %arg5[%c0_6, %c0_7, %c0_8], %9 {strides = array<i32>} : memref<1x16x256xf32, #tpu.memory_space<vmem>>, vector<1x16x256xf32>,
    return
  }
  func.func @transform_0(%arg0: i32, %arg1: i32) -> (i32, i32, i32) {
    %c0_i32 = arith.constant 0 : i32
    %c0_i32_0 = arith.constant 0 : i32
    %c0_i32_1 = arith.constant 0 : i32
    return %arg0, %c0_i32, %c0_i32_0 : i32, i32, i32
  }
  func.func @transform_1(%arg0: i32, %arg1: i32) -> (i32, i32) {
    %c0_i32 = arith.constant 0 : i32
    %c0_i32_0 = arith.constant 0 : i32
    %c0_i32_1 = arith.constant 0 : i32
    return %c0_i32, %c0_i32_0 : i32, i32
  }
  func.func @transform_2(%arg0: i32, %arg1: i32) -> (i32, i32) {
    %c0_i32 = arith.constant 0 : i32
    %c0_i32_0 = arith.constant 0 : i32
    %c0_i32_1 = arith.constant 0 : i32
    return %c0_i32, %c0_i32_0 : i32, i32
  }
  func.func @transform_3(%arg0: i32, %arg1: i32) -> (i32, i32, i32) {
    %c0_i32 = arith.constant 0 : i32
    %c0_i32_0 = arith.constant 0 : i32
    return %arg0, %c0_i32, %arg1 : i32, i32, i32
  }
}

module attributes {stable_mosaic.version = 11 : i64} {
  func.func @_conv_gemm_kernel(%arg0: i32, %arg1: i32, %arg2: memref<1x32x432xbf16, #tpu.memory_space<vmem>>, %arg3: memref<16x288xbf16, #tpu.memory_space<vmem>>, %arg4: memref<16x1xf32, #tpu.memory_space<vmem>>, %arg5: memref<1x16x384xf32, #tpu.memory_space<vmem>>) attributes {dimension_semantics = [#tpu.dimension_semantics<parallel>, #tpu.dimension_semantics<parallel>], iteration_bounds = array<i64: 2, 1>, scalar_prefetch = 0 : i64, scratch_operands = 0 : i64, tpu.core_type = #tpu.core_type<tc>, window_params = [{transform_indices = @transform_0, window_bounds = array<i64: 1, 32, 432>}, {pipeline_mode = #tpu.pipeline_mode<synchronous>, transform_indices = @transform_1, window_bounds = array<i64: 16, 288>}, {pipeline_mode = #tpu.pipeline_mode<synchronous>, transform_indices = @transform_2, window_bounds = array<i64: 16, 1>}, {transform_indices = @transform_3, window_bounds = array<i64: 1, 16, 384>}]} {
    %c0 = arith.constant 0 : index
    %c0_0 = arith.constant 0 : index
    %c0_1 = arith.constant 0 : index
    %0 = vector.load %arg2[%c0, %c0_0, %c0_1] : memref<1x32x432xbf16, #tpu.memory_space<vmem>>, vector<1x32x384xbf16>
    %1 = vector.shape_cast %0 : vector<1x32x384xbf16> to vector<32x384xbf16>
    %c0_2 = arith.constant 0 : index
    %c0_3 = arith.constant 0 : index
    %c1 = arith.constant 1 : index
    %2 = vector.load %arg2[%c0_2, %c0_3, %c1] : memref<1x32x432xbf16, #tpu.memory_space<vmem>>, vector<1x32x384xbf16>
    %3 = vector.shape_cast %2 : vector<1x32x384xbf16> to vector<32x384xbf16>
    %c0_4 = arith.constant 0 : index
    %c0_5 = arith.constant 0 : index
    %c2 = arith.constant 2 : index
    %4 = vector.load %arg2[%c0_4, %c0_5, %c2] : memref<1x32x432xbf16, #tpu.memory_space<vmem>>, vector<1x32x384xbf16>
    %5 = vector.shape_cast %4 : vector<1x32x384xbf16> to vector<32x384xbf16>
    %c0_6 = arith.constant 0 : index
    %c0_7 = arith.constant 0 : index
    %c18 = arith.constant 18 : index
    %6 = vector.load %arg2[%c0_6, %c0_7, %c18] : memref<1x32x432xbf16, #tpu.memory_space<vmem>>, vector<1x32x384xbf16>
    %7 = vector.shape_cast %6 : vector<1x32x384xbf16> to vector<32x384xbf16>
    %c0_8 = arith.constant 0 : index
    %c0_9 = arith.constant 0 : index
    %c19 = arith.constant 19 : index
    %8 = vector.load %arg2[%c0_8, %c0_9, %c19] : memref<1x32x432xbf16, #tpu.memory_space<vmem>>, vector<1x32x384xbf16>
    %9 = vector.shape_cast %8 : vector<1x32x384xbf16> to vector<32x384xbf16>
    %c0_10 = arith.constant 0 : index
    %c0_11 = arith.constant 0 : index
    %c20 = arith.constant 20 : index
    %10 = vector.load %arg2[%c0_10, %c0_11, %c20] : memref<1x32x432xbf16, #tpu.memory_space<vmem>>, vector<1x32x384xbf16>
    %11 = vector.shape_cast %10 : vector<1x32x384xbf16> to vector<32x384xbf16>
    %c0_12 = arith.constant 0 : index
    %c0_13 = arith.constant 0 : index
    %c36 = arith.constant 36 : index
    %12 = vector.load %arg2[%c0_12, %c0_13, %c36] : memref<1x32x432xbf16, #tpu.memory_space<vmem>>, vector<1x32x384xbf16>
    %13 = vector.shape_cast %12 : vector<1x32x384xbf16> to vector<32x384xbf16>
    %c0_14 = arith.constant 0 : index
    %c0_15 = arith.constant 0 : index
    %c37 = arith.constant 37 : index
    %14 = vector.load %arg2[%c0_14, %c0_15, %c37] : memref<1x32x432xbf16, #tpu.memory_space<vmem>>, vector<1x32x384xbf16>
    %15 = vector.shape_cast %14 : vector<1x32x384xbf16> to vector<32x384xbf16>
    %c0_16 = arith.constant 0 : index
    %c0_17 = arith.constant 0 : index
    %c38 = arith.constant 38 : index
    %16 = vector.load %arg2[%c0_16, %c0_17, %c38] : memref<1x32x432xbf16, #tpu.memory_space<vmem>>, vector<1x32x384xbf16>
    %17 = vector.shape_cast %16 : vector<1x32x384xbf16> to vector<32x384xbf16>
    %18 = tpu.concatenate %1, %3, %5, %7, %9, %11, %13, %15, %17 in 0 : vector<32x384xbf16>, vector<32x384xbf16>, vector<32x384xbf16>, vector<32x384xbf16>, vector<32x384xbf16>, vector<32x384xbf16>, vector<32x384xbf16>, vector<32x384xbf16>, vector<32x384xbf16> -> vector<288x384xbf16>
    %c0_18 = arith.constant 0 : index
    %c0_19 = arith.constant 0 : index
    %19 = vector.load %arg3[%c0_18, %c0_19] : memref<16x288xbf16, #tpu.memory_space<vmem>>, vector<16x288xbf16>
    %cst = arith.constant dense<0.000000e+00> : vector<16x384xf32>
    %20 = tpu.matmul %19, %18, %cst {dimension_numbers = #tpu.dot_dimension_numbers<[1], [0], [0], [1], [0, 0, 1, 1], [], []>} : vector<16x288xbf16>, vector<288x384xbf16>, vector<16x384xf32> -> vector<16x384xf32>
    %c0_20 = arith.constant 0 : index
    %c0_21 = arith.constant 0 : index
    %21 = vector.load %arg4[%c0_20, %c0_21] : memref<16x1xf32, #tpu.memory_space<vmem>>, vector<16x1xf32>
    %22 = vector.broadcast %21 : vector<16x1xf32> to vector<16x384xf32>
    %23 = arith.addf %20, %22 : vector<16x384xf32>
    %c0_22 = arith.constant 0 : index
    %c0_23 = arith.constant 0 : index
    %c0_24 = arith.constant 0 : index
    %24 = vector.load %arg5[%c0_22, %c0_23, %c0_24] : memref<1x16x384xf32, #tpu.memory_space<vmem>>, vector<1x16x384xf32>
    %25 = vector.shape_cast %24 : vector<1x16x384xf32> to vector<16x384xf32>
    %26 = vector.shape_cast %23 : vector<16x384xf32> to vector<1x16x384xf32>
    tpu.vector_store %arg5[%c0_22, %c0_23, %c0_24], %26 {strides = array<i32>} : memref<1x16x384xf32, #tpu.memory_space<vmem>>, vector<1x16x384xf32>,
    return
  }
  func.func @transform_0(%arg0: i32, %arg1: i32) -> (i32, i32, i32) {
    %c0_i32 = arith.constant 0 : i32
    %c0_i32_0 = arith.constant 0 : i32
    %c0_i32_1 = arith.constant 0 : i32
    return %arg0, %c0_i32, %c0_i32_0 : i32, i32, i32
  }
  func.func @transform_1(%arg0: i32, %arg1: i32) -> (i32, i32) {
    %c0_i32 = arith.constant 0 : i32
    %c0_i32_0 = arith.constant 0 : i32
    %c0_i32_1 = arith.constant 0 : i32
    return %c0_i32, %c0_i32_0 : i32, i32
  }
  func.func @transform_2(%arg0: i32, %arg1: i32) -> (i32, i32) {
    %c0_i32 = arith.constant 0 : i32
    %c0_i32_0 = arith.constant 0 : i32
    %c0_i32_1 = arith.constant 0 : i32
    return %c0_i32, %c0_i32_0 : i32, i32
  }
  func.func @transform_3(%arg0: i32, %arg1: i32) -> (i32, i32, i32) {
    %c0_i32 = arith.constant 0 : i32
    %c0_i32_0 = arith.constant 0 : i32
    return %arg0, %c0_i32, %arg1 : i32, i32, i32
  }
}

module attributes {stable_mosaic.version = 11 : i64} {
  func.func @_conv_gemm_kernel(%arg0: i32, %arg1: i32, %arg2: memref<1x16x256xbf16, #tpu.memory_space<vmem>>, %arg3: memref<3x16xbf16, #tpu.memory_space<vmem>>, %arg4: memref<3x1xf32, #tpu.memory_space<vmem>>, %arg5: memref<1x3x256xf32, #tpu.memory_space<vmem>>) attributes {dimension_semantics = [#tpu.dimension_semantics<parallel>, #tpu.dimension_semantics<parallel>], iteration_bounds = array<i64: 2, 1>, scalar_prefetch = 0 : i64, scratch_operands = 0 : i64, tpu.core_type = #tpu.core_type<tc>, window_params = [{transform_indices = @transform_0, window_bounds = array<i64: 1, 16, 256>}, {pipeline_mode = #tpu.pipeline_mode<synchronous>, transform_indices = @transform_1, window_bounds = array<i64: 3, 16>}, {pipeline_mode = #tpu.pipeline_mode<synchronous>, transform_indices = @transform_2, window_bounds = array<i64: 3, 1>}, {transform_indices = @transform_3, window_bounds = array<i64: 1, 3, 256>}]} {
    %c0 = arith.constant 0 : index
    %c0_0 = arith.constant 0 : index
    %c0_1 = arith.constant 0 : index
    %0 = vector.load %arg2[%c0, %c0_0, %c0_1] : memref<1x16x256xbf16, #tpu.memory_space<vmem>>, vector<1x16x256xbf16>
    %1 = vector.shape_cast %0 : vector<1x16x256xbf16> to vector<16x256xbf16>
    %c0_2 = arith.constant 0 : index
    %c0_3 = arith.constant 0 : index
    %2 = vector.load %arg3[%c0_2, %c0_3] : memref<3x16xbf16, #tpu.memory_space<vmem>>, vector<3x16xbf16>
    %cst = arith.constant dense<0.000000e+00> : vector<3x256xf32>
    %3 = tpu.matmul %2, %1, %cst {dimension_numbers = #tpu.dot_dimension_numbers<[1], [0], [0], [1], [0, 0, 1, 1], [], []>} : vector<3x16xbf16>, vector<16x256xbf16>, vector<3x256xf32> -> vector<3x256xf32>
    %c0_4 = arith.constant 0 : index
    %c0_5 = arith.constant 0 : index
    %4 = vector.load %arg4[%c0_4, %c0_5] : memref<3x1xf32, #tpu.memory_space<vmem>>, vector<3x1xf32>
    %5 = vector.broadcast %4 : vector<3x1xf32> to vector<3x256xf32>
    %6 = arith.addf %3, %5 : vector<3x256xf32>
    %c0_6 = arith.constant 0 : index
    %c0_7 = arith.constant 0 : index
    %c0_8 = arith.constant 0 : index
    %7 = vector.load %arg5[%c0_6, %c0_7, %c0_8] : memref<1x3x256xf32, #tpu.memory_space<vmem>>, vector<1x3x256xf32>
    %8 = vector.shape_cast %7 : vector<1x3x256xf32> to vector<3x256xf32>
    %9 = vector.shape_cast %6 : vector<3x256xf32> to vector<1x3x256xf32>
    tpu.vector_store %arg5[%c0_6, %c0_7, %c0_8], %9 {strides = array<i32>} : memref<1x3x256xf32, #tpu.memory_space<vmem>>, vector<1x3x256xf32>,
    return
  }
  func.func @transform_0(%arg0: i32, %arg1: i32) -> (i32, i32, i32) {
    %c0_i32 = arith.constant 0 : i32
    %c0_i32_0 = arith.constant 0 : i32
    %c0_i32_1 = arith.constant 0 : i32
    return %arg0, %c0_i32, %c0_i32_0 : i32, i32, i32
  }
  func.func @transform_1(%arg0: i32, %arg1: i32) -> (i32, i32) {
    %c0_i32 = arith.constant 0 : i32
    %c0_i32_0 = arith.constant 0 : i32
    %c0_i32_1 = arith.constant 0 : i32
    return %c0_i32, %c0_i32_0 : i32, i32
  }
  func.func @transform_2(%arg0: i32, %arg1: i32) -> (i32, i32) {
    %c0_i32 = arith.constant 0 : i32
    %c0_i32_0 = arith.constant 0 : i32
    %c0_i32_1 = arith.constant 0 : i32
    return %c0_i32, %c0_i32_0 : i32, i32
  }
  func.func @transform_3(%arg0: i32, %arg1: i32) -> (i32, i32, i32) {
    %c0_i32 = arith.constant 0 : i32
    %c0_i32_0 = arith.constant 0 : i32
    return %arg0, %c0_i32, %arg1 : i32, i32, i32
  }
}

</mosaic_0001>

<llo_original>
// kernel: enhanced_climate_unet.22
$region0: #{enhanced_climate_unet.22}
  #allocation0 [shape = 'u32[]', space=smem, size = 0x4, offset = 0x4, fixed_abs, tag = 'smem constant byte address 0x4 - core index']
  #allocation1 [shape = 'u32[144,128]{1,0:T(1,128)}', space=vmem, size = 0x12000, scoped, tag = 'internal scratch']
  %s0 = inlined_call_operand.vmem [shape: bf16[2,16,432], index: 0, kind: input, shape index: {}]
  %s1 = inlined_call_operand.vmem [shape: bf16[16,144], index: 1, kind: input, shape index: {}]
  %s2 = inlined_call_operand.vmem [shape: f32[16,1], index: 2, kind: input, shape index: {}]
  %s3 = inlined_call_operand.vmem [shape: f32[2,16,384], index: 3, kind: output, shape index: {}]
  %s4 = sld [smem:[#allocation0]]
  $region45: #{enhanced_climate_unet.22} parent=0
    _
  %s6 = ssub.s32 1, %s4
  %s7 = scalar_select 0, %s6, %s4
  loop: start=0, step=1, limit=4
  $region2: #{enhanced_climate_unet.22} parent=0 // loop_pre_header
    _
  $region3: #{enhanced_climate_unet.22} parent=0 // loop_header
    %s9 = sphi 0, %s13
    %p10 = scmp.ge.s32.totalorder %s9, 4
    %s16 = sphi 0, %s28
    %s17 = sphi 0, %s24
    %s18 = sphi 0, %s16
    %s19 = sphi 0, %s17
    %s20 = sphi 0, %s18
    %s21 = sphi 0, %s19
    %s31 = sphi 0, %s33
    %s34 = sphi 0, %s31
    %s35 = sphi 0, %s34
    %s51 = sphi 0, %s35
    %s55 = sphi 0, %s55
    %s57 = sphi 0, %s55
    %s58 = sphi 0, %s57
    %s72 = sphi 0, %s58
    %s76 = sphi 0, %s76
    %s78 = sphi 0, %s76
    %s79 = sphi 0, %s78
    %s93 = sphi 0, %s79
    %s101 = sphi 0, %s103
    %s104 = sphi 0, %s101
    %s105 = sphi 0, %s104
    %s121 = sphi 0, %s105
  $region4: #{enhanced_climate_unet.22} parent=0 // loop_header_branch
    %12 = sbr.rel (%p10) target = $region8
  $region5: #{enhanced_climate_unet.22} parent=0 // loop_body
    %s14 = ssub.s32 %s9, 1
    %s15 = ssub.s32 %s9, 2
    %s22 = sadd.s32 1, %s17
    %p23 = scmp.ge.s32.totalorder %s22, 1
    %s24 = scalar_select %p23, 0, %s22
    %s25 = sadd.s32 1, %s16
    %s26 = scalar_select %p23, %s25, %s16
    %p27 = scmp.ge.s32.totalorder %s26, 2
    %s28 = scalar_select %p27, 0, %s26
    %s29 = ssub.s32 %s16, %s28
    %p30 = scmp.eq.s32.totalorder %s29, 0
    %s32 = sadd.s32 %s31, 1
    %s33 = scalar_select %p30, %s31, %s32
    %p36 = pneg %p30
    %p37 = scmp.eq.s32.totalorder %s9, 1
    %p38 = por %p36, %p37
    %p39 = scmp.ne.s32.totalorder %s31, %s34
    %p40 = scmp.eq.s32.totalorder %s9, 0
    %p41 = por %p39, %p40
    %p42 = scmp.ne.s32.totalorder %s31, %s34
    %p43 = scmp.eq.s32.totalorder %s14, 1
    %p44 = por %p42, %p43
    %p45 = scmp.ne.s32.totalorder %s34, %s35
    %p46 = scmp.eq.s32.totalorder %s14, 0
    %p47 = por %p45, %p46
    %p48 = scmp.ne.s32.totalorder %s34, %s35
    %p49 = scmp.eq.s32.totalorder %s15, 1
    %p50 = por %p48, %p49
    %p52 = scmp.ne.s32.totalorder %s35, %s51
    %p53 = scmp.eq.s32.totalorder %s15, 0
    %p54 = por %p52, %p53
    %s56 = sadd.s32 %s55, 1
    %p59 = scmp.eq.s32.totalorder %s9, 1
    %p60 = scmp.ne.s32.totalorder %s55, %s57
    %p61 = scmp.eq.s32.totalorder %s9, 0
    %p62 = por %p60, %p61
    %p63 = scmp.ne.s32.totalorder %s55, %s57
    %p64 = scmp.eq.s32.totalorder %s14, 1
    %p65 = por %p63, %p64
    %p66 = scmp.ne.s32.totalorder %s57, %s58
    %p67 = scmp.eq.s32.totalorder %s14, 0
    %p68 = por %p66, %p67
    %p69 = scmp.ne.s32.totalorder %s57, %s58
    %p70 = scmp.eq.s32.totalorder %s15, 1
    %p71 = por %p69, %p70
    %p73 = scmp.ne.s32.totalorder %s58, %s72
    %p74 = scmp.eq.s32.totalorder %s15, 0
    %p75 = por %p73, %p74
    %s77 = sadd.s32 %s76, 1
    %p80 = scmp.eq.s32.totalorder %s9, 1
    %p81 = scmp.ne.s32.totalorder %s76, %s78
    %p82 = scmp.eq.s32.totalorder %s9, 0
    %p83 = por %p81, %p82
    %p84 = scmp.ne.s32.totalorder %s76, %s78
    %p85 = scmp.eq.s32.totalorder %s14, 1
    %p86 = por %p84, %p85
    %p87 = scmp.ne.s32.totalorder %s78, %s79
    %p88 = scmp.eq.s32.totalorder %s14, 0
    %p89 = por %p87, %p88
    %p90 = scmp.ne.s32.totalorder %s78, %s79
    %p91 = scmp.eq.s32.totalorder %s15, 1
    %p92 = por %p90, %p91
    %p94 = scmp.ne.s32.totalorder %s79, %s93
    %p95 = scmp.eq.s32.totalorder %s15, 0
    %p96 = por %p94, %p95
    %s97 = ssub.s32 %s16, %s28
    %s98 = ssub.s32 %s17, %s24
    %s99 = sor.u32 %s97, %s98
    %p100 = scmp.eq.s32.totalorder %s99, 0
    %s102 = sadd.s32 %s101, 1
    %s103 = scalar_select %p100, %s101, %s102
    %p106 = pneg %p100
    %p107 = scmp.eq.s32.totalorder %s9, 1
    %p108 = por %p106, %p107
    %p109 = scmp.ne.s32.totalorder %s101, %s104
    %p110 = scmp.eq.s32.totalorder %s9, 0
    %p111 = por %p109, %p110
    %p112 = scmp.ne.s32.totalorder %s101, %s104
    %p113 = scmp.eq.s32.totalorder %s14, 1
    %p114 = por %p112, %p113
    %p115 = scmp.ne.s32.totalorder %s104, %s105
    %p116 = scmp.eq.s32.totalorder %s14, 0
    %p117 = por %p115, %p116
    %p118 = scmp.ne.s32.totalorder %s104, %s105
    %p119 = scmp.eq.s32.totalorder %s15, 1
    %p120 = por %p118, %p119
    %p122 = scmp.ne.s32.totalorder %s105, %s121
    %p123 = scmp.eq.s32.totalorder %s15, 0
    %p124 = por %p122, %p123
    %p125 = scmp.le.s32.totalorder 1, %s9
    %p126 = scmp.lt.s32.totalorder %s9, 3
    %p127 = pnand %p125, %p126
    %p128 = pneg %p127
    // Predicated region
    $region9: #{enhanced_climate_unet.22} parent=5 // pred_check
      _
    $region10: #{enhanced_climate_unet.22} parent=5 // pred_check_branch
      %130 = sbr.rel (%p127) target = $region12
    $region11: #{enhanced_climate_unet.22} parent=5 // pred_region
      %s131 = ssub.s32 %s9, 1
      // Predicated region
      $region13: #{enhanced_climate_unet.22} parent=11 // pred_check
        %p132 = pneg %p68
      $region14: #{enhanced_climate_unet.22} parent=11 // pred_check_branch
        %134 = sbr.rel (%p132) target = $region16
      $region15: #{enhanced_climate_unet.22} parent=11 // pred_region
        _
      $region16: #{enhanced_climate_unet.22} parent=11 // pred_fallthru
        _
      // Predicated region
      $region17: #{enhanced_climate_unet.22} parent=11 // pred_check
        %p135 = pneg %p89
      $region18: #{enhanced_climate_unet.22} parent=11 // pred_check_branch
        %137 = sbr.rel (%p135) target = $region20
      $region19: #{enhanced_climate_unet.22} parent=11 // pred_region
        _
      $region20: #{enhanced_climate_unet.22} parent=11 // pred_fallthru
        _
    $region12: #{enhanced_climate_unet.22} parent=5 // pred_fallthru
      _
    %p138 = scmp.lt.s32.totalorder %s9, 2
    // Predicated region
    $region21: #{enhanced_climate_unet.22} parent=5 // pred_check
      %p139 = pneg %p138
    $region22: #{enhanced_climate_unet.22} parent=5 // pred_check_branch
      %141 = sbr.rel (%p139) target = $region24
    $region23: #{enhanced_climate_unet.22} parent=5 // pred_region
      // Predicated region
      $region25: #{enhanced_climate_unet.22} parent=23 // pred_check
        %p142 = pneg %p41
      $region26: #{enhanced_climate_unet.22} parent=23 // pred_check_branch
        %144 = sbr.rel (%p142) target = $region28
      $region27: #{enhanced_climate_unet.22} parent=23 // pred_region
        %p145 = scmp.lt.s32.totalorder %s16, 1
        %s146 = scalar_select %p145, %s16, 1
        %s147 = smul.addr %s146, 8
        %s148 = smul.addr %s147, 4
        %s149 = scalar_lea.vmem %s0, %s148
      $region28: #{enhanced_climate_unet.22} parent=23 // pred_fallthru
        _
    $region24: #{enhanced_climate_unet.22} parent=5 // pred_fallthru
      _
    %p150 = scmp.le.s32.totalorder 1, %s9
    %p151 = scmp.lt.s32.totalorder %s9, 3
    %p152 = pnand %p150, %p151
    %p153 = pneg %p152
    // Predicated region
    $region29: #{enhanced_climate_unet.22} parent=5 // pred_check
      _
    $region30: #{enhanced_climate_unet.22} parent=5 // pred_check_branch
      %155 = sbr.rel (%p152) target = $region32
    $region31: #{enhanced_climate_unet.22} parent=5 // pred_region
      %s156 = ssub.s32 %s9, 1
      %p157 = scmp.lt.s32.totalorder %s18, 1
      %s158 = scalar_select %p157, %s18, 1
      %s159 = smul.addr %s158, 8
      %s160 = smul.addr %s159, 4
      %s161 = scalar_lea.vmem %s0, %s160
      %p162 = pneg %p47
      %p163 = pneg %p44
      %p164 = pneg %p68
      %p165 = pneg %p65
      %p166 = pneg %p89
      %p167 = pneg %p86
      %p168 = pneg %p117
      %p169 = pneg %p114
      %s170 = smul.u32 3, %s19
      %p171 = scmp.lt.s32.totalorder %s18, 1
      %s172 = scalar_select %p171, %s18, 1
      %p173 = scmp.lt.s32.totalorder %s170, 2
      %s174 = scalar_select %p173, %s170, 2
      %s175 = smul.addr %s172, 6
      %s176 = sadd.s32 %s174, %s175
      %s177 = smul.addr %s176, 8
      %s178 = scalar_lea.vmem %s3, %s177
      %p179 = scmp.lt.s32.totalorder %s18, 1
      %s180 = scalar_select %p179, %s18, 1
      %s181 = smul.addr %s180, 8
      %s182 = smul.addr %s181, 4
      %s183 = scalar_lea.vmem %s0, %s182
      %s184 = smul.u32 3, %s19
      %p185 = scmp.lt.s32.totalorder %s18, 1
      %s186 = scalar_select %p185, %s18, 1
      %p187 = scmp.lt.s32.totalorder %s184, 2
      %s188 = scalar_select %p187, %s184, 2
      %s189 = smul.addr %s186, 6
      %s190 = sadd.s32 %s188, %s189
      %s191 = smul.addr %s190, 8
      %s192 = scalar_lea.vmem %s3, %s191
      %s193 = smul.u32 3, %s19
      %v195 = vld [vmem:[%s183] sm:$0xff]
      %v196 = vld [vmem:[%s183 + $0x8] sm:$0xf]
      %v197 = vld [vmem:[%s183 + $0x10] sm:$0xff]
      %v198 = vld [vmem:[%s183 + $0x18] sm:$0xf]
      %v199 = vld [vmem:[%s183 + $0x8] sm:$0xff]
      %v200 = vld [vmem:[%s183 + $0x18] sm:$0xff]
      %v205 = vunpack.c.l.b16 %v195
      %v206 = vunpack.c.h.b16 %v195
      %v207 = vunpack.c.l.b16 %v196
      %v208 = vunpack.c.l.b16 %v197
      %v209 = vunpack.c.h.b16 %v197
      %v210 = vunpack.c.l.b16 %v198
      %v211 = vpack.c.b16 %v208, %v205
      %v212 = vpack.c.b16 %v209, %v206
      %v213 = vpack.c.b16 %v210, %v207
      %v219 = vunpack.c.l.b16 %v199
      %v220 = vunpack.c.h.b16 %v199
      %v221 = vunpack.c.l.b16 %v200
      %v222 = vunpack.c.h.b16 %v200
      %v223 = vpack.c.b16 %v221, %v219
      %v224 = vpack.c.b16 %v222, %v220
      %225 = vrot.lane.b32.xlu0 %v211, 127
      %v226 = vpop.permute.xlu0 %225
      %227 = vrot.lane.b32.xlu0 %v212, 127
      %v228 = vpop.permute.xlu0 %227
      %229 = vrot.lane.b32.xlu0 %v223, 127
      %v230 = vpop.permute.xlu0 %229
      %231 = vrot.lane.b32.xlu0 %v224, 127
      %v232 = vpop.permute.xlu0 %231
      %vm233 = vcmask 1039360
      %v234 = vsel %vm233, %v226, %v228
      %v235 = vsel %vm233, %v228, %v230
      %v236 = vsel %vm233, %v230, %v232
      %240 = vrot.lane.b32.xlu0 %v211, 126
      %v241 = vpop.permute.xlu0 %240
      %242 = vrot.lane.b32.xlu0 %v212, 126
      %v243 = vpop.permute.xlu0 %242
      %244 = vrot.lane.b32.xlu0 %v223, 126
      %v245 = vpop.permute.xlu0 %244
      %246 = vrot.lane.b32.xlu0 %v224, 126
      %v247 = vpop.permute.xlu0 %246
      %vm248 = vcmask 1031168
      %v249 = vsel %vm248, %v241, %v243
      %v250 = vsel %vm248, %v243, %v245
      %v251 = vsel %vm248, %v245, %v247
      %255 = vrot.lane.b32.xlu0 %v211, 110
      %v256 = vpop.permute.xlu0 %255
      %257 = vrot.lane.b32.xlu0 %v212, 110
      %v258 = vpop.permute.xlu0 %257
      %259 = vrot.lane.b32.xlu0 %v223, 110
      %v260 = vpop.permute.xlu0 %259
      %261 = vrot.lane.b32.xlu0 %v224, 110
      %v262 = vpop.permute.xlu0 %261
      %vm263 = vcmask 900096
      %v264 = vsel %vm263, %v256, %v258
      %v265 = vsel %vm263, %v258, %v260
      %v266 = vsel %vm263, %v260, %v262
      %270 = vrot.lane.b32.xlu0 %v211, 109
      %v271 = vpop.permute.xlu0 %270
      %272 = vrot.lane.b32.xlu0 %v212, 109
      %v273 = vpop.permute.xlu0 %272
      %274 = vrot.lane.b32.xlu0 %v223, 109
      %v275 = vpop.permute.xlu0 %274
      %276 = vrot.lane.b32.xlu0 %v224, 109
      %v277 = vpop.permute.xlu0 %276
      %vm278 = vcmask 891904
      %v279 = vsel %vm278, %v271, %v273
      %v280 = vsel %vm278, %v273, %v275
      %v281 = vsel %vm278, %v275, %v277
      %285 = vrot.lane.b32.xlu0 %v211, 108
      %v286 = vpop.permute.xlu0 %285
      %287 = vrot.lane.b32.xlu0 %v212, 108
      %v288 = vpop.permute.xlu0 %287
      %289 = vrot.lane.b32.xlu0 %v223, 108
      %v290 = vpop.permute.xlu0 %289
      %291 = vrot.lane.b32.xlu0 %v224, 108
      %v292 = vpop.permute.xlu0 %291
      %vm293 = vcmask 883712
      %v294 = vsel %vm293, %v286, %v288
      %v295 = vsel %vm293, %v288, %v290
      %v296 = vsel %vm293, %v290, %v292
      %300 = vrot.lane.b32.xlu0 %v211, 92
      %v301 = vpop.permute.xlu0 %300
      %302 = vrot.lane.b32.xlu0 %v212, 92
      %v303 = vpop.permute.xlu0 %302
      %304 = vrot.lane.b32.xlu0 %v223, 92
      %v305 = vpop.permute.xlu0 %304
      %306 = vrot.lane.b32.xlu0 %v224, 92
      %v307 = vpop.permute.xlu0 %306
      %vm308 = vcmask 752640
      %v309 = vsel %vm308, %v301, %v303
      %v310 = vsel %vm308, %v303, %v305
      %v311 = vsel %vm308, %v305, %v307
      %315 = vrot.lane.b32.xlu0 %v211, 91
      %v316 = vpop.permute.xlu0 %315
      %317 = vrot.lane.b32.xlu0 %v212, 91
      %v318 = vpop.permute.xlu0 %317
      %319 = vrot.lane.b32.xlu0 %v223, 91
      %v320 = vpop.permute.xlu0 %319
      %321 = vrot.lane.b32.xlu0 %v224, 91
      %v322 = vpop.permute.xlu0 %321
      %vm323 = vcmask 744448
      %v324 = vsel %vm323, %v316, %v318
      %v325 = vsel %vm323, %v318, %v320
      %v326 = vsel %vm323, %v320, %v322
      %330 = vrot.lane.b32.xlu0 %v211, 90
      %v331 = vpop.permute.xlu0 %330
      %332 = vrot.lane.b32.xlu0 %v212, 90
      %v333 = vpop.permute.xlu0 %332
      %334 = vrot.lane.b32.xlu0 %v223, 90
      %v335 = vpop.permute.xlu0 %334
      %336 = vrot.lane.b32.xlu0 %v224, 90
      %v337 = vpop.permute.xlu0 %336
      %vm338 = vcmask 736256
      %v339 = vsel %vm338, %v331, %v333
      %v340 = vsel %vm338, %v333, %v335
      %v341 = vsel %vm338, %v335, %v337
      %v345 = vld [vmem:[%s1] sm:$0xff]
      %v346 = vld [vmem:[%s1 + $0x8] sm:$0xff]
      %v347 = vld [vmem:[%s2] sm:$0xff]
      %v348 = vld [vmem:[%s2 + $0x8] sm:$0xff]
      %350 = vset.pattern.permute.xlu0 0
      %351 = vperm.xlu0 %350, %v347
      %v352 = vpop.permute.xlu0 %351
      %355 = vset.pattern.permute.xlu0 0
      %356 = vperm.xlu0 %355, %v348
      %v357 = vpop.permute.xlu0 %356
      %v361 = vunpack.c.l.b16 %v345
      %v362 = vunpack.c.h.b16 %v345
      %v363 = vunpack.c.l.b16 %v346
      %v364 = vunpack.c.h.b16 %v346
      %v365 = vpack.c.b16 %v363, %v361
      %v366 = vpack.c.b16 %v364, %v362
      %vm368 = vcmask 130048
      %v370 = vsel %vm368, %v366, 0
      %372 = vmatprep.subr.bf16.mxu0 %v325
      %373 = vmatpush1.bf16.msra.mxu0 %v324
      %374 = vmatprep.subr.bf16.mxu0 %v310
      %375 = vmatpush1.bf16.msra.mxu0 %v309
      %376 = vmatprep.subr.bf16.mxu0 %v295
      %377 = vmatpush1.bf16.msra.mxu0 %v294
      %378 = vmatprep.subr.bf16.mxu0 %v280
      %379 = vmatpush1.bf16.msra.mxu0 %v279
      %380 = vmatprep.subr.bf16.mxu0 %v265
      %381 = vmatpush1.bf16.msra.mxu0 %v264
      %382 = vmatprep.subr.bf16.mxu0 %v250
      %383 = vmatpush1.bf16.msra.mxu0 %v249
      %384 = vmatprep.subr.bf16.mxu0 %v235
      %385 = vmatpush1.bf16.msra.mxu0 %v234
      %386 = vmatprep.subr.bf16.mxu0 %v212
      %387 = vmatpush1.bf16.msra.mxu0 %v211
      %388 = vmatprep.subr.bf16.mxu0 0
      %389 = vmatpush2.bf16.msra.mxu0 0
      %390 = vmatprep.subr.bf16.mxu0 0
      %391 = vmatpush2.bf16.msra.mxu0 0
      %392 = vmatprep.subr.bf16.mxu0 0
      %393 = vmatpush2.bf16.msra.mxu0 0
      %394 = vmatprep.subr.bf16.mxu0 0
      %395 = vmatpush2.bf16.msra.mxu0 0
      %396 = vmatprep.subr.bf16.mxu0 0
      %397 = vmatpush2.bf16.msra.mxu0 0
      %398 = vmatprep.subr.bf16.mxu0 0
      %399 = vmatpush2.bf16.msra.mxu0 0
      %400 = vmatprep.subr.bf16.mxu0 0
      %401 = vmatpush2.bf16.msra.mxu0 0
      %402 = vmatprep.subr.bf16.mxu0 %v340
      %403 = vmatpush2.bf16.msra.mxu0 %v339
      %404 = vmatprep.mubr.bf16.mxu0 %v370
      %405 = vmatmul.mubr.bf16.gmra.mxu0 %v365
      %v406 = vpop.f32.mrf.mxu0
      %v407 = vadd.f32 %v352, %v406
      %v408 = vpop.f32.mrf.mxu0
      %v409 = vadd.f32 %v352, %v408
      %v410 = vpop.f32.mrf.mxu0
      %v411 = vadd.f32 %v357, %v410
      %v412 = vpop.f32.mrf.mxu0
      %v413 = vadd.f32 %v357, %v412
      %414 = vdwg.mxu0
      %415 = vmatprep.subr.bf16.mxu0 0
      %416 = vmatpush1.bf16.msra.mxu0 %v326
      %417 = vmatprep.subr.bf16.mxu0 0
      %418 = vmatpush1.bf16.msra.mxu0 %v311
      %419 = vmatprep.subr.bf16.mxu0 0
      %420 = vmatpush1.bf16.msra.mxu0 %v296
      %421 = vmatprep.subr.bf16.mxu0 0
      %422 = vmatpush1.bf16.msra.mxu0 %v281
      %423 = vmatprep.subr.bf16.mxu0 0
      %424 = vmatpush1.bf16.msra.mxu0 %v266
      %425 = vmatprep.subr.bf16.mxu0 0
      %426 = vmatpush1.bf16.msra.mxu0 %v251
      %427 = vmatprep.subr.bf16.mxu0 0
      %428 = vmatpush1.bf16.msra.mxu0 %v236
      %429 = vmatprep.subr.bf16.mxu0 0
      %430 = vmatpush1.bf16.msra.mxu0 %v213
      %431 = vmatprep.subr.bf16.mxu0 0
      %432 = vmatpush2.bf16.msra.mxu0 0
      %433 = vmatprep.subr.bf16.mxu0 0
      %434 = vmatpush2.bf16.msra.mxu0 0
      %435 = vmatprep.subr.bf16.mxu0 0
      %436 = vmatpush2.bf16.msra.mxu0 0
      %437 = vmatprep.subr.bf16.mxu0 0
      %438 = vmatpush2.bf16.msra.mxu0 0
      %439 = vmatprep.subr.bf16.mxu0 0
      %440 = vmatpush2.bf16.msra.mxu0 0
      %441 = vmatprep.subr.bf16.mxu0 0
      %442 = vmatpush2.bf16.msra.mxu0 0
      %443 = vmatprep.subr.bf16.mxu0 0
      %444 = vmatpush2.bf16.msra.mxu0 0
      %445 = vmatprep.subr.bf16.mxu0 0
      %446 = vmatpush2.bf16.msra.mxu0 %v341
      %447 = vmatprep.mubr.bf16.mxu0 %v370
      %448 = vmatmul.mubr.bf16.gmra.mxu0 %v365
      %v449 = vpop.f32.mrf.mxu0
      %v450 = vadd.f32 %v352, %v449
      %v451 = vpop.f32.mrf.mxu0
      %v452 = vpop.f32.mrf.mxu0
      %v453 = vadd.f32 %v357, %v452
      %v454 = vpop.f32.mrf.mxu0
      %455 = vdwg.mxu0
      %456 = vst [vmem:[%s192] sm:$0xff] %v407
      %457 = vst [vmem:[%s192 + $0x8] sm:$0xff] %v409
      %458 = vst [vmem:[%s192 + $0x10] sm:$0xff] %v450
      %459 = vst [vmem:[%s192 + $0x18] sm:$0xff] %v411
      %460 = vst [vmem:[%s192 + $0x20] sm:$0xff] %v413
      %461 = vst [vmem:[%s192 + $0x28] sm:$0xff] %v453
      %s462 = smul.u32 3, %s19
      %p463 = scmp.lt.s32.totalorder %s18, 1
      %s464 = scalar_select %p463, %s18, 1
      %p465 = scmp.lt.s32.totalorder %s462, 2
      %s466 = scalar_select %p465, %s462, 2
      %s467 = smul.addr %s464, 6
      %s468 = sadd.s32 %s466, %s467
      %s469 = smul.addr %s468, 8
      %s470 = scalar_lea.vmem %s3, %s469
      // Predicated region
      $region33: #{enhanced_climate_unet.22} parent=31 // pred_check
        %p471 = pneg %p114
      $region34: #{enhanced_climate_unet.22} parent=31 // pred_check_branch
        %473 = sbr.rel (%p471) target = $region36
      $region35: #{enhanced_climate_unet.22} parent=31 // pred_region
        %s474 = smul.u32 3, %s19
      $region36: #{enhanced_climate_unet.22} parent=31 // pred_fallthru
        _
    $region32: #{enhanced_climate_unet.22} parent=5 // pred_fallthru
      _
    %p475 = scmp.le.s32.totalorder 2, %s9
    // Predicated region
    $region37: #{enhanced_climate_unet.22} parent=5 // pred_check
      %p476 = pneg %p475
    $region38: #{enhanced_climate_unet.22} parent=5 // pred_check_branch
      %478 = sbr.rel (%p476) target = $region40
    $region39: #{enhanced_climate_unet.22} parent=5 // pred_region
      %s479 = ssub.s32 %s9, 2
      // Predicated region
      $region41: #{enhanced_climate_unet.22} parent=39 // pred_check
        %p480 = pneg %p120
      $region42: #{enhanced_climate_unet.22} parent=39 // pred_check_branch
        %482 = sbr.rel (%p480) target = $region44
      $region43: #{enhanced_climate_unet.22} parent=39 // pred_region
        %s483 = smul.u32 3, %s21
        %p484 = scmp.lt.s32.totalorder %s20, 1
        %s485 = scalar_select %p484, %s20, 1
        %p486 = scmp.lt.s32.totalorder %s483, 2
        %s487 = scalar_select %p486, %s483, 2
        %s488 = smul.addr %s485, 6
        %s489 = sadd.s32 %s487, %s488
        %s490 = smul.addr %s489, 8
        %s491 = scalar_lea.vmem %s3, %s490
      $region44: #{enhanced_climate_unet.22} parent=39 // pred_fallthru
        _
    $region40: #{enhanced_climate_unet.22} parent=5 // pred_fallthru
      _
  $region6: #{enhanced_climate_unet.22} parent=0 // loop_footer
    %s13 = sadd.s32 1, %s9
  $region7: #{enhanced_climate_unet.22} parent=0 // loop_footer_branch
    %8 = sbr.rel target = $region3
  $region8: #{enhanced_climate_unet.22} parent=0 // loop_exit
    _

// kernel: enhanced_climate_unet.23
$region0: #{enhanced_climate_unet.23}
  #allocation0 [shape = 'u32[]', space=smem, size = 0x4, offset = 0x4, fixed_abs, tag = 'smem constant byte address 0x4 - core index']
  #allocation1 [shape = 'u32[144,128]{1,0:T(1,128)}', space=vmem, size = 0x12000, scoped, tag = 'internal scratch']
  %s0 = inlined_call_operand.vmem [shape: bf16[2,64,128], index: 0, kind: input, shape index: {}]
  %s1 = inlined_call_operand.vmem [shape: bf16[16,64], index: 1, kind: input, shape index: {}]
  %s2 = inlined_call_operand.vmem [shape: f32[16,1], index: 2, kind: input, shape index: {}]
  %s3 = inlined_call_operand.vmem [shape: f32[2,16,128], index: 3, kind: output, shape index: {}]
  %s4 = sld [smem:[#allocation0]]
  $region45: #{enhanced_climate_unet.23} parent=0
    _
  %s6 = ssub.s32 1, %s4
  %s7 = scalar_select 0, %s6, %s4
  loop: start=0, step=1, limit=4
  $region2: #{enhanced_climate_unet.23} parent=0 // loop_pre_header
    _
  $region3: #{enhanced_climate_unet.23} parent=0 // loop_header
    %s9 = sphi 0, %s13
    %p10 = scmp.ge.s32.totalorder %s9, 4
    %s16 = sphi 0, %s28
    %s17 = sphi 0, %s24
    %s18 = sphi 0, %s16
    %s19 = sphi 0, %s17
    %s20 = sphi 0, %s18
    %s21 = sphi 0, %s19
    %s31 = sphi 0, %s33
    %s34 = sphi 0, %s31
    %s35 = sphi 0, %s34
    %s51 = sphi 0, %s35
    %s55 = sphi 0, %s55
    %s57 = sphi 0, %s55
    %s58 = sphi 0, %s57
    %s72 = sphi 0, %s58
    %s76 = sphi 0, %s76
    %s78 = sphi 0, %s76
    %s79 = sphi 0, %s78
    %s93 = sphi 0, %s79
    %s101 = sphi 0, %s103
    %s104 = sphi 0, %s101
    %s105 = sphi 0, %s104
    %s121 = sphi 0, %s105
  $region4: #{enhanced_climate_unet.23} parent=0 // loop_header_branch
    %12 = sbr.rel (%p10) target = $region8
  $region5: #{enhanced_climate_unet.23} parent=0 // loop_body
    %s14 = ssub.s32 %s9, 1
    %s15 = ssub.s32 %s9, 2
    %s22 = sadd.s32 1, %s17
    %p23 = scmp.ge.s32.totalorder %s22, 1
    %s24 = scalar_select %p23, 0, %s22
    %s25 = sadd.s32 1, %s16
    %s26 = scalar_select %p23, %s25, %s16
    %p27 = scmp.ge.s32.totalorder %s26, 2
    %s28 = scalar_select %p27, 0, %s26
    %s29 = ssub.s32 %s16, %s28
    %p30 = scmp.eq.s32.totalorder %s29, 0
    %s32 = sadd.s32 %s31, 1
    %s33 = scalar_select %p30, %s31, %s32
    %p36 = pneg %p30
    %p37 = scmp.eq.s32.totalorder %s9, 1
    %p38 = por %p36, %p37
    %p39 = scmp.ne.s32.totalorder %s31, %s34
    %p40 = scmp.eq.s32.totalorder %s9, 0
    %p41 = por %p39, %p40
    %p42 = scmp.ne.s32.totalorder %s31, %s34
    %p43 = scmp.eq.s32.totalorder %s14, 1
    %p44 = por %p42, %p43
    %p45 = scmp.ne.s32.totalorder %s34, %s35
    %p46 = scmp.eq.s32.totalorder %s14, 0
    %p47 = por %p45, %p46
    %p48 = scmp.ne.s32.totalorder %s34, %s35
    %p49 = scmp.eq.s32.totalorder %s15, 1
    %p50 = por %p48, %p49
    %p52 = scmp.ne.s32.totalorder %s35, %s51
    %p53 = scmp.eq.s32.totalorder %s15, 0
    %p54 = por %p52, %p53
    %s56 = sadd.s32 %s55, 1
    %p59 = scmp.eq.s32.totalorder %s9, 1
    %p60 = scmp.ne.s32.totalorder %s55, %s57
    %p61 = scmp.eq.s32.totalorder %s9, 0
    %p62 = por %p60, %p61
    %p63 = scmp.ne.s32.totalorder %s55, %s57
    %p64 = scmp.eq.s32.totalorder %s14, 1
    %p65 = por %p63, %p64
    %p66 = scmp.ne.s32.totalorder %s57, %s58
    %p67 = scmp.eq.s32.totalorder %s14, 0
    %p68 = por %p66, %p67
    %p69 = scmp.ne.s32.totalorder %s57, %s58
    %p70 = scmp.eq.s32.totalorder %s15, 1
    %p71 = por %p69, %p70
    %p73 = scmp.ne.s32.totalorder %s58, %s72
    %p74 = scmp.eq.s32.totalorder %s15, 0
    %p75 = por %p73, %p74
    %s77 = sadd.s32 %s76, 1
    %p80 = scmp.eq.s32.totalorder %s9, 1
    %p81 = scmp.ne.s32.totalorder %s76, %s78
    %p82 = scmp.eq.s32.totalorder %s9, 0
    %p83 = por %p81, %p82
    %p84 = scmp.ne.s32.totalorder %s76, %s78
    %p85 = scmp.eq.s32.totalorder %s14, 1
    %p86 = por %p84, %p85
    %p87 = scmp.ne.s32.totalorder %s78, %s79
    %p88 = scmp.eq.s32.totalorder %s14, 0
    %p89 = por %p87, %p88
    %p90 = scmp.ne.s32.totalorder %s78, %s79
    %p91 = scmp.eq.s32.totalorder %s15, 1
    %p92 = por %p90, %p91
    %p94 = scmp.ne.s32.totalorder %s79, %s93
    %p95 = scmp.eq.s32.totalorder %s15, 0
    %p96 = por %p94, %p95
    %s97 = ssub.s32 %s16, %s28
    %s98 = ssub.s32 %s17, %s24
    %s99 = sor.u32 %s97, %s98
    %p100 = scmp.eq.s32.totalorder %s99, 0
    %s102 = sadd.s32 %s101, 1
    %s103 = scalar_select %p100, %s101, %s102
    %p106 = pneg %p100
    %p107 = scmp.eq.s32.totalorder %s9, 1
    %p108 = por %p106, %p107
    %p109 = scmp.ne.s32.totalorder %s101, %s104
    %p110 = scmp.eq.s32.totalorder %s9, 0
    %p111 = por %p109, %p110
    %p112 = scmp.ne.s32.totalorder %s101, %s104
    %p113 = scmp.eq.s32.totalorder %s14, 1
    %p114 = por %p112, %p113
    %p115 = scmp.ne.s32.totalorder %s104, %s105
    %p116 = scmp.eq.s32.totalorder %s14, 0
    %p117 = por %p115, %p116
    %p118 = scmp.ne.s32.totalorder %s104, %s105
    %p119 = scmp.eq.s32.totalorder %s15, 1
    %p120 = por %p118, %p119
    %p122 = scmp.ne.s32.totalorder %s105, %s121
    %p123 = scmp.eq.s32.totalorder %s15, 0
    %p124 = por %p122, %p123
    %p125 = scmp.le.s32.totalorder 1, %s9
    %p126 = scmp.lt.s32.totalorder %s9, 3
    %p127 = pnand %p125, %p126
    %p128 = pneg %p127
    // Predicated region
    $region9: #{enhanced_climate_unet.23} parent=5 // pred_check
      _
    $region10: #{enhanced_climate_unet.23} parent=5 // pred_check_branch
      %130 = sbr.rel (%p127) target = $region12
    $region11: #{enhanced_climate_unet.23} parent=5 // pred_region
      %s131 = ssub.s32 %s9, 1
      // Predicated region
      $region13: #{enhanced_climate_unet.23} parent=11 // pred_check
        %p132 = pneg %p68
      $region14: #{enhanced_climate_unet.23} parent=11 // pred_check_branch
        %134 = sbr.rel (%p132) target = $region16
      $region15: #{enhanced_climate_unet.23} parent=11 // pred_region
        _
      $region16: #{enhanced_climate_unet.23} parent=11 // pred_fallthru
        _
      // Predicated region
      $region17: #{enhanced_climate_unet.23} parent=11 // pred_check
        %p135 = pneg %p89
      $region18: #{enhanced_climate_unet.23} parent=11 // pred_check_branch
        %137 = sbr.rel (%p135) target = $region20
      $region19: #{enhanced_climate_unet.23} parent=11 // pred_region
        _
      $region20: #{enhanced_climate_unet.23} parent=11 // pred_fallthru
        _
    $region12: #{enhanced_climate_unet.23} parent=5 // pred_fallthru
      _
    %p138 = scmp.lt.s32.totalorder %s9, 2
    // Predicated region
    $region21: #{enhanced_climate_unet.23} parent=5 // pred_check
      %p139 = pneg %p138
    $region22: #{enhanced_climate_unet.23} parent=5 // pred_check_branch
      %141 = sbr.rel (%p139) target = $region24
    $region23: #{enhanced_climate_unet.23} parent=5 // pred_region
      // Predicated region
      $region25: #{enhanced_climate_unet.23} parent=23 // pred_check
        %p142 = pneg %p41
      $region26: #{enhanced_climate_unet.23} parent=23 // pred_check_branch
        %144 = sbr.rel (%p142) target = $region28
      $region27: #{enhanced_climate_unet.23} parent=23 // pred_region
        %p145 = scmp.lt.s32.totalorder %s16, 1
        %s146 = scalar_select %p145, %s16, 1
        %s147 = smul.addr %s146, 8
        %s148 = smul.addr %s147, 4
        %s149 = scalar_lea.vmem %s0, %s148
      $region28: #{enhanced_climate_unet.23} parent=23 // pred_fallthru
        _
    $region24: #{enhanced_climate_unet.23} parent=5 // pred_fallthru
      _
    %p150 = scmp.le.s32.totalorder 1, %s9
    %p151 = scmp.lt.s32.totalorder %s9, 3
    %p152 = pnand %p150, %p151
    %p153 = pneg %p152
    // Predicated region
    $region29: #{enhanced_climate_unet.23} parent=5 // pred_check
      _
    $region30: #{enhanced_climate_unet.23} parent=5 // pred_check_branch
      %155 = sbr.rel (%p152) target = $region32
    $region31: #{enhanced_climate_unet.23} parent=5 // pred_region
      %s156 = ssub.s32 %s9, 1
      %p157 = scmp.lt.s32.totalorder %s18, 1
      %s158 = scalar_select %p157, %s18, 1
      %s159 = smul.addr %s158, 8
      %s160 = smul.addr %s159, 4
      %s161 = scalar_lea.vmem %s0, %s160
      %p162 = pneg %p47
      %p163 = pneg %p44
      %p164 = pneg %p68
      %p165 = pneg %p65
      %p166 = pneg %p89
      %p167 = pneg %p86
      %p168 = pneg %p117
      %p169 = pneg %p114
      %p170 = scmp.lt.s32.totalorder %s18, 1
      %s171 = scalar_select %p170, %s18, 1
      %p172 = scmp.lt.s32.totalorder %s19, 0
      %s173 = scalar_select %p172, %s19, 0
      %s174 = smul.addr %s171, 2
      %s175 = sadd.s32 %s173, %s174
      %s176 = smul.addr %s175, 8
      %s177 = scalar_lea.vmem %s3, %s176
      %p178 = scmp.lt.s32.totalorder %s18, 1
      %s179 = scalar_select %p178, %s18, 1
      %s180 = smul.addr %s179, 8
      %s181 = smul.addr %s180, 4
      %s182 = scalar_lea.vmem %s0, %s181
      %p183 = scmp.lt.s32.totalorder %s18, 1
      %s184 = scalar_select %p183, %s18, 1
      %p185 = scmp.lt.s32.totalorder %s19, 0
      %s186 = scalar_select %p185, %s19, 0
      %s187 = smul.addr %s184, 2
      %s188 = sadd.s32 %s186, %s187
      %s189 = smul.addr %s188, 8
      %s190 = scalar_lea.vmem %s3, %s189
      %v192 = vld [vmem:[%s182] sm:$0xf]
      %v193 = vld [vmem:[%s182 + $0x4] sm:$0xf]
      %v194 = vld [vmem:[%s182 + $0x8] sm:$0xf]
      %v195 = vld [vmem:[%s182 + $0xc] sm:$0xf]
      %v196 = vld [vmem:[%s182 + $0x10] sm:$0xf]
      %v197 = vld [vmem:[%s182 + $0x14] sm:$0xf]
      %v198 = vld [vmem:[%s182 + $0x18] sm:$0xf]
      %v199 = vld [vmem:[%s182 + $0x1c] sm:$0xf]
      %v200 = vld [vmem:[%s1] sm:$0xf]
      %v201 = vld [vmem:[%s1 + $0x4] sm:$0xf]
      %v202 = vld [vmem:[%s2] sm:$0xff]
      %v203 = vld [vmem:[%s2 + $0x8] sm:$0xff]
      %205 = vset.pattern.permute.xlu0 0
      %206 = vperm.xlu0 %205, %v202
      %v207 = vpop.permute.xlu0 %206
      %210 = vset.pattern.permute.xlu0 0
      %211 = vperm.xlu0 %210, %v203
      %v212 = vpop.permute.xlu0 %211
      %v216 = vunpack.c.l.b16 %v200
      %v217 = vunpack.c.l.b16 %v201
      %v218 = vpack.c.b16 %v217, %v216
      %v227 = vunpack.c.l.b16 %v192
      %v228 = vunpack.c.l.b16 %v193
      %v229 = vunpack.c.l.b16 %v194
      %v230 = vunpack.c.l.b16 %v195
      %v231 = vunpack.c.l.b16 %v196
      %v232 = vunpack.c.l.b16 %v197
      %v233 = vunpack.c.l.b16 %v198
      %v234 = vunpack.c.l.b16 %v199
      %v235 = vpack.c.b16 %v228, %v227
      %v236 = vpack.c.b16 %v230, %v229
      %v237 = vpack.c.b16 %v232, %v231
      %v238 = vpack.c.b16 %v234, %v233
      %vm243 = vcmask 523264
      %v245 = vsel %vm243, %v218, 0
      %247 = vmatprep.subr.bf16.mxu0 0
      %248 = vmatpush1.bf16.msra.mxu0 0
      %249 = vmatprep.subr.bf16.mxu0 0
      %250 = vmatpush1.bf16.msra.mxu0 0
      %251 = vmatprep.subr.bf16.mxu0 0
      %252 = vmatpush1.bf16.msra.mxu0 0
      %253 = vmatprep.subr.bf16.mxu0 0
      %254 = vmatpush1.bf16.msra.mxu0 0
      %255 = vmatprep.subr.bf16.mxu0 0
      %256 = vmatpush1.bf16.msra.mxu0 %v238
      %257 = vmatprep.subr.bf16.mxu0 0
      %258 = vmatpush1.bf16.msra.mxu0 %v237
      %259 = vmatprep.subr.bf16.mxu0 0
      %260 = vmatpush1.bf16.msra.mxu0 %v236
      %261 = vmatprep.subr.bf16.mxu0 0
      %262 = vmatpush1.bf16.msra.mxu0 %v235
      %263 = vmatprep.subr.bf16.mxu0 0
      %264 = vmatpush2.bf16.msra.mxu0 0
      %265 = vmatprep.subr.bf16.mxu0 0
      %266 = vmatpush2.bf16.msra.mxu0 0
      %267 = vmatprep.subr.bf16.mxu0 0
      %268 = vmatpush2.bf16.msra.mxu0 0
      %269 = vmatprep.subr.bf16.mxu0 0
      %270 = vmatpush2.bf16.msra.mxu0 0
      %271 = vmatprep.subr.bf16.mxu0 0
      %272 = vmatpush2.bf16.msra.mxu0 0
      %273 = vmatprep.subr.bf16.mxu0 0
      %274 = vmatpush2.bf16.msra.mxu0 0
      %275 = vmatprep.subr.bf16.mxu0 0
      %276 = vmatpush2.bf16.msra.mxu0 0
      %277 = vmatprep.subr.bf16.mxu0 0
      %278 = vmatpush2.bf16.msra.mxu0 0
      %279 = vmatprep.mubr.bf16.mxu0 0
      %280 = vmatmul.mubr.bf16.gmra.mxu0 %v245
      %v281 = vpop.f32.mrf.mxu0
      %v282 = vadd.f32 %v207, %v281
      %v283 = vpop.f32.mrf.mxu0
      %v284 = vpop.f32.mrf.mxu0
      %v285 = vadd.f32 %v212, %v284
      %v286 = vpop.f32.mrf.mxu0
      %287 = vdwg.mxu0
      %288 = vst [vmem:[%s190] sm:$0xff] %v282
      %289 = vst [vmem:[%s190 + $0x8] sm:$0xff] %v285
      %p290 = scmp.lt.s32.totalorder %s18, 1
      %s291 = scalar_select %p290, %s18, 1
      %p292 = scmp.lt.s32.totalorder %s19, 0
      %s293 = scalar_select %p292, %s19, 0
      %s294 = smul.addr %s291, 2
      %s295 = sadd.s32 %s293, %s294
      %s296 = smul.addr %s295, 8
      %s297 = scalar_lea.vmem %s3, %s296
      // Predicated region
      $region33: #{enhanced_climate_unet.23} parent=31 // pred_check
        %p298 = pneg %p114
      $region34: #{enhanced_climate_unet.23} parent=31 // pred_check_branch
        %300 = sbr.rel (%p298) target = $region36
      $region35: #{enhanced_climate_unet.23} parent=31 // pred_region
        _
      $region36: #{enhanced_climate_unet.23} parent=31 // pred_fallthru
        _
    $region32: #{enhanced_climate_unet.23} parent=5 // pred_fallthru
      _
    %p301 = scmp.le.s32.totalorder 2, %s9
    // Predicated region
    $region37: #{enhanced_climate_unet.23} parent=5 // pred_check
      %p302 = pneg %p301
    $region38: #{enhanced_climate_unet.23} parent=5 // pred_check_branch
      %304 = sbr.rel (%p302) target = $region40
    $region39: #{enhanced_climate_unet.23} parent=5 // pred_region
      %s305 = ssub.s32 %s9, 2
      // Predicated region
      $region41: #{enhanced_climate_unet.23} parent=39 // pred_check
        %p306 = pneg %p120
      $region42: #{enhanced_climate_unet.23} parent=39 // pred_check_branch
        %308 = sbr.rel (%p306) target = $region44
      $region43: #{enhanced_climate_unet.23} parent=39 // pred_region
        %p309 = scmp.lt.s32.totalorder %s20, 1
        %s310 = scalar_select %p309, %s20, 1
        %p311 = scmp.lt.s32.totalorder %s21, 0
        %s312 = scalar_select %p311, %s21, 0
        %s313 = smul.addr %s310, 2
        %s314 = sadd.s32 %s312, %s313
        %s315 = smul.addr %s314, 8
        %s316 = scalar_lea.vmem %s3, %s315
      $region44: #{enhanced_climate_unet.23} parent=39 // pred_fallthru
        _
    $region40: #{enhanced_climate_unet.23} parent=5 // pred_fallthru
      _
  $region6: #{enhanced_climate_unet.23} parent=0 // loop_footer
    %s13 = sadd.s32 1, %s9
  $region7: #{enhanced_climate_unet.23} parent=0 // loop_footer_branch
    %8 = sbr.rel target = $region3
  $region8: #{enhanced_climate_unet.23} parent=0 // loop_exit
    _

// kernel: enhanced_climate_unet.25
$region0: #{enhanced_climate_unet.25}
  #allocation0 [shape = 'u32[]', space=smem, size = 0x4, offset = 0x4, fixed_abs, tag = 'smem constant byte address 0x4 - core index']
  #allocation1 [shape = 'u32[144,128]{1,0:T(1,128)}', space=vmem, size = 0x12000, scoped, tag = 'internal scratch']
  %s0 = inlined_call_operand.vmem [shape: bf16[2,16,150], index: 0, kind: input, shape index: {}]
  %s1 = inlined_call_operand.vmem [shape: bf16[32,144], index: 1, kind: input, shape index: {}]
  %s2 = inlined_call_operand.vmem [shape: f32[32,1], index: 2, kind: input, shape index: {}]
  %s3 = inlined_call_operand.vmem [shape: f32[2,32,128], index: 3, kind: output, shape index: {}]
  %s4 = sld [smem:[#allocation0]]
  $region45: #{enhanced_climate_unet.25} parent=0
    _
  %s6 = ssub.s32 1, %s4
  %s7 = scalar_select 0, %s6, %s4
  loop: start=0, step=1, limit=4
  $region2: #{enhanced_climate_unet.25} parent=0 // loop_pre_header
    _
  $region3: #{enhanced_climate_unet.25} parent=0 // loop_header
    %s9 = sphi 0, %s13
    %p10 = scmp.ge.s32.totalorder %s9, 4
    %s16 = sphi 0, %s28
    %s17 = sphi 0, %s24
    %s18 = sphi 0, %s16
    %s19 = sphi 0, %s17
    %s20 = sphi 0, %s18
    %s21 = sphi 0, %s19
    %s31 = sphi 0, %s33
    %s34 = sphi 0, %s31
    %s35 = sphi 0, %s34
    %s51 = sphi 0, %s35
    %s55 = sphi 0, %s55
    %s57 = sphi 0, %s55
    %s58 = sphi 0, %s57
    %s72 = sphi 0, %s58
    %s76 = sphi 0, %s76
    %s78 = sphi 0, %s76
    %s79 = sphi 0, %s78
    %s93 = sphi 0, %s79
    %s101 = sphi 0, %s103
    %s104 = sphi 0, %s101
    %s105 = sphi 0, %s104
    %s121 = sphi 0, %s105
  $region4: #{enhanced_climate_unet.25} parent=0 // loop_header_branch
    %12 = sbr.rel (%p10) target = $region8
  $region5: #{enhanced_climate_unet.25} parent=0 // loop_body
    %s14 = ssub.s32 %s9, 1
    %s15 = ssub.s32 %s9, 2
    %s22 = sadd.s32 1, %s17
    %p23 = scmp.ge.s32.totalorder %s22, 1
    %s24 = scalar_select %p23, 0, %s22
    %s25 = sadd.s32 1, %s16
    %s26 = scalar_select %p23, %s25, %s16
    %p27 = scmp.ge.s32.totalorder %s26, 2
    %s28 = scalar_select %p27, 0, %s26
    %s29 = ssub.s32 %s16, %s28
    %p30 = scmp.eq.s32.totalorder %s29, 0
    %s32 = sadd.s32 %s31, 1
    %s33 = scalar_select %p30, %s31, %s32
    %p36 = pneg %p30
    %p37 = scmp.eq.s32.totalorder %s9, 1
    %p38 = por %p36, %p37
    %p39 = scmp.ne.s32.totalorder %s31, %s34
    %p40 = scmp.eq.s32.totalorder %s9, 0
    %p41 = por %p39, %p40
    %p42 = scmp.ne.s32.totalorder %s31, %s34
    %p43 = scmp.eq.s32.totalorder %s14, 1
    %p44 = por %p42, %p43
    %p45 = scmp.ne.s32.totalorder %s34, %s35
    %p46 = scmp.eq.s32.totalorder %s14, 0
    %p47 = por %p45, %p46
    %p48 = scmp.ne.s32.totalorder %s34, %s35
    %p49 = scmp.eq.s32.totalorder %s15, 1
    %p50 = por %p48, %p49
    %p52 = scmp.ne.s32.totalorder %s35, %s51
    %p53 = scmp.eq.s32.totalorder %s15, 0
    %p54 = por %p52, %p53
    %s56 = sadd.s32 %s55, 1
    %p59 = scmp.eq.s32.totalorder %s9, 1
    %p60 = scmp.ne.s32.totalorder %s55, %s57
    %p61 = scmp.eq.s32.totalorder %s9, 0
    %p62 = por %p60, %p61
    %p63 = scmp.ne.s32.totalorder %s55, %s57
    %p64 = scmp.eq.s32.totalorder %s14, 1
    %p65 = por %p63, %p64
    %p66 = scmp.ne.s32.totalorder %s57, %s58
    %p67 = scmp.eq.s32.totalorder %s14, 0
    %p68 = por %p66, %p67
    %p69 = scmp.ne.s32.totalorder %s57, %s58
    %p70 = scmp.eq.s32.totalorder %s15, 1
    %p71 = por %p69, %p70
    %p73 = scmp.ne.s32.totalorder %s58, %s72
    %p74 = scmp.eq.s32.totalorder %s15, 0
    %p75 = por %p73, %p74
    %s77 = sadd.s32 %s76, 1
    %p80 = scmp.eq.s32.totalorder %s9, 1
    %p81 = scmp.ne.s32.totalorder %s76, %s78
    %p82 = scmp.eq.s32.totalorder %s9, 0
    %p83 = por %p81, %p82
    %p84 = scmp.ne.s32.totalorder %s76, %s78
    %p85 = scmp.eq.s32.totalorder %s14, 1
    %p86 = por %p84, %p85
    %p87 = scmp.ne.s32.totalorder %s78, %s79
    %p88 = scmp.eq.s32.totalorder %s14, 0
    %p89 = por %p87, %p88
    %p90 = scmp.ne.s32.totalorder %s78, %s79
    %p91 = scmp.eq.s32.totalorder %s15, 1
    %p92 = por %p90, %p91
    %p94 = scmp.ne.s32.totalorder %s79, %s93
    %p95 = scmp.eq.s32.totalorder %s15, 0
    %p96 = por %p94, %p95
    %s97 = ssub.s32 %s16, %s28
    %s98 = ssub.s32 %s17, %s24
    %s99 = sor.u32 %s97, %s98
    %p100 = scmp.eq.s32.totalorder %s99, 0
    %s102 = sadd.s32 %s101, 1
    %s103 = scalar_select %p100, %s101, %s102
    %p106 = pneg %p100
    %p107 = scmp.eq.s32.totalorder %s9, 1
    %p108 = por %p106, %p107
    %p109 = scmp.ne.s32.totalorder %s101, %s104
    %p110 = scmp.eq.s32.totalorder %s9, 0
    %p111 = por %p109, %p110
    %p112 = scmp.ne.s32.totalorder %s101, %s104
    %p113 = scmp.eq.s32.totalorder %s14, 1
    %p114 = por %p112, %p113
    %p115 = scmp.ne.s32.totalorder %s104, %s105
    %p116 = scmp.eq.s32.totalorder %s14, 0
    %p117 = por %p115, %p116
    %p118 = scmp.ne.s32.totalorder %s104, %s105
    %p119 = scmp.eq.s32.totalorder %s15, 1
    %p120 = por %p118, %p119
    %p122 = scmp.ne.s32.totalorder %s105, %s121
    %p123 = scmp.eq.s32.totalorder %s15, 0
    %p124 = por %p122, %p123
    %p125 = scmp.le.s32.totalorder 1, %s9
    %p126 = scmp.lt.s32.totalorder %s9, 3
    %p127 = pnand %p125, %p126
    %p128 = pneg %p127
    // Predicated region
    $region9: #{enhanced_climate_unet.25} parent=5 // pred_check
      _
    $region10: #{enhanced_climate_unet.25} parent=5 // pred_check_branch
      %130 = sbr.rel (%p127) target = $region12
    $region11: #{enhanced_climate_unet.25} parent=5 // pred_region
      %s131 = ssub.s32 %s9, 1
      // Predicated region
      $region13: #{enhanced_climate_unet.25} parent=11 // pred_check
        %p132 = pneg %p68
      $region14: #{enhanced_climate_unet.25} parent=11 // pred_check_branch
        %134 = sbr.rel (%p132) target = $region16
      $region15: #{enhanced_climate_unet.25} parent=11 // pred_region
        _
      $region16: #{enhanced_climate_unet.25} parent=11 // pred_fallthru
        _
      // Predicated region
      $region17: #{enhanced_climate_unet.25} parent=11 // pred_check
        %p135 = pneg %p89
      $region18: #{enhanced_climate_unet.25} parent=11 // pred_check_branch
        %137 = sbr.rel (%p135) target = $region20
      $region19: #{enhanced_climate_unet.25} parent=11 // pred_region
        _
      $region20: #{enhanced_climate_unet.25} parent=11 // pred_fallthru
        _
    $region12: #{enhanced_climate_unet.25} parent=5 // pred_fallthru
      _
    %p138 = scmp.lt.s32.totalorder %s9, 2
    // Predicated region
    $region21: #{enhanced_climate_unet.25} parent=5 // pred_check
      %p139 = pneg %p138
    $region22: #{enhanced_climate_unet.25} parent=5 // pred_check_branch
      %141 = sbr.rel (%p139) target = $region24
    $region23: #{enhanced_climate_unet.25} parent=5 // pred_region
      // Predicated region
      $region25: #{enhanced_climate_unet.25} parent=23 // pred_check
        %p142 = pneg %p41
      $region26: #{enhanced_climate_unet.25} parent=23 // pred_check_branch
        %144 = sbr.rel (%p142) target = $region28
      $region27: #{enhanced_climate_unet.25} parent=23 // pred_region
        %p145 = scmp.lt.s32.totalorder %s16, 1
        %s146 = scalar_select %p145, %s16, 1
        %s147 = smul.addr %s146, 4
        %s148 = smul.addr %s147, 4
        %s149 = scalar_lea.vmem %s0, %s148
      $region28: #{enhanced_climate_unet.25} parent=23 // pred_fallthru
        _
    $region24: #{enhanced_climate_unet.25} parent=5 // pred_fallthru
      _
    %p150 = scmp.le.s32.totalorder 1, %s9
    %p151 = scmp.lt.s32.totalorder %s9, 3
    %p152 = pnand %p150, %p151
    %p153 = pneg %p152
    // Predicated region
    $region29: #{enhanced_climate_unet.25} parent=5 // pred_check
      _
    $region30: #{enhanced_climate_unet.25} parent=5 // pred_check_branch
      %155 = sbr.rel (%p152) target = $region32
    $region31: #{enhanced_climate_unet.25} parent=5 // pred_region
      %s156 = ssub.s32 %s9, 1
      %p157 = scmp.lt.s32.totalorder %s18, 1
      %s158 = scalar_select %p157, %s18, 1
      %s159 = smul.addr %s158, 4
      %s160 = smul.addr %s159, 4
      %s161 = scalar_lea.vmem %s0, %s160
      %p162 = pneg %p47
      %p163 = pneg %p44
      %p164 = pneg %p68
      %p165 = pneg %p65
      %p166 = pneg %p89
      %p167 = pneg %p86
      %p168 = pneg %p117
      %p169 = pneg %p114
      %p170 = scmp.lt.s32.totalorder %s18, 1
      %s171 = scalar_select %p170, %s18, 1
      %p172 = scmp.lt.s32.totalorder %s19, 0
      %s173 = scalar_select %p172, %s19, 0
      %s174 = smul.addr %s171, 4
      %s175 = sadd.s32 %s173, %s174
      %s176 = smul.addr %s175, 8
      %s177 = scalar_lea.vmem %s3, %s176
      %p178 = scmp.lt.s32.totalorder %s18, 1
      %s179 = scalar_select %p178, %s18, 1
      %s180 = smul.addr %s179, 4
      %s181 = smul.addr %s180, 4
      %s182 = scalar_lea.vmem %s0, %s181
      %p183 = scmp.lt.s32.totalorder %s18, 1
      %s184 = scalar_select %p183, %s18, 1
      %p185 = scmp.lt.s32.totalorder %s19, 0
      %s186 = scalar_select %p185, %s19, 0
      %s187 = smul.addr %s184, 4
      %s188 = sadd.s32 %s186, %s187
      %s189 = smul.addr %s188, 8
      %s190 = scalar_lea.vmem %s3, %s189
      %v192 = vld [vmem:[%s182] sm:$0xf]
      %v193 = vld [vmem:[%s182 + $0x8] sm:$0xf]
      %v194 = vld [vmem:[%s182] sm:$0xff]
      %v195 = vld [vmem:[%s182 + $0x8] sm:$0xff]
      %v198 = vunpack.c.l.b16 %v192
      %v199 = vunpack.c.l.b16 %v193
      %v200 = vpack.c.b16 %v199, %v198
      %v204 = vunpack.c.l.b16 %v194
      %v205 = vunpack.c.h.b16 %v194
      %v206 = vunpack.c.l.b16 %v195
      %v207 = vunpack.c.h.b16 %v195
      %v208 = vpack.c.b16 %v206, %v204
      %v209 = vpack.c.b16 %v207, %v205
      %210 = vrot.lane.b32.xlu0 %v208, 127
      %v211 = vpop.permute.xlu0 %210
      %212 = vrot.lane.b32.xlu0 %v209, 127
      %v213 = vpop.permute.xlu0 %212
      %vm214 = vcmask 1039360
      %v215 = vsel %vm214, %v211, %v213
      %217 = vrot.lane.b32.xlu0 %v208, 126
      %v218 = vpop.permute.xlu0 %217
      %219 = vrot.lane.b32.xlu0 %v209, 126
      %v220 = vpop.permute.xlu0 %219
      %vm221 = vcmask 1031168
      %v222 = vsel %vm221, %v218, %v220
      %224 = vrot.lane.b32.xlu0 %v208, 118
      %v225 = vpop.permute.xlu0 %224
      %226 = vrot.lane.b32.xlu0 %v209, 118
      %v227 = vpop.permute.xlu0 %226
      %vm228 = vcmask 965632
      %v229 = vsel %vm228, %v225, %v227
      %231 = vrot.lane.b32.xlu0 %v208, 117
      %v232 = vpop.permute.xlu0 %231
      %233 = vrot.lane.b32.xlu0 %v209, 117
      %v234 = vpop.permute.xlu0 %233
      %vm235 = vcmask 957440
      %v236 = vsel %vm235, %v232, %v234
      %238 = vrot.lane.b32.xlu0 %v208, 116
      %v239 = vpop.permute.xlu0 %238
      %240 = vrot.lane.b32.xlu0 %v209, 116
      %v241 = vpop.permute.xlu0 %240
      %vm242 = vcmask 949248
      %v243 = vsel %vm242, %v239, %v241
      %245 = vrot.lane.b32.xlu0 %v208, 108
      %v246 = vpop.permute.xlu0 %245
      %247 = vrot.lane.b32.xlu0 %v209, 108
      %v248 = vpop.permute.xlu0 %247
      %vm249 = vcmask 883712
      %v250 = vsel %vm249, %v246, %v248
      %252 = vrot.lane.b32.xlu0 %v208, 107
      %v253 = vpop.permute.xlu0 %252
      %254 = vrot.lane.b32.xlu0 %v209, 107
      %v255 = vpop.permute.xlu0 %254
      %vm256 = vcmask 875520
      %v257 = vsel %vm256, %v253, %v255
      %259 = vrot.lane.b32.xlu0 %v208, 106
      %v260 = vpop.permute.xlu0 %259
      %261 = vrot.lane.b32.xlu0 %v209, 106
      %v262 = vpop.permute.xlu0 %261
      %vm263 = vcmask 867328
      %v264 = vsel %vm263, %v260, %v262
      %v266 = vld [vmem:[%s1] sm:$0xff]
      %v267 = vld [vmem:[%s1 + $0x8] sm:$0xff]
      %v268 = vld [vmem:[%s1 + $0x10] sm:$0xff]
      %v269 = vld [vmem:[%s1 + $0x18] sm:$0xff]
      %v270 = vld [vmem:[%s2] sm:$0xff]
      %v271 = vld [vmem:[%s2 + $0x8] sm:$0xff]
      %v272 = vld [vmem:[%s2 + $0x10] sm:$0xff]
      %v273 = vld [vmem:[%s2 + $0x18] sm:$0xff]
      %275 = vset.pattern.permute.xlu0 0
      %276 = vperm.xlu0 %275, %v270
      %v277 = vpop.permute.xlu0 %276
      %280 = vset.pattern.permute.xlu0 0
      %281 = vperm.xlu0 %280, %v271
      %v282 = vpop.permute.xlu0 %281
      %285 = vset.pattern.permute.xlu0 0
      %286 = vperm.xlu0 %285, %v272
      %v287 = vpop.permute.xlu0 %286
      %290 = vset.pattern.permute.xlu0 0
      %291 = vperm.xlu0 %290, %v273
      %v292 = vpop.permute.xlu0 %291
      %v298 = vunpack.c.l.b16 %v266
      %v299 = vunpack.c.h.b16 %v266
      %v300 = vunpack.c.l.b16 %v267
      %v301 = vunpack.c.h.b16 %v267
      %v302 = vunpack.c.l.b16 %v268
      %v303 = vunpack.c.h.b16 %v268
      %v304 = vunpack.c.l.b16 %v269
      %v305 = vunpack.c.h.b16 %v269
      %v306 = vpack.c.b16 %v300, %v298
      %v307 = vpack.c.b16 %v301, %v299
      %v308 = vpack.c.b16 %v304, %v302
      %v309 = vpack.c.b16 %v305, %v303
      %vm312 = vcmask 130048
      %v314 = vsel %vm312, %v307, 0
      %v317 = vsel %vm312, %v309, 0
      %319 = vmatprep.subr.bf16.mxu0 0
      %320 = vmatpush1.bf16.msra.mxu0 %v257
      %321 = vmatprep.subr.bf16.mxu0 0
      %322 = vmatpush1.bf16.msra.mxu0 %v250
      %323 = vmatprep.subr.bf16.mxu0 0
      %324 = vmatpush1.bf16.msra.mxu0 %v243
      %325 = vmatprep.subr.bf16.mxu0 0
      %326 = vmatpush1.bf16.msra.mxu0 %v236
      %327 = vmatprep.subr.bf16.mxu0 0
      %328 = vmatpush1.bf16.msra.mxu0 %v229
      %329 = vmatprep.subr.bf16.mxu0 0
      %330 = vmatpush1.bf16.msra.mxu0 %v222
      %331 = vmatprep.subr.bf16.mxu0 0
      %332 = vmatpush1.bf16.msra.mxu0 %v215
      %333 = vmatprep.subr.bf16.mxu0 0
      %334 = vmatpush1.bf16.msra.mxu0 %v200
      %335 = vmatprep.subr.bf16.mxu0 0
      %336 = vmatpush2.bf16.msra.mxu0 0
      %337 = vmatprep.subr.bf16.mxu0 0
      %338 = vmatpush2.bf16.msra.mxu0 0
      %339 = vmatprep.subr.bf16.mxu0 0
      %340 = vmatpush2.bf16.msra.mxu0 0
      %341 = vmatprep.subr.bf16.mxu0 0
      %342 = vmatpush2.bf16.msra.mxu0 0
      %343 = vmatprep.subr.bf16.mxu0 0
      %344 = vmatpush2.bf16.msra.mxu0 0
      %345 = vmatprep.subr.bf16.mxu0 0
      %346 = vmatpush2.bf16.msra.mxu0 0
      %347 = vmatprep.subr.bf16.mxu0 0
      %348 = vmatpush2.bf16.msra.mxu0 0
      %349 = vmatprep.subr.bf16.mxu0 0
      %350 = vmatpush2.bf16.msra.mxu0 %v264
      %351 = vmatprep.mubr.bf16.mxu0 %v314
      %352 = vmatmul.mubr.bf16.gmra.mxu0 %v306
      %v353 = vpop.f32.mrf.mxu0
      %v354 = vadd.f32 %v277, %v353
      %v355 = vpop.f32.mrf.mxu0
      %v356 = vpop.f32.mrf.mxu0
      %v357 = vadd.f32 %v282, %v356
      %v358 = vpop.f32.mrf.mxu0
      %359 = vmatprep.mubr.bf16.mxu0 %v317
      %360 = vmatmul.mubr.bf16.gmra.mxu0 %v308
      %v361 = vpop.f32.mrf.mxu0
      %v362 = vadd.f32 %v287, %v361
      %v363 = vpop.f32.mrf.mxu0
      %v364 = vpop.f32.mrf.mxu0
      %v365 = vadd.f32 %v292, %v364
      %v366 = vpop.f32.mrf.mxu0
      %367 = vdwg.mxu0
      %368 = vst [vmem:[%s190] sm:$0xff] %v354
      %369 = vst [vmem:[%s190 + $0x8] sm:$0xff] %v357
      %370 = vst [vmem:[%s190 + $0x10] sm:$0xff] %v362
      %371 = vst [vmem:[%s190 + $0x18] sm:$0xff] %v365
      %p372 = scmp.lt.s32.totalorder %s18, 1
      %s373 = scalar_select %p372, %s18, 1
      %p374 = scmp.lt.s32.totalorder %s19, 0
      %s375 = scalar_select %p374, %s19, 0
      %s376 = smul.addr %s373, 4
      %s377 = sadd.s32 %s375, %s376
      %s378 = smul.addr %s377, 8
      %s379 = scalar_lea.vmem %s3, %s378
      // Predicated region
      $region33: #{enhanced_climate_unet.25} parent=31 // pred_check
        %p380 = pneg %p114
      $region34: #{enhanced_climate_unet.25} parent=31 // pred_check_branch
        %382 = sbr.rel (%p380) target = $region36
      $region35: #{enhanced_climate_unet.25} parent=31 // pred_region
        _
      $region36: #{enhanced_climate_unet.25} parent=31 // pred_fallthru
        _
    $region32: #{enhanced_climate_unet.25} parent=5 // pred_fallthru
      _
    %p383 = scmp.le.s32.totalorder 2, %s9
    // Predicated region
    $region37: #{enhanced_climate_unet.25} parent=5 // pred_check
      %p384 = pneg %p383
    $region38: #{enhanced_climate_unet.25} parent=5 // pred_check_branch
      %386 = sbr.rel (%p384) target = $region40
    $region39: #{enhanced_climate_unet.25} parent=5 // pred_region
      %s387 = ssub.s32 %s9, 2
      // Predicated region
      $region41: #{enhanced_climate_unet.25} parent=39 // pred_check
        %p388 = pneg %p120
      $region42: #{enhanced_climate_unet.25} parent=39 // pred_check_branch
        %390 = sbr.rel (%p388) target = $region44
      $region43: #{enhanced_climate_unet.25} parent=39 // pred_region
        %p391 = scmp.lt.s32.totalorder %s20, 1
        %s392 = scalar_select %p391, %s20, 1
        %p393 = scmp.lt.s32.totalorder %s21, 0
        %s394 = scalar_select %p393, %s21, 0
        %s395 = smul.addr %s392, 4
        %s396 = sadd.s32 %s394, %s395
        %s397 = smul.addr %s396, 8
        %s398 = scalar_lea.vmem %s3, %s397
      $region44: #{enhanced_climate_unet.25} parent=39 // pred_fallthru
        _
    $region40: #{enhanced_climate_unet.25} parent=5 // pred_fallthru
      _
  $region6: #{enhanced_climate_unet.25} parent=0 // loop_footer
    %s13 = sadd.s32 1, %s9
  $region7: #{enhanced_climate_unet.25} parent=0 // loop_footer_branch
    %8 = sbr.rel target = $region3
  $region8: #{enhanced_climate_unet.25} parent=0 // loop_exit
    _

// kernel: enhanced_climate_unet.26
$region0: #{enhanced_climate_unet.26}
  #allocation0 [shape = 'u32[]', space=smem, size = 0x4, offset = 0x4, fixed_abs, tag = 'smem constant byte address 0x4 - core index']
  #allocation1 [shape = 'u32[144,128]{1,0:T(1,128)}', space=vmem, size = 0x12000, scoped, tag = 'internal scratch']
  %s0 = inlined_call_operand.vmem [shape: bf16[2,32,150], index: 0, kind: input, shape index: {}]
  %s1 = inlined_call_operand.vmem [shape: bf16[32,288], index: 1, kind: input, shape index: {}]
  %s2 = inlined_call_operand.vmem [shape: f32[32,1], index: 2, kind: input, shape index: {}]
  %s3 = inlined_call_operand.vmem [shape: f32[2,32,128], index: 3, kind: output, shape index: {}]
  %s4 = sld [smem:[#allocation0]]
  $region45: #{enhanced_climate_unet.26} parent=0
    _
  %s6 = ssub.s32 1, %s4
  %s7 = scalar_select 0, %s6, %s4
  loop: start=0, step=1, limit=4
  $region2: #{enhanced_climate_unet.26} parent=0 // loop_pre_header
    _
  $region3: #{enhanced_climate_unet.26} parent=0 // loop_header
    %s9 = sphi 0, %s13
    %p10 = scmp.ge.s32.totalorder %s9, 4
    %s16 = sphi 0, %s28
    %s17 = sphi 0, %s24
    %s18 = sphi 0, %s16
    %s19 = sphi 0, %s17
    %s20 = sphi 0, %s18
    %s21 = sphi 0, %s19
    %s31 = sphi 0, %s33
    %s34 = sphi 0, %s31
    %s35 = sphi 0, %s34
    %s51 = sphi 0, %s35
    %s55 = sphi 0, %s55
    %s57 = sphi 0, %s55
    %s58 = sphi 0, %s57
    %s72 = sphi 0, %s58
    %s76 = sphi 0, %s76
    %s78 = sphi 0, %s76
    %s79 = sphi 0, %s78
    %s93 = sphi 0, %s79
    %s101 = sphi 0, %s103
    %s104 = sphi 0, %s101
    %s105 = sphi 0, %s104
    %s121 = sphi 0, %s105
  $region4: #{enhanced_climate_unet.26} parent=0 // loop_header_branch
    %12 = sbr.rel (%p10) target = $region8
  $region5: #{enhanced_climate_unet.26} parent=0 // loop_body
    %s14 = ssub.s32 %s9, 1
    %s15 = ssub.s32 %s9, 2
    %s22 = sadd.s32 1, %s17
    %p23 = scmp.ge.s32.totalorder %s22, 1
    %s24 = scalar_select %p23, 0, %s22
    %s25 = sadd.s32 1, %s16
    %s26 = scalar_select %p23, %s25, %s16
    %p27 = scmp.ge.s32.totalorder %s26, 2
    %s28 = scalar_select %p27, 0, %s26
    %s29 = ssub.s32 %s16, %s28
    %p30 = scmp.eq.s32.totalorder %s29, 0
    %s32 = sadd.s32 %s31, 1
    %s33 = scalar_select %p30, %s31, %s32
    %p36 = pneg %p30
    %p37 = scmp.eq.s32.totalorder %s9, 1
    %p38 = por %p36, %p37
    %p39 = scmp.ne.s32.totalorder %s31, %s34
    %p40 = scmp.eq.s32.totalorder %s9, 0
    %p41 = por %p39, %p40
    %p42 = scmp.ne.s32.totalorder %s31, %s34
    %p43 = scmp.eq.s32.totalorder %s14, 1
    %p44 = por %p42, %p43
    %p45 = scmp.ne.s32.totalorder %s34, %s35
    %p46 = scmp.eq.s32.totalorder %s14, 0
    %p47 = por %p45, %p46
    %p48 = scmp.ne.s32.totalorder %s34, %s35
    %p49 = scmp.eq.s32.totalorder %s15, 1
    %p50 = por %p48, %p49
    %p52 = scmp.ne.s32.totalorder %s35, %s51
    %p53 = scmp.eq.s32.totalorder %s15, 0
    %p54 = por %p52, %p53
    %s56 = sadd.s32 %s55, 1
    %p59 = scmp.eq.s32.totalorder %s9, 1
    %p60 = scmp.ne.s32.totalorder %s55, %s57
    %p61 = scmp.eq.s32.totalorder %s9, 0
    %p62 = por %p60, %p61
    %p63 = scmp.ne.s32.totalorder %s55, %s57
    %p64 = scmp.eq.s32.totalorder %s14, 1
    %p65 = por %p63, %p64
    %p66 = scmp.ne.s32.totalorder %s57, %s58
    %p67 = scmp.eq.s32.totalorder %s14, 0
    %p68 = por %p66, %p67
    %p69 = scmp.ne.s32.totalorder %s57, %s58
    %p70 = scmp.eq.s32.totalorder %s15, 1
    %p71 = por %p69, %p70
    %p73 = scmp.ne.s32.totalorder %s58, %s72
    %p74 = scmp.eq.s32.totalorder %s15, 0
    %p75 = por %p73, %p74
    %s77 = sadd.s32 %s76, 1
    %p80 = scmp.eq.s32.totalorder %s9, 1
    %p81 = scmp.ne.s32.totalorder %s76, %s78
    %p82 = scmp.eq.s32.totalorder %s9, 0
    %p83 = por %p81, %p82
    %p84 = scmp.ne.s32.totalorder %s76, %s78
    %p85 = scmp.eq.s32.totalorder %s14, 1
    %p86 = por %p84, %p85
    %p87 = scmp.ne.s32.totalorder %s78, %s79
    %p88 = scmp.eq.s32.totalorder %s14, 0
    %p89 = por %p87, %p88
    %p90 = scmp.ne.s32.totalorder %s78, %s79
    %p91 = scmp.eq.s32.totalorder %s15, 1
    %p92 = por %p90, %p91
    %p94 = scmp.ne.s32.totalorder %s79, %s93
    %p95 = scmp.eq.s32.totalorder %s15, 0
    %p96 = por %p94, %p95
    %s97 = ssub.s32 %s16, %s28
    %s98 = ssub.s32 %s17, %s24
    %s99 = sor.u32 %s97, %s98
    %p100 = scmp.eq.s32.totalorder %s99, 0
    %s102 = sadd.s32 %s101, 1
    %s103 = scalar_select %p100, %s101, %s102
    %p106 = pneg %p100
    %p107 = scmp.eq.s32.totalorder %s9, 1
    %p108 = por %p106, %p107
    %p109 = scmp.ne.s32.totalorder %s101, %s104
    %p110 = scmp.eq.s32.totalorder %s9, 0
    %p111 = por %p109, %p110
    %p112 = scmp.ne.s32.totalorder %s101, %s104
    %p113 = scmp.eq.s32.totalorder %s14, 1
    %p114 = por %p112, %p113
    %p115 = scmp.ne.s32.totalorder %s104, %s105
    %p116 = scmp.eq.s32.totalorder %s14, 0
    %p117 = por %p115, %p116
    %p118 = scmp.ne.s32.totalorder %s104, %s105
    %p119 = scmp.eq.s32.totalorder %s15, 1
    %p120 = por %p118, %p119
    %p122 = scmp.ne.s32.totalorder %s105, %s121
    %p123 = scmp.eq.s32.totalorder %s15, 0
    %p124 = por %p122, %p123
    %p125 = scmp.le.s32.totalorder 1, %s9
    %p126 = scmp.lt.s32.totalorder %s9, 3
    %p127 = pnand %p125, %p126
    %p128 = pneg %p127
    // Predicated region
    $region9: #{enhanced_climate_unet.26} parent=5 // pred_check
      _
    $region10: #{enhanced_climate_unet.26} parent=5 // pred_check_branch
      %130 = sbr.rel (%p127) target = $region12
    $region11: #{enhanced_climate_unet.26} parent=5 // pred_region
      %s131 = ssub.s32 %s9, 1
      // Predicated region
      $region13: #{enhanced_climate_unet.26} parent=11 // pred_check
        %p132 = pneg %p68
      $region14: #{enhanced_climate_unet.26} parent=11 // pred_check_branch
        %134 = sbr.rel (%p132) target = $region16
      $region15: #{enhanced_climate_unet.26} parent=11 // pred_region
        _
      $region16: #{enhanced_climate_unet.26} parent=11 // pred_fallthru
        _
      // Predicated region
      $region17: #{enhanced_climate_unet.26} parent=11 // pred_check
        %p135 = pneg %p89
      $region18: #{enhanced_climate_unet.26} parent=11 // pred_check_branch
        %137 = sbr.rel (%p135) target = $region20
      $region19: #{enhanced_climate_unet.26} parent=11 // pred_region
        _
      $region20: #{enhanced_climate_unet.26} parent=11 // pred_fallthru
        _
    $region12: #{enhanced_climate_unet.26} parent=5 // pred_fallthru
      _
    %p138 = scmp.lt.s32.totalorder %s9, 2
    // Predicated region
    $region21: #{enhanced_climate_unet.26} parent=5 // pred_check
      %p139 = pneg %p138
    $region22: #{enhanced_climate_unet.26} parent=5 // pred_check_branch
      %141 = sbr.rel (%p139) target = $region24
    $region23: #{enhanced_climate_unet.26} parent=5 // pred_region
      // Predicated region
      $region25: #{enhanced_climate_unet.26} parent=23 // pred_check
        %p142 = pneg %p41
      $region26: #{enhanced_climate_unet.26} parent=23 // pred_check_branch
        %144 = sbr.rel (%p142) target = $region28
      $region27: #{enhanced_climate_unet.26} parent=23 // pred_region
        %p145 = scmp.lt.s32.totalorder %s16, 1
        %s146 = scalar_select %p145, %s16, 1
        %s147 = smul.addr %s146, 8
        %s148 = smul.addr %s147, 4
        %s149 = scalar_lea.vmem %s0, %s148
      $region28: #{enhanced_climate_unet.26} parent=23 // pred_fallthru
        _
    $region24: #{enhanced_climate_unet.26} parent=5 // pred_fallthru
      _
    %p150 = scmp.le.s32.totalorder 1, %s9
    %p151 = scmp.lt.s32.totalorder %s9, 3
    %p152 = pnand %p150, %p151
    %p153 = pneg %p152
    // Predicated region
    $region29: #{enhanced_climate_unet.26} parent=5 // pred_check
      _
    $region30: #{enhanced_climate_unet.26} parent=5 // pred_check_branch
      %155 = sbr.rel (%p152) target = $region32
    $region31: #{enhanced_climate_unet.26} parent=5 // pred_region
      %s156 = ssub.s32 %s9, 1
      %p157 = scmp.lt.s32.totalorder %s18, 1
      %s158 = scalar_select %p157, %s18, 1
      %s159 = smul.addr %s158, 8
      %s160 = smul.addr %s159, 4
      %s161 = scalar_lea.vmem %s0, %s160
      %p162 = pneg %p47
      %p163 = pneg %p44
      %p164 = pneg %p68
      %p165 = pneg %p65
      %p166 = pneg %p89
      %p167 = pneg %p86
      %p168 = pneg %p117
      %p169 = pneg %p114
      %p170 = scmp.lt.s32.totalorder %s18, 1
      %s171 = scalar_select %p170, %s18, 1
      %p172 = scmp.lt.s32.totalorder %s19, 0
      %s173 = scalar_select %p172, %s19, 0
      %s174 = smul.addr %s171, 4
      %s175 = sadd.s32 %s173, %s174
      %s176 = smul.addr %s175, 8
      %s177 = scalar_lea.vmem %s3, %s176
      %p178 = scmp.lt.s32.totalorder %s18, 1
      %s179 = scalar_select %p178, %s18, 1
      %s180 = smul.addr %s179, 8
      %s181 = smul.addr %s180, 4
      %s182 = scalar_lea.vmem %s0, %s181
      %p183 = scmp.lt.s32.totalorder %s18, 1
      %s184 = scalar_select %p183, %s18, 1
      %p185 = scmp.lt.s32.totalorder %s19, 0
      %s186 = scalar_select %p185, %s19, 0
      %s187 = smul.addr %s184, 4
      %s188 = sadd.s32 %s186, %s187
      %s189 = smul.addr %s188, 8
      %s190 = scalar_lea.vmem %s3, %s189
      %v192 = vld [vmem:[%s182] sm:$0xf]
      %v193 = vld [vmem:[%s182 + $0x8] sm:$0xf]
      %v194 = vld [vmem:[%s182 + $0x10] sm:$0xf]
      %v195 = vld [vmem:[%s182 + $0x18] sm:$0xf]
      %v196 = vld [vmem:[%s182] sm:$0xff]
      %v197 = vld [vmem:[%s182 + $0x8] sm:$0xff]
      %v198 = vld [vmem:[%s182 + $0x10] sm:$0xff]
      %v199 = vld [vmem:[%s182 + $0x18] sm:$0xff]
      %v204 = vunpack.c.l.b16 %v192
      %v205 = vunpack.c.l.b16 %v193
      %v206 = vunpack.c.l.b16 %v194
      %v207 = vunpack.c.l.b16 %v195
      %v208 = vpack.c.b16 %v205, %v204
      %v209 = vpack.c.b16 %v207, %v206
      %v216 = vunpack.c.l.b16 %v196
      %v217 = vunpack.c.h.b16 %v196
      %v218 = vunpack.c.l.b16 %v197
      %v219 = vunpack.c.h.b16 %v197
      %v220 = vunpack.c.l.b16 %v198
      %v221 = vunpack.c.h.b16 %v198
      %v222 = vunpack.c.l.b16 %v199
      %v223 = vunpack.c.h.b16 %v199
      %v224 = vpack.c.b16 %v218, %v216
      %v225 = vpack.c.b16 %v219, %v217
      %v226 = vpack.c.b16 %v222, %v220
      %v227 = vpack.c.b16 %v223, %v221
      %228 = vrot.lane.b32.xlu0 %v224, 127
      %v229 = vpop.permute.xlu0 %228
      %230 = vrot.lane.b32.xlu0 %v225, 127
      %v231 = vpop.permute.xlu0 %230
      %232 = vrot.lane.b32.xlu0 %v226, 127
      %v233 = vpop.permute.xlu0 %232
      %234 = vrot.lane.b32.xlu0 %v227, 127
      %v235 = vpop.permute.xlu0 %234
      %vm236 = vcmask 1039360
      %v237 = vsel %vm236, %v229, %v231
      %v238 = vsel %vm236, %v233, %v235
      %241 = vrot.lane.b32.xlu0 %v224, 126
      %v242 = vpop.permute.xlu0 %241
      %243 = vrot.lane.b32.xlu0 %v225, 126
      %v244 = vpop.permute.xlu0 %243
      %245 = vrot.lane.b32.xlu0 %v226, 126
      %v246 = vpop.permute.xlu0 %245
      %247 = vrot.lane.b32.xlu0 %v227, 126
      %v248 = vpop.permute.xlu0 %247
      %vm249 = vcmask 1031168
      %v250 = vsel %vm249, %v242, %v244
      %v251 = vsel %vm249, %v246, %v248
      %254 = vrot.lane.b32.xlu0 %v224, 118
      %v255 = vpop.permute.xlu0 %254
      %256 = vrot.lane.b32.xlu0 %v225, 118
      %v257 = vpop.permute.xlu0 %256
      %258 = vrot.lane.b32.xlu0 %v226, 118
      %v259 = vpop.permute.xlu0 %258
      %260 = vrot.lane.b32.xlu0 %v227, 118
      %v261 = vpop.permute.xlu0 %260
      %vm262 = vcmask 965632
      %v263 = vsel %vm262, %v255, %v257
      %v264 = vsel %vm262, %v259, %v261
      %267 = vrot.lane.b32.xlu0 %v224, 117
      %v268 = vpop.permute.xlu0 %267
      %269 = vrot.lane.b32.xlu0 %v225, 117
      %v270 = vpop.permute.xlu0 %269
      %271 = vrot.lane.b32.xlu0 %v226, 117
      %v272 = vpop.permute.xlu0 %271
      %273 = vrot.lane.b32.xlu0 %v227, 117
      %v274 = vpop.permute.xlu0 %273
      %vm275 = vcmask 957440
      %v276 = vsel %vm275, %v268, %v270
      %v277 = vsel %vm275, %v272, %v274
      %280 = vrot.lane.b32.xlu0 %v224, 116
      %v281 = vpop.permute.xlu0 %280
      %282 = vrot.lane.b32.xlu0 %v225, 116
      %v283 = vpop.permute.xlu0 %282
      %284 = vrot.lane.b32.xlu0 %v226, 116
      %v285 = vpop.permute.xlu0 %284
      %286 = vrot.lane.b32.xlu0 %v227, 116
      %v287 = vpop.permute.xlu0 %286
      %vm288 = vcmask 949248
      %v289 = vsel %vm288, %v281, %v283
      %v290 = vsel %vm288, %v285, %v287
      %293 = vrot.lane.b32.xlu0 %v224, 108
      %v294 = vpop.permute.xlu0 %293
      %295 = vrot.lane.b32.xlu0 %v225, 108
      %v296 = vpop.permute.xlu0 %295
      %297 = vrot.lane.b32.xlu0 %v226, 108
      %v298 = vpop.permute.xlu0 %297
      %299 = vrot.lane.b32.xlu0 %v227, 108
      %v300 = vpop.permute.xlu0 %299
      %vm301 = vcmask 883712
      %v302 = vsel %vm301, %v294, %v296
      %v303 = vsel %vm301, %v298, %v300
      %306 = vrot.lane.b32.xlu0 %v224, 107
      %v307 = vpop.permute.xlu0 %306
      %308 = vrot.lane.b32.xlu0 %v225, 107
      %v309 = vpop.permute.xlu0 %308
      %310 = vrot.lane.b32.xlu0 %v226, 107
      %v311 = vpop.permute.xlu0 %310
      %312 = vrot.lane.b32.xlu0 %v227, 107
      %v313 = vpop.permute.xlu0 %312
      %vm314 = vcmask 875520
      %v315 = vsel %vm314, %v307, %v309
      %v316 = vsel %vm314, %v311, %v313
      %319 = vrot.lane.b32.xlu0 %v224, 106
      %v320 = vpop.permute.xlu0 %319
      %321 = vrot.lane.b32.xlu0 %v225, 106
      %v322 = vpop.permute.xlu0 %321
      %323 = vrot.lane.b32.xlu0 %v226, 106
      %v324 = vpop.permute.xlu0 %323
      %325 = vrot.lane.b32.xlu0 %v227, 106
      %v326 = vpop.permute.xlu0 %325
      %vm327 = vcmask 867328
      %v328 = vsel %vm327, %v320, %v322
      %v329 = vsel %vm327, %v324, %v326
      %v332 = vld [vmem:[%s1] sm:$0xff]
      %v333 = vld [vmem:[%s1 + $0x8] sm:$0xf]
      %v334 = vld [vmem:[%s1 + $0xc] sm:$0xff]
      %v335 = vld [vmem:[%s1 + $0x14] sm:$0xf]
      %v336 = vld [vmem:[%s1 + $0x18] sm:$0xff]
      %v337 = vld [vmem:[%s1 + $0x20] sm:$0xf]
      %v338 = vld [vmem:[%s1 + $0x24] sm:$0xff]
      %v339 = vld [vmem:[%s1 + $0x2c] sm:$0xf]
      %v340 = vld [vmem:[%s2] sm:$0xff]
      %v341 = vld [vmem:[%s2 + $0x8] sm:$0xff]
      %v342 = vld [vmem:[%s2 + $0x10] sm:$0xff]
      %v343 = vld [vmem:[%s2 + $0x18] sm:$0xff]
      %345 = vset.pattern.permute.xlu0 0
      %346 = vperm.xlu0 %345, %v340
      %v347 = vpop.permute.xlu0 %346
      %350 = vset.pattern.permute.xlu0 0
      %351 = vperm.xlu0 %350, %v341
      %v352 = vpop.permute.xlu0 %351
      %355 = vset.pattern.permute.xlu0 0
      %356 = vperm.xlu0 %355, %v342
      %v357 = vpop.permute.xlu0 %356
      %360 = vset.pattern.permute.xlu0 0
      %361 = vperm.xlu0 %360, %v343
      %v362 = vpop.permute.xlu0 %361
      %v372 = vunpack.c.l.b16 %v332
      %v373 = vunpack.c.h.b16 %v332
      %v374 = vunpack.c.l.b16 %v333
      %v375 = vunpack.c.l.b16 %v334
      %v376 = vunpack.c.h.b16 %v334
      %v377 = vunpack.c.l.b16 %v335
      %v378 = vunpack.c.l.b16 %v336
      %v379 = vunpack.c.h.b16 %v336
      %v380 = vunpack.c.l.b16 %v337
      %v381 = vunpack.c.l.b16 %v338
      %v382 = vunpack.c.h.b16 %v338
      %v383 = vunpack.c.l.b16 %v339
      %v384 = vpack.c.b16 %v375, %v372
      %v385 = vpack.c.b16 %v376, %v373
      %v386 = vpack.c.b16 %v377, %v374
      %v387 = vpack.c.b16 %v381, %v378
      %v388 = vpack.c.b16 %v382, %v379
      %v389 = vpack.c.b16 %v383, %v380
      %vm394 = vcmask 261120
      %v396 = vsel %vm394, %v386, 0
      %v399 = vsel %vm394, %v389, 0
      %401 = vmatprep.subr.bf16.mxu0 0
      %402 = vmatpush1.bf16.msra.mxu0 %v264
      %403 = vmatprep.subr.bf16.mxu0 0
      %404 = vmatpush1.bf16.msra.mxu0 %v263
      %405 = vmatprep.subr.bf16.mxu0 0
      %406 = vmatpush1.bf16.msra.mxu0 %v251
      %407 = vmatprep.subr.bf16.mxu0 0
      %408 = vmatpush1.bf16.msra.mxu0 %v250
      %409 = vmatprep.subr.bf16.mxu0 0
      %410 = vmatpush1.bf16.msra.mxu0 %v238
      %411 = vmatprep.subr.bf16.mxu0 0
      %412 = vmatpush1.bf16.msra.mxu0 %v237
      %413 = vmatprep.subr.bf16.mxu0 0
      %414 = vmatpush1.bf16.msra.mxu0 %v209
      %415 = vmatprep.subr.bf16.mxu0 0
      %416 = vmatpush1.bf16.msra.mxu0 %v208
      %417 = vmatprep.subr.bf16.mxu0 0
      %418 = vmatpush2.bf16.msra.mxu0 %v316
      %419 = vmatprep.subr.bf16.mxu0 0
      %420 = vmatpush2.bf16.msra.mxu0 %v315
      %421 = vmatprep.subr.bf16.mxu0 0
      %422 = vmatpush2.bf16.msra.mxu0 %v303
      %423 = vmatprep.subr.bf16.mxu0 0
      %424 = vmatpush2.bf16.msra.mxu0 %v302
      %425 = vmatprep.subr.bf16.mxu0 0
      %426 = vmatpush2.bf16.msra.mxu0 %v290
      %427 = vmatprep.subr.bf16.mxu0 0
      %428 = vmatpush2.bf16.msra.mxu0 %v289
      %429 = vmatprep.subr.bf16.mxu0 0
      %430 = vmatpush2.bf16.msra.mxu0 %v277
      %431 = vmatprep.subr.bf16.mxu0 0
      %432 = vmatpush2.bf16.msra.mxu0 %v276
      %433 = vmatprep.mubr.bf16.mxu0 %v385
      %434 = vmatmul.mubr.bf16.gmra.mxu0 %v384
      %v435 = vpop.f32.mrf.mxu0
      %v436 = vadd.f32 %v347, %v435
      %v437 = vpop.f32.mrf.mxu0
      %v438 = vpop.f32.mrf.mxu0
      %v439 = vadd.f32 %v352, %v438
      %v440 = vpop.f32.mrf.mxu0
      %441 = vmatprep.mubr.bf16.mxu0 %v388
      %442 = vmatmul.mubr.bf16.gmra.mxu0 %v387
      %v443 = vpop.f32.mrf.mxu0
      %v444 = vadd.f32 %v357, %v443
      %v445 = vpop.f32.mrf.mxu0
      %v446 = vpop.f32.mrf.mxu0
      %v447 = vadd.f32 %v362, %v446
      %v448 = vpop.f32.mrf.mxu0
      %449 = vdwg.mxu0
      %450 = vmatprep.subr.bf16.mxu0 0
      %451 = vmatpush1.bf16.msra.mxu0 0
      %452 = vmatprep.subr.bf16.mxu0 0
      %453 = vmatpush1.bf16.msra.mxu0 0
      %454 = vmatprep.subr.bf16.mxu0 0
      %455 = vmatpush1.bf16.msra.mxu0 0
      %456 = vmatprep.subr.bf16.mxu0 0
      %457 = vmatpush1.bf16.msra.mxu0 0
      %458 = vmatprep.subr.bf16.mxu0 0
      %459 = vmatpush1.bf16.msra.mxu0 0
      %460 = vmatprep.subr.bf16.mxu0 0
      %461 = vmatpush1.bf16.msra.mxu0 0
      %462 = vmatprep.subr.bf16.mxu0 0
      %463 = vmatpush1.bf16.msra.mxu0 %v329
      %464 = vmatprep.subr.bf16.mxu0 0
      %465 = vmatpush1.bf16.msra.mxu0 %v328
      %466 = vmatprep.subr.bf16.mxu0 0
      %467 = vmatpush2.bf16.msra.mxu0 0
      %468 = vmatprep.subr.bf16.mxu0 0
      %469 = vmatpush2.bf16.msra.mxu0 0
      %470 = vmatprep.subr.bf16.mxu0 0
      %471 = vmatpush2.bf16.msra.mxu0 0
      %472 = vmatprep.subr.bf16.mxu0 0
      %473 = vmatpush2.bf16.msra.mxu0 0
      %474 = vmatprep.subr.bf16.mxu0 0
      %475 = vmatpush2.bf16.msra.mxu0 0
      %476 = vmatprep.subr.bf16.mxu0 0
      %477 = vmatpush2.bf16.msra.mxu0 0
      %478 = vmatprep.subr.bf16.mxu0 0
      %479 = vmatpush2.bf16.msra.mxu0 0
      %480 = vmatprep.subr.bf16.mxu0 0
      %481 = vmatpush2.bf16.msra.mxu0 0
      %482 = vmatprep.mubr.bf16.mxu0 0
      %483 = vmatmul.mubr.bf16.gmra.mxu0 %v396
      %v484 = vpop.f32.mrf.mxu0
      %v485 = vadd.f32 %v436, %v484
      %v486 = vpop.f32.mrf.mxu0
      %v487 = vpop.f32.mrf.mxu0
      %v488 = vadd.f32 %v439, %v487
      %v489 = vpop.f32.mrf.mxu0
      %490 = vmatprep.mubr.bf16.mxu0 0
      %491 = vmatmul.mubr.bf16.gmra.mxu0 %v399
      %v492 = vpop.f32.mrf.mxu0
      %v493 = vadd.f32 %v444, %v492
      %v494 = vpop.f32.mrf.mxu0
      %v495 = vpop.f32.mrf.mxu0
      %v496 = vadd.f32 %v447, %v495
      %v497 = vpop.f32.mrf.mxu0
      %498 = vdwg.mxu0
      %499 = vst [vmem:[%s190] sm:$0xff] %v485
      %500 = vst [vmem:[%s190 + $0x8] sm:$0xff] %v488
      %501 = vst [vmem:[%s190 + $0x10] sm:$0xff] %v493
      %502 = vst [vmem:[%s190 + $0x18] sm:$0xff] %v496
      %p503 = scmp.lt.s32.totalorder %s18, 1
      %s504 = scalar_select %p503, %s18, 1
      %p505 = scmp.lt.s32.totalorder %s19, 0
      %s506 = scalar_select %p505, %s19, 0
      %s507 = smul.addr %s504, 4
      %s508 = sadd.s32 %s506, %s507
      %s509 = smul.addr %s508, 8
      %s510 = scalar_lea.vmem %s3, %s509
      // Predicated region
      $region33: #{enhanced_climate_unet.26} parent=31 // pred_check
        %p511 = pneg %p114
      $region34: #{enhanced_climate_unet.26} parent=31 // pred_check_branch
        %513 = sbr.rel (%p511) target = $region36
      $region35: #{enhanced_climate_unet.26} parent=31 // pred_region
        _
      $region36: #{enhanced_climate_unet.26} parent=31 // pred_fallthru
        _
    $region32: #{enhanced_climate_unet.26} parent=5 // pred_fallthru
      _
    %p514 = scmp.le.s32.totalorder 2, %s9
    // Predicated region
    $region37: #{enhanced_climate_unet.26} parent=5 // pred_check
      %p515 = pneg %p514
    $region38: #{enhanced_climate_unet.26} parent=5 // pred_check_branch
      %517 = sbr.rel (%p515) target = $region40
    $region39: #{enhanced_climate_unet.26} parent=5 // pred_region
      %s518 = ssub.s32 %s9, 2
      // Predicated region
      $region41: #{enhanced_climate_unet.26} parent=39 // pred_check
        %p519 = pneg %p120
      $region42: #{enhanced_climate_unet.26} parent=39 // pred_check_branch
        %521 = sbr.rel (%p519) target = $region44
      $region43: #{enhanced_climate_unet.26} parent=39 // pred_region
        %p522 = scmp.lt.s32.totalorder %s20, 1
        %s523 = scalar_select %p522, %s20, 1
        %p524 = scmp.lt.s32.totalorder %s21, 0
        %s525 = scalar_select %p524, %s21, 0
        %s526 = smul.addr %s523, 4
        %s527 = sadd.s32 %s525, %s526
        %s528 = smul.addr %s527, 8
        %s529 = scalar_lea.vmem %s3, %s528
      $region44: #{enhanced_climate_unet.26} parent=39 // pred_fallthru
        _
    $region40: #{enhanced_climate_unet.26} parent=5 // pred_fallthru
      _
  $region6: #{enhanced_climate_unet.26} parent=0 // loop_footer
    %s13 = sadd.s32 1, %s9
  $region7: #{enhanced_climate_unet.26} parent=0 // loop_footer_branch
    %8 = sbr.rel target = $region3
  $region8: #{enhanced_climate_unet.26} parent=0 // loop_exit
    _

// kernel: enhanced_climate_unet.24
$region0: #{enhanced_climate_unet.24}
  #allocation0 [shape = 'u32[]', space=smem, size = 0x4, offset = 0x4, fixed_abs, tag = 'smem constant byte address 0x4 - core index']
  #allocation1 [shape = 'u32[144,128]{1,0:T(1,128)}', space=vmem, size = 0x12000, scoped, tag = 'internal scratch']
  %s0 = inlined_call_operand.vmem [shape: bf16[2,16,128], index: 0, kind: input, shape index: {}]
  %s1 = inlined_call_operand.vmem [shape: bf16[32,16], index: 1, kind: input, shape index: {}]
  %s2 = inlined_call_operand.vmem [shape: f32[32,1], index: 2, kind: input, shape index: {}]
  %s3 = inlined_call_operand.vmem [shape: f32[2,32,128], index: 3, kind: output, shape index: {}]
  %s4 = sld [smem:[#allocation0]]
  $region45: #{enhanced_climate_unet.24} parent=0
    _
  %s6 = ssub.s32 1, %s4
  %s7 = scalar_select 0, %s6, %s4
  loop: start=0, step=1, limit=4
  $region2: #{enhanced_climate_unet.24} parent=0 // loop_pre_header
    _
  $region3: #{enhanced_climate_unet.24} parent=0 // loop_header
    %s9 = sphi 0, %s13
    %p10 = scmp.ge.s32.totalorder %s9, 4
    %s16 = sphi 0, %s28
    %s17 = sphi 0, %s24
    %s18 = sphi 0, %s16
    %s19 = sphi 0, %s17
    %s20 = sphi 0, %s18
    %s21 = sphi 0, %s19
    %s31 = sphi 0, %s33
    %s34 = sphi 0, %s31
    %s35 = sphi 0, %s34
    %s51 = sphi 0, %s35
    %s55 = sphi 0, %s55
    %s57 = sphi 0, %s55
    %s58 = sphi 0, %s57
    %s72 = sphi 0, %s58
    %s76 = sphi 0, %s76
    %s78 = sphi 0, %s76
    %s79 = sphi 0, %s78
    %s93 = sphi 0, %s79
    %s101 = sphi 0, %s103
    %s104 = sphi 0, %s101
    %s105 = sphi 0, %s104
    %s121 = sphi 0, %s105
  $region4: #{enhanced_climate_unet.24} parent=0 // loop_header_branch
    %12 = sbr.rel (%p10) target = $region8
  $region5: #{enhanced_climate_unet.24} parent=0 // loop_body
    %s14 = ssub.s32 %s9, 1
    %s15 = ssub.s32 %s9, 2
    %s22 = sadd.s32 1, %s17
    %p23 = scmp.ge.s32.totalorder %s22, 1
    %s24 = scalar_select %p23, 0, %s22
    %s25 = sadd.s32 1, %s16
    %s26 = scalar_select %p23, %s25, %s16
    %p27 = scmp.ge.s32.totalorder %s26, 2
    %s28 = scalar_select %p27, 0, %s26
    %s29 = ssub.s32 %s16, %s28
    %p30 = scmp.eq.s32.totalorder %s29, 0
    %s32 = sadd.s32 %s31, 1
    %s33 = scalar_select %p30, %s31, %s32
    %p36 = pneg %p30
    %p37 = scmp.eq.s32.totalorder %s9, 1
    %p38 = por %p36, %p37
    %p39 = scmp.ne.s32.totalorder %s31, %s34
    %p40 = scmp.eq.s32.totalorder %s9, 0
    %p41 = por %p39, %p40
    %p42 = scmp.ne.s32.totalorder %s31, %s34
    %p43 = scmp.eq.s32.totalorder %s14, 1
    %p44 = por %p42, %p43
    %p45 = scmp.ne.s32.totalorder %s34, %s35
    %p46 = scmp.eq.s32.totalorder %s14, 0
    %p47 = por %p45, %p46
    %p48 = scmp.ne.s32.totalorder %s34, %s35
    %p49 = scmp.eq.s32.totalorder %s15, 1
    %p50 = por %p48, %p49
    %p52 = scmp.ne.s32.totalorder %s35, %s51
    %p53 = scmp.eq.s32.totalorder %s15, 0
    %p54 = por %p52, %p53
    %s56 = sadd.s32 %s55, 1
    %p59 = scmp.eq.s32.totalorder %s9, 1
    %p60 = scmp.ne.s32.totalorder %s55, %s57
    %p61 = scmp.eq.s32.totalorder %s9, 0
    %p62 = por %p60, %p61
    %p63 = scmp.ne.s32.totalorder %s55, %s57
    %p64 = scmp.eq.s32.totalorder %s14, 1
    %p65 = por %p63, %p64
    %p66 = scmp.ne.s32.totalorder %s57, %s58
    %p67 = scmp.eq.s32.totalorder %s14, 0
    %p68 = por %p66, %p67
    %p69 = scmp.ne.s32.totalorder %s57, %s58
    %p70 = scmp.eq.s32.totalorder %s15, 1
    %p71 = por %p69, %p70
    %p73 = scmp.ne.s32.totalorder %s58, %s72
    %p74 = scmp.eq.s32.totalorder %s15, 0
    %p75 = por %p73, %p74
    %s77 = sadd.s32 %s76, 1
    %p80 = scmp.eq.s32.totalorder %s9, 1
    %p81 = scmp.ne.s32.totalorder %s76, %s78
    %p82 = scmp.eq.s32.totalorder %s9, 0
    %p83 = por %p81, %p82
    %p84 = scmp.ne.s32.totalorder %s76, %s78
    %p85 = scmp.eq.s32.totalorder %s14, 1
    %p86 = por %p84, %p85
    %p87 = scmp.ne.s32.totalorder %s78, %s79
    %p88 = scmp.eq.s32.totalorder %s14, 0
    %p89 = por %p87, %p88
    %p90 = scmp.ne.s32.totalorder %s78, %s79
    %p91 = scmp.eq.s32.totalorder %s15, 1
    %p92 = por %p90, %p91
    %p94 = scmp.ne.s32.totalorder %s79, %s93
    %p95 = scmp.eq.s32.totalorder %s15, 0
    %p96 = por %p94, %p95
    %s97 = ssub.s32 %s16, %s28
    %s98 = ssub.s32 %s17, %s24
    %s99 = sor.u32 %s97, %s98
    %p100 = scmp.eq.s32.totalorder %s99, 0
    %s102 = sadd.s32 %s101, 1
    %s103 = scalar_select %p100, %s101, %s102
    %p106 = pneg %p100
    %p107 = scmp.eq.s32.totalorder %s9, 1
    %p108 = por %p106, %p107
    %p109 = scmp.ne.s32.totalorder %s101, %s104
    %p110 = scmp.eq.s32.totalorder %s9, 0
    %p111 = por %p109, %p110
    %p112 = scmp.ne.s32.totalorder %s101, %s104
    %p113 = scmp.eq.s32.totalorder %s14, 1
    %p114 = por %p112, %p113
    %p115 = scmp.ne.s32.totalorder %s104, %s105
    %p116 = scmp.eq.s32.totalorder %s14, 0
    %p117 = por %p115, %p116
    %p118 = scmp.ne.s32.totalorder %s104, %s105
    %p119 = scmp.eq.s32.totalorder %s15, 1
    %p120 = por %p118, %p119
    %p122 = scmp.ne.s32.totalorder %s105, %s121
    %p123 = scmp.eq.s32.totalorder %s15, 0
    %p124 = por %p122, %p123
    %p125 = scmp.le.s32.totalorder 1, %s9
    %p126 = scmp.lt.s32.totalorder %s9, 3
    %p127 = pnand %p125, %p126
    %p128 = pneg %p127
    // Predicated region
    $region9: #{enhanced_climate_unet.24} parent=5 // pred_check
      _
    $region10: #{enhanced_climate_unet.24} parent=5 // pred_check_branch
      %130 = sbr.rel (%p127) target = $region12
    $region11: #{enhanced_climate_unet.24} parent=5 // pred_region
      %s131 = ssub.s32 %s9, 1
      // Predicated region
      $region13: #{enhanced_climate_unet.24} parent=11 // pred_check
        %p132 = pneg %p68
      $region14: #{enhanced_climate_unet.24} parent=11 // pred_check_branch
        %134 = sbr.rel (%p132) target = $region16
      $region15: #{enhanced_climate_unet.24} parent=11 // pred_region
        _
      $region16: #{enhanced_climate_unet.24} parent=11 // pred_fallthru
        _
      // Predicated region
      $region17: #{enhanced_climate_unet.24} parent=11 // pred_check
        %p135 = pneg %p89
      $region18: #{enhanced_climate_unet.24} parent=11 // pred_check_branch
        %137 = sbr.rel (%p135) target = $region20
      $region19: #{enhanced_climate_unet.24} parent=11 // pred_region
        _
      $region20: #{enhanced_climate_unet.24} parent=11 // pred_fallthru
        _
    $region12: #{enhanced_climate_unet.24} parent=5 // pred_fallthru
      _
    %p138 = scmp.lt.s32.totalorder %s9, 2
    // Predicated region
    $region21: #{enhanced_climate_unet.24} parent=5 // pred_check
      %p139 = pneg %p138
    $region22: #{enhanced_climate_unet.24} parent=5 // pred_check_branch
      %141 = sbr.rel (%p139) target = $region24
    $region23: #{enhanced_climate_unet.24} parent=5 // pred_region
      // Predicated region
      $region25: #{enhanced_climate_unet.24} parent=23 // pred_check
        %p142 = pneg %p41
      $region26: #{enhanced_climate_unet.24} parent=23 // pred_check_branch
        %144 = sbr.rel (%p142) target = $region28
      $region27: #{enhanced_climate_unet.24} parent=23 // pred_region
        %p145 = scmp.lt.s32.totalorder %s16, 1
        %s146 = scalar_select %p145, %s16, 1
        %s147 = smul.addr %s146, 2
        %s148 = smul.addr %s147, 4
        %s149 = scalar_lea.vmem %s0, %s148
      $region28: #{enhanced_climate_unet.24} parent=23 // pred_fallthru
        _
    $region24: #{enhanced_climate_unet.24} parent=5 // pred_fallthru
      _
    %p150 = scmp.le.s32.totalorder 1, %s9
    %p151 = scmp.lt.s32.totalorder %s9, 3
    %p152 = pnand %p150, %p151
    %p153 = pneg %p152
    // Predicated region
    $region29: #{enhanced_climate_unet.24} parent=5 // pred_check
      _
    $region30: #{enhanced_climate_unet.24} parent=5 // pred_check_branch
      %155 = sbr.rel (%p152) target = $region32
    $region31: #{enhanced_climate_unet.24} parent=5 // pred_region
      %s156 = ssub.s32 %s9, 1
      %p157 = scmp.lt.s32.totalorder %s18, 1
      %s158 = scalar_select %p157, %s18, 1
      %s159 = smul.addr %s158, 2
      %s160 = smul.addr %s159, 4
      %s161 = scalar_lea.vmem %s0, %s160
      %p162 = pneg %p47
      %p163 = pneg %p44
      %p164 = pneg %p68
      %p165 = pneg %p65
      %p166 = pneg %p89
      %p167 = pneg %p86
      %p168 = pneg %p117
      %p169 = pneg %p114
      %p170 = scmp.lt.s32.totalorder %s18, 1
      %s171 = scalar_select %p170, %s18, 1
      %p172 = scmp.lt.s32.totalorder %s19, 0
      %s173 = scalar_select %p172, %s19, 0
      %s174 = smul.addr %s171, 4
      %s175 = sadd.s32 %s173, %s174
      %s176 = smul.addr %s175, 8
      %s177 = scalar_lea.vmem %s3, %s176
      %p178 = scmp.lt.s32.totalorder %s18, 1
      %s179 = scalar_select %p178, %s18, 1
      %s180 = smul.addr %s179, 2
      %s181 = smul.addr %s180, 4
      %s182 = scalar_lea.vmem %s0, %s181
      %p183 = scmp.lt.s32.totalorder %s18, 1
      %s184 = scalar_select %p183, %s18, 1
      %p185 = scmp.lt.s32.totalorder %s19, 0
      %s186 = scalar_select %p185, %s19, 0
      %s187 = smul.addr %s184, 4
      %s188 = sadd.s32 %s186, %s187
      %s189 = smul.addr %s188, 8
      %s190 = scalar_lea.vmem %s3, %s189
      %v192 = vld [vmem:[%s182] sm:$0xf]
      %v193 = vld [vmem:[%s182 + $0x4] sm:$0xf]
      %v194 = vld [vmem:[%s1] sm:$0xf]
      %v195 = vld [vmem:[%s1 + $0x4] sm:$0xf]
      %v196 = vld [vmem:[%s1 + $0x8] sm:$0xf]
      %v197 = vld [vmem:[%s1 + $0xc] sm:$0xf]
      %v198 = vld [vmem:[%s2] sm:$0xff]
      %v199 = vld [vmem:[%s2 + $0x8] sm:$0xff]
      %v200 = vld [vmem:[%s2 + $0x10] sm:$0xff]
      %v201 = vld [vmem:[%s2 + $0x18] sm:$0xff]
      %203 = vset.pattern.permute.xlu0 0
      %204 = vperm.xlu0 %203, %v198
      %v205 = vpop.permute.xlu0 %204
      %208 = vset.pattern.permute.xlu0 0
      %209 = vperm.xlu0 %208, %v199
      %v210 = vpop.permute.xlu0 %209
      %213 = vset.pattern.permute.xlu0 0
      %214 = vperm.xlu0 %213, %v200
      %v215 = vpop.permute.xlu0 %214
      %218 = vset.pattern.permute.xlu0 0
      %219 = vperm.xlu0 %218, %v201
      %v220 = vpop.permute.xlu0 %219
      %v226 = vunpack.c.l.b16 %v194
      %v227 = vunpack.c.l.b16 %v195
      %v228 = vunpack.c.l.b16 %v196
      %v229 = vunpack.c.l.b16 %v197
      %v230 = vpack.c.b16 %v227, %v226
      %v231 = vpack.c.b16 %v229, %v228
      %v234 = vunpack.c.l.b16 %v192
      %v235 = vunpack.c.l.b16 %v193
      %v236 = vpack.c.b16 %v235, %v234
      %vm238 = vcmask 130048
      %v240 = vsel %vm238, %v230, 0
      %v243 = vsel %vm238, %v231, 0
      %245 = vmatprep.subr.bf16.mxu0 0
      %246 = vmatpush1.bf16.msra.mxu0 0
      %247 = vmatprep.subr.bf16.mxu0 0
      %248 = vmatpush1.bf16.msra.mxu0 0
      %249 = vmatprep.subr.bf16.mxu0 0
      %250 = vmatpush1.bf16.msra.mxu0 0
      %251 = vmatprep.subr.bf16.mxu0 0
      %252 = vmatpush1.bf16.msra.mxu0 0
      %253 = vmatprep.subr.bf16.mxu0 0
      %254 = vmatpush1.bf16.msra.mxu0 0
      %255 = vmatprep.subr.bf16.mxu0 0
      %256 = vmatpush1.bf16.msra.mxu0 0
      %257 = vmatprep.subr.bf16.mxu0 0
      %258 = vmatpush1.bf16.msra.mxu0 0
      %259 = vmatprep.subr.bf16.mxu0 0
      %260 = vmatpush1.bf16.msra.mxu0 %v236
      %261 = vmatprep.subr.bf16.mxu0 0
      %262 = vmatpush2.bf16.msra.mxu0 0
      %263 = vmatprep.subr.bf16.mxu0 0
      %264 = vmatpush2.bf16.msra.mxu0 0
      %265 = vmatprep.subr.bf16.mxu0 0
      %266 = vmatpush2.bf16.msra.mxu0 0
      %267 = vmatprep.subr.bf16.mxu0 0
      %268 = vmatpush2.bf16.msra.mxu0 0
      %269 = vmatprep.subr.bf16.mxu0 0
      %270 = vmatpush2.bf16.msra.mxu0 0
      %271 = vmatprep.subr.bf16.mxu0 0
      %272 = vmatpush2.bf16.msra.mxu0 0
      %273 = vmatprep.subr.bf16.mxu0 0
      %274 = vmatpush2.bf16.msra.mxu0 0
      %275 = vmatprep.subr.bf16.mxu0 0
      %276 = vmatpush2.bf16.msra.mxu0 0
      %277 = vmatprep.mubr.bf16.mxu0 0
      %278 = vmatmul.mubr.bf16.gmra.mxu0 %v240
      %v279 = vpop.f32.mrf.mxu0
      %v280 = vadd.f32 %v205, %v279
      %v281 = vpop.f32.mrf.mxu0
      %v282 = vpop.f32.mrf.mxu0
      %v283 = vadd.f32 %v210, %v282
      %v284 = vpop.f32.mrf.mxu0
      %285 = vmatprep.mubr.bf16.mxu0 0
      %286 = vmatmul.mubr.bf16.gmra.mxu0 %v243
      %v287 = vpop.f32.mrf.mxu0
      %v288 = vadd.f32 %v215, %v287
      %v289 = vpop.f32.mrf.mxu0
      %v290 = vpop.f32.mrf.mxu0
      %v291 = vadd.f32 %v220, %v290
      %v292 = vpop.f32.mrf.mxu0
      %293 = vdwg.mxu0
      %294 = vst [vmem:[%s190] sm:$0xff] %v280
      %295 = vst [vmem:[%s190 + $0x8] sm:$0xff] %v283
      %296 = vst [vmem:[%s190 + $0x10] sm:$0xff] %v288
      %297 = vst [vmem:[%s190 + $0x18] sm:$0xff] %v291
      %p298 = scmp.lt.s32.totalorder %s18, 1
      %s299 = scalar_select %p298, %s18, 1
      %p300 = scmp.lt.s32.totalorder %s19, 0
      %s301 = scalar_select %p300, %s19, 0
      %s302 = smul.addr %s299, 4
      %s303 = sadd.s32 %s301, %s302
      %s304 = smul.addr %s303, 8
      %s305 = scalar_lea.vmem %s3, %s304
      // Predicated region
      $region33: #{enhanced_climate_unet.24} parent=31 // pred_check
        %p306 = pneg %p114
      $region34: #{enhanced_climate_unet.24} parent=31 // pred_check_branch
        %308 = sbr.rel (%p306) target = $region36
      $region35: #{enhanced_climate_unet.24} parent=31 // pred_region
        _
      $region36: #{enhanced_climate_unet.24} parent=31 // pred_fallthru
        _
    $region32: #{enhanced_climate_unet.24} parent=5 // pred_fallthru
      _
    %p309 = scmp.le.s32.totalorder 2, %s9
    // Predicated region
    $region37: #{enhanced_climate_unet.24} parent=5 // pred_check
      %p310 = pneg %p309
    $region38: #{enhanced_climate_unet.24} parent=5 // pred_check_branch
      %312 = sbr.rel (%p310) target = $region40
    $region39: #{enhanced_climate_unet.24} parent=5 // pred_region
      %s313 = ssub.s32 %s9, 2
      // Predicated region
      $region41: #{enhanced_climate_unet.24} parent=39 // pred_check
        %p314 = pneg %p120
      $region42: #{enhanced_climate_unet.24} parent=39 // pred_check_branch
        %316 = sbr.rel (%p314) target = $region44
      $region43: #{enhanced_climate_unet.24} parent=39 // pred_region
        %p317 = scmp.lt.s32.totalorder %s20, 1
        %s318 = scalar_select %p317, %s20, 1
        %p319 = scmp.lt.s32.totalorder %s21, 0
        %s320 = scalar_select %p319, %s21, 0
        %s321 = smul.addr %s318, 4
        %s322 = sadd.s32 %s320, %s321
        %s323 = smul.addr %s322, 8
        %s324 = scalar_lea.vmem %s3, %s323
      $region44: #{enhanced_climate_unet.24} parent=39 // pred_fallthru
        _
    $region40: #{enhanced_climate_unet.24} parent=5 // pred_fallthru
      _
  $region6: #{enhanced_climate_unet.24} parent=0 // loop_footer
    %s13 = sadd.s32 1, %s9
  $region7: #{enhanced_climate_unet.24} parent=0 // loop_footer_branch
    %8 = sbr.rel target = $region3
  $region8: #{enhanced_climate_unet.24} parent=0 // loop_exit
    _

// kernel: enhanced_climate_unet.27
$region0: #{enhanced_climate_unet.27}
  #allocation0 [shape = 'u32[]', space=smem, size = 0x4, offset = 0x4, fixed_abs, tag = 'smem constant byte address 0x4 - core index']
  #allocation1 [shape = 'u32[144,128]{1,0:T(1,128)}', space=vmem, size = 0x12000, scoped, tag = 'internal scratch']
  %s0 = inlined_call_operand.vmem [shape: bf16[2,128,128], index: 0, kind: input, shape index: {}]
  %s1 = inlined_call_operand.vmem [shape: bf16[32,128], index: 1, kind: input, shape index: {}]
  %s2 = inlined_call_operand.vmem [shape: f32[32,1], index: 2, kind: input, shape index: {}]
  %s3 = inlined_call_operand.vmem [shape: f32[2,32,128], index: 3, kind: output, shape index: {}]
  %s4 = sld [smem:[#allocation0]]
  $region45: #{enhanced_climate_unet.27} parent=0
    _
  %s6 = ssub.s32 1, %s4
  %s7 = scalar_select 0, %s6, %s4
  loop: start=0, step=1, limit=4
  $region2: #{enhanced_climate_unet.27} parent=0 // loop_pre_header
    _
  $region3: #{enhanced_climate_unet.27} parent=0 // loop_header
    %s9 = sphi 0, %s13
    %p10 = scmp.ge.s32.totalorder %s9, 4
    %s16 = sphi 0, %s28
    %s17 = sphi 0, %s24
    %s18 = sphi 0, %s16
    %s19 = sphi 0, %s17
    %s20 = sphi 0, %s18
    %s21 = sphi 0, %s19
    %s31 = sphi 0, %s33
    %s34 = sphi 0, %s31
    %s35 = sphi 0, %s34
    %s51 = sphi 0, %s35
    %s55 = sphi 0, %s55
    %s57 = sphi 0, %s55
    %s58 = sphi 0, %s57
    %s72 = sphi 0, %s58
    %s76 = sphi 0, %s76
    %s78 = sphi 0, %s76
    %s79 = sphi 0, %s78
    %s93 = sphi 0, %s79
    %s101 = sphi 0, %s103
    %s104 = sphi 0, %s101
    %s105 = sphi 0, %s104
    %s121 = sphi 0, %s105
  $region4: #{enhanced_climate_unet.27} parent=0 // loop_header_branch
    %12 = sbr.rel (%p10) target = $region8
  $region5: #{enhanced_climate_unet.27} parent=0 // loop_body
    %s14 = ssub.s32 %s9, 1
    %s15 = ssub.s32 %s9, 2
    %s22 = sadd.s32 1, %s17
    %p23 = scmp.ge.s32.totalorder %s22, 1
    %s24 = scalar_select %p23, 0, %s22
    %s25 = sadd.s32 1, %s16
    %s26 = scalar_select %p23, %s25, %s16
    %p27 = scmp.ge.s32.totalorder %s26, 2
    %s28 = scalar_select %p27, 0, %s26
    %s29 = ssub.s32 %s16, %s28
    %p30 = scmp.eq.s32.totalorder %s29, 0
    %s32 = sadd.s32 %s31, 1
    %s33 = scalar_select %p30, %s31, %s32
    %p36 = pneg %p30
    %p37 = scmp.eq.s32.totalorder %s9, 1
    %p38 = por %p36, %p37
    %p39 = scmp.ne.s32.totalorder %s31, %s34
    %p40 = scmp.eq.s32.totalorder %s9, 0
    %p41 = por %p39, %p40
    %p42 = scmp.ne.s32.totalorder %s31, %s34
    %p43 = scmp.eq.s32.totalorder %s14, 1
    %p44 = por %p42, %p43
    %p45 = scmp.ne.s32.totalorder %s34, %s35
    %p46 = scmp.eq.s32.totalorder %s14, 0
    %p47 = por %p45, %p46
    %p48 = scmp.ne.s32.totalorder %s34, %s35
    %p49 = scmp.eq.s32.totalorder %s15, 1
    %p50 = por %p48, %p49
    %p52 = scmp.ne.s32.totalorder %s35, %s51
    %p53 = scmp.eq.s32.totalorder %s15, 0
    %p54 = por %p52, %p53
    %s56 = sadd.s32 %s55, 1
    %p59 = scmp.eq.s32.totalorder %s9, 1
    %p60 = scmp.ne.s32.totalorder %s55, %s57
    %p61 = scmp.eq.s32.totalorder %s9, 0
    %p62 = por %p60, %p61
    %p63 = scmp.ne.s32.totalorder %s55, %s57
    %p64 = scmp.eq.s32.totalorder %s14, 1
    %p65 = por %p63, %p64
    %p66 = scmp.ne.s32.totalorder %s57, %s58
    %p67 = scmp.eq.s32.totalorder %s14, 0
    %p68 = por %p66, %p67
    %p69 = scmp.ne.s32.totalorder %s57, %s58
    %p70 = scmp.eq.s32.totalorder %s15, 1
    %p71 = por %p69, %p70
    %p73 = scmp.ne.s32.totalorder %s58, %s72
    %p74 = scmp.eq.s32.totalorder %s15, 0
    %p75 = por %p73, %p74
    %s77 = sadd.s32 %s76, 1
    %p80 = scmp.eq.s32.totalorder %s9, 1
    %p81 = scmp.ne.s32.totalorder %s76, %s78
    %p82 = scmp.eq.s32.totalorder %s9, 0
    %p83 = por %p81, %p82
    %p84 = scmp.ne.s32.totalorder %s76, %s78
    %p85 = scmp.eq.s32.totalorder %s14, 1
    %p86 = por %p84, %p85
    %p87 = scmp.ne.s32.totalorder %s78, %s79
    %p88 = scmp.eq.s32.totalorder %s14, 0
    %p89 = por %p87, %p88
    %p90 = scmp.ne.s32.totalorder %s78, %s79
    %p91 = scmp.eq.s32.totalorder %s15, 1
    %p92 = por %p90, %p91
    %p94 = scmp.ne.s32.totalorder %s79, %s93
    %p95 = scmp.eq.s32.totalorder %s15, 0
    %p96 = por %p94, %p95
    %s97 = ssub.s32 %s16, %s28
    %s98 = ssub.s32 %s17, %s24
    %s99 = sor.u32 %s97, %s98
    %p100 = scmp.eq.s32.totalorder %s99, 0
    %s102 = sadd.s32 %s101, 1
    %s103 = scalar_select %p100, %s101, %s102
    %p106 = pneg %p100
    %p107 = scmp.eq.s32.totalorder %s9, 1
    %p108 = por %p106, %p107
    %p109 = scmp.ne.s32.totalorder %s101, %s104
    %p110 = scmp.eq.s32.totalorder %s9, 0
    %p111 = por %p109, %p110
    %p112 = scmp.ne.s32.totalorder %s101, %s104
    %p113 = scmp.eq.s32.totalorder %s14, 1
    %p114 = por %p112, %p113
    %p115 = scmp.ne.s32.totalorder %s104, %s105
    %p116 = scmp.eq.s32.totalorder %s14, 0
    %p117 = por %p115, %p116
    %p118 = scmp.ne.s32.totalorder %s104, %s105
    %p119 = scmp.eq.s32.totalorder %s15, 1
    %p120 = por %p118, %p119
    %p122 = scmp.ne.s32.totalorder %s105, %s121
    %p123 = scmp.eq.s32.totalorder %s15, 0
    %p124 = por %p122, %p123
    %p125 = scmp.le.s32.totalorder 1, %s9
    %p126 = scmp.lt.s32.totalorder %s9, 3
    %p127 = pnand %p125, %p126
    %p128 = pneg %p127
    // Predicated region
    $region9: #{enhanced_climate_unet.27} parent=5 // pred_check
      _
    $region10: #{enhanced_climate_unet.27} parent=5 // pred_check_branch
      %130 = sbr.rel (%p127) target = $region12
    $region11: #{enhanced_climate_unet.27} parent=5 // pred_region
      %s131 = ssub.s32 %s9, 1
      // Predicated region
      $region13: #{enhanced_climate_unet.27} parent=11 // pred_check
        %p132 = pneg %p68
      $region14: #{enhanced_climate_unet.27} parent=11 // pred_check_branch
        %134 = sbr.rel (%p132) target = $region16
      $region15: #{enhanced_climate_unet.27} parent=11 // pred_region
        _
      $region16: #{enhanced_climate_unet.27} parent=11 // pred_fallthru
        _
      // Predicated region
      $region17: #{enhanced_climate_unet.27} parent=11 // pred_check
        %p135 = pneg %p89
      $region18: #{enhanced_climate_unet.27} parent=11 // pred_check_branch
        %137 = sbr.rel (%p135) target = $region20
      $region19: #{enhanced_climate_unet.27} parent=11 // pred_region
        _
      $region20: #{enhanced_climate_unet.27} parent=11 // pred_fallthru
        _
    $region12: #{enhanced_climate_unet.27} parent=5 // pred_fallthru
      _
    %p138 = scmp.lt.s32.totalorder %s9, 2
    // Predicated region
    $region21: #{enhanced_climate_unet.27} parent=5 // pred_check
      %p139 = pneg %p138
    $region22: #{enhanced_climate_unet.27} parent=5 // pred_check_branch
      %141 = sbr.rel (%p139) target = $region24
    $region23: #{enhanced_climate_unet.27} parent=5 // pred_region
      // Predicated region
      $region25: #{enhanced_climate_unet.27} parent=23 // pred_check
        %p142 = pneg %p41
      $region26: #{enhanced_climate_unet.27} parent=23 // pred_check_branch
        %144 = sbr.rel (%p142) target = $region28
      $region27: #{enhanced_climate_unet.27} parent=23 // pred_region
        %p145 = scmp.lt.s32.totalorder %s16, 1
        %s146 = scalar_select %p145, %s16, 1
        %s147 = smul.addr %s146, 16
        %s148 = smul.addr %s147, 4
        %s149 = scalar_lea.vmem %s0, %s148
      $region28: #{enhanced_climate_unet.27} parent=23 // pred_fallthru
        _
    $region24: #{enhanced_climate_unet.27} parent=5 // pred_fallthru
      _
    %p150 = scmp.le.s32.totalorder 1, %s9
    %p151 = scmp.lt.s32.totalorder %s9, 3
    %p152 = pnand %p150, %p151
    %p153 = pneg %p152
    // Predicated region
    $region29: #{enhanced_climate_unet.27} parent=5 // pred_check
      _
    $region30: #{enhanced_climate_unet.27} parent=5 // pred_check_branch
      %155 = sbr.rel (%p152) target = $region32
    $region31: #{enhanced_climate_unet.27} parent=5 // pred_region
      %s156 = ssub.s32 %s9, 1
      %p157 = scmp.lt.s32.totalorder %s18, 1
      %s158 = scalar_select %p157, %s18, 1
      %s159 = smul.addr %s158, 16
      %s160 = smul.addr %s159, 4
      %s161 = scalar_lea.vmem %s0, %s160
      %p162 = pneg %p47
      %p163 = pneg %p44
      %p164 = pneg %p68
      %p165 = pneg %p65
      %p166 = pneg %p89
      %p167 = pneg %p86
      %p168 = pneg %p117
      %p169 = pneg %p114
      %p170 = scmp.lt.s32.totalorder %s18, 1
      %s171 = scalar_select %p170, %s18, 1
      %p172 = scmp.lt.s32.totalorder %s19, 0
      %s173 = scalar_select %p172, %s19, 0
      %s174 = smul.addr %s171, 4
      %s175 = sadd.s32 %s173, %s174
      %s176 = smul.addr %s175, 8
      %s177 = scalar_lea.vmem %s3, %s176
      %p178 = scmp.lt.s32.totalorder %s18, 1
      %s179 = scalar_select %p178, %s18, 1
      %s180 = smul.addr %s179, 16
      %s181 = smul.addr %s180, 4
      %s182 = scalar_lea.vmem %s0, %s181
      %p183 = scmp.lt.s32.totalorder %s18, 1
      %s184 = scalar_select %p183, %s18, 1
      %p185 = scmp.lt.s32.totalorder %s19, 0
      %s186 = scalar_select %p185, %s19, 0
      %s187 = smul.addr %s184, 4
      %s188 = sadd.s32 %s186, %s187
      %s189 = smul.addr %s188, 8
      %s190 = scalar_lea.vmem %s3, %s189
      %v192 = vld [vmem:[%s182] sm:$0xf]
      %v193 = vld [vmem:[%s182 + $0x4] sm:$0xf]
      %v194 = vld [vmem:[%s182 + $0x8] sm:$0xf]
      %v195 = vld [vmem:[%s182 + $0xc] sm:$0xf]
      %v196 = vld [vmem:[%s182 + $0x10] sm:$0xf]
      %v197 = vld [vmem:[%s182 + $0x14] sm:$0xf]
      %v198 = vld [vmem:[%s182 + $0x18] sm:$0xf]
      %v199 = vld [vmem:[%s182 + $0x1c] sm:$0xf]
      %v200 = vld [vmem:[%s182 + $0x20] sm:$0xf]
      %v201 = vld [vmem:[%s182 + $0x24] sm:$0xf]
      %v202 = vld [vmem:[%s182 + $0x28] sm:$0xf]
      %v203 = vld [vmem:[%s182 + $0x2c] sm:$0xf]
      %v204 = vld [vmem:[%s182 + $0x30] sm:$0xf]
      %v205 = vld [vmem:[%s182 + $0x34] sm:$0xf]
      %v206 = vld [vmem:[%s182 + $0x38] sm:$0xf]
      %v207 = vld [vmem:[%s182 + $0x3c] sm:$0xf]
      %v208 = vld [vmem:[%s1] sm:$0xf]
      %v209 = vld [vmem:[%s1 + $0x4] sm:$0xf]
      %v210 = vld [vmem:[%s1 + $0x8] sm:$0xf]
      %v211 = vld [vmem:[%s1 + $0xc] sm:$0xf]
      %v212 = vld [vmem:[%s2] sm:$0xff]
      %v213 = vld [vmem:[%s2 + $0x8] sm:$0xff]
      %v214 = vld [vmem:[%s2 + $0x10] sm:$0xff]
      %v215 = vld [vmem:[%s2 + $0x18] sm:$0xff]
      %217 = vset.pattern.permute.xlu0 0
      %218 = vperm.xlu0 %217, %v212
      %v219 = vpop.permute.xlu0 %218
      %222 = vset.pattern.permute.xlu0 0
      %223 = vperm.xlu0 %222, %v213
      %v224 = vpop.permute.xlu0 %223
      %227 = vset.pattern.permute.xlu0 0
      %228 = vperm.xlu0 %227, %v214
      %v229 = vpop.permute.xlu0 %228
      %232 = vset.pattern.permute.xlu0 0
      %233 = vperm.xlu0 %232, %v215
      %v234 = vpop.permute.xlu0 %233
      %v240 = vunpack.c.l.b16 %v208
      %v241 = vunpack.c.l.b16 %v209
      %v242 = vunpack.c.l.b16 %v210
      %v243 = vunpack.c.l.b16 %v211
      %v244 = vpack.c.b16 %v241, %v240
      %v245 = vpack.c.b16 %v243, %v242
      %v264 = vunpack.c.l.b16 %v192
      %v265 = vunpack.c.l.b16 %v193
      %v266 = vunpack.c.l.b16 %v194
      %v267 = vunpack.c.l.b16 %v195
      %v268 = vunpack.c.l.b16 %v196
      %v269 = vunpack.c.l.b16 %v197
      %v270 = vunpack.c.l.b16 %v198
      %v271 = vunpack.c.l.b16 %v199
      %v272 = vunpack.c.l.b16 %v200
      %v273 = vunpack.c.l.b16 %v201
      %v274 = vunpack.c.l.b16 %v202
      %v275 = vunpack.c.l.b16 %v203
      %v276 = vunpack.c.l.b16 %v204
      %v277 = vunpack.c.l.b16 %v205
      %v278 = vunpack.c.l.b16 %v206
      %v279 = vunpack.c.l.b16 %v207
      %v280 = vpack.c.b16 %v265, %v264
      %v281 = vpack.c.b16 %v267, %v266
      %v282 = vpack.c.b16 %v269, %v268
      %v283 = vpack.c.b16 %v271, %v270
      %v284 = vpack.c.b16 %v273, %v272
      %v285 = vpack.c.b16 %v275, %v274
      %v286 = vpack.c.b16 %v277, %v276
      %v287 = vpack.c.b16 %v279, %v278
      %296 = vmatprep.subr.bf16.mxu0 0
      %297 = vmatpush1.bf16.msra.mxu0 %v287
      %298 = vmatprep.subr.bf16.mxu0 0
      %299 = vmatpush1.bf16.msra.mxu0 %v286
      %300 = vmatprep.subr.bf16.mxu0 0
      %301 = vmatpush1.bf16.msra.mxu0 %v285
      %302 = vmatprep.subr.bf16.mxu0 0
      %303 = vmatpush1.bf16.msra.mxu0 %v284
      %304 = vmatprep.subr.bf16.mxu0 0
      %305 = vmatpush1.bf16.msra.mxu0 %v283
      %306 = vmatprep.subr.bf16.mxu0 0
      %307 = vmatpush1.bf16.msra.mxu0 %v282
      %308 = vmatprep.subr.bf16.mxu0 0
      %309 = vmatpush1.bf16.msra.mxu0 %v281
      %310 = vmatprep.subr.bf16.mxu0 0
      %311 = vmatpush1.bf16.msra.mxu0 %v280
      %312 = vmatprep.subr.bf16.mxu0 0
      %313 = vmatpush2.bf16.msra.mxu0 0
      %314 = vmatprep.subr.bf16.mxu0 0
      %315 = vmatpush2.bf16.msra.mxu0 0
      %316 = vmatprep.subr.bf16.mxu0 0
      %317 = vmatpush2.bf16.msra.mxu0 0
      %318 = vmatprep.subr.bf16.mxu0 0
      %319 = vmatpush2.bf16.msra.mxu0 0
      %320 = vmatprep.subr.bf16.mxu0 0
      %321 = vmatpush2.bf16.msra.mxu0 0
      %322 = vmatprep.subr.bf16.mxu0 0
      %323 = vmatpush2.bf16.msra.mxu0 0
      %324 = vmatprep.subr.bf16.mxu0 0
      %325 = vmatpush2.bf16.msra.mxu0 0
      %326 = vmatprep.subr.bf16.mxu0 0
      %327 = vmatpush2.bf16.msra.mxu0 0
      %328 = vmatprep.mubr.bf16.mxu0 0
      %329 = vmatmul.mubr.bf16.gmra.mxu0 %v244
      %v330 = vpop.f32.mrf.mxu0
      %v331 = vadd.f32 %v219, %v330
      %v332 = vpop.f32.mrf.mxu0
      %v333 = vpop.f32.mrf.mxu0
      %v334 = vadd.f32 %v224, %v333
      %v335 = vpop.f32.mrf.mxu0
      %336 = vmatprep.mubr.bf16.mxu0 0
      %337 = vmatmul.mubr.bf16.gmra.mxu0 %v245
      %v338 = vpop.f32.mrf.mxu0
      %v339 = vadd.f32 %v229, %v338
      %v340 = vpop.f32.mrf.mxu0
      %v341 = vpop.f32.mrf.mxu0
      %v342 = vadd.f32 %v234, %v341
      %v343 = vpop.f32.mrf.mxu0
      %344 = vdwg.mxu0
      %345 = vst [vmem:[%s190] sm:$0xff] %v331
      %346 = vst [vmem:[%s190 + $0x8] sm:$0xff] %v334
      %347 = vst [vmem:[%s190 + $0x10] sm:$0xff] %v339
      %348 = vst [vmem:[%s190 + $0x18] sm:$0xff] %v342
      %p349 = scmp.lt.s32.totalorder %s18, 1
      %s350 = scalar_select %p349, %s18, 1
      %p351 = scmp.lt.s32.totalorder %s19, 0
      %s352 = scalar_select %p351, %s19, 0
      %s353 = smul.addr %s350, 4
      %s354 = sadd.s32 %s352, %s353
      %s355 = smul.addr %s354, 8
      %s356 = scalar_lea.vmem %s3, %s355
      // Predicated region
      $region33: #{enhanced_climate_unet.27} parent=31 // pred_check
        %p357 = pneg %p114
      $region34: #{enhanced_climate_unet.27} parent=31 // pred_check_branch
        %359 = sbr.rel (%p357) target = $region36
      $region35: #{enhanced_climate_unet.27} parent=31 // pred_region
        _
      $region36: #{enhanced_climate_unet.27} parent=31 // pred_fallthru
        _
    $region32: #{enhanced_climate_unet.27} parent=5 // pred_fallthru
      _
    %p360 = scmp.le.s32.totalorder 2, %s9
    // Predicated region
    $region37: #{enhanced_climate_unet.27} parent=5 // pred_check
      %p361 = pneg %p360
    $region38: #{enhanced_climate_unet.27} parent=5 // pred_check_branch
      %363 = sbr.rel (%p361) target = $region40
    $region39: #{enhanced_climate_unet.27} parent=5 // pred_region
      %s364 = ssub.s32 %s9, 2
      // Predicated region
      $region41: #{enhanced_climate_unet.27} parent=39 // pred_check
        %p365 = pneg %p120
      $region42: #{enhanced_climate_unet.27} parent=39 // pred_check_branch
        %367 = sbr.rel (%p365) target = $region44
      $region43: #{enhanced_climate_unet.27} parent=39 // pred_region
        %p368 = scmp.lt.s32.totalorder %s20, 1
        %s369 = scalar_select %p368, %s20, 1
        %p370 = scmp.lt.s32.totalorder %s21, 0
        %s371 = scalar_select %p370, %s21, 0
        %s372 = smul.addr %s369, 4
        %s373 = sadd.s32 %s371, %s372
        %s374 = smul.addr %s373, 8
        %s375 = scalar_lea.vmem %s3, %s374
      $region44: #{enhanced_climate_unet.27} parent=39 // pred_fallthru
        _
    $region40: #{enhanced_climate_unet.27} parent=5 // pred_fallthru
      _
  $region6: #{enhanced_climate_unet.27} parent=0 // loop_footer
    %s13 = sadd.s32 1, %s9
  $region7: #{enhanced_climate_unet.27} parent=0 // loop_footer_branch
    %8 = sbr.rel target = $region3
  $region8: #{enhanced_climate_unet.27} parent=0 // loop_exit
    _

// kernel: enhanced_climate_unet.29
$region0: #{enhanced_climate_unet.29}
  #allocation0 [shape = 'u32[]', space=smem, size = 0x4, offset = 0x4, fixed_abs, tag = 'smem constant byte address 0x4 - core index']
  #allocation1 [shape = 'u32[144,128]{1,0:T(1,128)}', space=vmem, size = 0x12000, scoped, tag = 'internal scratch']
  %s0 = inlined_call_operand.vmem [shape: bf16[2,32,144], index: 0, kind: input, shape index: {}]
  %s1 = inlined_call_operand.vmem [shape: bf16[64,288], index: 1, kind: input, shape index: {}]
  %s2 = inlined_call_operand.vmem [shape: f32[64,1], index: 2, kind: input, shape index: {}]
  %s3 = inlined_call_operand.vmem [shape: f32[2,64,128], index: 3, kind: output, shape index: {}]
  %s4 = sld [smem:[#allocation0]]
  $region45: #{enhanced_climate_unet.29} parent=0
    _
  %s6 = ssub.s32 1, %s4
  %s7 = scalar_select 0, %s6, %s4
  loop: start=0, step=1, limit=4
  $region2: #{enhanced_climate_unet.29} parent=0 // loop_pre_header
    _
  $region3: #{enhanced_climate_unet.29} parent=0 // loop_header
    %s9 = sphi 0, %s13
    %p10 = scmp.ge.s32.totalorder %s9, 4
    %s16 = sphi 0, %s28
    %s17 = sphi 0, %s24
    %s18 = sphi 0, %s16
    %s19 = sphi 0, %s17
    %s20 = sphi 0, %s18
    %s21 = sphi 0, %s19
    %s31 = sphi 0, %s33
    %s34 = sphi 0, %s31
    %s35 = sphi 0, %s34
    %s51 = sphi 0, %s35
    %s55 = sphi 0, %s55
    %s57 = sphi 0, %s55
    %s58 = sphi 0, %s57
    %s72 = sphi 0, %s58
    %s76 = sphi 0, %s76
    %s78 = sphi 0, %s76
    %s79 = sphi 0, %s78
    %s93 = sphi 0, %s79
    %s101 = sphi 0, %s103
    %s104 = sphi 0, %s101
    %s105 = sphi 0, %s104
    %s121 = sphi 0, %s105
  $region4: #{enhanced_climate_unet.29} parent=0 // loop_header_branch
    %12 = sbr.rel (%p10) target = $region8
  $region5: #{enhanced_climate_unet.29} parent=0 // loop_body
    %s14 = ssub.s32 %s9, 1
    %s15 = ssub.s32 %s9, 2
    %s22 = sadd.s32 1, %s17
    %p23 = scmp.ge.s32.totalorder %s22, 1
    %s24 = scalar_select %p23, 0, %s22
    %s25 = sadd.s32 1, %s16
    %s26 = scalar_select %p23, %s25, %s16
    %p27 = scmp.ge.s32.totalorder %s26, 2
    %s28 = scalar_select %p27, 0, %s26
    %s29 = ssub.s32 %s16, %s28
    %p30 = scmp.eq.s32.totalorder %s29, 0
    %s32 = sadd.s32 %s31, 1
    %s33 = scalar_select %p30, %s31, %s32
    %p36 = pneg %p30
    %p37 = scmp.eq.s32.totalorder %s9, 1
    %p38 = por %p36, %p37
    %p39 = scmp.ne.s32.totalorder %s31, %s34
    %p40 = scmp.eq.s32.totalorder %s9, 0
    %p41 = por %p39, %p40
    %p42 = scmp.ne.s32.totalorder %s31, %s34
    %p43 = scmp.eq.s32.totalorder %s14, 1
    %p44 = por %p42, %p43
    %p45 = scmp.ne.s32.totalorder %s34, %s35
    %p46 = scmp.eq.s32.totalorder %s14, 0
    %p47 = por %p45, %p46
    %p48 = scmp.ne.s32.totalorder %s34, %s35
    %p49 = scmp.eq.s32.totalorder %s15, 1
    %p50 = por %p48, %p49
    %p52 = scmp.ne.s32.totalorder %s35, %s51
    %p53 = scmp.eq.s32.totalorder %s15, 0
    %p54 = por %p52, %p53
    %s56 = sadd.s32 %s55, 1
    %p59 = scmp.eq.s32.totalorder %s9, 1
    %p60 = scmp.ne.s32.totalorder %s55, %s57
    %p61 = scmp.eq.s32.totalorder %s9, 0
    %p62 = por %p60, %p61
    %p63 = scmp.ne.s32.totalorder %s55, %s57
    %p64 = scmp.eq.s32.totalorder %s14, 1
    %p65 = por %p63, %p64
    %p66 = scmp.ne.s32.totalorder %s57, %s58
    %p67 = scmp.eq.s32.totalorder %s14, 0
    %p68 = por %p66, %p67
    %p69 = scmp.ne.s32.totalorder %s57, %s58
    %p70 = scmp.eq.s32.totalorder %s15, 1
    %p71 = por %p69, %p70
    %p73 = scmp.ne.s32.totalorder %s58, %s72
    %p74 = scmp.eq.s32.totalorder %s15, 0
    %p75 = por %p73, %p74
    %s77 = sadd.s32 %s76, 1
    %p80 = scmp.eq.s32.totalorder %s9, 1
    %p81 = scmp.ne.s32.totalorder %s76, %s78
    %p82 = scmp.eq.s32.totalorder %s9, 0
    %p83 = por %p81, %p82
    %p84 = scmp.ne.s32.totalorder %s76, %s78
    %p85 = scmp.eq.s32.totalorder %s14, 1
    %p86 = por %p84, %p85
    %p87 = scmp.ne.s32.totalorder %s78, %s79
    %p88 = scmp.eq.s32.totalorder %s14, 0
    %p89 = por %p87, %p88
    %p90 = scmp.ne.s32.totalorder %s78, %s79
    %p91 = scmp.eq.s32.totalorder %s15, 1
    %p92 = por %p90, %p91
    %p94 = scmp.ne.s32.totalorder %s79, %s93
    %p95 = scmp.eq.s32.totalorder %s15, 0
    %p96 = por %p94, %p95
    %s97 = ssub.s32 %s16, %s28
    %s98 = ssub.s32 %s17, %s24
    %s99 = sor.u32 %s97, %s98
    %p100 = scmp.eq.s32.totalorder %s99, 0
    %s102 = sadd.s32 %s101, 1
    %s103 = scalar_select %p100, %s101, %s102
    %p106 = pneg %p100
    %p107 = scmp.eq.s32.totalorder %s9, 1
    %p108 = por %p106, %p107
    %p109 = scmp.ne.s32.totalorder %s101, %s104
    %p110 = scmp.eq.s32.totalorder %s9, 0
    %p111 = por %p109, %p110
    %p112 = scmp.ne.s32.totalorder %s101, %s104
    %p113 = scmp.eq.s32.totalorder %s14, 1
    %p114 = por %p112, %p113
    %p115 = scmp.ne.s32.totalorder %s104, %s105
    %p116 = scmp.eq.s32.totalorder %s14, 0
    %p117 = por %p115, %p116
    %p118 = scmp.ne.s32.totalorder %s104, %s105
    %p119 = scmp.eq.s32.totalorder %s15, 1
    %p120 = por %p118, %p119
    %p122 = scmp.ne.s32.totalorder %s105, %s121
    %p123 = scmp.eq.s32.totalorder %s15, 0
    %p124 = por %p122, %p123
    %p125 = scmp.le.s32.totalorder 1, %s9
    %p126 = scmp.lt.s32.totalorder %s9, 3
    %p127 = pnand %p125, %p126
    %p128 = pneg %p127
    // Predicated region
    $region9: #{enhanced_climate_unet.29} parent=5 // pred_check
      _
    $region10: #{enhanced_climate_unet.29} parent=5 // pred_check_branch
      %130 = sbr.rel (%p127) target = $region12
    $region11: #{enhanced_climate_unet.29} parent=5 // pred_region
      %s131 = ssub.s32 %s9, 1
      // Predicated region
      $region13: #{enhanced_climate_unet.29} parent=11 // pred_check
        %p132 = pneg %p68
      $region14: #{enhanced_climate_unet.29} parent=11 // pred_check_branch
        %134 = sbr.rel (%p132) target = $region16
      $region15: #{enhanced_climate_unet.29} parent=11 // pred_region
        _
      $region16: #{enhanced_climate_unet.29} parent=11 // pred_fallthru
        _
      // Predicated region
      $region17: #{enhanced_climate_unet.29} parent=11 // pred_check
        %p135 = pneg %p89
      $region18: #{enhanced_climate_unet.29} parent=11 // pred_check_branch
        %137 = sbr.rel (%p135) target = $region20
      $region19: #{enhanced_climate_unet.29} parent=11 // pred_region
        _
      $region20: #{enhanced_climate_unet.29} parent=11 // pred_fallthru
        _
    $region12: #{enhanced_climate_unet.29} parent=5 // pred_fallthru
      _
    %p138 = scmp.lt.s32.totalorder %s9, 2
    // Predicated region
    $region21: #{enhanced_climate_unet.29} parent=5 // pred_check
      %p139 = pneg %p138
    $region22: #{enhanced_climate_unet.29} parent=5 // pred_check_branch
      %141 = sbr.rel (%p139) target = $region24
    $region23: #{enhanced_climate_unet.29} parent=5 // pred_region
      // Predicated region
      $region25: #{enhanced_climate_unet.29} parent=23 // pred_check
        %p142 = pneg %p41
      $region26: #{enhanced_climate_unet.29} parent=23 // pred_check_branch
        %144 = sbr.rel (%p142) target = $region28
      $region27: #{enhanced_climate_unet.29} parent=23 // pred_region
        %p145 = scmp.lt.s32.totalorder %s16, 1
        %s146 = scalar_select %p145, %s16, 1
        %s147 = smul.addr %s146, 8
        %s148 = smul.addr %s147, 4
        %s149 = scalar_lea.vmem %s0, %s148
      $region28: #{enhanced_climate_unet.29} parent=23 // pred_fallthru
        _
    $region24: #{enhanced_climate_unet.29} parent=5 // pred_fallthru
      _
    %p150 = scmp.le.s32.totalorder 1, %s9
    %p151 = scmp.lt.s32.totalorder %s9, 3
    %p152 = pnand %p150, %p151
    %p153 = pneg %p152
    // Predicated region
    $region29: #{enhanced_climate_unet.29} parent=5 // pred_check
      _
    $region30: #{enhanced_climate_unet.29} parent=5 // pred_check_branch
      %155 = sbr.rel (%p152) target = $region32
    $region31: #{enhanced_climate_unet.29} parent=5 // pred_region
      %s156 = ssub.s32 %s9, 1
      %p157 = scmp.lt.s32.totalorder %s18, 1
      %s158 = scalar_select %p157, %s18, 1
      %s159 = smul.addr %s158, 8
      %s160 = smul.addr %s159, 4
      %s161 = scalar_lea.vmem %s0, %s160
      %p162 = pneg %p47
      %p163 = pneg %p44
      %p164 = pneg %p68
      %p165 = pneg %p65
      %p166 = pneg %p89
      %p167 = pneg %p86
      %p168 = pneg %p117
      %p169 = pneg %p114
      %p170 = scmp.lt.s32.totalorder %s18, 1
      %s171 = scalar_select %p170, %s18, 1
      %p172 = scmp.lt.s32.totalorder %s19, 0
      %s173 = scalar_select %p172, %s19, 0
      %s174 = smul.addr %s171, 8
      %s175 = sadd.s32 %s173, %s174
      %s176 = smul.addr %s175, 8
      %s177 = scalar_lea.vmem %s3, %s176
      %p178 = scmp.lt.s32.totalorder %s18, 1
      %s179 = scalar_select %p178, %s18, 1
      %s180 = smul.addr %s179, 8
      %s181 = smul.addr %s180, 4
      %s182 = scalar_lea.vmem %s0, %s181
      %p183 = scmp.lt.s32.totalorder %s18, 1
      %s184 = scalar_select %p183, %s18, 1
      %p185 = scmp.lt.s32.totalorder %s19, 0
      %s186 = scalar_select %p185, %s19, 0
      %s187 = smul.addr %s184, 8
      %s188 = sadd.s32 %s186, %s187
      %s189 = smul.addr %s188, 8
      %s190 = scalar_lea.vmem %s3, %s189
      %v192 = vld [vmem:[%s182] sm:$0xf]
      %v193 = vld [vmem:[%s182 + $0x8] sm:$0xf]
      %v194 = vld [vmem:[%s182 + $0x10] sm:$0xf]
      %v195 = vld [vmem:[%s182 + $0x18] sm:$0xf]
      %v196 = vld [vmem:[%s182] sm:$0xff]
      %v197 = vld [vmem:[%s182 + $0x8] sm:$0xff]
      %v198 = vld [vmem:[%s182 + $0x10] sm:$0xff]
      %v199 = vld [vmem:[%s182 + $0x18] sm:$0xff]
      %v204 = vunpack.c.l.b16 %v192
      %v205 = vunpack.c.l.b16 %v193
      %v206 = vunpack.c.l.b16 %v194
      %v207 = vunpack.c.l.b16 %v195
      %v208 = vpack.c.b16 %v205, %v204
      %v209 = vpack.c.b16 %v207, %v206
      %v216 = vunpack.c.l.b16 %v196
      %v217 = vunpack.c.h.b16 %v196
      %v218 = vunpack.c.l.b16 %v197
      %v219 = vunpack.c.h.b16 %v197
      %v220 = vunpack.c.l.b16 %v198
      %v221 = vunpack.c.h.b16 %v198
      %v222 = vunpack.c.l.b16 %v199
      %v223 = vunpack.c.h.b16 %v199
      %v224 = vpack.c.b16 %v218, %v216
      %v225 = vpack.c.b16 %v219, %v217
      %v226 = vpack.c.b16 %v222, %v220
      %v227 = vpack.c.b16 %v223, %v221
      %228 = vrot.lane.b32.xlu0 %v224, 127
      %v229 = vpop.permute.xlu0 %228
      %230 = vrot.lane.b32.xlu0 %v225, 127
      %v231 = vpop.permute.xlu0 %230
      %232 = vrot.lane.b32.xlu0 %v226, 127
      %v233 = vpop.permute.xlu0 %232
      %234 = vrot.lane.b32.xlu0 %v227, 127
      %v235 = vpop.permute.xlu0 %234
      %vm236 = vcmask 1039360
      %v237 = vsel %vm236, %v229, %v231
      %v238 = vsel %vm236, %v233, %v235
      %241 = vrot.lane.b32.xlu0 %v224, 126
      %v242 = vpop.permute.xlu0 %241
      %243 = vrot.lane.b32.xlu0 %v225, 126
      %v244 = vpop.permute.xlu0 %243
      %245 = vrot.lane.b32.xlu0 %v226, 126
      %v246 = vpop.permute.xlu0 %245
      %247 = vrot.lane.b32.xlu0 %v227, 126
      %v248 = vpop.permute.xlu0 %247
      %vm249 = vcmask 1031168
      %v250 = vsel %vm249, %v242, %v244
      %v251 = vsel %vm249, %v246, %v248
      %254 = vrot.lane.b32.xlu0 %v224, 122
      %v255 = vpop.permute.xlu0 %254
      %256 = vrot.lane.b32.xlu0 %v225, 122
      %v257 = vpop.permute.xlu0 %256
      %258 = vrot.lane.b32.xlu0 %v226, 122
      %v259 = vpop.permute.xlu0 %258
      %260 = vrot.lane.b32.xlu0 %v227, 122
      %v261 = vpop.permute.xlu0 %260
      %vm262 = vcmask 998400
      %v263 = vsel %vm262, %v255, %v257
      %v264 = vsel %vm262, %v259, %v261
      %267 = vrot.lane.b32.xlu0 %v224, 121
      %v268 = vpop.permute.xlu0 %267
      %269 = vrot.lane.b32.xlu0 %v225, 121
      %v270 = vpop.permute.xlu0 %269
      %271 = vrot.lane.b32.xlu0 %v226, 121
      %v272 = vpop.permute.xlu0 %271
      %273 = vrot.lane.b32.xlu0 %v227, 121
      %v274 = vpop.permute.xlu0 %273
      %vm275 = vcmask 990208
      %v276 = vsel %vm275, %v268, %v270
      %v277 = vsel %vm275, %v272, %v274
      %280 = vrot.lane.b32.xlu0 %v224, 120
      %v281 = vpop.permute.xlu0 %280
      %282 = vrot.lane.b32.xlu0 %v225, 120
      %v283 = vpop.permute.xlu0 %282
      %284 = vrot.lane.b32.xlu0 %v226, 120
      %v285 = vpop.permute.xlu0 %284
      %286 = vrot.lane.b32.xlu0 %v227, 120
      %v287 = vpop.permute.xlu0 %286
      %vm288 = vcmask 982016
      %v289 = vsel %vm288, %v281, %v283
      %v290 = vsel %vm288, %v285, %v287
      %293 = vrot.lane.b32.xlu0 %v224, 116
      %v294 = vpop.permute.xlu0 %293
      %295 = vrot.lane.b32.xlu0 %v225, 116
      %v296 = vpop.permute.xlu0 %295
      %297 = vrot.lane.b32.xlu0 %v226, 116
      %v298 = vpop.permute.xlu0 %297
      %299 = vrot.lane.b32.xlu0 %v227, 116
      %v300 = vpop.permute.xlu0 %299
      %vm301 = vcmask 949248
      %v302 = vsel %vm301, %v294, %v296
      %v303 = vsel %vm301, %v298, %v300
      %306 = vrot.lane.b32.xlu0 %v224, 115
      %v307 = vpop.permute.xlu0 %306
      %308 = vrot.lane.b32.xlu0 %v225, 115
      %v309 = vpop.permute.xlu0 %308
      %310 = vrot.lane.b32.xlu0 %v226, 115
      %v311 = vpop.permute.xlu0 %310
      %312 = vrot.lane.b32.xlu0 %v227, 115
      %v313 = vpop.permute.xlu0 %312
      %vm314 = vcmask 941056
      %v315 = vsel %vm314, %v307, %v309
      %v316 = vsel %vm314, %v311, %v313
      %319 = vrot.lane.b32.xlu0 %v224, 114
      %v320 = vpop.permute.xlu0 %319
      %321 = vrot.lane.b32.xlu0 %v225, 114
      %v322 = vpop.permute.xlu0 %321
      %323 = vrot.lane.b32.xlu0 %v226, 114
      %v324 = vpop.permute.xlu0 %323
      %325 = vrot.lane.b32.xlu0 %v227, 114
      %v326 = vpop.permute.xlu0 %325
      %vm327 = vcmask 932864
      %v328 = vsel %vm327, %v320, %v322
      %v329 = vsel %vm327, %v324, %v326
      %v332 = vld [vmem:[%s1] sm:$0xff]
      %v333 = vld [vmem:[%s1 + $0x8] sm:$0xf]
      %v334 = vld [vmem:[%s1 + $0xc] sm:$0xff]
      %v335 = vld [vmem:[%s1 + $0x14] sm:$0xf]
      %v336 = vld [vmem:[%s1 + $0x18] sm:$0xff]
      %v337 = vld [vmem:[%s1 + $0x20] sm:$0xf]
      %v338 = vld [vmem:[%s1 + $0x24] sm:$0xff]
      %v339 = vld [vmem:[%s1 + $0x2c] sm:$0xf]
      %v340 = vld [vmem:[%s1 + $0x30] sm:$0xff]
      %v341 = vld [vmem:[%s1 + $0x38] sm:$0xf]
      %v342 = vld [vmem:[%s1 + $0x3c] sm:$0xff]
      %v343 = vld [vmem:[%s1 + $0x44] sm:$0xf]
      %v344 = vld [vmem:[%s1 + $0x48] sm:$0xff]
      %v345 = vld [vmem:[%s1 + $0x50] sm:$0xf]
      %v346 = vld [vmem:[%s1 + $0x54] sm:$0xff]
      %v347 = vld [vmem:[%s1 + $0x5c] sm:$0xf]
      %v348 = vld [vmem:[%s2] sm:$0xff]
      %v349 = vld [vmem:[%s2 + $0x8] sm:$0xff]
      %v350 = vld [vmem:[%s2 + $0x10] sm:$0xff]
      %v351 = vld [vmem:[%s2 + $0x18] sm:$0xff]
      %v352 = vld [vmem:[%s2 + $0x20] sm:$0xff]
      %v353 = vld [vmem:[%s2 + $0x28] sm:$0xff]
      %v354 = vld [vmem:[%s2 + $0x30] sm:$0xff]
      %v355 = vld [vmem:[%s2 + $0x38] sm:$0xff]
      %357 = vset.pattern.permute.xlu0 0
      %358 = vperm.xlu0 %357, %v348
      %v359 = vpop.permute.xlu0 %358
      %362 = vset.pattern.permute.xlu0 0
      %363 = vperm.xlu0 %362, %v349
      %v364 = vpop.permute.xlu0 %363
      %367 = vset.pattern.permute.xlu0 0
      %368 = vperm.xlu0 %367, %v350
      %v369 = vpop.permute.xlu0 %368
      %372 = vset.pattern.permute.xlu0 0
      %373 = vperm.xlu0 %372, %v351
      %v374 = vpop.permute.xlu0 %373
      %377 = vset.pattern.permute.xlu0 0
      %378 = vperm.xlu0 %377, %v352
      %v379 = vpop.permute.xlu0 %378
      %382 = vset.pattern.permute.xlu0 0
      %383 = vperm.xlu0 %382, %v353
      %v384 = vpop.permute.xlu0 %383
      %387 = vset.pattern.permute.xlu0 0
      %388 = vperm.xlu0 %387, %v354
      %v389 = vpop.permute.xlu0 %388
      %392 = vset.pattern.permute.xlu0 0
      %393 = vperm.xlu0 %392, %v355
      %v394 = vpop.permute.xlu0 %393
      %v412 = vunpack.c.l.b16 %v332
      %v413 = vunpack.c.h.b16 %v332
      %v414 = vunpack.c.l.b16 %v333
      %v415 = vunpack.c.l.b16 %v334
      %v416 = vunpack.c.h.b16 %v334
      %v417 = vunpack.c.l.b16 %v335
      %v418 = vunpack.c.l.b16 %v336
      %v419 = vunpack.c.h.b16 %v336
      %v420 = vunpack.c.l.b16 %v337
      %v421 = vunpack.c.l.b16 %v338
      %v422 = vunpack.c.h.b16 %v338
      %v423 = vunpack.c.l.b16 %v339
      %v424 = vunpack.c.l.b16 %v340
      %v425 = vunpack.c.h.b16 %v340
      %v426 = vunpack.c.l.b16 %v341
      %v427 = vunpack.c.l.b16 %v342
      %v428 = vunpack.c.h.b16 %v342
      %v429 = vunpack.c.l.b16 %v343
      %v430 = vunpack.c.l.b16 %v344
      %v431 = vunpack.c.h.b16 %v344
      %v432 = vunpack.c.l.b16 %v345
      %v433 = vunpack.c.l.b16 %v346
      %v434 = vunpack.c.h.b16 %v346
      %v435 = vunpack.c.l.b16 %v347
      %v436 = vpack.c.b16 %v415, %v412
      %v437 = vpack.c.b16 %v416, %v413
      %v438 = vpack.c.b16 %v417, %v414
      %v439 = vpack.c.b16 %v421, %v418
      %v440 = vpack.c.b16 %v422, %v419
      %v441 = vpack.c.b16 %v423, %v420
      %v442 = vpack.c.b16 %v427, %v424
      %v443 = vpack.c.b16 %v428, %v425
      %v444 = vpack.c.b16 %v429, %v426
      %v445 = vpack.c.b16 %v433, %v430
      %v446 = vpack.c.b16 %v434, %v431
      %v447 = vpack.c.b16 %v435, %v432
      %vm456 = vcmask 261120
      %v458 = vsel %vm456, %v438, 0
      %v461 = vsel %vm456, %v441, 0
      %v464 = vsel %vm456, %v444, 0
      %v467 = vsel %vm456, %v447, 0
      %469 = vmatprep.subr.bf16.mxu0 0
      %470 = vmatpush1.bf16.msra.mxu0 %v264
      %471 = vmatprep.subr.bf16.mxu0 0
      %472 = vmatpush1.bf16.msra.mxu0 %v263
      %473 = vmatprep.subr.bf16.mxu0 0
      %474 = vmatpush1.bf16.msra.mxu0 %v251
      %475 = vmatprep.subr.bf16.mxu0 0
      %476 = vmatpush1.bf16.msra.mxu0 %v250
      %477 = vmatprep.subr.bf16.mxu0 0
      %478 = vmatpush1.bf16.msra.mxu0 %v238
      %479 = vmatprep.subr.bf16.mxu0 0
      %480 = vmatpush1.bf16.msra.mxu0 %v237
      %481 = vmatprep.subr.bf16.mxu0 0
      %482 = vmatpush1.bf16.msra.mxu0 %v209
      %483 = vmatprep.subr.bf16.mxu0 0
      %484 = vmatpush1.bf16.msra.mxu0 %v208
      %485 = vmatprep.subr.bf16.mxu0 0
      %486 = vmatpush2.bf16.msra.mxu0 %v316
      %487 = vmatprep.subr.bf16.mxu0 0
      %488 = vmatpush2.bf16.msra.mxu0 %v315
      %489 = vmatprep.subr.bf16.mxu0 0
      %490 = vmatpush2.bf16.msra.mxu0 %v303
      %491 = vmatprep.subr.bf16.mxu0 0
      %492 = vmatpush2.bf16.msra.mxu0 %v302
      %493 = vmatprep.subr.bf16.mxu0 0
      %494 = vmatpush2.bf16.msra.mxu0 %v290
      %495 = vmatprep.subr.bf16.mxu0 0
      %496 = vmatpush2.bf16.msra.mxu0 %v289
      %497 = vmatprep.subr.bf16.mxu0 0
      %498 = vmatpush2.bf16.msra.mxu0 %v277
      %499 = vmatprep.subr.bf16.mxu0 0
      %500 = vmatpush2.bf16.msra.mxu0 %v276
      %501 = vmatprep.mubr.bf16.mxu0 %v437
      %502 = vmatmul.mubr.bf16.gmra.mxu0 %v436
      %v503 = vpop.f32.mrf.mxu0
      %v504 = vadd.f32 %v359, %v503
      %v505 = vpop.f32.mrf.mxu0
      %v506 = vpop.f32.mrf.mxu0
      %v507 = vadd.f32 %v364, %v506
      %v508 = vpop.f32.mrf.mxu0
      %509 = vmatprep.mubr.bf16.mxu0 %v440
      %510 = vmatmul.mubr.bf16.gmra.mxu0 %v439
      %v511 = vpop.f32.mrf.mxu0
      %v512 = vadd.f32 %v369, %v511
      %v513 = vpop.f32.mrf.mxu0
      %v514 = vpop.f32.mrf.mxu0
      %v515 = vadd.f32 %v374, %v514
      %v516 = vpop.f32.mrf.mxu0
      %517 = vmatprep.mubr.bf16.mxu0 %v443
      %518 = vmatmul.mubr.bf16.gmra.mxu0 %v442
      %v519 = vpop.f32.mrf.mxu0
      %v520 = vadd.f32 %v379, %v519
      %v521 = vpop.f32.mrf.mxu0
      %v522 = vpop.f32.mrf.mxu0
      %v523 = vadd.f32 %v384, %v522
      %v524 = vpop.f32.mrf.mxu0
      %525 = vmatprep.mubr.bf16.mxu0 %v446
      %526 = vmatmul.mubr.bf16.gmra.mxu0 %v445
      %v527 = vpop.f32.mrf.mxu0
      %v528 = vadd.f32 %v389, %v527
      %v529 = vpop.f32.mrf.mxu0
      %v530 = vpop.f32.mrf.mxu0
      %v531 = vadd.f32 %v394, %v530
      %v532 = vpop.f32.mrf.mxu0
      %533 = vdwg.mxu0
      %534 = vmatprep.subr.bf16.mxu0 0
      %535 = vmatpush1.bf16.msra.mxu0 0
      %536 = vmatprep.subr.bf16.mxu0 0
      %537 = vmatpush1.bf16.msra.mxu0 0
      %538 = vmatprep.subr.bf16.mxu0 0
      %539 = vmatpush1.bf16.msra.mxu0 0
      %540 = vmatprep.subr.bf16.mxu0 0
      %541 = vmatpush1.bf16.msra.mxu0 0
      %542 = vmatprep.subr.bf16.mxu0 0
      %543 = vmatpush1.bf16.msra.mxu0 0
      %544 = vmatprep.subr.bf16.mxu0 0
      %545 = vmatpush1.bf16.msra.mxu0 0
      %546 = vmatprep.subr.bf16.mxu0 0
      %547 = vmatpush1.bf16.msra.mxu0 %v329
      %548 = vmatprep.subr.bf16.mxu0 0
      %549 = vmatpush1.bf16.msra.mxu0 %v328
      %550 = vmatprep.subr.bf16.mxu0 0
      %551 = vmatpush2.bf16.msra.mxu0 0
      %552 = vmatprep.subr.bf16.mxu0 0
      %553 = vmatpush2.bf16.msra.mxu0 0
      %554 = vmatprep.subr.bf16.mxu0 0
      %555 = vmatpush2.bf16.msra.mxu0 0
      %556 = vmatprep.subr.bf16.mxu0 0
      %557 = vmatpush2.bf16.msra.mxu0 0
      %558 = vmatprep.subr.bf16.mxu0 0
      %559 = vmatpush2.bf16.msra.mxu0 0
      %560 = vmatprep.subr.bf16.mxu0 0
      %561 = vmatpush2.bf16.msra.mxu0 0
      %562 = vmatprep.subr.bf16.mxu0 0
      %563 = vmatpush2.bf16.msra.mxu0 0
      %564 = vmatprep.subr.bf16.mxu0 0
      %565 = vmatpush2.bf16.msra.mxu0 0
      %566 = vmatprep.mubr.bf16.mxu0 0
      %567 = vmatmul.mubr.bf16.gmra.mxu0 %v458
      %v568 = vpop.f32.mrf.mxu0
      %v569 = vadd.f32 %v504, %v568
      %v570 = vpop.f32.mrf.mxu0
      %v571 = vpop.f32.mrf.mxu0
      %v572 = vadd.f32 %v507, %v571
      %v573 = vpop.f32.mrf.mxu0
      %574 = vmatprep.mubr.bf16.mxu0 0
      %575 = vmatmul.mubr.bf16.gmra.mxu0 %v461
      %v576 = vpop.f32.mrf.mxu0
      %v577 = vadd.f32 %v512, %v576
      %v578 = vpop.f32.mrf.mxu0
      %v579 = vpop.f32.mrf.mxu0
      %v580 = vadd.f32 %v515, %v579
      %v581 = vpop.f32.mrf.mxu0
      %582 = vmatprep.mubr.bf16.mxu0 0
      %583 = vmatmul.mubr.bf16.gmra.mxu0 %v464
      %v584 = vpop.f32.mrf.mxu0
      %v585 = vadd.f32 %v520, %v584
      %v586 = vpop.f32.mrf.mxu0
      %v587 = vpop.f32.mrf.mxu0
      %v588 = vadd.f32 %v523, %v587
      %v589 = vpop.f32.mrf.mxu0
      %590 = vmatprep.mubr.bf16.mxu0 0
      %591 = vmatmul.mubr.bf16.gmra.mxu0 %v467
      %v592 = vpop.f32.mrf.mxu0
      %v593 = vadd.f32 %v528, %v592
      %v594 = vpop.f32.mrf.mxu0
      %v595 = vpop.f32.mrf.mxu0
      %v596 = vadd.f32 %v531, %v595
      %v597 = vpop.f32.mrf.mxu0
      %598 = vdwg.mxu0
      %599 = vst [vmem:[%s190] sm:$0xff] %v569
      %600 = vst [vmem:[%s190 + $0x8] sm:$0xff] %v572
      %601 = vst [vmem:[%s190 + $0x10] sm:$0xff] %v577
      %602 = vst [vmem:[%s190 + $0x18] sm:$0xff] %v580
      %603 = vst [vmem:[%s190 + $0x20] sm:$0xff] %v585
      %604 = vst [vmem:[%s190 + $0x28] sm:$0xff] %v588
      %605 = vst [vmem:[%s190 + $0x30] sm:$0xff] %v593
      %606 = vst [vmem:[%s190 + $0x38] sm:$0xff] %v596
      %p607 = scmp.lt.s32.totalorder %s18, 1
      %s608 = scalar_select %p607, %s18, 1
      %p609 = scmp.lt.s32.totalorder %s19, 0
      %s610 = scalar_select %p609, %s19, 0
      %s611 = smul.addr %s608, 8
      %s612 = sadd.s32 %s610, %s611
      %s613 = smul.addr %s612, 8
      %s614 = scalar_lea.vmem %s3, %s613
      // Predicated region
      $region33: #{enhanced_climate_unet.29} parent=31 // pred_check
        %p615 = pneg %p114
      $region34: #{enhanced_climate_unet.29} parent=31 // pred_check_branch
        %617 = sbr.rel (%p615) target = $region36
      $region35: #{enhanced_climate_unet.29} parent=31 // pred_region
        _
      $region36: #{enhanced_climate_unet.29} parent=31 // pred_fallthru
        _
    $region32: #{enhanced_climate_unet.29} parent=5 // pred_fallthru
      _
    %p618 = scmp.le.s32.totalorder 2, %s9
    // Predicated region
    $region37: #{enhanced_climate_unet.29} parent=5 // pred_check
      %p619 = pneg %p618
    $region38: #{enhanced_climate_unet.29} parent=5 // pred_check_branch
      %621 = sbr.rel (%p619) target = $region40
    $region39: #{enhanced_climate_unet.29} parent=5 // pred_region
      %s622 = ssub.s32 %s9, 2
      // Predicated region
      $region41: #{enhanced_climate_unet.29} parent=39 // pred_check
        %p623 = pneg %p120
      $region42: #{enhanced_climate_unet.29} parent=39 // pred_check_branch
        %625 = sbr.rel (%p623) target = $region44
      $region43: #{enhanced_climate_unet.29} parent=39 // pred_region
        %p626 = scmp.lt.s32.totalorder %s20, 1
        %s627 = scalar_select %p626, %s20, 1
        %p628 = scmp.lt.s32.totalorder %s21, 0
        %s629 = scalar_select %p628, %s21, 0
        %s630 = smul.addr %s627, 8
        %s631 = sadd.s32 %s629, %s630
        %s632 = smul.addr %s631, 8
        %s633 = scalar_lea.vmem %s3, %s632
      $region44: #{enhanced_climate_unet.29} parent=39 // pred_fallthru
        _
    $region40: #{enhanced_climate_unet.29} parent=5 // pred_fallthru
      _
  $region6: #{enhanced_climate_unet.29} parent=0 // loop_footer
    %s13 = sadd.s32 1, %s9
  $region7: #{enhanced_climate_unet.29} parent=0 // loop_footer_branch
    %8 = sbr.rel target = $region3
  $region8: #{enhanced_climate_unet.29} parent=0 // loop_exit
    _

// kernel: enhanced_climate_unet.28
$region0: #{enhanced_climate_unet.28}
  #allocation0 [shape = 'u32[]', space=smem, size = 0x4, offset = 0x4, fixed_abs, tag = 'smem constant byte address 0x4 - core index']
  #allocation1 [shape = 'u32[144,128]{1,0:T(1,128)}', space=vmem, size = 0x12000, scoped, tag = 'internal scratch']
  %s0 = inlined_call_operand.vmem [shape: bf16[2,32,128], index: 0, kind: input, shape index: {}]
  %s1 = inlined_call_operand.vmem [shape: bf16[64,32], index: 1, kind: input, shape index: {}]
  %s2 = inlined_call_operand.vmem [shape: f32[64,1], index: 2, kind: input, shape index: {}]
  %s3 = inlined_call_operand.vmem [shape: f32[2,64,128], index: 3, kind: output, shape index: {}]
  %s4 = sld [smem:[#allocation0]]
  $region45: #{enhanced_climate_unet.28} parent=0
    _
  %s6 = ssub.s32 1, %s4
  %s7 = scalar_select 0, %s6, %s4
  loop: start=0, step=1, limit=4
  $region2: #{enhanced_climate_unet.28} parent=0 // loop_pre_header
    _
  $region3: #{enhanced_climate_unet.28} parent=0 // loop_header
    %s9 = sphi 0, %s13
    %p10 = scmp.ge.s32.totalorder %s9, 4
    %s16 = sphi 0, %s28
    %s17 = sphi 0, %s24
    %s18 = sphi 0, %s16
    %s19 = sphi 0, %s17
    %s20 = sphi 0, %s18
    %s21 = sphi 0, %s19
    %s31 = sphi 0, %s33
    %s34 = sphi 0, %s31
    %s35 = sphi 0, %s34
    %s51 = sphi 0, %s35
    %s55 = sphi 0, %s55
    %s57 = sphi 0, %s55
    %s58 = sphi 0, %s57
    %s72 = sphi 0, %s58
    %s76 = sphi 0, %s76
    %s78 = sphi 0, %s76
    %s79 = sphi 0, %s78
    %s93 = sphi 0, %s79
    %s101 = sphi 0, %s103
    %s104 = sphi 0, %s101
    %s105 = sphi 0, %s104
    %s121 = sphi 0, %s105
  $region4: #{enhanced_climate_unet.28} parent=0 // loop_header_branch
    %12 = sbr.rel (%p10) target = $region8
  $region5: #{enhanced_climate_unet.28} parent=0 // loop_body
    %s14 = ssub.s32 %s9, 1
    %s15 = ssub.s32 %s9, 2
    %s22 = sadd.s32 1, %s17
    %p23 = scmp.ge.s32.totalorder %s22, 1
    %s24 = scalar_select %p23, 0, %s22
    %s25 = sadd.s32 1, %s16
    %s26 = scalar_select %p23, %s25, %s16
    %p27 = scmp.ge.s32.totalorder %s26, 2
    %s28 = scalar_select %p27, 0, %s26
    %s29 = ssub.s32 %s16, %s28
    %p30 = scmp.eq.s32.totalorder %s29, 0
    %s32 = sadd.s32 %s31, 1
    %s33 = scalar_select %p30, %s31, %s32
    %p36 = pneg %p30
    %p37 = scmp.eq.s32.totalorder %s9, 1
    %p38 = por %p36, %p37
    %p39 = scmp.ne.s32.totalorder %s31, %s34
    %p40 = scmp.eq.s32.totalorder %s9, 0
    %p41 = por %p39, %p40
    %p42 = scmp.ne.s32.totalorder %s31, %s34
    %p43 = scmp.eq.s32.totalorder %s14, 1
    %p44 = por %p42, %p43
    %p45 = scmp.ne.s32.totalorder %s34, %s35
    %p46 = scmp.eq.s32.totalorder %s14, 0
    %p47 = por %p45, %p46
    %p48 = scmp.ne.s32.totalorder %s34, %s35
    %p49 = scmp.eq.s32.totalorder %s15, 1
    %p50 = por %p48, %p49
    %p52 = scmp.ne.s32.totalorder %s35, %s51
    %p53 = scmp.eq.s32.totalorder %s15, 0
    %p54 = por %p52, %p53
    %s56 = sadd.s32 %s55, 1
    %p59 = scmp.eq.s32.totalorder %s9, 1
    %p60 = scmp.ne.s32.totalorder %s55, %s57
    %p61 = scmp.eq.s32.totalorder %s9, 0
    %p62 = por %p60, %p61
    %p63 = scmp.ne.s32.totalorder %s55, %s57
    %p64 = scmp.eq.s32.totalorder %s14, 1
    %p65 = por %p63, %p64
    %p66 = scmp.ne.s32.totalorder %s57, %s58
    %p67 = scmp.eq.s32.totalorder %s14, 0
    %p68 = por %p66, %p67
    %p69 = scmp.ne.s32.totalorder %s57, %s58
    %p70 = scmp.eq.s32.totalorder %s15, 1
    %p71 = por %p69, %p70
    %p73 = scmp.ne.s32.totalorder %s58, %s72
    %p74 = scmp.eq.s32.totalorder %s15, 0
    %p75 = por %p73, %p74
    %s77 = sadd.s32 %s76, 1
    %p80 = scmp.eq.s32.totalorder %s9, 1
    %p81 = scmp.ne.s32.totalorder %s76, %s78
    %p82 = scmp.eq.s32.totalorder %s9, 0
    %p83 = por %p81, %p82
    %p84 = scmp.ne.s32.totalorder %s76, %s78
    %p85 = scmp.eq.s32.totalorder %s14, 1
    %p86 = por %p84, %p85
    %p87 = scmp.ne.s32.totalorder %s78, %s79
    %p88 = scmp.eq.s32.totalorder %s14, 0
    %p89 = por %p87, %p88
    %p90 = scmp.ne.s32.totalorder %s78, %s79
    %p91 = scmp.eq.s32.totalorder %s15, 1
    %p92 = por %p90, %p91
    %p94 = scmp.ne.s32.totalorder %s79, %s93
    %p95 = scmp.eq.s32.totalorder %s15, 0
    %p96 = por %p94, %p95
    %s97 = ssub.s32 %s16, %s28
    %s98 = ssub.s32 %s17, %s24
    %s99 = sor.u32 %s97, %s98
    %p100 = scmp.eq.s32.totalorder %s99, 0
    %s102 = sadd.s32 %s101, 1
    %s103 = scalar_select %p100, %s101, %s102
    %p106 = pneg %p100
    %p107 = scmp.eq.s32.totalorder %s9, 1
    %p108 = por %p106, %p107
    %p109 = scmp.ne.s32.totalorder %s101, %s104
    %p110 = scmp.eq.s32.totalorder %s9, 0
    %p111 = por %p109, %p110
    %p112 = scmp.ne.s32.totalorder %s101, %s104
    %p113 = scmp.eq.s32.totalorder %s14, 1
    %p114 = por %p112, %p113
    %p115 = scmp.ne.s32.totalorder %s104, %s105
    %p116 = scmp.eq.s32.totalorder %s14, 0
    %p117 = por %p115, %p116
    %p118 = scmp.ne.s32.totalorder %s104, %s105
    %p119 = scmp.eq.s32.totalorder %s15, 1
    %p120 = por %p118, %p119
    %p122 = scmp.ne.s32.totalorder %s105, %s121
    %p123 = scmp.eq.s32.totalorder %s15, 0
    %p124 = por %p122, %p123
    %p125 = scmp.le.s32.totalorder 1, %s9
    %p126 = scmp.lt.s32.totalorder %s9, 3
    %p127 = pnand %p125, %p126
    %p128 = pneg %p127
    // Predicated region
    $region9: #{enhanced_climate_unet.28} parent=5 // pred_check
      _
    $region10: #{enhanced_climate_unet.28} parent=5 // pred_check_branch
      %130 = sbr.rel (%p127) target = $region12
    $region11: #{enhanced_climate_unet.28} parent=5 // pred_region
      %s131 = ssub.s32 %s9, 1
      // Predicated region
      $region13: #{enhanced_climate_unet.28} parent=11 // pred_check
        %p132 = pneg %p68
      $region14: #{enhanced_climate_unet.28} parent=11 // pred_check_branch
        %134 = sbr.rel (%p132) target = $region16
      $region15: #{enhanced_climate_unet.28} parent=11 // pred_region
        _
      $region16: #{enhanced_climate_unet.28} parent=11 // pred_fallthru
        _
      // Predicated region
      $region17: #{enhanced_climate_unet.28} parent=11 // pred_check
        %p135 = pneg %p89
      $region18: #{enhanced_climate_unet.28} parent=11 // pred_check_branch
        %137 = sbr.rel (%p135) target = $region20
      $region19: #{enhanced_climate_unet.28} parent=11 // pred_region
        _
      $region20: #{enhanced_climate_unet.28} parent=11 // pred_fallthru
        _
    $region12: #{enhanced_climate_unet.28} parent=5 // pred_fallthru
      _
    %p138 = scmp.lt.s32.totalorder %s9, 2
    // Predicated region
    $region21: #{enhanced_climate_unet.28} parent=5 // pred_check
      %p139 = pneg %p138
    $region22: #{enhanced_climate_unet.28} parent=5 // pred_check_branch
      %141 = sbr.rel (%p139) target = $region24
    $region23: #{enhanced_climate_unet.28} parent=5 // pred_region
      // Predicated region
      $region25: #{enhanced_climate_unet.28} parent=23 // pred_check
        %p142 = pneg %p41
      $region26: #{enhanced_climate_unet.28} parent=23 // pred_check_branch
        %144 = sbr.rel (%p142) target = $region28
      $region27: #{enhanced_climate_unet.28} parent=23 // pred_region
        %p145 = scmp.lt.s32.totalorder %s16, 1
        %s146 = scalar_select %p145, %s16, 1
        %s147 = smul.addr %s146, 4
        %s148 = smul.addr %s147, 4
        %s149 = scalar_lea.vmem %s0, %s148
      $region28: #{enhanced_climate_unet.28} parent=23 // pred_fallthru
        _
    $region24: #{enhanced_climate_unet.28} parent=5 // pred_fallthru
      _
    %p150 = scmp.le.s32.totalorder 1, %s9
    %p151 = scmp.lt.s32.totalorder %s9, 3
    %p152 = pnand %p150, %p151
    %p153 = pneg %p152
    // Predicated region
    $region29: #{enhanced_climate_unet.28} parent=5 // pred_check
      _
    $region30: #{enhanced_climate_unet.28} parent=5 // pred_check_branch
      %155 = sbr.rel (%p152) target = $region32
    $region31: #{enhanced_climate_unet.28} parent=5 // pred_region
      %s156 = ssub.s32 %s9, 1
      %p157 = scmp.lt.s32.totalorder %s18, 1
      %s158 = scalar_select %p157, %s18, 1
      %s159 = smul.addr %s158, 4
      %s160 = smul.addr %s159, 4
      %s161 = scalar_lea.vmem %s0, %s160
      %p162 = pneg %p47
      %p163 = pneg %p44
      %p164 = pneg %p68
      %p165 = pneg %p65
      %p166 = pneg %p89
      %p167 = pneg %p86
      %p168 = pneg %p117
      %p169 = pneg %p114
      %p170 = scmp.lt.s32.totalorder %s18, 1
      %s171 = scalar_select %p170, %s18, 1
      %p172 = scmp.lt.s32.totalorder %s19, 0
      %s173 = scalar_select %p172, %s19, 0
      %s174 = smul.addr %s171, 8
      %s175 = sadd.s32 %s173, %s174
      %s176 = smul.addr %s175, 8
      %s177 = scalar_lea.vmem %s3, %s176
      %p178 = scmp.lt.s32.totalorder %s18, 1
      %s179 = scalar_select %p178, %s18, 1
      %s180 = smul.addr %s179, 4
      %s181 = smul.addr %s180, 4
      %s182 = scalar_lea.vmem %s0, %s181
      %p183 = scmp.lt.s32.totalorder %s18, 1
      %s184 = scalar_select %p183, %s18, 1
      %p185 = scmp.lt.s32.totalorder %s19, 0
      %s186 = scalar_select %p185, %s19, 0
      %s187 = smul.addr %s184, 8
      %s188 = sadd.s32 %s186, %s187
      %s189 = smul.addr %s188, 8
      %s190 = scalar_lea.vmem %s3, %s189
      %v192 = vld [vmem:[%s182] sm:$0xf]
      %v193 = vld [vmem:[%s182 + $0x4] sm:$0xf]
      %v194 = vld [vmem:[%s182 + $0x8] sm:$0xf]
      %v195 = vld [vmem:[%s182 + $0xc] sm:$0xf]
      %v196 = vld [vmem:[%s1] sm:$0xf]
      %v197 = vld [vmem:[%s1 + $0x4] sm:$0xf]
      %v198 = vld [vmem:[%s1 + $0x8] sm:$0xf]
      %v199 = vld [vmem:[%s1 + $0xc] sm:$0xf]
      %v200 = vld [vmem:[%s1 + $0x10] sm:$0xf]
      %v201 = vld [vmem:[%s1 + $0x14] sm:$0xf]
      %v202 = vld [vmem:[%s1 + $0x18] sm:$0xf]
      %v203 = vld [vmem:[%s1 + $0x1c] sm:$0xf]
      %v204 = vld [vmem:[%s2] sm:$0xff]
      %v205 = vld [vmem:[%s2 + $0x8] sm:$0xff]
      %v206 = vld [vmem:[%s2 + $0x10] sm:$0xff]
      %v207 = vld [vmem:[%s2 + $0x18] sm:$0xff]
      %v208 = vld [vmem:[%s2 + $0x20] sm:$0xff]
      %v209 = vld [vmem:[%s2 + $0x28] sm:$0xff]
      %v210 = vld [vmem:[%s2 + $0x30] sm:$0xff]
      %v211 = vld [vmem:[%s2 + $0x38] sm:$0xff]
      %213 = vset.pattern.permute.xlu0 0
      %214 = vperm.xlu0 %213, %v204
      %v215 = vpop.permute.xlu0 %214
      %218 = vset.pattern.permute.xlu0 0
      %219 = vperm.xlu0 %218, %v205
      %v220 = vpop.permute.xlu0 %219
      %223 = vset.pattern.permute.xlu0 0
      %224 = vperm.xlu0 %223, %v206
      %v225 = vpop.permute.xlu0 %224
      %228 = vset.pattern.permute.xlu0 0
      %229 = vperm.xlu0 %228, %v207
      %v230 = vpop.permute.xlu0 %229
      %233 = vset.pattern.permute.xlu0 0
      %234 = vperm.xlu0 %233, %v208
      %v235 = vpop.permute.xlu0 %234
      %238 = vset.pattern.permute.xlu0 0
      %239 = vperm.xlu0 %238, %v209
      %v240 = vpop.permute.xlu0 %239
      %243 = vset.pattern.permute.xlu0 0
      %244 = vperm.xlu0 %243, %v210
      %v245 = vpop.permute.xlu0 %244
      %248 = vset.pattern.permute.xlu0 0
      %249 = vperm.xlu0 %248, %v211
      %v250 = vpop.permute.xlu0 %249
      %v260 = vunpack.c.l.b16 %v196
      %v261 = vunpack.c.l.b16 %v197
      %v262 = vunpack.c.l.b16 %v198
      %v263 = vunpack.c.l.b16 %v199
      %v264 = vunpack.c.l.b16 %v200
      %v265 = vunpack.c.l.b16 %v201
      %v266 = vunpack.c.l.b16 %v202
      %v267 = vunpack.c.l.b16 %v203
      %v268 = vpack.c.b16 %v261, %v260
      %v269 = vpack.c.b16 %v263, %v262
      %v270 = vpack.c.b16 %v265, %v264
      %v271 = vpack.c.b16 %v267, %v266
      %v276 = vunpack.c.l.b16 %v192
      %v277 = vunpack.c.l.b16 %v193
      %v278 = vunpack.c.l.b16 %v194
      %v279 = vunpack.c.l.b16 %v195
      %v280 = vpack.c.b16 %v277, %v276
      %v281 = vpack.c.b16 %v279, %v278
      %vm284 = vcmask 261120
      %v286 = vsel %vm284, %v268, 0
      %v289 = vsel %vm284, %v269, 0
      %v292 = vsel %vm284, %v270, 0
      %v295 = vsel %vm284, %v271, 0
      %297 = vmatprep.subr.bf16.mxu0 0
      %298 = vmatpush1.bf16.msra.mxu0 0
      %299 = vmatprep.subr.bf16.mxu0 0
      %300 = vmatpush1.bf16.msra.mxu0 0
      %301 = vmatprep.subr.bf16.mxu0 0
      %302 = vmatpush1.bf16.msra.mxu0 0
      %303 = vmatprep.subr.bf16.mxu0 0
      %304 = vmatpush1.bf16.msra.mxu0 0
      %305 = vmatprep.subr.bf16.mxu0 0
      %306 = vmatpush1.bf16.msra.mxu0 0
      %307 = vmatprep.subr.bf16.mxu0 0
      %308 = vmatpush1.bf16.msra.mxu0 0
      %309 = vmatprep.subr.bf16.mxu0 0
      %310 = vmatpush1.bf16.msra.mxu0 %v281
      %311 = vmatprep.subr.bf16.mxu0 0
      %312 = vmatpush1.bf16.msra.mxu0 %v280
      %313 = vmatprep.subr.bf16.mxu0 0
      %314 = vmatpush2.bf16.msra.mxu0 0
      %315 = vmatprep.subr.bf16.mxu0 0
      %316 = vmatpush2.bf16.msra.mxu0 0
      %317 = vmatprep.subr.bf16.mxu0 0
      %318 = vmatpush2.bf16.msra.mxu0 0
      %319 = vmatprep.subr.bf16.mxu0 0
      %320 = vmatpush2.bf16.msra.mxu0 0
      %321 = vmatprep.subr.bf16.mxu0 0
      %322 = vmatpush2.bf16.msra.mxu0 0
      %323 = vmatprep.subr.bf16.mxu0 0
      %324 = vmatpush2.bf16.msra.mxu0 0
      %325 = vmatprep.subr.bf16.mxu0 0
      %326 = vmatpush2.bf16.msra.mxu0 0
      %327 = vmatprep.subr.bf16.mxu0 0
      %328 = vmatpush2.bf16.msra.mxu0 0
      %329 = vmatprep.mubr.bf16.mxu0 0
      %330 = vmatmul.mubr.bf16.gmra.mxu0 %v286
      %v331 = vpop.f32.mrf.mxu0
      %v332 = vadd.f32 %v215, %v331
      %v333 = vpop.f32.mrf.mxu0
      %v334 = vpop.f32.mrf.mxu0
      %v335 = vadd.f32 %v220, %v334
      %v336 = vpop.f32.mrf.mxu0
      %337 = vmatprep.mubr.bf16.mxu0 0
      %338 = vmatmul.mubr.bf16.gmra.mxu0 %v289
      %v339 = vpop.f32.mrf.mxu0
      %v340 = vadd.f32 %v225, %v339
      %v341 = vpop.f32.mrf.mxu0
      %v342 = vpop.f32.mrf.mxu0
      %v343 = vadd.f32 %v230, %v342
      %v344 = vpop.f32.mrf.mxu0
      %345 = vmatprep.mubr.bf16.mxu0 0
      %346 = vmatmul.mubr.bf16.gmra.mxu0 %v292
      %v347 = vpop.f32.mrf.mxu0
      %v348 = vadd.f32 %v235, %v347
      %v349 = vpop.f32.mrf.mxu0
      %v350 = vpop.f32.mrf.mxu0
      %v351 = vadd.f32 %v240, %v350
      %v352 = vpop.f32.mrf.mxu0
      %353 = vmatprep.mubr.bf16.mxu0 0
      %354 = vmatmul.mubr.bf16.gmra.mxu0 %v295
      %v355 = vpop.f32.mrf.mxu0
      %v356 = vadd.f32 %v245, %v355
      %v357 = vpop.f32.mrf.mxu0
      %v358 = vpop.f32.mrf.mxu0
      %v359 = vadd.f32 %v250, %v358
      %v360 = vpop.f32.mrf.mxu0
      %361 = vdwg.mxu0
      %362 = vst [vmem:[%s190] sm:$0xff] %v332
      %363 = vst [vmem:[%s190 + $0x8] sm:$0xff] %v335
      %364 = vst [vmem:[%s190 + $0x10] sm:$0xff] %v340
      %365 = vst [vmem:[%s190 + $0x18] sm:$0xff] %v343
      %366 = vst [vmem:[%s190 + $0x20] sm:$0xff] %v348
      %367 = vst [vmem:[%s190 + $0x28] sm:$0xff] %v351
      %368 = vst [vmem:[%s190 + $0x30] sm:$0xff] %v356
      %369 = vst [vmem:[%s190 + $0x38] sm:$0xff] %v359
      %p370 = scmp.lt.s32.totalorder %s18, 1
      %s371 = scalar_select %p370, %s18, 1
      %p372 = scmp.lt.s32.totalorder %s19, 0
      %s373 = scalar_select %p372, %s19, 0
      %s374 = smul.addr %s371, 8
      %s375 = sadd.s32 %s373, %s374
      %s376 = smul.addr %s375, 8
      %s377 = scalar_lea.vmem %s3, %s376
      // Predicated region
      $region33: #{enhanced_climate_unet.28} parent=31 // pred_check
        %p378 = pneg %p114
      $region34: #{enhanced_climate_unet.28} parent=31 // pred_check_branch
        %380 = sbr.rel (%p378) target = $region36
      $region35: #{enhanced_climate_unet.28} parent=31 // pred_region
        _
      $region36: #{enhanced_climate_unet.28} parent=31 // pred_fallthru
        _
    $region32: #{enhanced_climate_unet.28} parent=5 // pred_fallthru
      _
    %p381 = scmp.le.s32.totalorder 2, %s9
    // Predicated region
    $region37: #{enhanced_climate_unet.28} parent=5 // pred_check
      %p382 = pneg %p381
    $region38: #{enhanced_climate_unet.28} parent=5 // pred_check_branch
      %384 = sbr.rel (%p382) target = $region40
    $region39: #{enhanced_climate_unet.28} parent=5 // pred_region
      %s385 = ssub.s32 %s9, 2
      // Predicated region
      $region41: #{enhanced_climate_unet.28} parent=39 // pred_check
        %p386 = pneg %p120
      $region42: #{enhanced_climate_unet.28} parent=39 // pred_check_branch
        %388 = sbr.rel (%p386) target = $region44
      $region43: #{enhanced_climate_unet.28} parent=39 // pred_region
        %p389 = scmp.lt.s32.totalorder %s20, 1
        %s390 = scalar_select %p389, %s20, 1
        %p391 = scmp.lt.s32.totalorder %s21, 0
        %s392 = scalar_select %p391, %s21, 0
        %s393 = smul.addr %s390, 8
        %s394 = sadd.s32 %s392, %s393
        %s395 = smul.addr %s394, 8
        %s396 = scalar_lea.vmem %s3, %s395
      $region44: #{enhanced_climate_unet.28} parent=39 // pred_fallthru
        _
    $region40: #{enhanced_climate_unet.28} parent=5 // pred_fallthru
      _
  $region6: #{enhanced_climate_unet.28} parent=0 // loop_footer
    %s13 = sadd.s32 1, %s9
  $region7: #{enhanced_climate_unet.28} parent=0 // loop_footer_branch
    %8 = sbr.rel target = $region3
  $region8: #{enhanced_climate_unet.28} parent=0 // loop_exit
    _

// kernel: enhanced_climate_unet.30
$region0: #{enhanced_climate_unet.30}
  #allocation0 [shape = 'u32[]', space=smem, size = 0x4, offset = 0x4, fixed_abs, tag = 'smem constant byte address 0x4 - core index']
  #allocation1 [shape = 'u32[144,128]{1,0:T(1,128)}', space=vmem, size = 0x12000, scoped, tag = 'internal scratch']
  %s0 = inlined_call_operand.vmem [shape: bf16[2,64,144], index: 0, kind: input, shape index: {}]
  %s1 = inlined_call_operand.vmem [shape: bf16[64,576], index: 1, kind: input, shape index: {}]
  %s2 = inlined_call_operand.vmem [shape: f32[64,1], index: 2, kind: input, shape index: {}]
  %s3 = inlined_call_operand.vmem [shape: f32[2,64,128], index: 3, kind: output, shape index: {}]
  %s4 = sld [smem:[#allocation0]]
  $region45: #{enhanced_climate_unet.30} parent=0
    _
  %s6 = ssub.s32 1, %s4
  %s7 = scalar_select 0, %s6, %s4
  loop: start=0, step=1, limit=4
  $region2: #{enhanced_climate_unet.30} parent=0 // loop_pre_header
    _
  $region3: #{enhanced_climate_unet.30} parent=0 // loop_header
    %s9 = sphi 0, %s13
    %p10 = scmp.ge.s32.totalorder %s9, 4
    %s16 = sphi 0, %s28
    %s17 = sphi 0, %s24
    %s18 = sphi 0, %s16
    %s19 = sphi 0, %s17
    %s20 = sphi 0, %s18
    %s21 = sphi 0, %s19
    %s31 = sphi 0, %s33
    %s34 = sphi 0, %s31
    %s35 = sphi 0, %s34
    %s51 = sphi 0, %s35
    %s55 = sphi 0, %s55
    %s57 = sphi 0, %s55
    %s58 = sphi 0, %s57
    %s72 = sphi 0, %s58
    %s76 = sphi 0, %s76
    %s78 = sphi 0, %s76
    %s79 = sphi 0, %s78
    %s93 = sphi 0, %s79
    %s101 = sphi 0, %s103
    %s104 = sphi 0, %s101
    %s105 = sphi 0, %s104
    %s121 = sphi 0, %s105
  $region4: #{enhanced_climate_unet.30} parent=0 // loop_header_branch
    %12 = sbr.rel (%p10) target = $region8
  $region5: #{enhanced_climate_unet.30} parent=0 // loop_body
    %s14 = ssub.s32 %s9, 1
    %s15 = ssub.s32 %s9, 2
    %s22 = sadd.s32 1, %s17
    %p23 = scmp.ge.s32.totalorder %s22, 1
    %s24 = scalar_select %p23, 0, %s22
    %s25 = sadd.s32 1, %s16
    %s26 = scalar_select %p23, %s25, %s16
    %p27 = scmp.ge.s32.totalorder %s26, 2
    %s28 = scalar_select %p27, 0, %s26
    %s29 = ssub.s32 %s16, %s28
    %p30 = scmp.eq.s32.totalorder %s29, 0
    %s32 = sadd.s32 %s31, 1
    %s33 = scalar_select %p30, %s31, %s32
    %p36 = pneg %p30
    %p37 = scmp.eq.s32.totalorder %s9, 1
    %p38 = por %p36, %p37
    %p39 = scmp.ne.s32.totalorder %s31, %s34
    %p40 = scmp.eq.s32.totalorder %s9, 0
    %p41 = por %p39, %p40
    %p42 = scmp.ne.s32.totalorder %s31, %s34
    %p43 = scmp.eq.s32.totalorder %s14, 1
    %p44 = por %p42, %p43
    %p45 = scmp.ne.s32.totalorder %s34, %s35
    %p46 = scmp.eq.s32.totalorder %s14, 0
    %p47 = por %p45, %p46
    %p48 = scmp.ne.s32.totalorder %s34, %s35
    %p49 = scmp.eq.s32.totalorder %s15, 1
    %p50 = por %p48, %p49
    %p52 = scmp.ne.s32.totalorder %s35, %s51
    %p53 = scmp.eq.s32.totalorder %s15, 0
    %p54 = por %p52, %p53
    %s56 = sadd.s32 %s55, 1
    %p59 = scmp.eq.s32.totalorder %s9, 1
    %p60 = scmp.ne.s32.totalorder %s55, %s57
    %p61 = scmp.eq.s32.totalorder %s9, 0
    %p62 = por %p60, %p61
    %p63 = scmp.ne.s32.totalorder %s55, %s57
    %p64 = scmp.eq.s32.totalorder %s14, 1
    %p65 = por %p63, %p64
    %p66 = scmp.ne.s32.totalorder %s57, %s58
    %p67 = scmp.eq.s32.totalorder %s14, 0
    %p68 = por %p66, %p67
    %p69 = scmp.ne.s32.totalorder %s57, %s58
    %p70 = scmp.eq.s32.totalorder %s15, 1
    %p71 = por %p69, %p70
    %p73 = scmp.ne.s32.totalorder %s58, %s72
    %p74 = scmp.eq.s32.totalorder %s15, 0
    %p75 = por %p73, %p74
    %s77 = sadd.s32 %s76, 1
    %p80 = scmp.eq.s32.totalorder %s9, 1
    %p81 = scmp.ne.s32.totalorder %s76, %s78
    %p82 = scmp.eq.s32.totalorder %s9, 0
    %p83 = por %p81, %p82
    %p84 = scmp.ne.s32.totalorder %s76, %s78
    %p85 = scmp.eq.s32.totalorder %s14, 1
    %p86 = por %p84, %p85
    %p87 = scmp.ne.s32.totalorder %s78, %s79
    %p88 = scmp.eq.s32.totalorder %s14, 0
    %p89 = por %p87, %p88
    %p90 = scmp.ne.s32.totalorder %s78, %s79
    %p91 = scmp.eq.s32.totalorder %s15, 1
    %p92 = por %p90, %p91
    %p94 = scmp.ne.s32.totalorder %s79, %s93
    %p95 = scmp.eq.s32.totalorder %s15, 0
    %p96 = por %p94, %p95
    %s97 = ssub.s32 %s16, %s28
    %s98 = ssub.s32 %s17, %s24
    %s99 = sor.u32 %s97, %s98
    %p100 = scmp.eq.s32.totalorder %s99, 0
    %s102 = sadd.s32 %s101, 1
    %s103 = scalar_select %p100, %s101, %s102
    %p106 = pneg %p100
    %p107 = scmp.eq.s32.totalorder %s9, 1
    %p108 = por %p106, %p107
    %p109 = scmp.ne.s32.totalorder %s101, %s104
    %p110 = scmp.eq.s32.totalorder %s9, 0
    %p111 = por %p109, %p110
    %p112 = scmp.ne.s32.totalorder %s101, %s104
    %p113 = scmp.eq.s32.totalorder %s14, 1
    %p114 = por %p112, %p113
    %p115 = scmp.ne.s32.totalorder %s104, %s105
    %p116 = scmp.eq.s32.totalorder %s14, 0
    %p117 = por %p115, %p116
    %p118 = scmp.ne.s32.totalorder %s104, %s105
    %p119 = scmp.eq.s32.totalorder %s15, 1
    %p120 = por %p118, %p119
    %p122 = scmp.ne.s32.totalorder %s105, %s121
    %p123 = scmp.eq.s32.totalorder %s15, 0
    %p124 = por %p122, %p123
    %p125 = scmp.le.s32.totalorder 1, %s9
    %p126 = scmp.lt.s32.totalorder %s9, 3
    %p127 = pnand %p125, %p126
    %p128 = pneg %p127
    // Predicated region
    $region9: #{enhanced_climate_unet.30} parent=5 // pred_check
      _
    $region10: #{enhanced_climate_unet.30} parent=5 // pred_check_branch
      %130 = sbr.rel (%p127) target = $region12
    $region11: #{enhanced_climate_unet.30} parent=5 // pred_region
      %s131 = ssub.s32 %s9, 1
      // Predicated region
      $region13: #{enhanced_climate_unet.30} parent=11 // pred_check
        %p132 = pneg %p68
      $region14: #{enhanced_climate_unet.30} parent=11 // pred_check_branch
        %134 = sbr.rel (%p132) target = $region16
      $region15: #{enhanced_climate_unet.30} parent=11 // pred_region
        _
      $region16: #{enhanced_climate_unet.30} parent=11 // pred_fallthru
        _
      // Predicated region
      $region17: #{enhanced_climate_unet.30} parent=11 // pred_check
        %p135 = pneg %p89
      $region18: #{enhanced_climate_unet.30} parent=11 // pred_check_branch
        %137 = sbr.rel (%p135) target = $region20
      $region19: #{enhanced_climate_unet.30} parent=11 // pred_region
        _
      $region20: #{enhanced_climate_unet.30} parent=11 // pred_fallthru
        _
    $region12: #{enhanced_climate_unet.30} parent=5 // pred_fallthru
      _
    %p138 = scmp.lt.s32.totalorder %s9, 2
    // Predicated region
    $region21: #{enhanced_climate_unet.30} parent=5 // pred_check
      %p139 = pneg %p138
    $region22: #{enhanced_climate_unet.30} parent=5 // pred_check_branch
      %141 = sbr.rel (%p139) target = $region24
    $region23: #{enhanced_climate_unet.30} parent=5 // pred_region
      // Predicated region
      $region25: #{enhanced_climate_unet.30} parent=23 // pred_check
        %p142 = pneg %p41
      $region26: #{enhanced_climate_unet.30} parent=23 // pred_check_branch
        %144 = sbr.rel (%p142) target = $region28
      $region27: #{enhanced_climate_unet.30} parent=23 // pred_region
        %p145 = scmp.lt.s32.totalorder %s16, 1
        %s146 = scalar_select %p145, %s16, 1
        %s147 = smul.addr %s146, 16
        %s148 = smul.addr %s147, 4
        %s149 = scalar_lea.vmem %s0, %s148
      $region28: #{enhanced_climate_unet.30} parent=23 // pred_fallthru
        _
    $region24: #{enhanced_climate_unet.30} parent=5 // pred_fallthru
      _
    %p150 = scmp.le.s32.totalorder 1, %s9
    %p151 = scmp.lt.s32.totalorder %s9, 3
    %p152 = pnand %p150, %p151
    %p153 = pneg %p152
    // Predicated region
    $region29: #{enhanced_climate_unet.30} parent=5 // pred_check
      _
    $region30: #{enhanced_climate_unet.30} parent=5 // pred_check_branch
      %155 = sbr.rel (%p152) target = $region32
    $region31: #{enhanced_climate_unet.30} parent=5 // pred_region
      %s156 = ssub.s32 %s9, 1
      %p157 = scmp.lt.s32.totalorder %s18, 1
      %s158 = scalar_select %p157, %s18, 1
      %s159 = smul.addr %s158, 16
      %s160 = smul.addr %s159, 4
      %s161 = scalar_lea.vmem %s0, %s160
      %p162 = pneg %p47
      %p163 = pneg %p44
      %p164 = pneg %p68
      %p165 = pneg %p65
      %p166 = pneg %p89
      %p167 = pneg %p86
      %p168 = pneg %p117
      %p169 = pneg %p114
      %p170 = scmp.lt.s32.totalorder %s18, 1
      %s171 = scalar_select %p170, %s18, 1
      %p172 = scmp.lt.s32.totalorder %s19, 0
      %s173 = scalar_select %p172, %s19, 0
      %s174 = smul.addr %s171, 8
      %s175 = sadd.s32 %s173, %s174
      %s176 = smul.addr %s175, 8
      %s177 = scalar_lea.vmem %s3, %s176
      %p178 = scmp.lt.s32.totalorder %s18, 1
      %s179 = scalar_select %p178, %s18, 1
      %s180 = smul.addr %s179, 16
      %s181 = smul.addr %s180, 4
      %s182 = scalar_lea.vmem %s0, %s181
      %p183 = scmp.lt.s32.totalorder %s18, 1
      %s184 = scalar_select %p183, %s18, 1
      %p185 = scmp.lt.s32.totalorder %s19, 0
      %s186 = scalar_select %p185, %s19, 0
      %s187 = smul.addr %s184, 8
      %s188 = sadd.s32 %s186, %s187
      %s189 = smul.addr %s188, 8
      %s190 = scalar_lea.vmem %s3, %s189
      %v192 = vld [vmem:[%s182] sm:$0xf]
      %v193 = vld [vmem:[%s182 + $0x8] sm:$0xf]
      %v194 = vld [vmem:[%s182 + $0x10] sm:$0xf]
      %v195 = vld [vmem:[%s182 + $0x18] sm:$0xf]
      %v196 = vld [vmem:[%s182 + $0x20] sm:$0xf]
      %v197 = vld [vmem:[%s182 + $0x28] sm:$0xf]
      %v198 = vld [vmem:[%s182 + $0x30] sm:$0xf]
      %v199 = vld [vmem:[%s182 + $0x38] sm:$0xf]
      %v200 = vld [vmem:[%s182] sm:$0xff]
      %v201 = vld [vmem:[%s182 + $0x8] sm:$0xff]
      %v202 = vld [vmem:[%s182 + $0x10] sm:$0xff]
      %v203 = vld [vmem:[%s182 + $0x18] sm:$0xff]
      %v204 = vld [vmem:[%s182 + $0x20] sm:$0xff]
      %v205 = vld [vmem:[%s182 + $0x28] sm:$0xff]
      %v206 = vld [vmem:[%s182 + $0x30] sm:$0xff]
      %v207 = vld [vmem:[%s182 + $0x38] sm:$0xff]
      %v216 = vunpack.c.l.b16 %v192
      %v217 = vunpack.c.l.b16 %v193
      %v218 = vunpack.c.l.b16 %v194
      %v219 = vunpack.c.l.b16 %v195
      %v220 = vunpack.c.l.b16 %v196
      %v221 = vunpack.c.l.b16 %v197
      %v222 = vunpack.c.l.b16 %v198
      %v223 = vunpack.c.l.b16 %v199
      %v224 = vpack.c.b16 %v217, %v216
      %v225 = vpack.c.b16 %v219, %v218
      %v226 = vpack.c.b16 %v221, %v220
      %v227 = vpack.c.b16 %v223, %v222
      %v240 = vunpack.c.l.b16 %v200
      %v241 = vunpack.c.h.b16 %v200
      %v242 = vunpack.c.l.b16 %v201
      %v243 = vunpack.c.h.b16 %v201
      %v244 = vunpack.c.l.b16 %v202
      %v245 = vunpack.c.h.b16 %v202
      %v246 = vunpack.c.l.b16 %v203
      %v247 = vunpack.c.h.b16 %v203
      %v248 = vunpack.c.l.b16 %v204
      %v249 = vunpack.c.h.b16 %v204
      %v250 = vunpack.c.l.b16 %v205
      %v251 = vunpack.c.h.b16 %v205
      %v252 = vunpack.c.l.b16 %v206
      %v253 = vunpack.c.h.b16 %v206
      %v254 = vunpack.c.l.b16 %v207
      %v255 = vunpack.c.h.b16 %v207
      %v256 = vpack.c.b16 %v242, %v240
      %v257 = vpack.c.b16 %v243, %v241
      %v258 = vpack.c.b16 %v246, %v244
      %v259 = vpack.c.b16 %v247, %v245
      %v260 = vpack.c.b16 %v250, %v248
      %v261 = vpack.c.b16 %v251, %v249
      %v262 = vpack.c.b16 %v254, %v252
      %v263 = vpack.c.b16 %v255, %v253
      %264 = vrot.lane.b32.xlu0 %v256, 127
      %v265 = vpop.permute.xlu0 %264
      %266 = vrot.lane.b32.xlu0 %v257, 127
      %v267 = vpop.permute.xlu0 %266
      %268 = vrot.lane.b32.xlu0 %v258, 127
      %v269 = vpop.permute.xlu0 %268
      %270 = vrot.lane.b32.xlu0 %v259, 127
      %v271 = vpop.permute.xlu0 %270
      %272 = vrot.lane.b32.xlu0 %v260, 127
      %v273 = vpop.permute.xlu0 %272
      %274 = vrot.lane.b32.xlu0 %v261, 127
      %v275 = vpop.permute.xlu0 %274
      %276 = vrot.lane.b32.xlu0 %v262, 127
      %v277 = vpop.permute.xlu0 %276
      %278 = vrot.lane.b32.xlu0 %v263, 127
      %v279 = vpop.permute.xlu0 %278
      %vm280 = vcmask 1039360
      %v281 = vsel %vm280, %v265, %v267
      %v282 = vsel %vm280, %v269, %v271
      %v283 = vsel %vm280, %v273, %v275
      %v284 = vsel %vm280, %v277, %v279
      %289 = vrot.lane.b32.xlu0 %v256, 126
      %v290 = vpop.permute.xlu0 %289
      %291 = vrot.lane.b32.xlu0 %v257, 126
      %v292 = vpop.permute.xlu0 %291
      %293 = vrot.lane.b32.xlu0 %v258, 126
      %v294 = vpop.permute.xlu0 %293
      %295 = vrot.lane.b32.xlu0 %v259, 126
      %v296 = vpop.permute.xlu0 %295
      %297 = vrot.lane.b32.xlu0 %v260, 126
      %v298 = vpop.permute.xlu0 %297
      %299 = vrot.lane.b32.xlu0 %v261, 126
      %v300 = vpop.permute.xlu0 %299
      %301 = vrot.lane.b32.xlu0 %v262, 126
      %v302 = vpop.permute.xlu0 %301
      %303 = vrot.lane.b32.xlu0 %v263, 126
      %v304 = vpop.permute.xlu0 %303
      %vm305 = vcmask 1031168
      %v306 = vsel %vm305, %v290, %v292
      %v307 = vsel %vm305, %v294, %v296
      %v308 = vsel %vm305, %v298, %v300
      %v309 = vsel %vm305, %v302, %v304
      %314 = vrot.lane.b32.xlu0 %v256, 122
      %v315 = vpop.permute.xlu0 %314
      %316 = vrot.lane.b32.xlu0 %v257, 122
      %v317 = vpop.permute.xlu0 %316
      %318 = vrot.lane.b32.xlu0 %v258, 122
      %v319 = vpop.permute.xlu0 %318
      %320 = vrot.lane.b32.xlu0 %v259, 122
      %v321 = vpop.permute.xlu0 %320
      %322 = vrot.lane.b32.xlu0 %v260, 122
      %v323 = vpop.permute.xlu0 %322
      %324 = vrot.lane.b32.xlu0 %v261, 122
      %v325 = vpop.permute.xlu0 %324
      %326 = vrot.lane.b32.xlu0 %v262, 122
      %v327 = vpop.permute.xlu0 %326
      %328 = vrot.lane.b32.xlu0 %v263, 122
      %v329 = vpop.permute.xlu0 %328
      %vm330 = vcmask 998400
      %v331 = vsel %vm330, %v315, %v317
      %v332 = vsel %vm330, %v319, %v321
      %v333 = vsel %vm330, %v323, %v325
      %v334 = vsel %vm330, %v327, %v329
      %339 = vrot.lane.b32.xlu0 %v256, 121
      %v340 = vpop.permute.xlu0 %339
      %341 = vrot.lane.b32.xlu0 %v257, 121
      %v342 = vpop.permute.xlu0 %341
      %343 = vrot.lane.b32.xlu0 %v258, 121
      %v344 = vpop.permute.xlu0 %343
      %345 = vrot.lane.b32.xlu0 %v259, 121
      %v346 = vpop.permute.xlu0 %345
      %347 = vrot.lane.b32.xlu0 %v260, 121
      %v348 = vpop.permute.xlu0 %347
      %349 = vrot.lane.b32.xlu0 %v261, 121
      %v350 = vpop.permute.xlu0 %349
      %351 = vrot.lane.b32.xlu0 %v262, 121
      %v352 = vpop.permute.xlu0 %351
      %353 = vrot.lane.b32.xlu0 %v263, 121
      %v354 = vpop.permute.xlu0 %353
      %vm355 = vcmask 990208
      %v356 = vsel %vm355, %v340, %v342
      %v357 = vsel %vm355, %v344, %v346
      %v358 = vsel %vm355, %v348, %v350
      %v359 = vsel %vm355, %v352, %v354
      %364 = vrot.lane.b32.xlu0 %v256, 120
      %v365 = vpop.permute.xlu0 %364
      %366 = vrot.lane.b32.xlu0 %v257, 120
      %v367 = vpop.permute.xlu0 %366
      %368 = vrot.lane.b32.xlu0 %v258, 120
      %v369 = vpop.permute.xlu0 %368
      %370 = vrot.lane.b32.xlu0 %v259, 120
      %v371 = vpop.permute.xlu0 %370
      %372 = vrot.lane.b32.xlu0 %v260, 120
      %v373 = vpop.permute.xlu0 %372
      %374 = vrot.lane.b32.xlu0 %v261, 120
      %v375 = vpop.permute.xlu0 %374
      %376 = vrot.lane.b32.xlu0 %v262, 120
      %v377 = vpop.permute.xlu0 %376
      %378 = vrot.lane.b32.xlu0 %v263, 120
      %v379 = vpop.permute.xlu0 %378
      %vm380 = vcmask 982016
      %v381 = vsel %vm380, %v365, %v367
      %v382 = vsel %vm380, %v369, %v371
      %v383 = vsel %vm380, %v373, %v375
      %v384 = vsel %vm380, %v377, %v379
      %389 = vrot.lane.b32.xlu0 %v256, 116
      %v390 = vpop.permute.xlu0 %389
      %391 = vrot.lane.b32.xlu0 %v257, 116
      %v392 = vpop.permute.xlu0 %391
      %393 = vrot.lane.b32.xlu0 %v258, 116
      %v394 = vpop.permute.xlu0 %393
      %395 = vrot.lane.b32.xlu0 %v259, 116
      %v396 = vpop.permute.xlu0 %395
      %397 = vrot.lane.b32.xlu0 %v260, 116
      %v398 = vpop.permute.xlu0 %397
      %399 = vrot.lane.b32.xlu0 %v261, 116
      %v400 = vpop.permute.xlu0 %399
      %401 = vrot.lane.b32.xlu0 %v262, 116
      %v402 = vpop.permute.xlu0 %401
      %403 = vrot.lane.b32.xlu0 %v263, 116
      %v404 = vpop.permute.xlu0 %403
      %vm405 = vcmask 949248
      %v406 = vsel %vm405, %v390, %v392
      %v407 = vsel %vm405, %v394, %v396
      %v408 = vsel %vm405, %v398, %v400
      %v409 = vsel %vm405, %v402, %v404
      %414 = vrot.lane.b32.xlu0 %v256, 115
      %v415 = vpop.permute.xlu0 %414
      %416 = vrot.lane.b32.xlu0 %v257, 115
      %v417 = vpop.permute.xlu0 %416
      %418 = vrot.lane.b32.xlu0 %v258, 115
      %v419 = vpop.permute.xlu0 %418
      %420 = vrot.lane.b32.xlu0 %v259, 115
      %v421 = vpop.permute.xlu0 %420
      %422 = vrot.lane.b32.xlu0 %v260, 115
      %v423 = vpop.permute.xlu0 %422
      %424 = vrot.lane.b32.xlu0 %v261, 115
      %v425 = vpop.permute.xlu0 %424
      %426 = vrot.lane.b32.xlu0 %v262, 115
      %v427 = vpop.permute.xlu0 %426
      %428 = vrot.lane.b32.xlu0 %v263, 115
      %v429 = vpop.permute.xlu0 %428
      %vm430 = vcmask 941056
      %v431 = vsel %vm430, %v415, %v417
      %v432 = vsel %vm430, %v419, %v421
      %v433 = vsel %vm430, %v423, %v425
      %v434 = vsel %vm430, %v427, %v429
      %439 = vrot.lane.b32.xlu0 %v256, 114
      %v440 = vpop.permute.xlu0 %439
      %441 = vrot.lane.b32.xlu0 %v257, 114
      %v442 = vpop.permute.xlu0 %441
      %443 = vrot.lane.b32.xlu0 %v258, 114
      %v444 = vpop.permute.xlu0 %443
      %445 = vrot.lane.b32.xlu0 %v259, 114
      %v446 = vpop.permute.xlu0 %445
      %447 = vrot.lane.b32.xlu0 %v260, 114
      %v448 = vpop.permute.xlu0 %447
      %449 = vrot.lane.b32.xlu0 %v261, 114
      %v450 = vpop.permute.xlu0 %449
      %451 = vrot.lane.b32.xlu0 %v262, 114
      %v452 = vpop.permute.xlu0 %451
      %453 = vrot.lane.b32.xlu0 %v263, 114
      %v454 = vpop.permute.xlu0 %453
      %vm455 = vcmask 932864
      %v456 = vsel %vm455, %v440, %v442
      %v457 = vsel %vm455, %v444, %v446
      %v458 = vsel %vm455, %v448, %v450
      %v459 = vsel %vm455, %v452, %v454
      %v464 = vld [vmem:[%s1] sm:$0xff]
      %v465 = vld [vmem:[%s1 + $0x8] sm:$0xff]
      %v466 = vld [vmem:[%s1 + $0x10] sm:$0xf]
      %v467 = vld [vmem:[%s1 + $0x14] sm:$0xff]
      %v468 = vld [vmem:[%s1 + $0x1c] sm:$0xff]
      %v469 = vld [vmem:[%s1 + $0x24] sm:$0xf]
      %v470 = vld [vmem:[%s1 + $0x28] sm:$0xff]
      %v471 = vld [vmem:[%s1 + $0x30] sm:$0xff]
      %v472 = vld [vmem:[%s1 + $0x38] sm:$0xf]
      %v473 = vld [vmem:[%s1 + $0x3c] sm:$0xff]
      %v474 = vld [vmem:[%s1 + $0x44] sm:$0xff]
      %v475 = vld [vmem:[%s1 + $0x4c] sm:$0xf]
      %v476 = vld [vmem:[%s1 + $0x50] sm:$0xff]
      %v477 = vld [vmem:[%s1 + $0x58] sm:$0xff]
      %v478 = vld [vmem:[%s1 + $0x60] sm:$0xf]
      %v479 = vld [vmem:[%s1 + $0x64] sm:$0xff]
      %v480 = vld [vmem:[%s1 + $0x6c] sm:$0xff]
      %v481 = vld [vmem:[%s1 + $0x74] sm:$0xf]
      %v482 = vld [vmem:[%s1 + $0x78] sm:$0xff]
      %v483 = vld [vmem:[%s1 + $0x80] sm:$0xff]
      %v484 = vld [vmem:[%s1 + $0x88] sm:$0xf]
      %v485 = vld [vmem:[%s1 + $0x8c] sm:$0xff]
      %v486 = vld [vmem:[%s1 + $0x94] sm:$0xff]
      %v487 = vld [vmem:[%s1 + $0x9c] sm:$0xf]
      %v488 = vld [vmem:[%s2] sm:$0xff]
      %v489 = vld [vmem:[%s2 + $0x8] sm:$0xff]
      %v490 = vld [vmem:[%s2 + $0x10] sm:$0xff]
      %v491 = vld [vmem:[%s2 + $0x18] sm:$0xff]
      %v492 = vld [vmem:[%s2 + $0x20] sm:$0xff]
      %v493 = vld [vmem:[%s2 + $0x28] sm:$0xff]
      %v494 = vld [vmem:[%s2 + $0x30] sm:$0xff]
      %v495 = vld [vmem:[%s2 + $0x38] sm:$0xff]
      %497 = vset.pattern.permute.xlu0 0
      %498 = vperm.xlu0 %497, %v488
      %v499 = vpop.permute.xlu0 %498
      %502 = vset.pattern.permute.xlu0 0
      %503 = vperm.xlu0 %502, %v489
      %v504 = vpop.permute.xlu0 %503
      %507 = vset.pattern.permute.xlu0 0
      %508 = vperm.xlu0 %507, %v490
      %v509 = vpop.permute.xlu0 %508
      %512 = vset.pattern.permute.xlu0 0
      %513 = vperm.xlu0 %512, %v491
      %v514 = vpop.permute.xlu0 %513
      %517 = vset.pattern.permute.xlu0 0
      %518 = vperm.xlu0 %517, %v492
      %v519 = vpop.permute.xlu0 %518
      %522 = vset.pattern.permute.xlu0 0
      %523 = vperm.xlu0 %522, %v493
      %v524 = vpop.permute.xlu0 %523
      %527 = vset.pattern.permute.xlu0 0
      %528 = vperm.xlu0 %527, %v494
      %v529 = vpop.permute.xlu0 %528
      %532 = vset.pattern.permute.xlu0 0
      %533 = vperm.xlu0 %532, %v495
      %v534 = vpop.permute.xlu0 %533
      %v560 = vunpack.c.l.b16 %v464
      %v561 = vunpack.c.h.b16 %v464
      %v562 = vunpack.c.l.b16 %v465
      %v563 = vunpack.c.h.b16 %v465
      %v564 = vunpack.c.l.b16 %v466
      %v565 = vunpack.c.l.b16 %v467
      %v566 = vunpack.c.h.b16 %v467
      %v567 = vunpack.c.l.b16 %v468
      %v568 = vunpack.c.h.b16 %v468
      %v569 = vunpack.c.l.b16 %v469
      %v570 = vunpack.c.l.b16 %v470
      %v571 = vunpack.c.h.b16 %v470
      %v572 = vunpack.c.l.b16 %v471
      %v573 = vunpack.c.h.b16 %v471
      %v574 = vunpack.c.l.b16 %v472
      %v575 = vunpack.c.l.b16 %v473
      %v576 = vunpack.c.h.b16 %v473
      %v577 = vunpack.c.l.b16 %v474
      %v578 = vunpack.c.h.b16 %v474
      %v579 = vunpack.c.l.b16 %v475
      %v580 = vunpack.c.l.b16 %v476
      %v581 = vunpack.c.h.b16 %v476
      %v582 = vunpack.c.l.b16 %v477
      %v583 = vunpack.c.h.b16 %v477
      %v584 = vunpack.c.l.b16 %v478
      %v585 = vunpack.c.l.b16 %v479
      %v586 = vunpack.c.h.b16 %v479
      %v587 = vunpack.c.l.b16 %v480
      %v588 = vunpack.c.h.b16 %v480
      %v589 = vunpack.c.l.b16 %v481
      %v590 = vunpack.c.l.b16 %v482
      %v591 = vunpack.c.h.b16 %v482
      %v592 = vunpack.c.l.b16 %v483
      %v593 = vunpack.c.h.b16 %v483
      %v594 = vunpack.c.l.b16 %v484
      %v595 = vunpack.c.l.b16 %v485
      %v596 = vunpack.c.h.b16 %v485
      %v597 = vunpack.c.l.b16 %v486
      %v598 = vunpack.c.h.b16 %v486
      %v599 = vunpack.c.l.b16 %v487
      %v600 = vpack.c.b16 %v565, %v560
      %v601 = vpack.c.b16 %v566, %v561
      %v602 = vpack.c.b16 %v567, %v562
      %v603 = vpack.c.b16 %v568, %v563
      %v604 = vpack.c.b16 %v569, %v564
      %v605 = vpack.c.b16 %v575, %v570
      %v606 = vpack.c.b16 %v576, %v571
      %v607 = vpack.c.b16 %v577, %v572
      %v608 = vpack.c.b16 %v578, %v573
      %v609 = vpack.c.b16 %v579, %v574
      %v610 = vpack.c.b16 %v585, %v580
      %v611 = vpack.c.b16 %v586, %v581
      %v612 = vpack.c.b16 %v587, %v582
      %v613 = vpack.c.b16 %v588, %v583
      %v614 = vpack.c.b16 %v589, %v584
      %v615 = vpack.c.b16 %v595, %v590
      %v616 = vpack.c.b16 %v596, %v591
      %v617 = vpack.c.b16 %v597, %v592
      %v618 = vpack.c.b16 %v598, %v593
      %v619 = vpack.c.b16 %v599, %v594
      %vm636 = vcmask 523264
      %v638 = vsel %vm636, %v604, 0
      %v641 = vsel %vm636, %v609, 0
      %v644 = vsel %vm636, %v614, 0
      %v647 = vsel %vm636, %v619, 0
      %649 = vmatprep.subr.bf16.mxu0 0
      %650 = vmatpush1.bf16.msra.mxu0 %v284
      %651 = vmatprep.subr.bf16.mxu0 0
      %652 = vmatpush1.bf16.msra.mxu0 %v283
      %653 = vmatprep.subr.bf16.mxu0 0
      %654 = vmatpush1.bf16.msra.mxu0 %v282
      %655 = vmatprep.subr.bf16.mxu0 0
      %656 = vmatpush1.bf16.msra.mxu0 %v281
      %657 = vmatprep.subr.bf16.mxu0 0
      %658 = vmatpush1.bf16.msra.mxu0 %v227
      %659 = vmatprep.subr.bf16.mxu0 0
      %660 = vmatpush1.bf16.msra.mxu0 %v226
      %661 = vmatprep.subr.bf16.mxu0 0
      %662 = vmatpush1.bf16.msra.mxu0 %v225
      %663 = vmatprep.subr.bf16.mxu0 0
      %664 = vmatpush1.bf16.msra.mxu0 %v224
      %665 = vmatprep.subr.bf16.mxu0 0
      %666 = vmatpush2.bf16.msra.mxu0 %v334
      %667 = vmatprep.subr.bf16.mxu0 0
      %668 = vmatpush2.bf16.msra.mxu0 %v333
      %669 = vmatprep.subr.bf16.mxu0 0
      %670 = vmatpush2.bf16.msra.mxu0 %v332
      %671 = vmatprep.subr.bf16.mxu0 0
      %672 = vmatpush2.bf16.msra.mxu0 %v331
      %673 = vmatprep.subr.bf16.mxu0 0
      %674 = vmatpush2.bf16.msra.mxu0 %v309
      %675 = vmatprep.subr.bf16.mxu0 0
      %676 = vmatpush2.bf16.msra.mxu0 %v308
      %677 = vmatprep.subr.bf16.mxu0 0
      %678 = vmatpush2.bf16.msra.mxu0 %v307
      %679 = vmatprep.subr.bf16.mxu0 0
      %680 = vmatpush2.bf16.msra.mxu0 %v306
      %681 = vmatprep.mubr.bf16.mxu0 %v601
      %682 = vmatmul.mubr.bf16.gmra.mxu0 %v600
      %v683 = vpop.f32.mrf.mxu0
      %v684 = vadd.f32 %v499, %v683
      %v685 = vpop.f32.mrf.mxu0
      %v686 = vpop.f32.mrf.mxu0
      %v687 = vadd.f32 %v504, %v686
      %v688 = vpop.f32.mrf.mxu0
      %689 = vmatprep.mubr.bf16.mxu0 %v606
      %690 = vmatmul.mubr.bf16.gmra.mxu0 %v605
      %v691 = vpop.f32.mrf.mxu0
      %v692 = vadd.f32 %v509, %v691
      %v693 = vpop.f32.mrf.mxu0
      %v694 = vpop.f32.mrf.mxu0
      %v695 = vadd.f32 %v514, %v694
      %v696 = vpop.f32.mrf.mxu0
      %697 = vmatprep.mubr.bf16.mxu0 %v611
      %698 = vmatmul.mubr.bf16.gmra.mxu0 %v610
      %v699 = vpop.f32.mrf.mxu0
      %v700 = vadd.f32 %v519, %v699
      %v701 = vpop.f32.mrf.mxu0
      %v702 = vpop.f32.mrf.mxu0
      %v703 = vadd.f32 %v524, %v702
      %v704 = vpop.f32.mrf.mxu0
      %705 = vmatprep.mubr.bf16.mxu0 %v616
      %706 = vmatmul.mubr.bf16.gmra.mxu0 %v615
      %v707 = vpop.f32.mrf.mxu0
      %v708 = vadd.f32 %v529, %v707
      %v709 = vpop.f32.mrf.mxu0
      %v710 = vpop.f32.mrf.mxu0
      %v711 = vadd.f32 %v534, %v710
      %v712 = vpop.f32.mrf.mxu0
      %713 = vdwg.mxu0
      %714 = vmatprep.subr.bf16.mxu0 0
      %715 = vmatpush1.bf16.msra.mxu0 %v384
      %716 = vmatprep.subr.bf16.mxu0 0
      %717 = vmatpush1.bf16.msra.mxu0 %v383
      %718 = vmatprep.subr.bf16.mxu0 0
      %719 = vmatpush1.bf16.msra.mxu0 %v382
      %720 = vmatprep.subr.bf16.mxu0 0
      %721 = vmatpush1.bf16.msra.mxu0 %v381
      %722 = vmatprep.subr.bf16.mxu0 0
      %723 = vmatpush1.bf16.msra.mxu0 %v359
      %724 = vmatprep.subr.bf16.mxu0 0
      %725 = vmatpush1.bf16.msra.mxu0 %v358
      %726 = vmatprep.subr.bf16.mxu0 0
      %727 = vmatpush1.bf16.msra.mxu0 %v357
      %728 = vmatprep.subr.bf16.mxu0 0
      %729 = vmatpush1.bf16.msra.mxu0 %v356
      %730 = vmatprep.subr.bf16.mxu0 0
      %731 = vmatpush2.bf16.msra.mxu0 %v434
      %732 = vmatprep.subr.bf16.mxu0 0
      %733 = vmatpush2.bf16.msra.mxu0 %v433
      %734 = vmatprep.subr.bf16.mxu0 0
      %735 = vmatpush2.bf16.msra.mxu0 %v432
      %736 = vmatprep.subr.bf16.mxu0 0
      %737 = vmatpush2.bf16.msra.mxu0 %v431
      %738 = vmatprep.subr.bf16.mxu0 0
      %739 = vmatpush2.bf16.msra.mxu0 %v409
      %740 = vmatprep.subr.bf16.mxu0 0
      %741 = vmatpush2.bf16.msra.mxu0 %v408
      %742 = vmatprep.subr.bf16.mxu0 0
      %743 = vmatpush2.bf16.msra.mxu0 %v407
      %744 = vmatprep.subr.bf16.mxu0 0
      %745 = vmatpush2.bf16.msra.mxu0 %v406
      %746 = vmatprep.mubr.bf16.mxu0 %v603
      %747 = vmatmul.mubr.bf16.gmra.mxu0 %v602
      %v748 = vpop.f32.mrf.mxu0
      %v749 = vadd.f32 %v684, %v748
      %v750 = vpop.f32.mrf.mxu0
      %v751 = vpop.f32.mrf.mxu0
      %v752 = vadd.f32 %v687, %v751
      %v753 = vpop.f32.mrf.mxu0
      %754 = vmatprep.mubr.bf16.mxu0 %v608
      %755 = vmatmul.mubr.bf16.gmra.mxu0 %v607
      %v756 = vpop.f32.mrf.mxu0
      %v757 = vadd.f32 %v692, %v756
      %v758 = vpop.f32.mrf.mxu0
      %v759 = vpop.f32.mrf.mxu0
      %v760 = vadd.f32 %v695, %v759
      %v761 = vpop.f32.mrf.mxu0
      %762 = vmatprep.mubr.bf16.mxu0 %v613
      %763 = vmatmul.mubr.bf16.gmra.mxu0 %v612
      %v764 = vpop.f32.mrf.mxu0
      %v765 = vadd.f32 %v700, %v764
      %v766 = vpop.f32.mrf.mxu0
      %v767 = vpop.f32.mrf.mxu0
      %v768 = vadd.f32 %v703, %v767
      %v769 = vpop.f32.mrf.mxu0
      %770 = vmatprep.mubr.bf16.mxu0 %v618
      %771 = vmatmul.mubr.bf16.gmra.mxu0 %v617
      %v772 = vpop.f32.mrf.mxu0
      %v773 = vadd.f32 %v708, %v772
      %v774 = vpop.f32.mrf.mxu0
      %v775 = vpop.f32.mrf.mxu0
      %v776 = vadd.f32 %v711, %v775
      %v777 = vpop.f32.mrf.mxu0
      %778 = vdwg.mxu0
      %779 = vmatprep.subr.bf16.mxu0 0
      %780 = vmatpush1.bf16.msra.mxu0 0
      %781 = vmatprep.subr.bf16.mxu0 0
      %782 = vmatpush1.bf16.msra.mxu0 0
      %783 = vmatprep.subr.bf16.mxu0 0
      %784 = vmatpush1.bf16.msra.mxu0 0
      %785 = vmatprep.subr.bf16.mxu0 0
      %786 = vmatpush1.bf16.msra.mxu0 0
      %787 = vmatprep.subr.bf16.mxu0 0
      %788 = vmatpush1.bf16.msra.mxu0 %v459
      %789 = vmatprep.subr.bf16.mxu0 0
      %790 = vmatpush1.bf16.msra.mxu0 %v458
      %791 = vmatprep.subr.bf16.mxu0 0
      %792 = vmatpush1.bf16.msra.mxu0 %v457
      %793 = vmatprep.subr.bf16.mxu0 0
      %794 = vmatpush1.bf16.msra.mxu0 %v456
      %795 = vmatprep.subr.bf16.mxu0 0
      %796 = vmatpush2.bf16.msra.mxu0 0
      %797 = vmatprep.subr.bf16.mxu0 0
      %798 = vmatpush2.bf16.msra.mxu0 0
      %799 = vmatprep.subr.bf16.mxu0 0
      %800 = vmatpush2.bf16.msra.mxu0 0
      %801 = vmatprep.subr.bf16.mxu0 0
      %802 = vmatpush2.bf16.msra.mxu0 0
      %803 = vmatprep.subr.bf16.mxu0 0
      %804 = vmatpush2.bf16.msra.mxu0 0
      %805 = vmatprep.subr.bf16.mxu0 0
      %806 = vmatpush2.bf16.msra.mxu0 0
      %807 = vmatprep.subr.bf16.mxu0 0
      %808 = vmatpush2.bf16.msra.mxu0 0
      %809 = vmatprep.subr.bf16.mxu0 0
      %810 = vmatpush2.bf16.msra.mxu0 0
      %811 = vmatprep.mubr.bf16.mxu0 0
      %812 = vmatmul.mubr.bf16.gmra.mxu0 %v638
      %v813 = vpop.f32.mrf.mxu0
      %v814 = vadd.f32 %v749, %v813
      %v815 = vpop.f32.mrf.mxu0
      %v816 = vpop.f32.mrf.mxu0
      %v817 = vadd.f32 %v752, %v816
      %v818 = vpop.f32.mrf.mxu0
      %819 = vmatprep.mubr.bf16.mxu0 0
      %820 = vmatmul.mubr.bf16.gmra.mxu0 %v641
      %v821 = vpop.f32.mrf.mxu0
      %v822 = vadd.f32 %v757, %v821
      %v823 = vpop.f32.mrf.mxu0
      %v824 = vpop.f32.mrf.mxu0
      %v825 = vadd.f32 %v760, %v824
      %v826 = vpop.f32.mrf.mxu0
      %827 = vmatprep.mubr.bf16.mxu0 0
      %828 = vmatmul.mubr.bf16.gmra.mxu0 %v644
      %v829 = vpop.f32.mrf.mxu0
      %v830 = vadd.f32 %v765, %v829
      %v831 = vpop.f32.mrf.mxu0
      %v832 = vpop.f32.mrf.mxu0
      %v833 = vadd.f32 %v768, %v832
      %v834 = vpop.f32.mrf.mxu0
      %835 = vmatprep.mubr.bf16.mxu0 0
      %836 = vmatmul.mubr.bf16.gmra.mxu0 %v647
      %v837 = vpop.f32.mrf.mxu0
      %v838 = vadd.f32 %v773, %v837
      %v839 = vpop.f32.mrf.mxu0
      %v840 = vpop.f32.mrf.mxu0
      %v841 = vadd.f32 %v776, %v840
      %v842 = vpop.f32.mrf.mxu0
      %843 = vdwg.mxu0
      %844 = vst [vmem:[%s190] sm:$0xff] %v814
      %845 = vst [vmem:[%s190 + $0x8] sm:$0xff] %v817
      %846 = vst [vmem:[%s190 + $0x10] sm:$0xff] %v822
      %847 = vst [vmem:[%s190 + $0x18] sm:$0xff] %v825
      %848 = vst [vmem:[%s190 + $0x20] sm:$0xff] %v830
      %849 = vst [vmem:[%s190 + $0x28] sm:$0xff] %v833
      %850 = vst [vmem:[%s190 + $0x30] sm:$0xff] %v838
      %851 = vst [vmem:[%s190 + $0x38] sm:$0xff] %v841
      %p852 = scmp.lt.s32.totalorder %s18, 1
      %s853 = scalar_select %p852, %s18, 1
      %p854 = scmp.lt.s32.totalorder %s19, 0
      %s855 = scalar_select %p854, %s19, 0
      %s856 = smul.addr %s853, 8
      %s857 = sadd.s32 %s855, %s856
      %s858 = smul.addr %s857, 8
      %s859 = scalar_lea.vmem %s3, %s858
      // Predicated region
      $region33: #{enhanced_climate_unet.30} parent=31 // pred_check
        %p860 = pneg %p114
      $region34: #{enhanced_climate_unet.30} parent=31 // pred_check_branch
        %862 = sbr.rel (%p860) target = $region36
      $region35: #{enhanced_climate_unet.30} parent=31 // pred_region
        _
      $region36: #{enhanced_climate_unet.30} parent=31 // pred_fallthru
        _
    $region32: #{enhanced_climate_unet.30} parent=5 // pred_fallthru
      _
    %p863 = scmp.le.s32.totalorder 2, %s9
    // Predicated region
    $region37: #{enhanced_climate_unet.30} parent=5 // pred_check
      %p864 = pneg %p863
    $region38: #{enhanced_climate_unet.30} parent=5 // pred_check_branch
      %866 = sbr.rel (%p864) target = $region40
    $region39: #{enhanced_climate_unet.30} parent=5 // pred_region
      %s867 = ssub.s32 %s9, 2
      // Predicated region
      $region41: #{enhanced_climate_unet.30} parent=39 // pred_check
        %p868 = pneg %p120
      $region42: #{enhanced_climate_unet.30} parent=39 // pred_check_branch
        %870 = sbr.rel (%p868) target = $region44
      $region43: #{enhanced_climate_unet.30} parent=39 // pred_region
        %p871 = scmp.lt.s32.totalorder %s20, 1
        %s872 = scalar_select %p871, %s20, 1
        %p873 = scmp.lt.s32.totalorder %s21, 0
        %s874 = scalar_select %p873, %s21, 0
        %s875 = smul.addr %s872, 8
        %s876 = sadd.s32 %s874, %s875
        %s877 = smul.addr %s876, 8
        %s878 = scalar_lea.vmem %s3, %s877
      $region44: #{enhanced_climate_unet.30} parent=39 // pred_fallthru
        _
    $region40: #{enhanced_climate_unet.30} parent=5 // pred_fallthru
      _
  $region6: #{enhanced_climate_unet.30} parent=0 // loop_footer
    %s13 = sadd.s32 1, %s9
  $region7: #{enhanced_climate_unet.30} parent=0 // loop_footer_branch
    %8 = sbr.rel target = $region3
  $region8: #{enhanced_climate_unet.30} parent=0 // loop_exit
    _

// kernel: enhanced_climate_unet.31
$region0: #{enhanced_climate_unet.31}
  #allocation0 [shape = 'u32[]', space=smem, size = 0x4, offset = 0x4, fixed_abs, tag = 'smem constant byte address 0x4 - core index']
  #allocation1 [shape = 'u32[144,128]{1,0:T(1,128)}', space=vmem, size = 0x12000, scoped, tag = 'internal scratch']
  %s0 = inlined_call_operand.vmem [shape: bf16[2,64,168], index: 0, kind: input, shape index: {}]
  %s1 = inlined_call_operand.vmem [shape: bf16[64,576], index: 1, kind: input, shape index: {}]
  %s2 = inlined_call_operand.vmem [shape: f32[64,1], index: 2, kind: input, shape index: {}]
  %s3 = inlined_call_operand.vmem [shape: f32[2,64,128], index: 3, kind: output, shape index: {}]
  %s4 = sld [smem:[#allocation0]]
  $region45: #{enhanced_climate_unet.31} parent=0
    _
  %s6 = ssub.s32 1, %s4
  %s7 = scalar_select 0, %s6, %s4
  loop: start=0, step=1, limit=4
  $region2: #{enhanced_climate_unet.31} parent=0 // loop_pre_header
    _
  $region3: #{enhanced_climate_unet.31} parent=0 // loop_header
    %s9 = sphi 0, %s13
    %p10 = scmp.ge.s32.totalorder %s9, 4
    %s16 = sphi 0, %s28
    %s17 = sphi 0, %s24
    %s18 = sphi 0, %s16
    %s19 = sphi 0, %s17
    %s20 = sphi 0, %s18
    %s21 = sphi 0, %s19
    %s31 = sphi 0, %s33
    %s34 = sphi 0, %s31
    %s35 = sphi 0, %s34
    %s51 = sphi 0, %s35
    %s55 = sphi 0, %s55
    %s57 = sphi 0, %s55
    %s58 = sphi 0, %s57
    %s72 = sphi 0, %s58
    %s76 = sphi 0, %s76
    %s78 = sphi 0, %s76
    %s79 = sphi 0, %s78
    %s93 = sphi 0, %s79
    %s101 = sphi 0, %s103
    %s104 = sphi 0, %s101
    %s105 = sphi 0, %s104
    %s121 = sphi 0, %s105
  $region4: #{enhanced_climate_unet.31} parent=0 // loop_header_branch
    %12 = sbr.rel (%p10) target = $region8
  $region5: #{enhanced_climate_unet.31} parent=0 // loop_body
    %s14 = ssub.s32 %s9, 1
    %s15 = ssub.s32 %s9, 2
    %s22 = sadd.s32 1, %s17
    %p23 = scmp.ge.s32.totalorder %s22, 1
    %s24 = scalar_select %p23, 0, %s22
    %s25 = sadd.s32 1, %s16
    %s26 = scalar_select %p23, %s25, %s16
    %p27 = scmp.ge.s32.totalorder %s26, 2
    %s28 = scalar_select %p27, 0, %s26
    %s29 = ssub.s32 %s16, %s28
    %p30 = scmp.eq.s32.totalorder %s29, 0
    %s32 = sadd.s32 %s31, 1
    %s33 = scalar_select %p30, %s31, %s32
    %p36 = pneg %p30
    %p37 = scmp.eq.s32.totalorder %s9, 1
    %p38 = por %p36, %p37
    %p39 = scmp.ne.s32.totalorder %s31, %s34
    %p40 = scmp.eq.s32.totalorder %s9, 0
    %p41 = por %p39, %p40
    %p42 = scmp.ne.s32.totalorder %s31, %s34
    %p43 = scmp.eq.s32.totalorder %s14, 1
    %p44 = por %p42, %p43
    %p45 = scmp.ne.s32.totalorder %s34, %s35
    %p46 = scmp.eq.s32.totalorder %s14, 0
    %p47 = por %p45, %p46
    %p48 = scmp.ne.s32.totalorder %s34, %s35
    %p49 = scmp.eq.s32.totalorder %s15, 1
    %p50 = por %p48, %p49
    %p52 = scmp.ne.s32.totalorder %s35, %s51
    %p53 = scmp.eq.s32.totalorder %s15, 0
    %p54 = por %p52, %p53
    %s56 = sadd.s32 %s55, 1
    %p59 = scmp.eq.s32.totalorder %s9, 1
    %p60 = scmp.ne.s32.totalorder %s55, %s57
    %p61 = scmp.eq.s32.totalorder %s9, 0
    %p62 = por %p60, %p61
    %p63 = scmp.ne.s32.totalorder %s55, %s57
    %p64 = scmp.eq.s32.totalorder %s14, 1
    %p65 = por %p63, %p64
    %p66 = scmp.ne.s32.totalorder %s57, %s58
    %p67 = scmp.eq.s32.totalorder %s14, 0
    %p68 = por %p66, %p67
    %p69 = scmp.ne.s32.totalorder %s57, %s58
    %p70 = scmp.eq.s32.totalorder %s15, 1
    %p71 = por %p69, %p70
    %p73 = scmp.ne.s32.totalorder %s58, %s72
    %p74 = scmp.eq.s32.totalorder %s15, 0
    %p75 = por %p73, %p74
    %s77 = sadd.s32 %s76, 1
    %p80 = scmp.eq.s32.totalorder %s9, 1
    %p81 = scmp.ne.s32.totalorder %s76, %s78
    %p82 = scmp.eq.s32.totalorder %s9, 0
    %p83 = por %p81, %p82
    %p84 = scmp.ne.s32.totalorder %s76, %s78
    %p85 = scmp.eq.s32.totalorder %s14, 1
    %p86 = por %p84, %p85
    %p87 = scmp.ne.s32.totalorder %s78, %s79
    %p88 = scmp.eq.s32.totalorder %s14, 0
    %p89 = por %p87, %p88
    %p90 = scmp.ne.s32.totalorder %s78, %s79
    %p91 = scmp.eq.s32.totalorder %s15, 1
    %p92 = por %p90, %p91
    %p94 = scmp.ne.s32.totalorder %s79, %s93
    %p95 = scmp.eq.s32.totalorder %s15, 0
    %p96 = por %p94, %p95
    %s97 = ssub.s32 %s16, %s28
    %s98 = ssub.s32 %s17, %s24
    %s99 = sor.u32 %s97, %s98
    %p100 = scmp.eq.s32.totalorder %s99, 0
    %s102 = sadd.s32 %s101, 1
    %s103 = scalar_select %p100, %s101, %s102
    %p106 = pneg %p100
    %p107 = scmp.eq.s32.totalorder %s9, 1
    %p108 = por %p106, %p107
    %p109 = scmp.ne.s32.totalorder %s101, %s104
    %p110 = scmp.eq.s32.totalorder %s9, 0
    %p111 = por %p109, %p110
    %p112 = scmp.ne.s32.totalorder %s101, %s104
    %p113 = scmp.eq.s32.totalorder %s14, 1
    %p114 = por %p112, %p113
    %p115 = scmp.ne.s32.totalorder %s104, %s105
    %p116 = scmp.eq.s32.totalorder %s14, 0
    %p117 = por %p115, %p116
    %p118 = scmp.ne.s32.totalorder %s104, %s105
    %p119 = scmp.eq.s32.totalorder %s15, 1
    %p120 = por %p118, %p119
    %p122 = scmp.ne.s32.totalorder %s105, %s121
    %p123 = scmp.eq.s32.totalorder %s15, 0
    %p124 = por %p122, %p123
    %p125 = scmp.le.s32.totalorder 1, %s9
    %p126 = scmp.lt.s32.totalorder %s9, 3
    %p127 = pnand %p125, %p126
    %p128 = pneg %p127
    // Predicated region
    $region9: #{enhanced_climate_unet.31} parent=5 // pred_check
      _
    $region10: #{enhanced_climate_unet.31} parent=5 // pred_check_branch
      %130 = sbr.rel (%p127) target = $region12
    $region11: #{enhanced_climate_unet.31} parent=5 // pred_region
      %s131 = ssub.s32 %s9, 1
      // Predicated region
      $region13: #{enhanced_climate_unet.31} parent=11 // pred_check
        %p132 = pneg %p68
      $region14: #{enhanced_climate_unet.31} parent=11 // pred_check_branch
        %134 = sbr.rel (%p132) target = $region16
      $region15: #{enhanced_climate_unet.31} parent=11 // pred_region
        _
      $region16: #{enhanced_climate_unet.31} parent=11 // pred_fallthru
        _
      // Predicated region
      $region17: #{enhanced_climate_unet.31} parent=11 // pred_check
        %p135 = pneg %p89
      $region18: #{enhanced_climate_unet.31} parent=11 // pred_check_branch
        %137 = sbr.rel (%p135) target = $region20
      $region19: #{enhanced_climate_unet.31} parent=11 // pred_region
        _
      $region20: #{enhanced_climate_unet.31} parent=11 // pred_fallthru
        _
    $region12: #{enhanced_climate_unet.31} parent=5 // pred_fallthru
      _
    %p138 = scmp.lt.s32.totalorder %s9, 2
    // Predicated region
    $region21: #{enhanced_climate_unet.31} parent=5 // pred_check
      %p139 = pneg %p138
    $region22: #{enhanced_climate_unet.31} parent=5 // pred_check_branch
      %141 = sbr.rel (%p139) target = $region24
    $region23: #{enhanced_climate_unet.31} parent=5 // pred_region
      // Predicated region
      $region25: #{enhanced_climate_unet.31} parent=23 // pred_check
        %p142 = pneg %p41
      $region26: #{enhanced_climate_unet.31} parent=23 // pred_check_branch
        %144 = sbr.rel (%p142) target = $region28
      $region27: #{enhanced_climate_unet.31} parent=23 // pred_region
        %p145 = scmp.lt.s32.totalorder %s16, 1
        %s146 = scalar_select %p145, %s16, 1
        %s147 = smul.addr %s146, 16
        %s148 = smul.addr %s147, 4
        %s149 = scalar_lea.vmem %s0, %s148
      $region28: #{enhanced_climate_unet.31} parent=23 // pred_fallthru
        _
    $region24: #{enhanced_climate_unet.31} parent=5 // pred_fallthru
      _
    %p150 = scmp.le.s32.totalorder 1, %s9
    %p151 = scmp.lt.s32.totalorder %s9, 3
    %p152 = pnand %p150, %p151
    %p153 = pneg %p152
    // Predicated region
    $region29: #{enhanced_climate_unet.31} parent=5 // pred_check
      _
    $region30: #{enhanced_climate_unet.31} parent=5 // pred_check_branch
      %155 = sbr.rel (%p152) target = $region32
    $region31: #{enhanced_climate_unet.31} parent=5 // pred_region
      %s156 = ssub.s32 %s9, 1
      %p157 = scmp.lt.s32.totalorder %s18, 1
      %s158 = scalar_select %p157, %s18, 1
      %s159 = smul.addr %s158, 16
      %s160 = smul.addr %s159, 4
      %s161 = scalar_lea.vmem %s0, %s160
      %p162 = pneg %p47
      %p163 = pneg %p44
      %p164 = pneg %p68
      %p165 = pneg %p65
      %p166 = pneg %p89
      %p167 = pneg %p86
      %p168 = pneg %p117
      %p169 = pneg %p114
      %p170 = scmp.lt.s32.totalorder %s18, 1
      %s171 = scalar_select %p170, %s18, 1
      %p172 = scmp.lt.s32.totalorder %s19, 0
      %s173 = scalar_select %p172, %s19, 0
      %s174 = smul.addr %s171, 8
      %s175 = sadd.s32 %s173, %s174
      %s176 = smul.addr %s175, 8
      %s177 = scalar_lea.vmem %s3, %s176
      %p178 = scmp.lt.s32.totalorder %s18, 1
      %s179 = scalar_select %p178, %s18, 1
      %s180 = smul.addr %s179, 16
      %s181 = smul.addr %s180, 4
      %s182 = scalar_lea.vmem %s0, %s181
      %p183 = scmp.lt.s32.totalorder %s18, 1
      %s184 = scalar_select %p183, %s18, 1
      %p185 = scmp.lt.s32.totalorder %s19, 0
      %s186 = scalar_select %p185, %s19, 0
      %s187 = smul.addr %s184, 8
      %s188 = sadd.s32 %s186, %s187
      %s189 = smul.addr %s188, 8
      %s190 = scalar_lea.vmem %s3, %s189
      %v192 = vld [vmem:[%s182] sm:$0xf]
      %v193 = vld [vmem:[%s182 + $0x8] sm:$0xf]
      %v194 = vld [vmem:[%s182 + $0x10] sm:$0xf]
      %v195 = vld [vmem:[%s182 + $0x18] sm:$0xf]
      %v196 = vld [vmem:[%s182 + $0x20] sm:$0xf]
      %v197 = vld [vmem:[%s182 + $0x28] sm:$0xf]
      %v198 = vld [vmem:[%s182 + $0x30] sm:$0xf]
      %v199 = vld [vmem:[%s182 + $0x38] sm:$0xf]
      %v200 = vld [vmem:[%s182] sm:$0xff]
      %v201 = vld [vmem:[%s182 + $0x8] sm:$0xff]
      %v202 = vld [vmem:[%s182 + $0x10] sm:$0xff]
      %v203 = vld [vmem:[%s182 + $0x18] sm:$0xff]
      %v204 = vld [vmem:[%s182 + $0x20] sm:$0xff]
      %v205 = vld [vmem:[%s182 + $0x28] sm:$0xff]
      %v206 = vld [vmem:[%s182 + $0x30] sm:$0xff]
      %v207 = vld [vmem:[%s182 + $0x38] sm:$0xff]
      %v216 = vunpack.c.l.b16 %v192
      %v217 = vunpack.c.l.b16 %v193
      %v218 = vunpack.c.l.b16 %v194
      %v219 = vunpack.c.l.b16 %v195
      %v220 = vunpack.c.l.b16 %v196
      %v221 = vunpack.c.l.b16 %v197
      %v222 = vunpack.c.l.b16 %v198
      %v223 = vunpack.c.l.b16 %v199
      %v224 = vpack.c.b16 %v217, %v216
      %v225 = vpack.c.b16 %v219, %v218
      %v226 = vpack.c.b16 %v221, %v220
      %v227 = vpack.c.b16 %v223, %v222
      %v240 = vunpack.c.l.b16 %v200
      %v241 = vunpack.c.h.b16 %v200
      %v242 = vunpack.c.l.b16 %v201
      %v243 = vunpack.c.h.b16 %v201
      %v244 = vunpack.c.l.b16 %v202
      %v245 = vunpack.c.h.b16 %v202
      %v246 = vunpack.c.l.b16 %v203
      %v247 = vunpack.c.h.b16 %v203
      %v248 = vunpack.c.l.b16 %v204
      %v249 = vunpack.c.h.b16 %v204
      %v250 = vunpack.c.l.b16 %v205
      %v251 = vunpack.c.h.b16 %v205
      %v252 = vunpack.c.l.b16 %v206
      %v253 = vunpack.c.h.b16 %v206
      %v254 = vunpack.c.l.b16 %v207
      %v255 = vunpack.c.h.b16 %v207
      %v256 = vpack.c.b16 %v242, %v240
      %v257 = vpack.c.b16 %v243, %v241
      %v258 = vpack.c.b16 %v246, %v244
      %v259 = vpack.c.b16 %v247, %v245
      %v260 = vpack.c.b16 %v250, %v248
      %v261 = vpack.c.b16 %v251, %v249
      %v262 = vpack.c.b16 %v254, %v252
      %v263 = vpack.c.b16 %v255, %v253
      %264 = vrot.lane.b32.xlu0 %v256, 126
      %v265 = vpop.permute.xlu0 %264
      %266 = vrot.lane.b32.xlu0 %v257, 126
      %v267 = vpop.permute.xlu0 %266
      %268 = vrot.lane.b32.xlu0 %v258, 126
      %v269 = vpop.permute.xlu0 %268
      %270 = vrot.lane.b32.xlu0 %v259, 126
      %v271 = vpop.permute.xlu0 %270
      %272 = vrot.lane.b32.xlu0 %v260, 126
      %v273 = vpop.permute.xlu0 %272
      %274 = vrot.lane.b32.xlu0 %v261, 126
      %v275 = vpop.permute.xlu0 %274
      %276 = vrot.lane.b32.xlu0 %v262, 126
      %v277 = vpop.permute.xlu0 %276
      %278 = vrot.lane.b32.xlu0 %v263, 126
      %v279 = vpop.permute.xlu0 %278
      %vm280 = vcmask 1031168
      %v281 = vsel %vm280, %v265, %v267
      %v282 = vsel %vm280, %v269, %v271
      %v283 = vsel %vm280, %v273, %v275
      %v284 = vsel %vm280, %v277, %v279
      %289 = vrot.lane.b32.xlu0 %v256, 124
      %v290 = vpop.permute.xlu0 %289
      %291 = vrot.lane.b32.xlu0 %v257, 124
      %v292 = vpop.permute.xlu0 %291
      %293 = vrot.lane.b32.xlu0 %v258, 124
      %v294 = vpop.permute.xlu0 %293
      %295 = vrot.lane.b32.xlu0 %v259, 124
      %v296 = vpop.permute.xlu0 %295
      %297 = vrot.lane.b32.xlu0 %v260, 124
      %v298 = vpop.permute.xlu0 %297
      %299 = vrot.lane.b32.xlu0 %v261, 124
      %v300 = vpop.permute.xlu0 %299
      %301 = vrot.lane.b32.xlu0 %v262, 124
      %v302 = vpop.permute.xlu0 %301
      %303 = vrot.lane.b32.xlu0 %v263, 124
      %v304 = vpop.permute.xlu0 %303
      %vm305 = vcmask 1014784
      %v306 = vsel %vm305, %v290, %v292
      %v307 = vsel %vm305, %v294, %v296
      %v308 = vsel %vm305, %v298, %v300
      %v309 = vsel %vm305, %v302, %v304
      %314 = vrot.lane.b32.xlu0 %v256, 112
      %v315 = vpop.permute.xlu0 %314
      %316 = vrot.lane.b32.xlu0 %v257, 112
      %v317 = vpop.permute.xlu0 %316
      %318 = vrot.lane.b32.xlu0 %v258, 112
      %v319 = vpop.permute.xlu0 %318
      %320 = vrot.lane.b32.xlu0 %v259, 112
      %v321 = vpop.permute.xlu0 %320
      %322 = vrot.lane.b32.xlu0 %v260, 112
      %v323 = vpop.permute.xlu0 %322
      %324 = vrot.lane.b32.xlu0 %v261, 112
      %v325 = vpop.permute.xlu0 %324
      %326 = vrot.lane.b32.xlu0 %v262, 112
      %v327 = vpop.permute.xlu0 %326
      %328 = vrot.lane.b32.xlu0 %v263, 112
      %v329 = vpop.permute.xlu0 %328
      %vm330 = vcmask 916480
      %v331 = vsel %vm330, %v315, %v317
      %v332 = vsel %vm330, %v319, %v321
      %v333 = vsel %vm330, %v323, %v325
      %v334 = vsel %vm330, %v327, %v329
      %339 = vrot.lane.b32.xlu0 %v256, 110
      %v340 = vpop.permute.xlu0 %339
      %341 = vrot.lane.b32.xlu0 %v257, 110
      %v342 = vpop.permute.xlu0 %341
      %343 = vrot.lane.b32.xlu0 %v258, 110
      %v344 = vpop.permute.xlu0 %343
      %345 = vrot.lane.b32.xlu0 %v259, 110
      %v346 = vpop.permute.xlu0 %345
      %347 = vrot.lane.b32.xlu0 %v260, 110
      %v348 = vpop.permute.xlu0 %347
      %349 = vrot.lane.b32.xlu0 %v261, 110
      %v350 = vpop.permute.xlu0 %349
      %351 = vrot.lane.b32.xlu0 %v262, 110
      %v352 = vpop.permute.xlu0 %351
      %353 = vrot.lane.b32.xlu0 %v263, 110
      %v354 = vpop.permute.xlu0 %353
      %vm355 = vcmask 900096
      %v356 = vsel %vm355, %v340, %v342
      %v357 = vsel %vm355, %v344, %v346
      %v358 = vsel %vm355, %v348, %v350
      %v359 = vsel %vm355, %v352, %v354
      %364 = vrot.lane.b32.xlu0 %v256, 108
      %v365 = vpop.permute.xlu0 %364
      %366 = vrot.lane.b32.xlu0 %v257, 108
      %v367 = vpop.permute.xlu0 %366
      %368 = vrot.lane.b32.xlu0 %v258, 108
      %v369 = vpop.permute.xlu0 %368
      %370 = vrot.lane.b32.xlu0 %v259, 108
      %v371 = vpop.permute.xlu0 %370
      %372 = vrot.lane.b32.xlu0 %v260, 108
      %v373 = vpop.permute.xlu0 %372
      %374 = vrot.lane.b32.xlu0 %v261, 108
      %v375 = vpop.permute.xlu0 %374
      %376 = vrot.lane.b32.xlu0 %v262, 108
      %v377 = vpop.permute.xlu0 %376
      %378 = vrot.lane.b32.xlu0 %v263, 108
      %v379 = vpop.permute.xlu0 %378
      %vm380 = vcmask 883712
      %v381 = vsel %vm380, %v365, %v367
      %v382 = vsel %vm380, %v369, %v371
      %v383 = vsel %vm380, %v373, %v375
      %v384 = vsel %vm380, %v377, %v379
      %389 = vrot.lane.b32.xlu0 %v256, 96
      %v390 = vpop.permute.xlu0 %389
      %391 = vrot.lane.b32.xlu0 %v257, 96
      %v392 = vpop.permute.xlu0 %391
      %393 = vrot.lane.b32.xlu0 %v258, 96
      %v394 = vpop.permute.xlu0 %393
      %395 = vrot.lane.b32.xlu0 %v259, 96
      %v396 = vpop.permute.xlu0 %395
      %397 = vrot.lane.b32.xlu0 %v260, 96
      %v398 = vpop.permute.xlu0 %397
      %399 = vrot.lane.b32.xlu0 %v261, 96
      %v400 = vpop.permute.xlu0 %399
      %401 = vrot.lane.b32.xlu0 %v262, 96
      %v402 = vpop.permute.xlu0 %401
      %403 = vrot.lane.b32.xlu0 %v263, 96
      %v404 = vpop.permute.xlu0 %403
      %vm405 = vcmask 785408
      %v406 = vsel %vm405, %v390, %v392
      %v407 = vsel %vm405, %v394, %v396
      %v408 = vsel %vm405, %v398, %v400
      %v409 = vsel %vm405, %v402, %v404
      %414 = vrot.lane.b32.xlu0 %v256, 94
      %v415 = vpop.permute.xlu0 %414
      %416 = vrot.lane.b32.xlu0 %v257, 94
      %v417 = vpop.permute.xlu0 %416
      %418 = vrot.lane.b32.xlu0 %v258, 94
      %v419 = vpop.permute.xlu0 %418
      %420 = vrot.lane.b32.xlu0 %v259, 94
      %v421 = vpop.permute.xlu0 %420
      %422 = vrot.lane.b32.xlu0 %v260, 94
      %v423 = vpop.permute.xlu0 %422
      %424 = vrot.lane.b32.xlu0 %v261, 94
      %v425 = vpop.permute.xlu0 %424
      %426 = vrot.lane.b32.xlu0 %v262, 94
      %v427 = vpop.permute.xlu0 %426
      %428 = vrot.lane.b32.xlu0 %v263, 94
      %v429 = vpop.permute.xlu0 %428
      %vm430 = vcmask 769024
      %v431 = vsel %vm430, %v415, %v417
      %v432 = vsel %vm430, %v419, %v421
      %v433 = vsel %vm430, %v423, %v425
      %v434 = vsel %vm430, %v427, %v429
      %439 = vrot.lane.b32.xlu0 %v256, 92
      %v440 = vpop.permute.xlu0 %439
      %441 = vrot.lane.b32.xlu0 %v257, 92
      %v442 = vpop.permute.xlu0 %441
      %443 = vrot.lane.b32.xlu0 %v258, 92
      %v444 = vpop.permute.xlu0 %443
      %445 = vrot.lane.b32.xlu0 %v259, 92
      %v446 = vpop.permute.xlu0 %445
      %447 = vrot.lane.b32.xlu0 %v260, 92
      %v448 = vpop.permute.xlu0 %447
      %449 = vrot.lane.b32.xlu0 %v261, 92
      %v450 = vpop.permute.xlu0 %449
      %451 = vrot.lane.b32.xlu0 %v262, 92
      %v452 = vpop.permute.xlu0 %451
      %453 = vrot.lane.b32.xlu0 %v263, 92
      %v454 = vpop.permute.xlu0 %453
      %vm455 = vcmask 752640
      %v456 = vsel %vm455, %v440, %v442
      %v457 = vsel %vm455, %v444, %v446
      %v458 = vsel %vm455, %v448, %v450
      %v459 = vsel %vm455, %v452, %v454
      %v464 = vld [vmem:[%s1] sm:$0xff]
      %v465 = vld [vmem:[%s1 + $0x8] sm:$0xff]
      %v466 = vld [vmem:[%s1 + $0x10] sm:$0xf]
      %v467 = vld [vmem:[%s1 + $0x14] sm:$0xff]
      %v468 = vld [vmem:[%s1 + $0x1c] sm:$0xff]
      %v469 = vld [vmem:[%s1 + $0x24] sm:$0xf]
      %v470 = vld [vmem:[%s1 + $0x28] sm:$0xff]
      %v471 = vld [vmem:[%s1 + $0x30] sm:$0xff]
      %v472 = vld [vmem:[%s1 + $0x38] sm:$0xf]
      %v473 = vld [vmem:[%s1 + $0x3c] sm:$0xff]
      %v474 = vld [vmem:[%s1 + $0x44] sm:$0xff]
      %v475 = vld [vmem:[%s1 + $0x4c] sm:$0xf]
      %v476 = vld [vmem:[%s1 + $0x50] sm:$0xff]
      %v477 = vld [vmem:[%s1 + $0x58] sm:$0xff]
      %v478 = vld [vmem:[%s1 + $0x60] sm:$0xf]
      %v479 = vld [vmem:[%s1 + $0x64] sm:$0xff]
      %v480 = vld [vmem:[%s1 + $0x6c] sm:$0xff]
      %v481 = vld [vmem:[%s1 + $0x74] sm:$0xf]
      %v482 = vld [vmem:[%s1 + $0x78] sm:$0xff]
      %v483 = vld [vmem:[%s1 + $0x80] sm:$0xff]
      %v484 = vld [vmem:[%s1 + $0x88] sm:$0xf]
      %v485 = vld [vmem:[%s1 + $0x8c] sm:$0xff]
      %v486 = vld [vmem:[%s1 + $0x94] sm:$0xff]
      %v487 = vld [vmem:[%s1 + $0x9c] sm:$0xf]
      %v488 = vld [vmem:[%s2] sm:$0xff]
      %v489 = vld [vmem:[%s2 + $0x8] sm:$0xff]
      %v490 = vld [vmem:[%s2 + $0x10] sm:$0xff]
      %v491 = vld [vmem:[%s2 + $0x18] sm:$0xff]
      %v492 = vld [vmem:[%s2 + $0x20] sm:$0xff]
      %v493 = vld [vmem:[%s2 + $0x28] sm:$0xff]
      %v494 = vld [vmem:[%s2 + $0x30] sm:$0xff]
      %v495 = vld [vmem:[%s2 + $0x38] sm:$0xff]
      %497 = vset.pattern.permute.xlu0 0
      %498 = vperm.xlu0 %497, %v488
      %v499 = vpop.permute.xlu0 %498
      %502 = vset.pattern.permute.xlu0 0
      %503 = vperm.xlu0 %502, %v489
      %v504 = vpop.permute.xlu0 %503
      %507 = vset.pattern.permute.xlu0 0
      %508 = vperm.xlu0 %507, %v490
      %v509 = vpop.permute.xlu0 %508
      %512 = vset.pattern.permute.xlu0 0
      %513 = vperm.xlu0 %512, %v491
      %v514 = vpop.permute.xlu0 %513
      %517 = vset.pattern.permute.xlu0 0
      %518 = vperm.xlu0 %517, %v492
      %v519 = vpop.permute.xlu0 %518
      %522 = vset.pattern.permute.xlu0 0
      %523 = vperm.xlu0 %522, %v493
      %v524 = vpop.permute.xlu0 %523
      %527 = vset.pattern.permute.xlu0 0
      %528 = vperm.xlu0 %527, %v494
      %v529 = vpop.permute.xlu0 %528
      %532 = vset.pattern.permute.xlu0 0
      %533 = vperm.xlu0 %532, %v495
      %v534 = vpop.permute.xlu0 %533
      %v560 = vunpack.c.l.b16 %v464
      %v561 = vunpack.c.h.b16 %v464
      %v562 = vunpack.c.l.b16 %v465
      %v563 = vunpack.c.h.b16 %v465
      %v564 = vunpack.c.l.b16 %v466
      %v565 = vunpack.c.l.b16 %v467
      %v566 = vunpack.c.h.b16 %v467
      %v567 = vunpack.c.l.b16 %v468
      %v568 = vunpack.c.h.b16 %v468
      %v569 = vunpack.c.l.b16 %v469
      %v570 = vunpack.c.l.b16 %v470
      %v571 = vunpack.c.h.b16 %v470
      %v572 = vunpack.c.l.b16 %v471
      %v573 = vunpack.c.h.b16 %v471
      %v574 = vunpack.c.l.b16 %v472
      %v575 = vunpack.c.l.b16 %v473
      %v576 = vunpack.c.h.b16 %v473
      %v577 = vunpack.c.l.b16 %v474
      %v578 = vunpack.c.h.b16 %v474
      %v579 = vunpack.c.l.b16 %v475
      %v580 = vunpack.c.l.b16 %v476
      %v581 = vunpack.c.h.b16 %v476
      %v582 = vunpack.c.l.b16 %v477
      %v583 = vunpack.c.h.b16 %v477
      %v584 = vunpack.c.l.b16 %v478
      %v585 = vunpack.c.l.b16 %v479
      %v586 = vunpack.c.h.b16 %v479
      %v587 = vunpack.c.l.b16 %v480
      %v588 = vunpack.c.h.b16 %v480
      %v589 = vunpack.c.l.b16 %v481
      %v590 = vunpack.c.l.b16 %v482
      %v591 = vunpack.c.h.b16 %v482
      %v592 = vunpack.c.l.b16 %v483
      %v593 = vunpack.c.h.b16 %v483
      %v594 = vunpack.c.l.b16 %v484
      %v595 = vunpack.c.l.b16 %v485
      %v596 = vunpack.c.h.b16 %v485
      %v597 = vunpack.c.l.b16 %v486
      %v598 = vunpack.c.h.b16 %v486
      %v599 = vunpack.c.l.b16 %v487
      %v600 = vpack.c.b16 %v565, %v560
      %v601 = vpack.c.b16 %v566, %v561
      %v602 = vpack.c.b16 %v567, %v562
      %v603 = vpack.c.b16 %v568, %v563
      %v604 = vpack.c.b16 %v569, %v564
      %v605 = vpack.c.b16 %v575, %v570
      %v606 = vpack.c.b16 %v576, %v571
      %v607 = vpack.c.b16 %v577, %v572
      %v608 = vpack.c.b16 %v578, %v573
      %v609 = vpack.c.b16 %v579, %v574
      %v610 = vpack.c.b16 %v585, %v580
      %v611 = vpack.c.b16 %v586, %v581
      %v612 = vpack.c.b16 %v587, %v582
      %v613 = vpack.c.b16 %v588, %v583
      %v614 = vpack.c.b16 %v589, %v584
      %v615 = vpack.c.b16 %v595, %v590
      %v616 = vpack.c.b16 %v596, %v591
      %v617 = vpack.c.b16 %v597, %v592
      %v618 = vpack.c.b16 %v598, %v593
      %v619 = vpack.c.b16 %v599, %v594
      %vm636 = vcmask 523264
      %v638 = vsel %vm636, %v604, 0
      %v641 = vsel %vm636, %v609, 0
      %v644 = vsel %vm636, %v614, 0
      %v647 = vsel %vm636, %v619, 0
      %649 = vmatprep.subr.bf16.mxu0 0
      %650 = vmatpush1.bf16.msra.mxu0 %v284
      %651 = vmatprep.subr.bf16.mxu0 0
      %652 = vmatpush1.bf16.msra.mxu0 %v283
      %653 = vmatprep.subr.bf16.mxu0 0
      %654 = vmatpush1.bf16.msra.mxu0 %v282
      %655 = vmatprep.subr.bf16.mxu0 0
      %656 = vmatpush1.bf16.msra.mxu0 %v281
      %657 = vmatprep.subr.bf16.mxu0 0
      %658 = vmatpush1.bf16.msra.mxu0 %v227
      %659 = vmatprep.subr.bf16.mxu0 0
      %660 = vmatpush1.bf16.msra.mxu0 %v226
      %661 = vmatprep.subr.bf16.mxu0 0
      %662 = vmatpush1.bf16.msra.mxu0 %v225
      %663 = vmatprep.subr.bf16.mxu0 0
      %664 = vmatpush1.bf16.msra.mxu0 %v224
      %665 = vmatprep.subr.bf16.mxu0 0
      %666 = vmatpush2.bf16.msra.mxu0 %v334
      %667 = vmatprep.subr.bf16.mxu0 0
      %668 = vmatpush2.bf16.msra.mxu0 %v333
      %669 = vmatprep.subr.bf16.mxu0 0
      %670 = vmatpush2.bf16.msra.mxu0 %v332
      %671 = vmatprep.subr.bf16.mxu0 0
      %672 = vmatpush2.bf16.msra.mxu0 %v331
      %673 = vmatprep.subr.bf16.mxu0 0
      %674 = vmatpush2.bf16.msra.mxu0 %v309
      %675 = vmatprep.subr.bf16.mxu0 0
      %676 = vmatpush2.bf16.msra.mxu0 %v308
      %677 = vmatprep.subr.bf16.mxu0 0
      %678 = vmatpush2.bf16.msra.mxu0 %v307
      %679 = vmatprep.subr.bf16.mxu0 0
      %680 = vmatpush2.bf16.msra.mxu0 %v306
      %681 = vmatprep.mubr.bf16.mxu0 %v601
      %682 = vmatmul.mubr.bf16.gmra.mxu0 %v600
      %v683 = vpop.f32.mrf.mxu0
      %v684 = vadd.f32 %v499, %v683
      %v685 = vpop.f32.mrf.mxu0
      %v686 = vpop.f32.mrf.mxu0
      %v687 = vadd.f32 %v504, %v686
      %v688 = vpop.f32.mrf.mxu0
      %689 = vmatprep.mubr.bf16.mxu0 %v606
      %690 = vmatmul.mubr.bf16.gmra.mxu0 %v605
      %v691 = vpop.f32.mrf.mxu0
      %v692 = vadd.f32 %v509, %v691
      %v693 = vpop.f32.mrf.mxu0
      %v694 = vpop.f32.mrf.mxu0
      %v695 = vadd.f32 %v514, %v694
      %v696 = vpop.f32.mrf.mxu0
      %697 = vmatprep.mubr.bf16.mxu0 %v611
      %698 = vmatmul.mubr.bf16.gmra.mxu0 %v610
      %v699 = vpop.f32.mrf.mxu0
      %v700 = vadd.f32 %v519, %v699
      %v701 = vpop.f32.mrf.mxu0
      %v702 = vpop.f32.mrf.mxu0
      %v703 = vadd.f32 %v524, %v702
      %v704 = vpop.f32.mrf.mxu0
      %705 = vmatprep.mubr.bf16.mxu0 %v616
      %706 = vmatmul.mubr.bf16.gmra.mxu0 %v615
      %v707 = vpop.f32.mrf.mxu0
      %v708 = vadd.f32 %v529, %v707
      %v709 = vpop.f32.mrf.mxu0
      %v710 = vpop.f32.mrf.mxu0
      %v711 = vadd.f32 %v534, %v710
      %v712 = vpop.f32.mrf.mxu0
      %713 = vdwg.mxu0
      %714 = vmatprep.subr.bf16.mxu0 0
      %715 = vmatpush1.bf16.msra.mxu0 %v384
      %716 = vmatprep.subr.bf16.mxu0 0
      %717 = vmatpush1.bf16.msra.mxu0 %v383
      %718 = vmatprep.subr.bf16.mxu0 0
      %719 = vmatpush1.bf16.msra.mxu0 %v382
      %720 = vmatprep.subr.bf16.mxu0 0
      %721 = vmatpush1.bf16.msra.mxu0 %v381
      %722 = vmatprep.subr.bf16.mxu0 0
      %723 = vmatpush1.bf16.msra.mxu0 %v359
      %724 = vmatprep.subr.bf16.mxu0 0
      %725 = vmatpush1.bf16.msra.mxu0 %v358
      %726 = vmatprep.subr.bf16.mxu0 0
      %727 = vmatpush1.bf16.msra.mxu0 %v357
      %728 = vmatprep.subr.bf16.mxu0 0
      %729 = vmatpush1.bf16.msra.mxu0 %v356
      %730 = vmatprep.subr.bf16.mxu0 0
      %731 = vmatpush2.bf16.msra.mxu0 %v434
      %732 = vmatprep.subr.bf16.mxu0 0
      %733 = vmatpush2.bf16.msra.mxu0 %v433
      %734 = vmatprep.subr.bf16.mxu0 0
      %735 = vmatpush2.bf16.msra.mxu0 %v432
      %736 = vmatprep.subr.bf16.mxu0 0
      %737 = vmatpush2.bf16.msra.mxu0 %v431
      %738 = vmatprep.subr.bf16.mxu0 0
      %739 = vmatpush2.bf16.msra.mxu0 %v409
      %740 = vmatprep.subr.bf16.mxu0 0
      %741 = vmatpush2.bf16.msra.mxu0 %v408
      %742 = vmatprep.subr.bf16.mxu0 0
      %743 = vmatpush2.bf16.msra.mxu0 %v407
      %744 = vmatprep.subr.bf16.mxu0 0
      %745 = vmatpush2.bf16.msra.mxu0 %v406
      %746 = vmatprep.mubr.bf16.mxu0 %v603
      %747 = vmatmul.mubr.bf16.gmra.mxu0 %v602
      %v748 = vpop.f32.mrf.mxu0
      %v749 = vadd.f32 %v684, %v748
      %v750 = vpop.f32.mrf.mxu0
      %v751 = vpop.f32.mrf.mxu0
      %v752 = vadd.f32 %v687, %v751
      %v753 = vpop.f32.mrf.mxu0
      %754 = vmatprep.mubr.bf16.mxu0 %v608
      %755 = vmatmul.mubr.bf16.gmra.mxu0 %v607
      %v756 = vpop.f32.mrf.mxu0
      %v757 = vadd.f32 %v692, %v756
      %v758 = vpop.f32.mrf.mxu0
      %v759 = vpop.f32.mrf.mxu0
      %v760 = vadd.f32 %v695, %v759
      %v761 = vpop.f32.mrf.mxu0
      %762 = vmatprep.mubr.bf16.mxu0 %v613
      %763 = vmatmul.mubr.bf16.gmra.mxu0 %v612
      %v764 = vpop.f32.mrf.mxu0
      %v765 = vadd.f32 %v700, %v764
      %v766 = vpop.f32.mrf.mxu0
      %v767 = vpop.f32.mrf.mxu0
      %v768 = vadd.f32 %v703, %v767
      %v769 = vpop.f32.mrf.mxu0
      %770 = vmatprep.mubr.bf16.mxu0 %v618
      %771 = vmatmul.mubr.bf16.gmra.mxu0 %v617
      %v772 = vpop.f32.mrf.mxu0
      %v773 = vadd.f32 %v708, %v772
      %v774 = vpop.f32.mrf.mxu0
      %v775 = vpop.f32.mrf.mxu0
      %v776 = vadd.f32 %v711, %v775
      %v777 = vpop.f32.mrf.mxu0
      %778 = vdwg.mxu0
      %779 = vmatprep.subr.bf16.mxu0 0
      %780 = vmatpush1.bf16.msra.mxu0 0
      %781 = vmatprep.subr.bf16.mxu0 0
      %782 = vmatpush1.bf16.msra.mxu0 0
      %783 = vmatprep.subr.bf16.mxu0 0
      %784 = vmatpush1.bf16.msra.mxu0 0
      %785 = vmatprep.subr.bf16.mxu0 0
      %786 = vmatpush1.bf16.msra.mxu0 0
      %787 = vmatprep.subr.bf16.mxu0 0
      %788 = vmatpush1.bf16.msra.mxu0 %v459
      %789 = vmatprep.subr.bf16.mxu0 0
      %790 = vmatpush1.bf16.msra.mxu0 %v458
      %791 = vmatprep.subr.bf16.mxu0 0
      %792 = vmatpush1.bf16.msra.mxu0 %v457
      %793 = vmatprep.subr.bf16.mxu0 0
      %794 = vmatpush1.bf16.msra.mxu0 %v456
      %795 = vmatprep.subr.bf16.mxu0 0
      %796 = vmatpush2.bf16.msra.mxu0 0
      %797 = vmatprep.subr.bf16.mxu0 0
      %798 = vmatpush2.bf16.msra.mxu0 0
      %799 = vmatprep.subr.bf16.mxu0 0
      %800 = vmatpush2.bf16.msra.mxu0 0
      %801 = vmatprep.subr.bf16.mxu0 0
      %802 = vmatpush2.bf16.msra.mxu0 0
      %803 = vmatprep.subr.bf16.mxu0 0
      %804 = vmatpush2.bf16.msra.mxu0 0
      %805 = vmatprep.subr.bf16.mxu0 0
      %806 = vmatpush2.bf16.msra.mxu0 0
      %807 = vmatprep.subr.bf16.mxu0 0
      %808 = vmatpush2.bf16.msra.mxu0 0
      %809 = vmatprep.subr.bf16.mxu0 0
      %810 = vmatpush2.bf16.msra.mxu0 0
      %811 = vmatprep.mubr.bf16.mxu0 0
      %812 = vmatmul.mubr.bf16.gmra.mxu0 %v638
      %v813 = vpop.f32.mrf.mxu0
      %v814 = vadd.f32 %v749, %v813
      %v815 = vpop.f32.mrf.mxu0
      %v816 = vpop.f32.mrf.mxu0
      %v817 = vadd.f32 %v752, %v816
      %v818 = vpop.f32.mrf.mxu0
      %819 = vmatprep.mubr.bf16.mxu0 0
      %820 = vmatmul.mubr.bf16.gmra.mxu0 %v641
      %v821 = vpop.f32.mrf.mxu0
      %v822 = vadd.f32 %v757, %v821
      %v823 = vpop.f32.mrf.mxu0
      %v824 = vpop.f32.mrf.mxu0
      %v825 = vadd.f32 %v760, %v824
      %v826 = vpop.f32.mrf.mxu0
      %827 = vmatprep.mubr.bf16.mxu0 0
      %828 = vmatmul.mubr.bf16.gmra.mxu0 %v644
      %v829 = vpop.f32.mrf.mxu0
      %v830 = vadd.f32 %v765, %v829
      %v831 = vpop.f32.mrf.mxu0
      %v832 = vpop.f32.mrf.mxu0
      %v833 = vadd.f32 %v768, %v832
      %v834 = vpop.f32.mrf.mxu0
      %835 = vmatprep.mubr.bf16.mxu0 0
      %836 = vmatmul.mubr.bf16.gmra.mxu0 %v647
      %v837 = vpop.f32.mrf.mxu0
      %v838 = vadd.f32 %v773, %v837
      %v839 = vpop.f32.mrf.mxu0
      %v840 = vpop.f32.mrf.mxu0
      %v841 = vadd.f32 %v776, %v840
      %v842 = vpop.f32.mrf.mxu0
      %843 = vdwg.mxu0
      %844 = vst [vmem:[%s190] sm:$0xff] %v814
      %845 = vst [vmem:[%s190 + $0x8] sm:$0xff] %v817
      %846 = vst [vmem:[%s190 + $0x10] sm:$0xff] %v822
      %847 = vst [vmem:[%s190 + $0x18] sm:$0xff] %v825
      %848 = vst [vmem:[%s190 + $0x20] sm:$0xff] %v830
      %849 = vst [vmem:[%s190 + $0x28] sm:$0xff] %v833
      %850 = vst [vmem:[%s190 + $0x30] sm:$0xff] %v838
      %851 = vst [vmem:[%s190 + $0x38] sm:$0xff] %v841
      %p852 = scmp.lt.s32.totalorder %s18, 1
      %s853 = scalar_select %p852, %s18, 1
      %p854 = scmp.lt.s32.totalorder %s19, 0
      %s855 = scalar_select %p854, %s19, 0
      %s856 = smul.addr %s853, 8
      %s857 = sadd.s32 %s855, %s856
      %s858 = smul.addr %s857, 8
      %s859 = scalar_lea.vmem %s3, %s858
      // Predicated region
      $region33: #{enhanced_climate_unet.31} parent=31 // pred_check
        %p860 = pneg %p114
      $region34: #{enhanced_climate_unet.31} parent=31 // pred_check_branch
        %862 = sbr.rel (%p860) target = $region36
      $region35: #{enhanced_climate_unet.31} parent=31 // pred_region
        _
      $region36: #{enhanced_climate_unet.31} parent=31 // pred_fallthru
        _
    $region32: #{enhanced_climate_unet.31} parent=5 // pred_fallthru
      _
    %p863 = scmp.le.s32.totalorder 2, %s9
    // Predicated region
    $region37: #{enhanced_climate_unet.31} parent=5 // pred_check
      %p864 = pneg %p863
    $region38: #{enhanced_climate_unet.31} parent=5 // pred_check_branch
      %866 = sbr.rel (%p864) target = $region40
    $region39: #{enhanced_climate_unet.31} parent=5 // pred_region
      %s867 = ssub.s32 %s9, 2
      // Predicated region
      $region41: #{enhanced_climate_unet.31} parent=39 // pred_check
        %p868 = pneg %p120
      $region42: #{enhanced_climate_unet.31} parent=39 // pred_check_branch
        %870 = sbr.rel (%p868) target = $region44
      $region43: #{enhanced_climate_unet.31} parent=39 // pred_region
        %p871 = scmp.lt.s32.totalorder %s20, 1
        %s872 = scalar_select %p871, %s20, 1
        %p873 = scmp.lt.s32.totalorder %s21, 0
        %s874 = scalar_select %p873, %s21, 0
        %s875 = smul.addr %s872, 8
        %s876 = sadd.s32 %s874, %s875
        %s877 = smul.addr %s876, 8
        %s878 = scalar_lea.vmem %s3, %s877
      $region44: #{enhanced_climate_unet.31} parent=39 // pred_fallthru
        _
    $region40: #{enhanced_climate_unet.31} parent=5 // pred_fallthru
      _
  $region6: #{enhanced_climate_unet.31} parent=0 // loop_footer
    %s13 = sadd.s32 1, %s9
  $region7: #{enhanced_climate_unet.31} parent=0 // loop_footer_branch
    %8 = sbr.rel target = $region3
  $region8: #{enhanced_climate_unet.31} parent=0 // loop_exit
    _

// kernel: tile.13
$region0: #{tile.13}
  #allocation0 [shape = 's32[1]{0}', space=sflag, size = 0x4, scoped, tag = 'scoped memory for tile.13']
  %s0 = inlined_call_operand.vmem [shape: f32[32], index: 0, kind: input, shape index: {}]
  %s1 = inlined_call_operand.vmem [shape: f32[4,32], index: 1, kind: output, shape index: {}]
  // Predicated region
  $region2: #{tile.13} parent=0 // pred_check
    _
  $region3: #{tile.13} parent=0 // pred_check_branch
    %3 = sbr.rel (0) target = $region5
  $region4: #{tile.13} parent=0 // pred_region
    _
  $region5: #{tile.13} parent=0 // pred_fallthru
    _
  %v4 = vld [vmem:[%s0] ss:$0 sm:$0xff]
  %5 = vst [vmem:[%s1] sm:$0xf] %v4

// kernel: tile.0
$region0: #{tile.0}
  %s0 = inlined_call_operand.vmem [shape: f32[4,32], index: 0, kind: input, shape index: {}]
  %s1 = inlined_call_operand.vmem [shape: f32[128,1], index: 1, kind: output, shape index: {}]
  $region1: #{tile.0} parent=0
    #allocation0 [shape = 'u8[4096]{0}', space=vmem, size = 0x1000, scoped, tag = 'scoped mem for input reshape']
    %s3 = sshll.u32 1, 4
    %s4 = ssub.s32 %s3, 1
    %v5 = vld [vmem:[%s0] sm:%s4]
    %6 = vst [vmem:[#allocation0] sm:%s4] %v5
    %v7 = vld [vmem:[#allocation0] sm:$0xf]
    %vm8 = vcmask 7168
    %9 = vst.msk [vmem:[%s1] sm:$0x1] %vm8, %v7
    %s10 = scalar_lea.vmem %s1, 31
    %11 = vst.msk [vmem:[%s10] sm:$0x2] %vm8, %v7
    %s12 = scalar_lea.vmem %s1, 62
    %13 = vst.msk [vmem:[%s12] sm:$0x4] %vm8, %v7
    %s14 = scalar_lea.vmem %s1, 93
    %15 = vst.msk [vmem:[%s14] sm:$0x8] %vm8, %v7
    %v16 = vld [vmem:[#allocation0] sm:$0xf]
    %17 = vrot.lane.b32.xlu0 %v16, 127
    %v18 = vpop.permute.xlu0 %17
    %vm19 = vcmask 7168
    %s20 = scalar_lea.vmem %s1, 1
    %21 = vst.msk [vmem:[%s20] sm:$0x1] %vm19, %v18
    %s22 = scalar_lea.vmem %s1, 32
    %23 = vst.msk [vmem:[%s22] sm:$0x2] %vm19, %v18
    %s24 = scalar_lea.vmem %s1, 63
    %25 = vst.msk [vmem:[%s24] sm:$0x4] %vm19, %v18
    %s26 = scalar_lea.vmem %s1, 94
    %27 = vst.msk [vmem:[%s26] sm:$0x8] %vm19, %v18
    %v28 = vld [vmem:[#allocation0] sm:$0xf]
    %29 = vrot.lane.b32.xlu0 %v28, 126
    %v30 = vpop.permute.xlu0 %29
    %vm31 = vcmask 7168
    %s32 = scalar_lea.vmem %s1, 2
    %33 = vst.msk [vmem:[%s32] sm:$0x1] %vm31, %v30
    %s34 = scalar_lea.vmem %s1, 33
    %35 = vst.msk [vmem:[%s34] sm:$0x2] %vm31, %v30
    %s36 = scalar_lea.vmem %s1, 64
    %37 = vst.msk [vmem:[%s36] sm:$0x4] %vm31, %v30
    %s38 = scalar_lea.vmem %s1, 95
    %39 = vst.msk [vmem:[%s38] sm:$0x8] %vm31, %v30
    %v40 = vld [vmem:[#allocation0] sm:$0xf]
    %41 = vrot.lane.b32.xlu0 %v40, 125
    %v42 = vpop.permute.xlu0 %41
    %vm43 = vcmask 7168
    %s44 = scalar_lea.vmem %s1, 3
    %45 = vst.msk [vmem:[%s44] sm:$0x1] %vm43, %v42
    %s46 = scalar_lea.vmem %s1, 34
    %47 = vst.msk [vmem:[%s46] sm:$0x2] %vm43, %v42
    %s48 = scalar_lea.vmem %s1, 65
    %49 = vst.msk [vmem:[%s48] sm:$0x4] %vm43, %v42
    %s50 = scalar_lea.vmem %s1, 96
    %51 = vst.msk [vmem:[%s50] sm:$0x8] %vm43, %v42
    %v52 = vld [vmem:[#allocation0] sm:$0xf]
    %53 = vrot.lane.b32.xlu0 %v52, 124
    %v54 = vpop.permute.xlu0 %53
    %vm55 = vcmask 7168
    %s56 = scalar_lea.vmem %s1, 4
    %57 = vst.msk [vmem:[%s56] sm:$0x1] %vm55, %v54
    %s58 = scalar_lea.vmem %s1, 35
    %59 = vst.msk [vmem:[%s58] sm:$0x2] %vm55, %v54
    %s60 = scalar_lea.vmem %s1, 66
    %61 = vst.msk [vmem:[%s60] sm:$0x4] %vm55, %v54
    %s62 = scalar_lea.vmem %s1, 97
    %63 = vst.msk [vmem:[%s62] sm:$0x8] %vm55, %v54
    %v64 = vld [vmem:[#allocation0] sm:$0xf]
    %65 = vrot.lane.b32.xlu0 %v64, 123
    %v66 = vpop.permute.xlu0 %65
    %vm67 = vcmask 7168
    %s68 = scalar_lea.vmem %s1, 5
    %69 = vst.msk [vmem:[%s68] sm:$0x1] %vm67, %v66
    %s70 = scalar_lea.vmem %s1, 36
    %71 = vst.msk [vmem:[%s70] sm:$0x2] %vm67, %v66
    %s72 = scalar_lea.vmem %s1, 67
    %73 = vst.msk [vmem:[%s72] sm:$0x4] %vm67, %v66
    %s74 = scalar_lea.vmem %s1, 98
    %75 = vst.msk [vmem:[%s74] sm:$0x8] %vm67, %v66
    %v76 = vld [vmem:[#allocation0] sm:$0xf]
    %77 = vrot.lane.b32.xlu0 %v76, 122
    %v78 = vpop.permute.xlu0 %77
    %vm79 = vcmask 7168
    %s80 = scalar_lea.vmem %s1, 6
    %81 = vst.msk [vmem:[%s80] sm:$0x1] %vm79, %v78
    %s82 = scalar_lea.vmem %s1, 37
    %83 = vst.msk [vmem:[%s82] sm:$0x2] %vm79, %v78
    %s84 = scalar_lea.vmem %s1, 68
    %85 = vst.msk [vmem:[%s84] sm:$0x4] %vm79, %v78
    %s86 = scalar_lea.vmem %s1, 99
    %87 = vst.msk [vmem:[%s86] sm:$0x8] %vm79, %v78
    %v88 = vld [vmem:[#allocation0] sm:$0xf]
    %89 = vrot.lane.b32.xlu0 %v88, 121
    %v90 = vpop.permute.xlu0 %89
    %vm91 = vcmask 7168
    %s92 = scalar_lea.vmem %s1, 7
    %93 = vst.msk [vmem:[%s92] sm:$0x1] %vm91, %v90
    %s94 = scalar_lea.vmem %s1, 38
    %95 = vst.msk [vmem:[%s94] sm:$0x2] %vm91, %v90
    %s96 = scalar_lea.vmem %s1, 69
    %97 = vst.msk [vmem:[%s96] sm:$0x4] %vm91, %v90
    %s98 = scalar_lea.vmem %s1, 100
    %99 = vst.msk [vmem:[%s98] sm:$0x8] %vm91, %v90
    %v100 = vld [vmem:[#allocation0] sm:$0xf]
    %101 = vrot.lane.b32.xlu0 %v100, 120
    %v102 = vpop.permute.xlu0 %101
    %vm103 = vcmask 7168
    %s104 = scalar_lea.vmem %s1, 8
    %105 = vst.msk [vmem:[%s104] sm:$0x1] %vm103, %v102
    %s106 = scalar_lea.vmem %s1, 39
    %107 = vst.msk [vmem:[%s106] sm:$0x2] %vm103, %v102
    %s108 = scalar_lea.vmem %s1, 70
    %109 = vst.msk [vmem:[%s108] sm:$0x4] %vm103, %v102
    %s110 = scalar_lea.vmem %s1, 101
    %111 = vst.msk [vmem:[%s110] sm:$0x8] %vm103, %v102
    %v112 = vld [vmem:[#allocation0] sm:$0xf]
    %113 = vrot.lane.b32.xlu0 %v112, 119
    %v114 = vpop.permute.xlu0 %113
    %vm115 = vcmask 7168
    %s116 = scalar_lea.vmem %s1, 9
    %117 = vst.msk [vmem:[%s116] sm:$0x1] %vm115, %v114
    %s118 = scalar_lea.vmem %s1, 40
    %119 = vst.msk [vmem:[%s118] sm:$0x2] %vm115, %v114
    %s120 = scalar_lea.vmem %s1, 71
    %121 = vst.msk [vmem:[%s120] sm:$0x4] %vm115, %v114
    %s122 = scalar_lea.vmem %s1, 102
    %123 = vst.msk [vmem:[%s122] sm:$0x8] %vm115, %v114
    %v124 = vld [vmem:[#allocation0] sm:$0xf]
    %125 = vrot.lane.b32.xlu0 %v124, 118
    %v126 = vpop.permute.xlu0 %125
    %vm127 = vcmask 7168
    %s128 = scalar_lea.vmem %s1, 10
    %129 = vst.msk [vmem:[%s128] sm:$0x1] %vm127, %v126
    %s130 = scalar_lea.vmem %s1, 41
    %131 = vst.msk [vmem:[%s130] sm:$0x2] %vm127, %v126
    %s132 = scalar_lea.vmem %s1, 72
    %133 = vst.msk [vmem:[%s132] sm:$0x4] %vm127, %v126
    %s134 = scalar_lea.vmem %s1, 103
    %135 = vst.msk [vmem:[%s134] sm:$0x8] %vm127, %v126
    %v136 = vld [vmem:[#allocation0] sm:$0xf]
    %137 = vrot.lane.b32.xlu0 %v136, 117
    %v138 = vpop.permute.xlu0 %137
    %vm139 = vcmask 7168
    %s140 = scalar_lea.vmem %s1, 11
    %141 = vst.msk [vmem:[%s140] sm:$0x1] %vm139, %v138
    %s142 = scalar_lea.vmem %s1, 42
    %143 = vst.msk [vmem:[%s142] sm:$0x2] %vm139, %v138
    %s144 = scalar_lea.vmem %s1, 73
    %145 = vst.msk [vmem:[%s144] sm:$0x4] %vm139, %v138
    %s146 = scalar_lea.vmem %s1, 104
    %147 = vst.msk [vmem:[%s146] sm:$0x8] %vm139, %v138
    %v148 = vld [vmem:[#allocation0] sm:$0xf]
    %149 = vrot.lane.b32.xlu0 %v148, 116
    %v150 = vpop.permute.xlu0 %149
    %vm151 = vcmask 7168
    %s152 = scalar_lea.vmem %s1, 12
    %153 = vst.msk [vmem:[%s152] sm:$0x1] %vm151, %v150
    %s154 = scalar_lea.vmem %s1, 43
    %155 = vst.msk [vmem:[%s154] sm:$0x2] %vm151, %v150
    %s156 = scalar_lea.vmem %s1, 74
    %157 = vst.msk [vmem:[%s156] sm:$0x4] %vm151, %v150
    %s158 = scalar_lea.vmem %s1, 105
    %159 = vst.msk [vmem:[%s158] sm:$0x8] %vm151, %v150
    %v160 = vld [vmem:[#allocation0] sm:$0xf]
    %161 = vrot.lane.b32.xlu0 %v160, 115
    %v162 = vpop.permute.xlu0 %161
    %vm163 = vcmask 7168
    %s164 = scalar_lea.vmem %s1, 13
    %165 = vst.msk [vmem:[%s164] sm:$0x1] %vm163, %v162
    %s166 = scalar_lea.vmem %s1, 44
    %167 = vst.msk [vmem:[%s166] sm:$0x2] %vm163, %v162
    %s168 = scalar_lea.vmem %s1, 75
    %169 = vst.msk [vmem:[%s168] sm:$0x4] %vm163, %v162
    %s170 = scalar_lea.vmem %s1, 106
    %171 = vst.msk [vmem:[%s170] sm:$0x8] %vm163, %v162
    %v172 = vld [vmem:[#allocation0] sm:$0xf]
    %173 = vrot.lane.b32.xlu0 %v172, 114
    %v174 = vpop.permute.xlu0 %173
    %vm175 = vcmask 7168
    %s176 = scalar_lea.vmem %s1, 14
    %177 = vst.msk [vmem:[%s176] sm:$0x1] %vm175, %v174
    %s178 = scalar_lea.vmem %s1, 45
    %179 = vst.msk [vmem:[%s178] sm:$0x2] %vm175, %v174
    %s180 = scalar_lea.vmem %s1, 76
    %181 = vst.msk [vmem:[%s180] sm:$0x4] %vm175, %v174
    %s182 = scalar_lea.vmem %s1, 107
    %183 = vst.msk [vmem:[%s182] sm:$0x8] %vm175, %v174
    %v184 = vld [vmem:[#allocation0] sm:$0xf]
    %185 = vrot.lane.b32.xlu0 %v184, 113
    %v186 = vpop.permute.xlu0 %185
    %vm187 = vcmask 7168
    %s188 = scalar_lea.vmem %s1, 15
    %189 = vst.msk [vmem:[%s188] sm:$0x1] %vm187, %v186
    %s190 = scalar_lea.vmem %s1, 46
    %191 = vst.msk [vmem:[%s190] sm:$0x2] %vm187, %v186
    %s192 = scalar_lea.vmem %s1, 77
    %193 = vst.msk [vmem:[%s192] sm:$0x4] %vm187, %v186
    %s194 = scalar_lea.vmem %s1, 108
    %195 = vst.msk [vmem:[%s194] sm:$0x8] %vm187, %v186
    %v196 = vld [vmem:[#allocation0] sm:$0xf]
    %197 = vrot.lane.b32.xlu0 %v196, 112
    %v198 = vpop.permute.xlu0 %197
    %vm199 = vcmask 7168
    %s200 = scalar_lea.vmem %s1, 16
    %201 = vst.msk [vmem:[%s200] sm:$0x1] %vm199, %v198
    %s202 = scalar_lea.vmem %s1, 47
    %203 = vst.msk [vmem:[%s202] sm:$0x2] %vm199, %v198
    %s204 = scalar_lea.vmem %s1, 78
    %205 = vst.msk [vmem:[%s204] sm:$0x4] %vm199, %v198
    %s206 = scalar_lea.vmem %s1, 109
    %207 = vst.msk [vmem:[%s206] sm:$0x8] %vm199, %v198
    %v208 = vld [vmem:[#allocation0] sm:$0xf]
    %209 = vrot.lane.b32.xlu0 %v208, 111
    %v210 = vpop.permute.xlu0 %209
    %vm211 = vcmask 7168
    %s212 = scalar_lea.vmem %s1, 17
    %213 = vst.msk [vmem:[%s212] sm:$0x1] %vm211, %v210
    %s214 = scalar_lea.vmem %s1, 48
    %215 = vst.msk [vmem:[%s214] sm:$0x2] %vm211, %v210
    %s216 = scalar_lea.vmem %s1, 79
    %217 = vst.msk [vmem:[%s216] sm:$0x4] %vm211, %v210
    %s218 = scalar_lea.vmem %s1, 110
    %219 = vst.msk [vmem:[%s218] sm:$0x8] %vm211, %v210
    %v220 = vld [vmem:[#allocation0] sm:$0xf]
    %221 = vrot.lane.b32.xlu0 %v220, 110
    %v222 = vpop.permute.xlu0 %221
    %vm223 = vcmask 7168
    %s224 = scalar_lea.vmem %s1, 18
    %225 = vst.msk [vmem:[%s224] sm:$0x1] %vm223, %v222
    %s226 = scalar_lea.vmem %s1, 49
    %227 = vst.msk [vmem:[%s226] sm:$0x2] %vm223, %v222
    %s228 = scalar_lea.vmem %s1, 80
    %229 = vst.msk [vmem:[%s228] sm:$0x4] %vm223, %v222
    %s230 = scalar_lea.vmem %s1, 111
    %231 = vst.msk [vmem:[%s230] sm:$0x8] %vm223, %v222
    %v232 = vld [vmem:[#allocation0] sm:$0xf]
    %233 = vrot.lane.b32.xlu0 %v232, 109
    %v234 = vpop.permute.xlu0 %233
    %vm235 = vcmask 7168
    %s236 = scalar_lea.vmem %s1, 19
    %237 = vst.msk [vmem:[%s236] sm:$0x1] %vm235, %v234
    %s238 = scalar_lea.vmem %s1, 50
    %239 = vst.msk [vmem:[%s238] sm:$0x2] %vm235, %v234
    %s240 = scalar_lea.vmem %s1, 81
    %241 = vst.msk [vmem:[%s240] sm:$0x4] %vm235, %v234
    %s242 = scalar_lea.vmem %s1, 112
    %243 = vst.msk [vmem:[%s242] sm:$0x8] %vm235, %v234
    %v244 = vld [vmem:[#allocation0] sm:$0xf]
    %245 = vrot.lane.b32.xlu0 %v244, 108
    %v246 = vpop.permute.xlu0 %245
    %vm247 = vcmask 7168
    %s248 = scalar_lea.vmem %s1, 20
    %249 = vst.msk [vmem:[%s248] sm:$0x1] %vm247, %v246
    %s250 = scalar_lea.vmem %s1, 51
    %251 = vst.msk [vmem:[%s250] sm:$0x2] %vm247, %v246
    %s252 = scalar_lea.vmem %s1, 82
    %253 = vst.msk [vmem:[%s252] sm:$0x4] %vm247, %v246
    %s254 = scalar_lea.vmem %s1, 113
    %255 = vst.msk [vmem:[%s254] sm:$0x8] %vm247, %v246
    %v256 = vld [vmem:[#allocation0] sm:$0xf]
    %257 = vrot.lane.b32.xlu0 %v256, 107
    %v258 = vpop.permute.xlu0 %257
    %vm259 = vcmask 7168
    %s260 = scalar_lea.vmem %s1, 21
    %261 = vst.msk [vmem:[%s260] sm:$0x1] %vm259, %v258
    %s262 = scalar_lea.vmem %s1, 52
    %263 = vst.msk [vmem:[%s262] sm:$0x2] %vm259, %v258
    %s264 = scalar_lea.vmem %s1, 83
    %265 = vst.msk [vmem:[%s264] sm:$0x4] %vm259, %v258
    %s266 = scalar_lea.vmem %s1, 114
    %267 = vst.msk [vmem:[%s266] sm:$0x8] %vm259, %v258
    %v268 = vld [vmem:[#allocation0] sm:$0xf]
    %269 = vrot.lane.b32.xlu0 %v268, 106
    %v270 = vpop.permute.xlu0 %269
    %vm271 = vcmask 7168
    %s272 = scalar_lea.vmem %s1, 22
    %273 = vst.msk [vmem:[%s272] sm:$0x1] %vm271, %v270
    %s274 = scalar_lea.vmem %s1, 53
    %275 = vst.msk [vmem:[%s274] sm:$0x2] %vm271, %v270
    %s276 = scalar_lea.vmem %s1, 84
    %277 = vst.msk [vmem:[%s276] sm:$0x4] %vm271, %v270
    %s278 = scalar_lea.vmem %s1, 115
    %279 = vst.msk [vmem:[%s278] sm:$0x8] %vm271, %v270
    %v280 = vld [vmem:[#allocation0] sm:$0xf]
    %281 = vrot.lane.b32.xlu0 %v280, 105
    %v282 = vpop.permute.xlu0 %281
    %vm283 = vcmask 7168
    %s284 = scalar_lea.vmem %s1, 23
    %285 = vst.msk [vmem:[%s284] sm:$0x1] %vm283, %v282
    %s286 = scalar_lea.vmem %s1, 54
    %287 = vst.msk [vmem:[%s286] sm:$0x2] %vm283, %v282
    %s288 = scalar_lea.vmem %s1, 85
    %289 = vst.msk [vmem:[%s288] sm:$0x4] %vm283, %v282
    %s290 = scalar_lea.vmem %s1, 116
    %291 = vst.msk [vmem:[%s290] sm:$0x8] %vm283, %v282
    %v292 = vld [vmem:[#allocation0] sm:$0xf]
    %293 = vrot.lane.b32.xlu0 %v292, 104
    %v294 = vpop.permute.xlu0 %293
    %vm295 = vcmask 7168
    %s296 = scalar_lea.vmem %s1, 24
    %297 = vst.msk [vmem:[%s296] sm:$0x1] %vm295, %v294
    %s298 = scalar_lea.vmem %s1, 55
    %299 = vst.msk [vmem:[%s298] sm:$0x2] %vm295, %v294
    %s300 = scalar_lea.vmem %s1, 86
    %301 = vst.msk [vmem:[%s300] sm:$0x4] %vm295, %v294
    %s302 = scalar_lea.vmem %s1, 117
    %303 = vst.msk [vmem:[%s302] sm:$0x8] %vm295, %v294
    %v304 = vld [vmem:[#allocation0] sm:$0xf]
    %305 = vrot.lane.b32.xlu0 %v304, 103
    %v306 = vpop.permute.xlu0 %305
    %vm307 = vcmask 7168
    %s308 = scalar_lea.vmem %s1, 25
    %309 = vst.msk [vmem:[%s308] sm:$0x1] %vm307, %v306
    %s310 = scalar_lea.vmem %s1, 56
    %311 = vst.msk [vmem:[%s310] sm:$0x2] %vm307, %v306
    %s312 = scalar_lea.vmem %s1, 87
    %313 = vst.msk [vmem:[%s312] sm:$0x4] %vm307, %v306
    %s314 = scalar_lea.vmem %s1, 118
    %315 = vst.msk [vmem:[%s314] sm:$0x8] %vm307, %v306
    %v316 = vld [vmem:[#allocation0] sm:$0xf]
    %317 = vrot.lane.b32.xlu0 %v316, 102
    %v318 = vpop.permute.xlu0 %317
    %vm319 = vcmask 7168
    %s320 = scalar_lea.vmem %s1, 26
    %321 = vst.msk [vmem:[%s320] sm:$0x1] %vm319, %v318
    %s322 = scalar_lea.vmem %s1, 57
    %323 = vst.msk [vmem:[%s322] sm:$0x2] %vm319, %v318
    %s324 = scalar_lea.vmem %s1, 88
    %325 = vst.msk [vmem:[%s324] sm:$0x4] %vm319, %v318
    %s326 = scalar_lea.vmem %s1, 119
    %327 = vst.msk [vmem:[%s326] sm:$0x8] %vm319, %v318
    %v328 = vld [vmem:[#allocation0] sm:$0xf]
    %329 = vrot.lane.b32.xlu0 %v328, 101
    %v330 = vpop.permute.xlu0 %329
    %vm331 = vcmask 7168
    %s332 = scalar_lea.vmem %s1, 27
    %333 = vst.msk [vmem:[%s332] sm:$0x1] %vm331, %v330
    %s334 = scalar_lea.vmem %s1, 58
    %335 = vst.msk [vmem:[%s334] sm:$0x2] %vm331, %v330
    %s336 = scalar_lea.vmem %s1, 89
    %337 = vst.msk [vmem:[%s336] sm:$0x4] %vm331, %v330
    %s338 = scalar_lea.vmem %s1, 120
    %339 = vst.msk [vmem:[%s338] sm:$0x8] %vm331, %v330
    %v340 = vld [vmem:[#allocation0] sm:$0xf]
    %341 = vrot.lane.b32.xlu0 %v340, 100
    %v342 = vpop.permute.xlu0 %341
    %vm343 = vcmask 7168
    %s344 = scalar_lea.vmem %s1, 28
    %345 = vst.msk [vmem:[%s344] sm:$0x1] %vm343, %v342
    %s346 = scalar_lea.vmem %s1, 59
    %347 = vst.msk [vmem:[%s346] sm:$0x2] %vm343, %v342
    %s348 = scalar_lea.vmem %s1, 90
    %349 = vst.msk [vmem:[%s348] sm:$0x4] %vm343, %v342
    %s350 = scalar_lea.vmem %s1, 121
    %351 = vst.msk [vmem:[%s350] sm:$0x8] %vm343, %v342
    %v352 = vld [vmem:[#allocation0] sm:$0xf]
    %353 = vrot.lane.b32.xlu0 %v352, 99
    %v354 = vpop.permute.xlu0 %353
    %vm355 = vcmask 7168
    %s356 = scalar_lea.vmem %s1, 29
    %357 = vst.msk [vmem:[%s356] sm:$0x1] %vm355, %v354
    %s358 = scalar_lea.vmem %s1, 60
    %359 = vst.msk [vmem:[%s358] sm:$0x2] %vm355, %v354
    %s360 = scalar_lea.vmem %s1, 91
    %361 = vst.msk [vmem:[%s360] sm:$0x4] %vm355, %v354
    %s362 = scalar_lea.vmem %s1, 122
    %363 = vst.msk [vmem:[%s362] sm:$0x8] %vm355, %v354
    %v364 = vld [vmem:[#allocation0] sm:$0xf]
    %365 = vrot.lane.b32.xlu0 %v364, 98
    %v366 = vpop.permute.xlu0 %365
    %vm367 = vcmask 7168
    %s368 = scalar_lea.vmem %s1, 30
    %369 = vst.msk [vmem:[%s368] sm:$0x1] %vm367, %v366
    %s370 = scalar_lea.vmem %s1, 61
    %371 = vst.msk [vmem:[%s370] sm:$0x2] %vm367, %v366
    %s372 = scalar_lea.vmem %s1, 92
    %373 = vst.msk [vmem:[%s372] sm:$0x4] %vm367, %v366
    %s374 = scalar_lea.vmem %s1, 123
    %375 = vst.msk [vmem:[%s374] sm:$0x8] %vm367, %v366
    %v376 = vld [vmem:[#allocation0] sm:$0xf]
    %377 = vrot.lane.b32.xlu0 %v376, 97
    %v378 = vpop.permute.xlu0 %377
    %vm379 = vcmask 7168
    %s380 = scalar_lea.vmem %s1, 31
    %381 = vst.msk [vmem:[%s380] sm:$0x1] %vm379, %v378
    %s382 = scalar_lea.vmem %s1, 62
    %383 = vst.msk [vmem:[%s382] sm:$0x2] %vm379, %v378
    %s384 = scalar_lea.vmem %s1, 93
    %385 = vst.msk [vmem:[%s384] sm:$0x4] %vm379, %v378
    %s386 = scalar_lea.vmem %s1, 124
    %387 = vst.msk [vmem:[%s386] sm:$0x8] %vm379, %v378

// kernel: enhanced_climate_unet.33
$region0: #{enhanced_climate_unet.33}
  #allocation0 [shape = 'u32[]', space=smem, size = 0x4, offset = 0x4, fixed_abs, tag = 'smem constant byte address 0x4 - core index']
  #allocation1 [shape = 'u32[144,128]{1,0:T(1,128)}', space=vmem, size = 0x12000, scoped, tag = 'internal scratch']
  %s0 = inlined_call_operand.vmem [shape: bf16[2,64,240], index: 0, kind: input, shape index: {}]
  %s1 = inlined_call_operand.vmem [shape: bf16[64,576], index: 1, kind: input, shape index: {}]
  %s2 = inlined_call_operand.vmem [shape: f32[64,1], index: 2, kind: input, shape index: {}]
  %s3 = inlined_call_operand.vmem [shape: f32[2,64,128], index: 3, kind: output, shape index: {}]
  %s4 = sld [smem:[#allocation0]]
  $region45: #{enhanced_climate_unet.33} parent=0
    _
  %s6 = ssub.s32 1, %s4
  %s7 = scalar_select 0, %s6, %s4
  loop: start=0, step=1, limit=4
  $region2: #{enhanced_climate_unet.33} parent=0 // loop_pre_header
    _
  $region3: #{enhanced_climate_unet.33} parent=0 // loop_header
    %s9 = sphi 0, %s13
    %p10 = scmp.ge.s32.totalorder %s9, 4
    %s16 = sphi 0, %s28
    %s17 = sphi 0, %s24
    %s18 = sphi 0, %s16
    %s19 = sphi 0, %s17
    %s20 = sphi 0, %s18
    %s21 = sphi 0, %s19
    %s31 = sphi 0, %s33
    %s34 = sphi 0, %s31
    %s35 = sphi 0, %s34
    %s51 = sphi 0, %s35
    %s55 = sphi 0, %s55
    %s57 = sphi 0, %s55
    %s58 = sphi 0, %s57
    %s72 = sphi 0, %s58
    %s76 = sphi 0, %s76
    %s78 = sphi 0, %s76
    %s79 = sphi 0, %s78
    %s93 = sphi 0, %s79
    %s101 = sphi 0, %s103
    %s104 = sphi 0, %s101
    %s105 = sphi 0, %s104
    %s121 = sphi 0, %s105
  $region4: #{enhanced_climate_unet.33} parent=0 // loop_header_branch
    %12 = sbr.rel (%p10) target = $region8
  $region5: #{enhanced_climate_unet.33} parent=0 // loop_body
    %s14 = ssub.s32 %s9, 1
    %s15 = ssub.s32 %s9, 2
    %s22 = sadd.s32 1, %s17
    %p23 = scmp.ge.s32.totalorder %s22, 1
    %s24 = scalar_select %p23, 0, %s22
    %s25 = sadd.s32 1, %s16
    %s26 = scalar_select %p23, %s25, %s16
    %p27 = scmp.ge.s32.totalorder %s26, 2
    %s28 = scalar_select %p27, 0, %s26
    %s29 = ssub.s32 %s16, %s28
    %p30 = scmp.eq.s32.totalorder %s29, 0
    %s32 = sadd.s32 %s31, 1
    %s33 = scalar_select %p30, %s31, %s32
    %p36 = pneg %p30
    %p37 = scmp.eq.s32.totalorder %s9, 1
    %p38 = por %p36, %p37
    %p39 = scmp.ne.s32.totalorder %s31, %s34
    %p40 = scmp.eq.s32.totalorder %s9, 0
    %p41 = por %p39, %p40
    %p42 = scmp.ne.s32.totalorder %s31, %s34
    %p43 = scmp.eq.s32.totalorder %s14, 1
    %p44 = por %p42, %p43
    %p45 = scmp.ne.s32.totalorder %s34, %s35
    %p46 = scmp.eq.s32.totalorder %s14, 0
    %p47 = por %p45, %p46
    %p48 = scmp.ne.s32.totalorder %s34, %s35
    %p49 = scmp.eq.s32.totalorder %s15, 1
    %p50 = por %p48, %p49
    %p52 = scmp.ne.s32.totalorder %s35, %s51
    %p53 = scmp.eq.s32.totalorder %s15, 0
    %p54 = por %p52, %p53
    %s56 = sadd.s32 %s55, 1
    %p59 = scmp.eq.s32.totalorder %s9, 1
    %p60 = scmp.ne.s32.totalorder %s55, %s57
    %p61 = scmp.eq.s32.totalorder %s9, 0
    %p62 = por %p60, %p61
    %p63 = scmp.ne.s32.totalorder %s55, %s57
    %p64 = scmp.eq.s32.totalorder %s14, 1
    %p65 = por %p63, %p64
    %p66 = scmp.ne.s32.totalorder %s57, %s58
    %p67 = scmp.eq.s32.totalorder %s14, 0
    %p68 = por %p66, %p67
    %p69 = scmp.ne.s32.totalorder %s57, %s58
    %p70 = scmp.eq.s32.totalorder %s15, 1
    %p71 = por %p69, %p70
    %p73 = scmp.ne.s32.totalorder %s58, %s72
    %p74 = scmp.eq.s32.totalorder %s15, 0
    %p75 = por %p73, %p74
    %s77 = sadd.s32 %s76, 1
    %p80 = scmp.eq.s32.totalorder %s9, 1
    %p81 = scmp.ne.s32.totalorder %s76, %s78
    %p82 = scmp.eq.s32.totalorder %s9, 0
    %p83 = por %p81, %p82
    %p84 = scmp.ne.s32.totalorder %s76, %s78
    %p85 = scmp.eq.s32.totalorder %s14, 1
    %p86 = por %p84, %p85
    %p87 = scmp.ne.s32.totalorder %s78, %s79
    %p88 = scmp.eq.s32.totalorder %s14, 0
    %p89 = por %p87, %p88
    %p90 = scmp.ne.s32.totalorder %s78, %s79
    %p91 = scmp.eq.s32.totalorder %s15, 1
    %p92 = por %p90, %p91
    %p94 = scmp.ne.s32.totalorder %s79, %s93
    %p95 = scmp.eq.s32.totalorder %s15, 0
    %p96 = por %p94, %p95
    %s97 = ssub.s32 %s16, %s28
    %s98 = ssub.s32 %s17, %s24
    %s99 = sor.u32 %s97, %s98
    %p100 = scmp.eq.s32.totalorder %s99, 0
    %s102 = sadd.s32 %s101, 1
    %s103 = scalar_select %p100, %s101, %s102
    %p106 = pneg %p100
    %p107 = scmp.eq.s32.totalorder %s9, 1
    %p108 = por %p106, %p107
    %p109 = scmp.ne.s32.totalorder %s101, %s104
    %p110 = scmp.eq.s32.totalorder %s9, 0
    %p111 = por %p109, %p110
    %p112 = scmp.ne.s32.totalorder %s101, %s104
    %p113 = scmp.eq.s32.totalorder %s14, 1
    %p114 = por %p112, %p113
    %p115 = scmp.ne.s32.totalorder %s104, %s105
    %p116 = scmp.eq.s32.totalorder %s14, 0
    %p117 = por %p115, %p116
    %p118 = scmp.ne.s32.totalorder %s104, %s105
    %p119 = scmp.eq.s32.totalorder %s15, 1
    %p120 = por %p118, %p119
    %p122 = scmp.ne.s32.totalorder %s105, %s121
    %p123 = scmp.eq.s32.totalorder %s15, 0
    %p124 = por %p122, %p123
    %p125 = scmp.le.s32.totalorder 1, %s9
    %p126 = scmp.lt.s32.totalorder %s9, 3
    %p127 = pnand %p125, %p126
    %p128 = pneg %p127
    // Predicated region
    $region9: #{enhanced_climate_unet.33} parent=5 // pred_check
      _
    $region10: #{enhanced_climate_unet.33} parent=5 // pred_check_branch
      %130 = sbr.rel (%p127) target = $region12
    $region11: #{enhanced_climate_unet.33} parent=5 // pred_region
      %s131 = ssub.s32 %s9, 1
      // Predicated region
      $region13: #{enhanced_climate_unet.33} parent=11 // pred_check
        %p132 = pneg %p68
      $region14: #{enhanced_climate_unet.33} parent=11 // pred_check_branch
        %134 = sbr.rel (%p132) target = $region16
      $region15: #{enhanced_climate_unet.33} parent=11 // pred_region
        _
      $region16: #{enhanced_climate_unet.33} parent=11 // pred_fallthru
        _
      // Predicated region
      $region17: #{enhanced_climate_unet.33} parent=11 // pred_check
        %p135 = pneg %p89
      $region18: #{enhanced_climate_unet.33} parent=11 // pred_check_branch
        %137 = sbr.rel (%p135) target = $region20
      $region19: #{enhanced_climate_unet.33} parent=11 // pred_region
        _
      $region20: #{enhanced_climate_unet.33} parent=11 // pred_fallthru
        _
    $region12: #{enhanced_climate_unet.33} parent=5 // pred_fallthru
      _
    %p138 = scmp.lt.s32.totalorder %s9, 2
    // Predicated region
    $region21: #{enhanced_climate_unet.33} parent=5 // pred_check
      %p139 = pneg %p138
    $region22: #{enhanced_climate_unet.33} parent=5 // pred_check_branch
      %141 = sbr.rel (%p139) target = $region24
    $region23: #{enhanced_climate_unet.33} parent=5 // pred_region
      // Predicated region
      $region25: #{enhanced_climate_unet.33} parent=23 // pred_check
        %p142 = pneg %p41
      $region26: #{enhanced_climate_unet.33} parent=23 // pred_check_branch
        %144 = sbr.rel (%p142) target = $region28
      $region27: #{enhanced_climate_unet.33} parent=23 // pred_region
        %p145 = scmp.lt.s32.totalorder %s16, 1
        %s146 = scalar_select %p145, %s16, 1
        %s147 = smul.addr %s146, 16
        %s148 = smul.addr %s147, 4
        %s149 = scalar_lea.vmem %s0, %s148
      $region28: #{enhanced_climate_unet.33} parent=23 // pred_fallthru
        _
    $region24: #{enhanced_climate_unet.33} parent=5 // pred_fallthru
      _
    %p150 = scmp.le.s32.totalorder 1, %s9
    %p151 = scmp.lt.s32.totalorder %s9, 3
    %p152 = pnand %p150, %p151
    %p153 = pneg %p152
    // Predicated region
    $region29: #{enhanced_climate_unet.33} parent=5 // pred_check
      _
    $region30: #{enhanced_climate_unet.33} parent=5 // pred_check_branch
      %155 = sbr.rel (%p152) target = $region32
    $region31: #{enhanced_climate_unet.33} parent=5 // pred_region
      %s156 = ssub.s32 %s9, 1
      %p157 = scmp.lt.s32.totalorder %s18, 1
      %s158 = scalar_select %p157, %s18, 1
      %s159 = smul.addr %s158, 16
      %s160 = smul.addr %s159, 4
      %s161 = scalar_lea.vmem %s0, %s160
      %p162 = pneg %p47
      %p163 = pneg %p44
      %p164 = pneg %p68
      %p165 = pneg %p65
      %p166 = pneg %p89
      %p167 = pneg %p86
      %p168 = pneg %p117
      %p169 = pneg %p114
      %p170 = scmp.lt.s32.totalorder %s18, 1
      %s171 = scalar_select %p170, %s18, 1
      %p172 = scmp.lt.s32.totalorder %s19, 0
      %s173 = scalar_select %p172, %s19, 0
      %s174 = smul.addr %s171, 8
      %s175 = sadd.s32 %s173, %s174
      %s176 = smul.addr %s175, 8
      %s177 = scalar_lea.vmem %s3, %s176
      %p178 = scmp.lt.s32.totalorder %s18, 1
      %s179 = scalar_select %p178, %s18, 1
      %s180 = smul.addr %s179, 16
      %s181 = smul.addr %s180, 4
      %s182 = scalar_lea.vmem %s0, %s181
      %p183 = scmp.lt.s32.totalorder %s18, 1
      %s184 = scalar_select %p183, %s18, 1
      %p185 = scmp.lt.s32.totalorder %s19, 0
      %s186 = scalar_select %p185, %s19, 0
      %s187 = smul.addr %s184, 8
      %s188 = sadd.s32 %s186, %s187
      %s189 = smul.addr %s188, 8
      %s190 = scalar_lea.vmem %s3, %s189
      %v192 = vld [vmem:[%s182] sm:$0xf]
      %v193 = vld [vmem:[%s182 + $0x8] sm:$0xf]
      %v194 = vld [vmem:[%s182 + $0x10] sm:$0xf]
      %v195 = vld [vmem:[%s182 + $0x18] sm:$0xf]
      %v196 = vld [vmem:[%s182 + $0x20] sm:$0xf]
      %v197 = vld [vmem:[%s182 + $0x28] sm:$0xf]
      %v198 = vld [vmem:[%s182 + $0x30] sm:$0xf]
      %v199 = vld [vmem:[%s182 + $0x38] sm:$0xf]
      %v200 = vld [vmem:[%s182] sm:$0xff]
      %v201 = vld [vmem:[%s182 + $0x8] sm:$0xff]
      %v202 = vld [vmem:[%s182 + $0x10] sm:$0xff]
      %v203 = vld [vmem:[%s182 + $0x18] sm:$0xff]
      %v204 = vld [vmem:[%s182 + $0x20] sm:$0xff]
      %v205 = vld [vmem:[%s182 + $0x28] sm:$0xff]
      %v206 = vld [vmem:[%s182 + $0x30] sm:$0xff]
      %v207 = vld [vmem:[%s182 + $0x38] sm:$0xff]
      %v216 = vunpack.c.l.b16 %v192
      %v217 = vunpack.c.l.b16 %v193
      %v218 = vunpack.c.l.b16 %v194
      %v219 = vunpack.c.l.b16 %v195
      %v220 = vunpack.c.l.b16 %v196
      %v221 = vunpack.c.l.b16 %v197
      %v222 = vunpack.c.l.b16 %v198
      %v223 = vunpack.c.l.b16 %v199
      %v224 = vpack.c.b16 %v217, %v216
      %v225 = vpack.c.b16 %v219, %v218
      %v226 = vpack.c.b16 %v221, %v220
      %v227 = vpack.c.b16 %v223, %v222
      %v240 = vunpack.c.l.b16 %v200
      %v241 = vunpack.c.h.b16 %v200
      %v242 = vunpack.c.l.b16 %v201
      %v243 = vunpack.c.h.b16 %v201
      %v244 = vunpack.c.l.b16 %v202
      %v245 = vunpack.c.h.b16 %v202
      %v246 = vunpack.c.l.b16 %v203
      %v247 = vunpack.c.h.b16 %v203
      %v248 = vunpack.c.l.b16 %v204
      %v249 = vunpack.c.h.b16 %v204
      %v250 = vunpack.c.l.b16 %v205
      %v251 = vunpack.c.h.b16 %v205
      %v252 = vunpack.c.l.b16 %v206
      %v253 = vunpack.c.h.b16 %v206
      %v254 = vunpack.c.l.b16 %v207
      %v255 = vunpack.c.h.b16 %v207
      %v256 = vpack.c.b16 %v242, %v240
      %v257 = vpack.c.b16 %v243, %v241
      %v258 = vpack.c.b16 %v246, %v244
      %v259 = vpack.c.b16 %v247, %v245
      %v260 = vpack.c.b16 %v250, %v248
      %v261 = vpack.c.b16 %v251, %v249
      %v262 = vpack.c.b16 %v254, %v252
      %v263 = vpack.c.b16 %v255, %v253
      %264 = vrot.lane.b32.xlu0 %v256, 124
      %v265 = vpop.permute.xlu0 %264
      %266 = vrot.lane.b32.xlu0 %v257, 124
      %v267 = vpop.permute.xlu0 %266
      %268 = vrot.lane.b32.xlu0 %v258, 124
      %v269 = vpop.permute.xlu0 %268
      %270 = vrot.lane.b32.xlu0 %v259, 124
      %v271 = vpop.permute.xlu0 %270
      %272 = vrot.lane.b32.xlu0 %v260, 124
      %v273 = vpop.permute.xlu0 %272
      %274 = vrot.lane.b32.xlu0 %v261, 124
      %v275 = vpop.permute.xlu0 %274
      %276 = vrot.lane.b32.xlu0 %v262, 124
      %v277 = vpop.permute.xlu0 %276
      %278 = vrot.lane.b32.xlu0 %v263, 124
      %v279 = vpop.permute.xlu0 %278
      %vm280 = vcmask 1014784
      %v281 = vsel %vm280, %v265, %v267
      %v282 = vsel %vm280, %v269, %v271
      %v283 = vsel %vm280, %v273, %v275
      %v284 = vsel %vm280, %v277, %v279
      %289 = vrot.lane.b32.xlu0 %v256, 120
      %v290 = vpop.permute.xlu0 %289
      %291 = vrot.lane.b32.xlu0 %v257, 120
      %v292 = vpop.permute.xlu0 %291
      %293 = vrot.lane.b32.xlu0 %v258, 120
      %v294 = vpop.permute.xlu0 %293
      %295 = vrot.lane.b32.xlu0 %v259, 120
      %v296 = vpop.permute.xlu0 %295
      %297 = vrot.lane.b32.xlu0 %v260, 120
      %v298 = vpop.permute.xlu0 %297
      %299 = vrot.lane.b32.xlu0 %v261, 120
      %v300 = vpop.permute.xlu0 %299
      %301 = vrot.lane.b32.xlu0 %v262, 120
      %v302 = vpop.permute.xlu0 %301
      %303 = vrot.lane.b32.xlu0 %v263, 120
      %v304 = vpop.permute.xlu0 %303
      %vm305 = vcmask 982016
      %v306 = vsel %vm305, %v290, %v292
      %v307 = vsel %vm305, %v294, %v296
      %v308 = vsel %vm305, %v298, %v300
      %v309 = vsel %vm305, %v302, %v304
      %314 = vrot.lane.b32.xlu0 %v256, 80
      %v315 = vpop.permute.xlu0 %314
      %316 = vrot.lane.b32.xlu0 %v257, 80
      %v317 = vpop.permute.xlu0 %316
      %318 = vrot.lane.b32.xlu0 %v258, 80
      %v319 = vpop.permute.xlu0 %318
      %320 = vrot.lane.b32.xlu0 %v259, 80
      %v321 = vpop.permute.xlu0 %320
      %322 = vrot.lane.b32.xlu0 %v260, 80
      %v323 = vpop.permute.xlu0 %322
      %324 = vrot.lane.b32.xlu0 %v261, 80
      %v325 = vpop.permute.xlu0 %324
      %326 = vrot.lane.b32.xlu0 %v262, 80
      %v327 = vpop.permute.xlu0 %326
      %328 = vrot.lane.b32.xlu0 %v263, 80
      %v329 = vpop.permute.xlu0 %328
      %vm330 = vcmask 654336
      %v331 = vsel %vm330, %v315, %v317
      %v332 = vsel %vm330, %v319, %v321
      %v333 = vsel %vm330, %v323, %v325
      %v334 = vsel %vm330, %v327, %v329
      %339 = vrot.lane.b32.xlu0 %v256, 76
      %v340 = vpop.permute.xlu0 %339
      %341 = vrot.lane.b32.xlu0 %v257, 76
      %v342 = vpop.permute.xlu0 %341
      %343 = vrot.lane.b32.xlu0 %v258, 76
      %v344 = vpop.permute.xlu0 %343
      %345 = vrot.lane.b32.xlu0 %v259, 76
      %v346 = vpop.permute.xlu0 %345
      %347 = vrot.lane.b32.xlu0 %v260, 76
      %v348 = vpop.permute.xlu0 %347
      %349 = vrot.lane.b32.xlu0 %v261, 76
      %v350 = vpop.permute.xlu0 %349
      %351 = vrot.lane.b32.xlu0 %v262, 76
      %v352 = vpop.permute.xlu0 %351
      %353 = vrot.lane.b32.xlu0 %v263, 76
      %v354 = vpop.permute.xlu0 %353
      %vm355 = vcmask 621568
      %v356 = vsel %vm355, %v340, %v342
      %v357 = vsel %vm355, %v344, %v346
      %v358 = vsel %vm355, %v348, %v350
      %v359 = vsel %vm355, %v352, %v354
      %364 = vrot.lane.b32.xlu0 %v256, 72
      %v365 = vpop.permute.xlu0 %364
      %366 = vrot.lane.b32.xlu0 %v257, 72
      %v367 = vpop.permute.xlu0 %366
      %368 = vrot.lane.b32.xlu0 %v258, 72
      %v369 = vpop.permute.xlu0 %368
      %370 = vrot.lane.b32.xlu0 %v259, 72
      %v371 = vpop.permute.xlu0 %370
      %372 = vrot.lane.b32.xlu0 %v260, 72
      %v373 = vpop.permute.xlu0 %372
      %374 = vrot.lane.b32.xlu0 %v261, 72
      %v375 = vpop.permute.xlu0 %374
      %376 = vrot.lane.b32.xlu0 %v262, 72
      %v377 = vpop.permute.xlu0 %376
      %378 = vrot.lane.b32.xlu0 %v263, 72
      %v379 = vpop.permute.xlu0 %378
      %vm380 = vcmask 588800
      %v381 = vsel %vm380, %v365, %v367
      %v382 = vsel %vm380, %v369, %v371
      %v383 = vsel %vm380, %v373, %v375
      %v384 = vsel %vm380, %v377, %v379
      %389 = vrot.lane.b32.xlu0 %v256, 32
      %v390 = vpop.permute.xlu0 %389
      %391 = vrot.lane.b32.xlu0 %v257, 32
      %v392 = vpop.permute.xlu0 %391
      %393 = vrot.lane.b32.xlu0 %v258, 32
      %v394 = vpop.permute.xlu0 %393
      %395 = vrot.lane.b32.xlu0 %v259, 32
      %v396 = vpop.permute.xlu0 %395
      %397 = vrot.lane.b32.xlu0 %v260, 32
      %v398 = vpop.permute.xlu0 %397
      %399 = vrot.lane.b32.xlu0 %v261, 32
      %v400 = vpop.permute.xlu0 %399
      %401 = vrot.lane.b32.xlu0 %v262, 32
      %v402 = vpop.permute.xlu0 %401
      %403 = vrot.lane.b32.xlu0 %v263, 32
      %v404 = vpop.permute.xlu0 %403
      %vm405 = vcmask 261120
      %v406 = vsel %vm405, %v390, %v392
      %v407 = vsel %vm405, %v394, %v396
      %v408 = vsel %vm405, %v398, %v400
      %v409 = vsel %vm405, %v402, %v404
      %414 = vrot.lane.b32.xlu0 %v256, 28
      %v415 = vpop.permute.xlu0 %414
      %416 = vrot.lane.b32.xlu0 %v257, 28
      %v417 = vpop.permute.xlu0 %416
      %418 = vrot.lane.b32.xlu0 %v258, 28
      %v419 = vpop.permute.xlu0 %418
      %420 = vrot.lane.b32.xlu0 %v259, 28
      %v421 = vpop.permute.xlu0 %420
      %422 = vrot.lane.b32.xlu0 %v260, 28
      %v423 = vpop.permute.xlu0 %422
      %424 = vrot.lane.b32.xlu0 %v261, 28
      %v425 = vpop.permute.xlu0 %424
      %426 = vrot.lane.b32.xlu0 %v262, 28
      %v427 = vpop.permute.xlu0 %426
      %428 = vrot.lane.b32.xlu0 %v263, 28
      %v429 = vpop.permute.xlu0 %428
      %vm430 = vcmask 228352
      %v431 = vsel %vm430, %v415, %v417
      %v432 = vsel %vm430, %v419, %v421
      %v433 = vsel %vm430, %v423, %v425
      %v434 = vsel %vm430, %v427, %v429
      %439 = vrot.lane.b32.xlu0 %v256, 24
      %v440 = vpop.permute.xlu0 %439
      %441 = vrot.lane.b32.xlu0 %v257, 24
      %v442 = vpop.permute.xlu0 %441
      %443 = vrot.lane.b32.xlu0 %v258, 24
      %v444 = vpop.permute.xlu0 %443
      %445 = vrot.lane.b32.xlu0 %v259, 24
      %v446 = vpop.permute.xlu0 %445
      %447 = vrot.lane.b32.xlu0 %v260, 24
      %v448 = vpop.permute.xlu0 %447
      %449 = vrot.lane.b32.xlu0 %v261, 24
      %v450 = vpop.permute.xlu0 %449
      %451 = vrot.lane.b32.xlu0 %v262, 24
      %v452 = vpop.permute.xlu0 %451
      %453 = vrot.lane.b32.xlu0 %v263, 24
      %v454 = vpop.permute.xlu0 %453
      %vm455 = vcmask 195584
      %v456 = vsel %vm455, %v440, %v442
      %v457 = vsel %vm455, %v444, %v446
      %v458 = vsel %vm455, %v448, %v450
      %v459 = vsel %vm455, %v452, %v454
      %v464 = vld [vmem:[%s1] sm:$0xff]
      %v465 = vld [vmem:[%s1 + $0x8] sm:$0xff]
      %v466 = vld [vmem:[%s1 + $0x10] sm:$0xf]
      %v467 = vld [vmem:[%s1 + $0x14] sm:$0xff]
      %v468 = vld [vmem:[%s1 + $0x1c] sm:$0xff]
      %v469 = vld [vmem:[%s1 + $0x24] sm:$0xf]
      %v470 = vld [vmem:[%s1 + $0x28] sm:$0xff]
      %v471 = vld [vmem:[%s1 + $0x30] sm:$0xff]
      %v472 = vld [vmem:[%s1 + $0x38] sm:$0xf]
      %v473 = vld [vmem:[%s1 + $0x3c] sm:$0xff]
      %v474 = vld [vmem:[%s1 + $0x44] sm:$0xff]
      %v475 = vld [vmem:[%s1 + $0x4c] sm:$0xf]
      %v476 = vld [vmem:[%s1 + $0x50] sm:$0xff]
      %v477 = vld [vmem:[%s1 + $0x58] sm:$0xff]
      %v478 = vld [vmem:[%s1 + $0x60] sm:$0xf]
      %v479 = vld [vmem:[%s1 + $0x64] sm:$0xff]
      %v480 = vld [vmem:[%s1 + $0x6c] sm:$0xff]
      %v481 = vld [vmem:[%s1 + $0x74] sm:$0xf]
      %v482 = vld [vmem:[%s1 + $0x78] sm:$0xff]
      %v483 = vld [vmem:[%s1 + $0x80] sm:$0xff]
      %v484 = vld [vmem:[%s1 + $0x88] sm:$0xf]
      %v485 = vld [vmem:[%s1 + $0x8c] sm:$0xff]
      %v486 = vld [vmem:[%s1 + $0x94] sm:$0xff]
      %v487 = vld [vmem:[%s1 + $0x9c] sm:$0xf]
      %v488 = vld [vmem:[%s2] sm:$0xff]
      %v489 = vld [vmem:[%s2 + $0x8] sm:$0xff]
      %v490 = vld [vmem:[%s2 + $0x10] sm:$0xff]
      %v491 = vld [vmem:[%s2 + $0x18] sm:$0xff]
      %v492 = vld [vmem:[%s2 + $0x20] sm:$0xff]
      %v493 = vld [vmem:[%s2 + $0x28] sm:$0xff]
      %v494 = vld [vmem:[%s2 + $0x30] sm:$0xff]
      %v495 = vld [vmem:[%s2 + $0x38] sm:$0xff]
      %497 = vset.pattern.permute.xlu0 0
      %498 = vperm.xlu0 %497, %v488
      %v499 = vpop.permute.xlu0 %498
      %502 = vset.pattern.permute.xlu0 0
      %503 = vperm.xlu0 %502, %v489
      %v504 = vpop.permute.xlu0 %503
      %507 = vset.pattern.permute.xlu0 0
      %508 = vperm.xlu0 %507, %v490
      %v509 = vpop.permute.xlu0 %508
      %512 = vset.pattern.permute.xlu0 0
      %513 = vperm.xlu0 %512, %v491
      %v514 = vpop.permute.xlu0 %513
      %517 = vset.pattern.permute.xlu0 0
      %518 = vperm.xlu0 %517, %v492
      %v519 = vpop.permute.xlu0 %518
      %522 = vset.pattern.permute.xlu0 0
      %523 = vperm.xlu0 %522, %v493
      %v524 = vpop.permute.xlu0 %523
      %527 = vset.pattern.permute.xlu0 0
      %528 = vperm.xlu0 %527, %v494
      %v529 = vpop.permute.xlu0 %528
      %532 = vset.pattern.permute.xlu0 0
      %533 = vperm.xlu0 %532, %v495
      %v534 = vpop.permute.xlu0 %533
      %v560 = vunpack.c.l.b16 %v464
      %v561 = vunpack.c.h.b16 %v464
      %v562 = vunpack.c.l.b16 %v465
      %v563 = vunpack.c.h.b16 %v465
      %v564 = vunpack.c.l.b16 %v466
      %v565 = vunpack.c.l.b16 %v467
      %v566 = vunpack.c.h.b16 %v467
      %v567 = vunpack.c.l.b16 %v468
      %v568 = vunpack.c.h.b16 %v468
      %v569 = vunpack.c.l.b16 %v469
      %v570 = vunpack.c.l.b16 %v470
      %v571 = vunpack.c.h.b16 %v470
      %v572 = vunpack.c.l.b16 %v471
      %v573 = vunpack.c.h.b16 %v471
      %v574 = vunpack.c.l.b16 %v472
      %v575 = vunpack.c.l.b16 %v473
      %v576 = vunpack.c.h.b16 %v473
      %v577 = vunpack.c.l.b16 %v474
      %v578 = vunpack.c.h.b16 %v474
      %v579 = vunpack.c.l.b16 %v475
      %v580 = vunpack.c.l.b16 %v476
      %v581 = vunpack.c.h.b16 %v476
      %v582 = vunpack.c.l.b16 %v477
      %v583 = vunpack.c.h.b16 %v477
      %v584 = vunpack.c.l.b16 %v478
      %v585 = vunpack.c.l.b16 %v479
      %v586 = vunpack.c.h.b16 %v479
      %v587 = vunpack.c.l.b16 %v480
      %v588 = vunpack.c.h.b16 %v480
      %v589 = vunpack.c.l.b16 %v481
      %v590 = vunpack.c.l.b16 %v482
      %v591 = vunpack.c.h.b16 %v482
      %v592 = vunpack.c.l.b16 %v483
      %v593 = vunpack.c.h.b16 %v483
      %v594 = vunpack.c.l.b16 %v484
      %v595 = vunpack.c.l.b16 %v485
      %v596 = vunpack.c.h.b16 %v485
      %v597 = vunpack.c.l.b16 %v486
      %v598 = vunpack.c.h.b16 %v486
      %v599 = vunpack.c.l.b16 %v487
      %v600 = vpack.c.b16 %v565, %v560
      %v601 = vpack.c.b16 %v566, %v561
      %v602 = vpack.c.b16 %v567, %v562
      %v603 = vpack.c.b16 %v568, %v563
      %v604 = vpack.c.b16 %v569, %v564
      %v605 = vpack.c.b16 %v575, %v570
      %v606 = vpack.c.b16 %v576, %v571
      %v607 = vpack.c.b16 %v577, %v572
      %v608 = vpack.c.b16 %v578, %v573
      %v609 = vpack.c.b16 %v579, %v574
      %v610 = vpack.c.b16 %v585, %v580
      %v611 = vpack.c.b16 %v586, %v581
      %v612 = vpack.c.b16 %v587, %v582
      %v613 = vpack.c.b16 %v588, %v583
      %v614 = vpack.c.b16 %v589, %v584
      %v615 = vpack.c.b16 %v595, %v590
      %v616 = vpack.c.b16 %v596, %v591
      %v617 = vpack.c.b16 %v597, %v592
      %v618 = vpack.c.b16 %v598, %v593
      %v619 = vpack.c.b16 %v599, %v594
      %vm636 = vcmask 523264
      %v638 = vsel %vm636, %v604, 0
      %v641 = vsel %vm636, %v609, 0
      %v644 = vsel %vm636, %v614, 0
      %v647 = vsel %vm636, %v619, 0
      %649 = vmatprep.subr.bf16.mxu0 0
      %650 = vmatpush1.bf16.msra.mxu0 %v284
      %651 = vmatprep.subr.bf16.mxu0 0
      %652 = vmatpush1.bf16.msra.mxu0 %v283
      %653 = vmatprep.subr.bf16.mxu0 0
      %654 = vmatpush1.bf16.msra.mxu0 %v282
      %655 = vmatprep.subr.bf16.mxu0 0
      %656 = vmatpush1.bf16.msra.mxu0 %v281
      %657 = vmatprep.subr.bf16.mxu0 0
      %658 = vmatpush1.bf16.msra.mxu0 %v227
      %659 = vmatprep.subr.bf16.mxu0 0
      %660 = vmatpush1.bf16.msra.mxu0 %v226
      %661 = vmatprep.subr.bf16.mxu0 0
      %662 = vmatpush1.bf16.msra.mxu0 %v225
      %663 = vmatprep.subr.bf16.mxu0 0
      %664 = vmatpush1.bf16.msra.mxu0 %v224
      %665 = vmatprep.subr.bf16.mxu0 0
      %666 = vmatpush2.bf16.msra.mxu0 %v334
      %667 = vmatprep.subr.bf16.mxu0 0
      %668 = vmatpush2.bf16.msra.mxu0 %v333
      %669 = vmatprep.subr.bf16.mxu0 0
      %670 = vmatpush2.bf16.msra.mxu0 %v332
      %671 = vmatprep.subr.bf16.mxu0 0
      %672 = vmatpush2.bf16.msra.mxu0 %v331
      %673 = vmatprep.subr.bf16.mxu0 0
      %674 = vmatpush2.bf16.msra.mxu0 %v309
      %675 = vmatprep.subr.bf16.mxu0 0
      %676 = vmatpush2.bf16.msra.mxu0 %v308
      %677 = vmatprep.subr.bf16.mxu0 0
      %678 = vmatpush2.bf16.msra.mxu0 %v307
      %679 = vmatprep.subr.bf16.mxu0 0
      %680 = vmatpush2.bf16.msra.mxu0 %v306
      %681 = vmatprep.mubr.bf16.mxu0 %v601
      %682 = vmatmul.mubr.bf16.gmra.mxu0 %v600
      %v683 = vpop.f32.mrf.mxu0
      %v684 = vadd.f32 %v499, %v683
      %v685 = vpop.f32.mrf.mxu0
      %v686 = vpop.f32.mrf.mxu0
      %v687 = vadd.f32 %v504, %v686
      %v688 = vpop.f32.mrf.mxu0
      %689 = vmatprep.mubr.bf16.mxu0 %v606
      %690 = vmatmul.mubr.bf16.gmra.mxu0 %v605
      %v691 = vpop.f32.mrf.mxu0
      %v692 = vadd.f32 %v509, %v691
      %v693 = vpop.f32.mrf.mxu0
      %v694 = vpop.f32.mrf.mxu0
      %v695 = vadd.f32 %v514, %v694
      %v696 = vpop.f32.mrf.mxu0
      %697 = vmatprep.mubr.bf16.mxu0 %v611
      %698 = vmatmul.mubr.bf16.gmra.mxu0 %v610
      %v699 = vpop.f32.mrf.mxu0
      %v700 = vadd.f32 %v519, %v699
      %v701 = vpop.f32.mrf.mxu0
      %v702 = vpop.f32.mrf.mxu0
      %v703 = vadd.f32 %v524, %v702
      %v704 = vpop.f32.mrf.mxu0
      %705 = vmatprep.mubr.bf16.mxu0 %v616
      %706 = vmatmul.mubr.bf16.gmra.mxu0 %v615
      %v707 = vpop.f32.mrf.mxu0
      %v708 = vadd.f32 %v529, %v707
      %v709 = vpop.f32.mrf.mxu0
      %v710 = vpop.f32.mrf.mxu0
      %v711 = vadd.f32 %v534, %v710
      %v712 = vpop.f32.mrf.mxu0
      %713 = vdwg.mxu0
      %714 = vmatprep.subr.bf16.mxu0 0
      %715 = vmatpush1.bf16.msra.mxu0 %v384
      %716 = vmatprep.subr.bf16.mxu0 0
      %717 = vmatpush1.bf16.msra.mxu0 %v383
      %718 = vmatprep.subr.bf16.mxu0 0
      %719 = vmatpush1.bf16.msra.mxu0 %v382
      %720 = vmatprep.subr.bf16.mxu0 0
      %721 = vmatpush1.bf16.msra.mxu0 %v381
      %722 = vmatprep.subr.bf16.mxu0 0
      %723 = vmatpush1.bf16.msra.mxu0 %v359
      %724 = vmatprep.subr.bf16.mxu0 0
      %725 = vmatpush1.bf16.msra.mxu0 %v358
      %726 = vmatprep.subr.bf16.mxu0 0
      %727 = vmatpush1.bf16.msra.mxu0 %v357
      %728 = vmatprep.subr.bf16.mxu0 0
      %729 = vmatpush1.bf16.msra.mxu0 %v356
      %730 = vmatprep.subr.bf16.mxu0 0
      %731 = vmatpush2.bf16.msra.mxu0 %v434
      %732 = vmatprep.subr.bf16.mxu0 0
      %733 = vmatpush2.bf16.msra.mxu0 %v433
      %734 = vmatprep.subr.bf16.mxu0 0
      %735 = vmatpush2.bf16.msra.mxu0 %v432
      %736 = vmatprep.subr.bf16.mxu0 0
      %737 = vmatpush2.bf16.msra.mxu0 %v431
      %738 = vmatprep.subr.bf16.mxu0 0
      %739 = vmatpush2.bf16.msra.mxu0 %v409
      %740 = vmatprep.subr.bf16.mxu0 0
      %741 = vmatpush2.bf16.msra.mxu0 %v408
      %742 = vmatprep.subr.bf16.mxu0 0
      %743 = vmatpush2.bf16.msra.mxu0 %v407
      %744 = vmatprep.subr.bf16.mxu0 0
      %745 = vmatpush2.bf16.msra.mxu0 %v406
      %746 = vmatprep.mubr.bf16.mxu0 %v603
      %747 = vmatmul.mubr.bf16.gmra.mxu0 %v602
      %v748 = vpop.f32.mrf.mxu0
      %v749 = vadd.f32 %v684, %v748
      %v750 = vpop.f32.mrf.mxu0
      %v751 = vpop.f32.mrf.mxu0
      %v752 = vadd.f32 %v687, %v751
      %v753 = vpop.f32.mrf.mxu0
      %754 = vmatprep.mubr.bf16.mxu0 %v608
      %755 = vmatmul.mubr.bf16.gmra.mxu0 %v607
      %v756 = vpop.f32.mrf.mxu0
      %v757 = vadd.f32 %v692, %v756
      %v758 = vpop.f32.mrf.mxu0
      %v759 = vpop.f32.mrf.mxu0
      %v760 = vadd.f32 %v695, %v759
      %v761 = vpop.f32.mrf.mxu0
      %762 = vmatprep.mubr.bf16.mxu0 %v613
      %763 = vmatmul.mubr.bf16.gmra.mxu0 %v612
      %v764 = vpop.f32.mrf.mxu0
      %v765 = vadd.f32 %v700, %v764
      %v766 = vpop.f32.mrf.mxu0
      %v767 = vpop.f32.mrf.mxu0
      %v768 = vadd.f32 %v703, %v767
      %v769 = vpop.f32.mrf.mxu0
      %770 = vmatprep.mubr.bf16.mxu0 %v618
      %771 = vmatmul.mubr.bf16.gmra.mxu0 %v617
      %v772 = vpop.f32.mrf.mxu0
      %v773 = vadd.f32 %v708, %v772
      %v774 = vpop.f32.mrf.mxu0
      %v775 = vpop.f32.mrf.mxu0
      %v776 = vadd.f32 %v711, %v775
      %v777 = vpop.f32.mrf.mxu0
      %778 = vdwg.mxu0
      %779 = vmatprep.subr.bf16.mxu0 0
      %780 = vmatpush1.bf16.msra.mxu0 0
      %781 = vmatprep.subr.bf16.mxu0 0
      %782 = vmatpush1.bf16.msra.mxu0 0
      %783 = vmatprep.subr.bf16.mxu0 0
      %784 = vmatpush1.bf16.msra.mxu0 0
      %785 = vmatprep.subr.bf16.mxu0 0
      %786 = vmatpush1.bf16.msra.mxu0 0
      %787 = vmatprep.subr.bf16.mxu0 0
      %788 = vmatpush1.bf16.msra.mxu0 %v459
      %789 = vmatprep.subr.bf16.mxu0 0
      %790 = vmatpush1.bf16.msra.mxu0 %v458
      %791 = vmatprep.subr.bf16.mxu0 0
      %792 = vmatpush1.bf16.msra.mxu0 %v457
      %793 = vmatprep.subr.bf16.mxu0 0
      %794 = vmatpush1.bf16.msra.mxu0 %v456
      %795 = vmatprep.subr.bf16.mxu0 0
      %796 = vmatpush2.bf16.msra.mxu0 0
      %797 = vmatprep.subr.bf16.mxu0 0
      %798 = vmatpush2.bf16.msra.mxu0 0
      %799 = vmatprep.subr.bf16.mxu0 0
      %800 = vmatpush2.bf16.msra.mxu0 0
      %801 = vmatprep.subr.bf16.mxu0 0
      %802 = vmatpush2.bf16.msra.mxu0 0
      %803 = vmatprep.subr.bf16.mxu0 0
      %804 = vmatpush2.bf16.msra.mxu0 0
      %805 = vmatprep.subr.bf16.mxu0 0
      %806 = vmatpush2.bf16.msra.mxu0 0
      %807 = vmatprep.subr.bf16.mxu0 0
      %808 = vmatpush2.bf16.msra.mxu0 0
      %809 = vmatprep.subr.bf16.mxu0 0
      %810 = vmatpush2.bf16.msra.mxu0 0
      %811 = vmatprep.mubr.bf16.mxu0 0
      %812 = vmatmul.mubr.bf16.gmra.mxu0 %v638
      %v813 = vpop.f32.mrf.mxu0
      %v814 = vadd.f32 %v749, %v813
      %v815 = vpop.f32.mrf.mxu0
      %v816 = vpop.f32.mrf.mxu0
      %v817 = vadd.f32 %v752, %v816
      %v818 = vpop.f32.mrf.mxu0
      %819 = vmatprep.mubr.bf16.mxu0 0
      %820 = vmatmul.mubr.bf16.gmra.mxu0 %v641
      %v821 = vpop.f32.mrf.mxu0
      %v822 = vadd.f32 %v757, %v821
      %v823 = vpop.f32.mrf.mxu0
      %v824 = vpop.f32.mrf.mxu0
      %v825 = vadd.f32 %v760, %v824
      %v826 = vpop.f32.mrf.mxu0
      %827 = vmatprep.mubr.bf16.mxu0 0
      %828 = vmatmul.mubr.bf16.gmra.mxu0 %v644
      %v829 = vpop.f32.mrf.mxu0
      %v830 = vadd.f32 %v765, %v829
      %v831 = vpop.f32.mrf.mxu0
      %v832 = vpop.f32.mrf.mxu0
      %v833 = vadd.f32 %v768, %v832
      %v834 = vpop.f32.mrf.mxu0
      %835 = vmatprep.mubr.bf16.mxu0 0
      %836 = vmatmul.mubr.bf16.gmra.mxu0 %v647
      %v837 = vpop.f32.mrf.mxu0
      %v838 = vadd.f32 %v773, %v837
      %v839 = vpop.f32.mrf.mxu0
      %v840 = vpop.f32.mrf.mxu0
      %v841 = vadd.f32 %v776, %v840
      %v842 = vpop.f32.mrf.mxu0
      %843 = vdwg.mxu0
      %844 = vst [vmem:[%s190] sm:$0xff] %v814
      %845 = vst [vmem:[%s190 + $0x8] sm:$0xff] %v817
      %846 = vst [vmem:[%s190 + $0x10] sm:$0xff] %v822
      %847 = vst [vmem:[%s190 + $0x18] sm:$0xff] %v825
      %848 = vst [vmem:[%s190 + $0x20] sm:$0xff] %v830
      %849 = vst [vmem:[%s190 + $0x28] sm:$0xff] %v833
      %850 = vst [vmem:[%s190 + $0x30] sm:$0xff] %v838
      %851 = vst [vmem:[%s190 + $0x38] sm:$0xff] %v841
      %p852 = scmp.lt.s32.totalorder %s18, 1
      %s853 = scalar_select %p852, %s18, 1
      %p854 = scmp.lt.s32.totalorder %s19, 0
      %s855 = scalar_select %p854, %s19, 0
      %s856 = smul.addr %s853, 8
      %s857 = sadd.s32 %s855, %s856
      %s858 = smul.addr %s857, 8
      %s859 = scalar_lea.vmem %s3, %s858
      // Predicated region
      $region33: #{enhanced_climate_unet.33} parent=31 // pred_check
        %p860 = pneg %p114
      $region34: #{enhanced_climate_unet.33} parent=31 // pred_check_branch
        %862 = sbr.rel (%p860) target = $region36
      $region35: #{enhanced_climate_unet.33} parent=31 // pred_region
        _
      $region36: #{enhanced_climate_unet.33} parent=31 // pred_fallthru
        _
    $region32: #{enhanced_climate_unet.33} parent=5 // pred_fallthru
      _
    %p863 = scmp.le.s32.totalorder 2, %s9
    // Predicated region
    $region37: #{enhanced_climate_unet.33} parent=5 // pred_check
      %p864 = pneg %p863
    $region38: #{enhanced_climate_unet.33} parent=5 // pred_check_branch
      %866 = sbr.rel (%p864) target = $region40
    $region39: #{enhanced_climate_unet.33} parent=5 // pred_region
      %s867 = ssub.s32 %s9, 2
      // Predicated region
      $region41: #{enhanced_climate_unet.33} parent=39 // pred_check
        %p868 = pneg %p120
      $region42: #{enhanced_climate_unet.33} parent=39 // pred_check_branch
        %870 = sbr.rel (%p868) target = $region44
      $region43: #{enhanced_climate_unet.33} parent=39 // pred_region
        %p871 = scmp.lt.s32.totalorder %s20, 1
        %s872 = scalar_select %p871, %s20, 1
        %p873 = scmp.lt.s32.totalorder %s21, 0
        %s874 = scalar_select %p873, %s21, 0
        %s875 = smul.addr %s872, 8
        %s876 = sadd.s32 %s874, %s875
        %s877 = smul.addr %s876, 8
        %s878 = scalar_lea.vmem %s3, %s877
      $region44: #{enhanced_climate_unet.33} parent=39 // pred_fallthru
        _
    $region40: #{enhanced_climate_unet.33} parent=5 // pred_fallthru
      _
  $region6: #{enhanced_climate_unet.33} parent=0 // loop_footer
    %s13 = sadd.s32 1, %s9
  $region7: #{enhanced_climate_unet.33} parent=0 // loop_footer_branch
    %8 = sbr.rel target = $region3
  $region8: #{enhanced_climate_unet.33} parent=0 // loop_exit
    _

// kernel: enhanced_climate_unet.35
$region0: #{enhanced_climate_unet.35}
  #allocation0 [shape = 'u32[]', space=smem, size = 0x4, offset = 0x4, fixed_abs, tag = 'smem constant byte address 0x4 - core index']
  #allocation1 [shape = 'u32[144,128]{1,0:T(1,128)}', space=vmem, size = 0x12000, scoped, tag = 'internal scratch']
  %s0 = inlined_call_operand.vmem [shape: bf16[2,64,128], index: 0, kind: input, shape index: {}]
  %s1 = inlined_call_operand.vmem [shape: bf16[128,64], index: 1, kind: input, shape index: {}]
  %s2 = inlined_call_operand.vmem [shape: f32[128,1], index: 2, kind: input, shape index: {}]
  %s3 = inlined_call_operand.vmem [shape: f32[2,128,128], index: 3, kind: output, shape index: {}]
  %s4 = sld [smem:[#allocation0]]
  $region45: #{enhanced_climate_unet.35} parent=0
    _
  %s6 = ssub.s32 1, %s4
  %s7 = scalar_select 0, %s6, %s4
  loop: start=0, step=1, limit=4
  $region2: #{enhanced_climate_unet.35} parent=0 // loop_pre_header
    _
  $region3: #{enhanced_climate_unet.35} parent=0 // loop_header
    %s9 = sphi 0, %s13
    %p10 = scmp.ge.s32.totalorder %s9, 4
    %s16 = sphi 0, %s28
    %s17 = sphi 0, %s24
    %s18 = sphi 0, %s16
    %s19 = sphi 0, %s17
    %s20 = sphi 0, %s18
    %s21 = sphi 0, %s19
    %s31 = sphi 0, %s33
    %s34 = sphi 0, %s31
    %s35 = sphi 0, %s34
    %s51 = sphi 0, %s35
    %s55 = sphi 0, %s55
    %s57 = sphi 0, %s55
    %s58 = sphi 0, %s57
    %s72 = sphi 0, %s58
    %s76 = sphi 0, %s76
    %s78 = sphi 0, %s76
    %s79 = sphi 0, %s78
    %s93 = sphi 0, %s79
    %s101 = sphi 0, %s103
    %s104 = sphi 0, %s101
    %s105 = sphi 0, %s104
    %s121 = sphi 0, %s105
  $region4: #{enhanced_climate_unet.35} parent=0 // loop_header_branch
    %12 = sbr.rel (%p10) target = $region8
  $region5: #{enhanced_climate_unet.35} parent=0 // loop_body
    %s14 = ssub.s32 %s9, 1
    %s15 = ssub.s32 %s9, 2
    %s22 = sadd.s32 1, %s17
    %p23 = scmp.ge.s32.totalorder %s22, 1
    %s24 = scalar_select %p23, 0, %s22
    %s25 = sadd.s32 1, %s16
    %s26 = scalar_select %p23, %s25, %s16
    %p27 = scmp.ge.s32.totalorder %s26, 2
    %s28 = scalar_select %p27, 0, %s26
    %s29 = ssub.s32 %s16, %s28
    %p30 = scmp.eq.s32.totalorder %s29, 0
    %s32 = sadd.s32 %s31, 1
    %s33 = scalar_select %p30, %s31, %s32
    %p36 = pneg %p30
    %p37 = scmp.eq.s32.totalorder %s9, 1
    %p38 = por %p36, %p37
    %p39 = scmp.ne.s32.totalorder %s31, %s34
    %p40 = scmp.eq.s32.totalorder %s9, 0
    %p41 = por %p39, %p40
    %p42 = scmp.ne.s32.totalorder %s31, %s34
    %p43 = scmp.eq.s32.totalorder %s14, 1
    %p44 = por %p42, %p43
    %p45 = scmp.ne.s32.totalorder %s34, %s35
    %p46 = scmp.eq.s32.totalorder %s14, 0
    %p47 = por %p45, %p46
    %p48 = scmp.ne.s32.totalorder %s34, %s35
    %p49 = scmp.eq.s32.totalorder %s15, 1
    %p50 = por %p48, %p49
    %p52 = scmp.ne.s32.totalorder %s35, %s51
    %p53 = scmp.eq.s32.totalorder %s15, 0
    %p54 = por %p52, %p53
    %s56 = sadd.s32 %s55, 1
    %p59 = scmp.eq.s32.totalorder %s9, 1
    %p60 = scmp.ne.s32.totalorder %s55, %s57
    %p61 = scmp.eq.s32.totalorder %s9, 0
    %p62 = por %p60, %p61
    %p63 = scmp.ne.s32.totalorder %s55, %s57
    %p64 = scmp.eq.s32.totalorder %s14, 1
    %p65 = por %p63, %p64
    %p66 = scmp.ne.s32.totalorder %s57, %s58
    %p67 = scmp.eq.s32.totalorder %s14, 0
    %p68 = por %p66, %p67
    %p69 = scmp.ne.s32.totalorder %s57, %s58
    %p70 = scmp.eq.s32.totalorder %s15, 1
    %p71 = por %p69, %p70
    %p73 = scmp.ne.s32.totalorder %s58, %s72
    %p74 = scmp.eq.s32.totalorder %s15, 0
    %p75 = por %p73, %p74
    %s77 = sadd.s32 %s76, 1
    %p80 = scmp.eq.s32.totalorder %s9, 1
    %p81 = scmp.ne.s32.totalorder %s76, %s78
    %p82 = scmp.eq.s32.totalorder %s9, 0
    %p83 = por %p81, %p82
    %p84 = scmp.ne.s32.totalorder %s76, %s78
    %p85 = scmp.eq.s32.totalorder %s14, 1
    %p86 = por %p84, %p85
    %p87 = scmp.ne.s32.totalorder %s78, %s79
    %p88 = scmp.eq.s32.totalorder %s14, 0
    %p89 = por %p87, %p88
    %p90 = scmp.ne.s32.totalorder %s78, %s79
    %p91 = scmp.eq.s32.totalorder %s15, 1
    %p92 = por %p90, %p91
    %p94 = scmp.ne.s32.totalorder %s79, %s93
    %p95 = scmp.eq.s32.totalorder %s15, 0
    %p96 = por %p94, %p95
    %s97 = ssub.s32 %s16, %s28
    %s98 = ssub.s32 %s17, %s24
    %s99 = sor.u32 %s97, %s98
    %p100 = scmp.eq.s32.totalorder %s99, 0
    %s102 = sadd.s32 %s101, 1
    %s103 = scalar_select %p100, %s101, %s102
    %p106 = pneg %p100
    %p107 = scmp.eq.s32.totalorder %s9, 1
    %p108 = por %p106, %p107
    %p109 = scmp.ne.s32.totalorder %s101, %s104
    %p110 = scmp.eq.s32.totalorder %s9, 0
    %p111 = por %p109, %p110
    %p112 = scmp.ne.s32.totalorder %s101, %s104
    %p113 = scmp.eq.s32.totalorder %s14, 1
    %p114 = por %p112, %p113
    %p115 = scmp.ne.s32.totalorder %s104, %s105
    %p116 = scmp.eq.s32.totalorder %s14, 0
    %p117 = por %p115, %p116
    %p118 = scmp.ne.s32.totalorder %s104, %s105
    %p119 = scmp.eq.s32.totalorder %s15, 1
    %p120 = por %p118, %p119
    %p122 = scmp.ne.s32.totalorder %s105, %s121
    %p123 = scmp.eq.s32.totalorder %s15, 0
    %p124 = por %p122, %p123
    %p125 = scmp.le.s32.totalorder 1, %s9
    %p126 = scmp.lt.s32.totalorder %s9, 3
    %p127 = pnand %p125, %p126
    %p128 = pneg %p127
    // Predicated region
    $region9: #{enhanced_climate_unet.35} parent=5 // pred_check
      _
    $region10: #{enhanced_climate_unet.35} parent=5 // pred_check_branch
      %130 = sbr.rel (%p127) target = $region12
    $region11: #{enhanced_climate_unet.35} parent=5 // pred_region
      %s131 = ssub.s32 %s9, 1
      // Predicated region
      $region13: #{enhanced_climate_unet.35} parent=11 // pred_check
        %p132 = pneg %p68
      $region14: #{enhanced_climate_unet.35} parent=11 // pred_check_branch
        %134 = sbr.rel (%p132) target = $region16
      $region15: #{enhanced_climate_unet.35} parent=11 // pred_region
        _
      $region16: #{enhanced_climate_unet.35} parent=11 // pred_fallthru
        _
      // Predicated region
      $region17: #{enhanced_climate_unet.35} parent=11 // pred_check
        %p135 = pneg %p89
      $region18: #{enhanced_climate_unet.35} parent=11 // pred_check_branch
        %137 = sbr.rel (%p135) target = $region20
      $region19: #{enhanced_climate_unet.35} parent=11 // pred_region
        _
      $region20: #{enhanced_climate_unet.35} parent=11 // pred_fallthru
        _
    $region12: #{enhanced_climate_unet.35} parent=5 // pred_fallthru
      _
    %p138 = scmp.lt.s32.totalorder %s9, 2
    // Predicated region
    $region21: #{enhanced_climate_unet.35} parent=5 // pred_check
      %p139 = pneg %p138
    $region22: #{enhanced_climate_unet.35} parent=5 // pred_check_branch
      %141 = sbr.rel (%p139) target = $region24
    $region23: #{enhanced_climate_unet.35} parent=5 // pred_region
      // Predicated region
      $region25: #{enhanced_climate_unet.35} parent=23 // pred_check
        %p142 = pneg %p41
      $region26: #{enhanced_climate_unet.35} parent=23 // pred_check_branch
        %144 = sbr.rel (%p142) target = $region28
      $region27: #{enhanced_climate_unet.35} parent=23 // pred_region
        %p145 = scmp.lt.s32.totalorder %s16, 1
        %s146 = scalar_select %p145, %s16, 1
        %s147 = smul.addr %s146, 8
        %s148 = smul.addr %s147, 4
        %s149 = scalar_lea.vmem %s0, %s148
      $region28: #{enhanced_climate_unet.35} parent=23 // pred_fallthru
        _
    $region24: #{enhanced_climate_unet.35} parent=5 // pred_fallthru
      _
    %p150 = scmp.le.s32.totalorder 1, %s9
    %p151 = scmp.lt.s32.totalorder %s9, 3
    %p152 = pnand %p150, %p151
    %p153 = pneg %p152
    // Predicated region
    $region29: #{enhanced_climate_unet.35} parent=5 // pred_check
      _
    $region30: #{enhanced_climate_unet.35} parent=5 // pred_check_branch
      %155 = sbr.rel (%p152) target = $region32
    $region31: #{enhanced_climate_unet.35} parent=5 // pred_region
      %s156 = ssub.s32 %s9, 1
      %p157 = scmp.lt.s32.totalorder %s18, 1
      %s158 = scalar_select %p157, %s18, 1
      %s159 = smul.addr %s158, 8
      %s160 = smul.addr %s159, 4
      %s161 = scalar_lea.vmem %s0, %s160
      %p162 = pneg %p47
      %p163 = pneg %p44
      %p164 = pneg %p68
      %p165 = pneg %p65
      %p166 = pneg %p89
      %p167 = pneg %p86
      %p168 = pneg %p117
      %p169 = pneg %p114
      %p170 = scmp.lt.s32.totalorder %s18, 1
      %s171 = scalar_select %p170, %s18, 1
      %p172 = scmp.lt.s32.totalorder %s19, 0
      %s173 = scalar_select %p172, %s19, 0
      %s174 = smul.addr %s171, 16
      %s175 = sadd.s32 %s173, %s174
      %s176 = smul.addr %s175, 8
      %s177 = scalar_lea.vmem %s3, %s176
      %p178 = scmp.lt.s32.totalorder %s18, 1
      %s179 = scalar_select %p178, %s18, 1
      %s180 = smul.addr %s179, 8
      %s181 = smul.addr %s180, 4
      %s182 = scalar_lea.vmem %s0, %s181
      %p183 = scmp.lt.s32.totalorder %s18, 1
      %s184 = scalar_select %p183, %s18, 1
      %p185 = scmp.lt.s32.totalorder %s19, 0
      %s186 = scalar_select %p185, %s19, 0
      %s187 = smul.addr %s184, 16
      %s188 = sadd.s32 %s186, %s187
      %s189 = smul.addr %s188, 8
      %s190 = scalar_lea.vmem %s3, %s189
      %v192 = vld [vmem:[%s182] sm:$0xf]
      %v193 = vld [vmem:[%s182 + $0x4] sm:$0xf]
      %v194 = vld [vmem:[%s182 + $0x8] sm:$0xf]
      %v195 = vld [vmem:[%s182 + $0xc] sm:$0xf]
      %v196 = vld [vmem:[%s182 + $0x10] sm:$0xf]
      %v197 = vld [vmem:[%s182 + $0x14] sm:$0xf]
      %v198 = vld [vmem:[%s182 + $0x18] sm:$0xf]
      %v199 = vld [vmem:[%s182 + $0x1c] sm:$0xf]
      %v200 = vld [vmem:[%s1] sm:$0xf]
      %v201 = vld [vmem:[%s1 + $0x4] sm:$0xf]
      %v202 = vld [vmem:[%s1 + $0x8] sm:$0xf]
      %v203 = vld [vmem:[%s1 + $0xc] sm:$0xf]
      %v204 = vld [vmem:[%s1 + $0x10] sm:$0xf]
      %v205 = vld [vmem:[%s1 + $0x14] sm:$0xf]
      %v206 = vld [vmem:[%s1 + $0x18] sm:$0xf]
      %v207 = vld [vmem:[%s1 + $0x1c] sm:$0xf]
      %v208 = vld [vmem:[%s1 + $0x20] sm:$0xf]
      %v209 = vld [vmem:[%s1 + $0x24] sm:$0xf]
      %v210 = vld [vmem:[%s1 + $0x28] sm:$0xf]
      %v211 = vld [vmem:[%s1 + $0x2c] sm:$0xf]
      %v212 = vld [vmem:[%s1 + $0x30] sm:$0xf]
      %v213 = vld [vmem:[%s1 + $0x34] sm:$0xf]
      %v214 = vld [vmem:[%s1 + $0x38] sm:$0xf]
      %v215 = vld [vmem:[%s1 + $0x3c] sm:$0xf]
      %v216 = vld [vmem:[%s2] sm:$0xff]
      %v217 = vld [vmem:[%s2 + $0x8] sm:$0xff]
      %v218 = vld [vmem:[%s2 + $0x10] sm:$0xff]
      %v219 = vld [vmem:[%s2 + $0x18] sm:$0xff]
      %v220 = vld [vmem:[%s2 + $0x20] sm:$0xff]
      %v221 = vld [vmem:[%s2 + $0x28] sm:$0xff]
      %v222 = vld [vmem:[%s2 + $0x30] sm:$0xff]
      %v223 = vld [vmem:[%s2 + $0x38] sm:$0xff]
      %v224 = vld [vmem:[%s2 + $0x40] sm:$0xff]
      %v225 = vld [vmem:[%s2 + $0x48] sm:$0xff]
      %v226 = vld [vmem:[%s2 + $0x50] sm:$0xff]
      %v227 = vld [vmem:[%s2 + $0x58] sm:$0xff]
      %v228 = vld [vmem:[%s2 + $0x60] sm:$0xff]
      %v229 = vld [vmem:[%s2 + $0x68] sm:$0xff]
      %v230 = vld [vmem:[%s2 + $0x70] sm:$0xff]
      %v231 = vld [vmem:[%s2 + $0x78] sm:$0xff]
      %233 = vset.pattern.permute.xlu0 0
      %234 = vperm.xlu0 %233, %v216
      %v235 = vpop.permute.xlu0 %234
      %238 = vset.pattern.permute.xlu0 0
      %239 = vperm.xlu0 %238, %v217
      %v240 = vpop.permute.xlu0 %239
      %243 = vset.pattern.permute.xlu0 0
      %244 = vperm.xlu0 %243, %v218
      %v245 = vpop.permute.xlu0 %244
      %248 = vset.pattern.permute.xlu0 0
      %249 = vperm.xlu0 %248, %v219
      %v250 = vpop.permute.xlu0 %249
      %253 = vset.pattern.permute.xlu0 0
      %254 = vperm.xlu0 %253, %v220
      %v255 = vpop.permute.xlu0 %254
      %258 = vset.pattern.permute.xlu0 0
      %259 = vperm.xlu0 %258, %v221
      %v260 = vpop.permute.xlu0 %259
      %263 = vset.pattern.permute.xlu0 0
      %264 = vperm.xlu0 %263, %v222
      %v265 = vpop.permute.xlu0 %264
      %268 = vset.pattern.permute.xlu0 0
      %269 = vperm.xlu0 %268, %v223
      %v270 = vpop.permute.xlu0 %269
      %273 = vset.pattern.permute.xlu0 0
      %274 = vperm.xlu0 %273, %v224
      %v275 = vpop.permute.xlu0 %274
      %278 = vset.pattern.permute.xlu0 0
      %279 = vperm.xlu0 %278, %v225
      %v280 = vpop.permute.xlu0 %279
      %283 = vset.pattern.permute.xlu0 0
      %284 = vperm.xlu0 %283, %v226
      %v285 = vpop.permute.xlu0 %284
      %288 = vset.pattern.permute.xlu0 0
      %289 = vperm.xlu0 %288, %v227
      %v290 = vpop.permute.xlu0 %289
      %293 = vset.pattern.permute.xlu0 0
      %294 = vperm.xlu0 %293, %v228
      %v295 = vpop.permute.xlu0 %294
      %298 = vset.pattern.permute.xlu0 0
      %299 = vperm.xlu0 %298, %v229
      %v300 = vpop.permute.xlu0 %299
      %303 = vset.pattern.permute.xlu0 0
      %304 = vperm.xlu0 %303, %v230
      %v305 = vpop.permute.xlu0 %304
      %308 = vset.pattern.permute.xlu0 0
      %309 = vperm.xlu0 %308, %v231
      %v310 = vpop.permute.xlu0 %309
      %v328 = vunpack.c.l.b16 %v200
      %v329 = vunpack.c.l.b16 %v201
      %v330 = vunpack.c.l.b16 %v202
      %v331 = vunpack.c.l.b16 %v203
      %v332 = vunpack.c.l.b16 %v204
      %v333 = vunpack.c.l.b16 %v205
      %v334 = vunpack.c.l.b16 %v206
      %v335 = vunpack.c.l.b16 %v207
      %v336 = vunpack.c.l.b16 %v208
      %v337 = vunpack.c.l.b16 %v209
      %v338 = vunpack.c.l.b16 %v210
      %v339 = vunpack.c.l.b16 %v211
      %v340 = vunpack.c.l.b16 %v212
      %v341 = vunpack.c.l.b16 %v213
      %v342 = vunpack.c.l.b16 %v214
      %v343 = vunpack.c.l.b16 %v215
      %v344 = vpack.c.b16 %v329, %v328
      %v345 = vpack.c.b16 %v331, %v330
      %v346 = vpack.c.b16 %v333, %v332
      %v347 = vpack.c.b16 %v335, %v334
      %v348 = vpack.c.b16 %v337, %v336
      %v349 = vpack.c.b16 %v339, %v338
      %v350 = vpack.c.b16 %v341, %v340
      %v351 = vpack.c.b16 %v343, %v342
      %v360 = vunpack.c.l.b16 %v192
      %v361 = vunpack.c.l.b16 %v193
      %v362 = vunpack.c.l.b16 %v194
      %v363 = vunpack.c.l.b16 %v195
      %v364 = vunpack.c.l.b16 %v196
      %v365 = vunpack.c.l.b16 %v197
      %v366 = vunpack.c.l.b16 %v198
      %v367 = vunpack.c.l.b16 %v199
      %v368 = vpack.c.b16 %v361, %v360
      %v369 = vpack.c.b16 %v363, %v362
      %v370 = vpack.c.b16 %v365, %v364
      %v371 = vpack.c.b16 %v367, %v366
      %vm376 = vcmask 523264
      %v378 = vsel %vm376, %v344, 0
      %v381 = vsel %vm376, %v345, 0
      %v384 = vsel %vm376, %v346, 0
      %v387 = vsel %vm376, %v347, 0
      %v390 = vsel %vm376, %v348, 0
      %v393 = vsel %vm376, %v349, 0
      %v396 = vsel %vm376, %v350, 0
      %v399 = vsel %vm376, %v351, 0
      %401 = vmatprep.subr.bf16.mxu0 0
      %402 = vmatpush1.bf16.msra.mxu0 0
      %403 = vmatprep.subr.bf16.mxu0 0
      %404 = vmatpush1.bf16.msra.mxu0 0
      %405 = vmatprep.subr.bf16.mxu0 0
      %406 = vmatpush1.bf16.msra.mxu0 0
      %407 = vmatprep.subr.bf16.mxu0 0
      %408 = vmatpush1.bf16.msra.mxu0 0
      %409 = vmatprep.subr.bf16.mxu0 0
      %410 = vmatpush1.bf16.msra.mxu0 %v371
      %411 = vmatprep.subr.bf16.mxu0 0
      %412 = vmatpush1.bf16.msra.mxu0 %v370
      %413 = vmatprep.subr.bf16.mxu0 0
      %414 = vmatpush1.bf16.msra.mxu0 %v369
      %415 = vmatprep.subr.bf16.mxu0 0
      %416 = vmatpush1.bf16.msra.mxu0 %v368
      %417 = vmatprep.subr.bf16.mxu0 0
      %418 = vmatpush2.bf16.msra.mxu0 0
      %419 = vmatprep.subr.bf16.mxu0 0
      %420 = vmatpush2.bf16.msra.mxu0 0
      %421 = vmatprep.subr.bf16.mxu0 0
      %422 = vmatpush2.bf16.msra.mxu0 0
      %423 = vmatprep.subr.bf16.mxu0 0
      %424 = vmatpush2.bf16.msra.mxu0 0
      %425 = vmatprep.subr.bf16.mxu0 0
      %426 = vmatpush2.bf16.msra.mxu0 0
      %427 = vmatprep.subr.bf16.mxu0 0
      %428 = vmatpush2.bf16.msra.mxu0 0
      %429 = vmatprep.subr.bf16.mxu0 0
      %430 = vmatpush2.bf16.msra.mxu0 0
      %431 = vmatprep.subr.bf16.mxu0 0
      %432 = vmatpush2.bf16.msra.mxu0 0
      %433 = vmatprep.mubr.bf16.mxu0 0
      %434 = vmatmul.mubr.bf16.gmra.mxu0 %v378
      %v435 = vpop.f32.mrf.mxu0
      %v436 = vadd.f32 %v235, %v435
      %v437 = vpop.f32.mrf.mxu0
      %v438 = vpop.f32.mrf.mxu0
      %v439 = vadd.f32 %v240, %v438
      %v440 = vpop.f32.mrf.mxu0
      %441 = vmatprep.mubr.bf16.mxu0 0
      %442 = vmatmul.mubr.bf16.gmra.mxu0 %v381
      %v443 = vpop.f32.mrf.mxu0
      %v444 = vadd.f32 %v245, %v443
      %v445 = vpop.f32.mrf.mxu0
      %v446 = vpop.f32.mrf.mxu0
      %v447 = vadd.f32 %v250, %v446
      %v448 = vpop.f32.mrf.mxu0
      %449 = vmatprep.mubr.bf16.mxu0 0
      %450 = vmatmul.mubr.bf16.gmra.mxu0 %v384
      %v451 = vpop.f32.mrf.mxu0
      %v452 = vadd.f32 %v255, %v451
      %v453 = vpop.f32.mrf.mxu0
      %v454 = vpop.f32.mrf.mxu0
      %v455 = vadd.f32 %v260, %v454
      %v456 = vpop.f32.mrf.mxu0
      %457 = vmatprep.mubr.bf16.mxu0 0
      %458 = vmatmul.mubr.bf16.gmra.mxu0 %v387
      %v459 = vpop.f32.mrf.mxu0
      %v460 = vadd.f32 %v265, %v459
      %v461 = vpop.f32.mrf.mxu0
      %v462 = vpop.f32.mrf.mxu0
      %v463 = vadd.f32 %v270, %v462
      %v464 = vpop.f32.mrf.mxu0
      %465 = vmatprep.mubr.bf16.mxu0 0
      %466 = vmatmul.mubr.bf16.gmra.mxu0 %v390
      %v467 = vpop.f32.mrf.mxu0
      %v468 = vadd.f32 %v275, %v467
      %v469 = vpop.f32.mrf.mxu0
      %v470 = vpop.f32.mrf.mxu0
      %v471 = vadd.f32 %v280, %v470
      %v472 = vpop.f32.mrf.mxu0
      %473 = vmatprep.mubr.bf16.mxu0 0
      %474 = vmatmul.mubr.bf16.gmra.mxu0 %v393
      %v475 = vpop.f32.mrf.mxu0
      %v476 = vadd.f32 %v285, %v475
      %v477 = vpop.f32.mrf.mxu0
      %v478 = vpop.f32.mrf.mxu0
      %v479 = vadd.f32 %v290, %v478
      %v480 = vpop.f32.mrf.mxu0
      %481 = vmatprep.mubr.bf16.mxu0 0
      %482 = vmatmul.mubr.bf16.gmra.mxu0 %v396
      %v483 = vpop.f32.mrf.mxu0
      %v484 = vadd.f32 %v295, %v483
      %v485 = vpop.f32.mrf.mxu0
      %v486 = vpop.f32.mrf.mxu0
      %v487 = vadd.f32 %v300, %v486
      %v488 = vpop.f32.mrf.mxu0
      %489 = vmatprep.mubr.bf16.mxu0 0
      %490 = vmatmul.mubr.bf16.gmra.mxu0 %v399
      %v491 = vpop.f32.mrf.mxu0
      %v492 = vadd.f32 %v305, %v491
      %v493 = vpop.f32.mrf.mxu0
      %v494 = vpop.f32.mrf.mxu0
      %v495 = vadd.f32 %v310, %v494
      %v496 = vpop.f32.mrf.mxu0
      %497 = vdwg.mxu0
      %498 = vst [vmem:[%s190] sm:$0xff] %v436
      %499 = vst [vmem:[%s190 + $0x8] sm:$0xff] %v439
      %500 = vst [vmem:[%s190 + $0x10] sm:$0xff] %v444
      %501 = vst [vmem:[%s190 + $0x18] sm:$0xff] %v447
      %502 = vst [vmem:[%s190 + $0x20] sm:$0xff] %v452
      %503 = vst [vmem:[%s190 + $0x28] sm:$0xff] %v455
      %504 = vst [vmem:[%s190 + $0x30] sm:$0xff] %v460
      %505 = vst [vmem:[%s190 + $0x38] sm:$0xff] %v463
      %506 = vst [vmem:[%s190 + $0x40] sm:$0xff] %v468
      %507 = vst [vmem:[%s190 + $0x48] sm:$0xff] %v471
      %508 = vst [vmem:[%s190 + $0x50] sm:$0xff] %v476
      %509 = vst [vmem:[%s190 + $0x58] sm:$0xff] %v479
      %510 = vst [vmem:[%s190 + $0x60] sm:$0xff] %v484
      %511 = vst [vmem:[%s190 + $0x68] sm:$0xff] %v487
      %512 = vst [vmem:[%s190 + $0x70] sm:$0xff] %v492
      %513 = vst [vmem:[%s190 + $0x78] sm:$0xff] %v495
      %p514 = scmp.lt.s32.totalorder %s18, 1
      %s515 = scalar_select %p514, %s18, 1
      %p516 = scmp.lt.s32.totalorder %s19, 0
      %s517 = scalar_select %p516, %s19, 0
      %s518 = smul.addr %s515, 16
      %s519 = sadd.s32 %s517, %s518
      %s520 = smul.addr %s519, 8
      %s521 = scalar_lea.vmem %s3, %s520
      // Predicated region
      $region33: #{enhanced_climate_unet.35} parent=31 // pred_check
        %p522 = pneg %p114
      $region34: #{enhanced_climate_unet.35} parent=31 // pred_check_branch
        %524 = sbr.rel (%p522) target = $region36
      $region35: #{enhanced_climate_unet.35} parent=31 // pred_region
        _
      $region36: #{enhanced_climate_unet.35} parent=31 // pred_fallthru
        _
    $region32: #{enhanced_climate_unet.35} parent=5 // pred_fallthru
      _
    %p525 = scmp.le.s32.totalorder 2, %s9
    // Predicated region
    $region37: #{enhanced_climate_unet.35} parent=5 // pred_check
      %p526 = pneg %p525
    $region38: #{enhanced_climate_unet.35} parent=5 // pred_check_branch
      %528 = sbr.rel (%p526) target = $region40
    $region39: #{enhanced_climate_unet.35} parent=5 // pred_region
      %s529 = ssub.s32 %s9, 2
      // Predicated region
      $region41: #{enhanced_climate_unet.35} parent=39 // pred_check
        %p530 = pneg %p120
      $region42: #{enhanced_climate_unet.35} parent=39 // pred_check_branch
        %532 = sbr.rel (%p530) target = $region44
      $region43: #{enhanced_climate_unet.35} parent=39 // pred_region
        %p533 = scmp.lt.s32.totalorder %s20, 1
        %s534 = scalar_select %p533, %s20, 1
        %p535 = scmp.lt.s32.totalorder %s21, 0
        %s536 = scalar_select %p535, %s21, 0
        %s537 = smul.addr %s534, 16
        %s538 = sadd.s32 %s536, %s537
        %s539 = smul.addr %s538, 8
        %s540 = scalar_lea.vmem %s3, %s539
      $region44: #{enhanced_climate_unet.35} parent=39 // pred_fallthru
        _
    $region40: #{enhanced_climate_unet.35} parent=5 // pred_fallthru
      _
  $region6: #{enhanced_climate_unet.35} parent=0 // loop_footer
    %s13 = sadd.s32 1, %s9
  $region7: #{enhanced_climate_unet.35} parent=0 // loop_footer_branch
    %8 = sbr.rel target = $region3
  $region8: #{enhanced_climate_unet.35} parent=0 // loop_exit
    _

// kernel: tile.18
$region0: #{tile.18}
  #allocation0 [shape = 's32[1]{0}', space=sflag, size = 0x4, scoped, tag = 'scoped memory for tile.18']
  %s0 = inlined_call_operand.vmem [shape: f32[16], index: 0, kind: input, shape index: {}]
  %s1 = inlined_call_operand.vmem [shape: f32[4,16], index: 1, kind: output, shape index: {}]
  // Predicated region
  $region2: #{tile.18} parent=0 // pred_check
    _
  $region3: #{tile.18} parent=0 // pred_check_branch
    %3 = sbr.rel (0) target = $region5
  $region4: #{tile.18} parent=0 // pred_region
    _
  $region5: #{tile.18} parent=0 // pred_fallthru
    _
  %v4 = vld [vmem:[%s0] ss:$0 sm:$0xff]
  %5 = vst [vmem:[%s1] sm:$0xf] %v4

// kernel: tile.1
$region0: #{tile.1}
  %s0 = inlined_call_operand.vmem [shape: f32[4,16], index: 0, kind: input, shape index: {}]
  %s1 = inlined_call_operand.vmem [shape: f32[64,1], index: 1, kind: output, shape index: {}]
  $region1: #{tile.1} parent=0
    #allocation0 [shape = 'u8[4096]{0}', space=vmem, size = 0x1000, scoped, tag = 'scoped mem for input reshape']
    %s3 = sshll.u32 1, 4
    %s4 = ssub.s32 %s3, 1
    %v5 = vld [vmem:[%s0] sm:%s4]
    %6 = vst [vmem:[#allocation0] sm:%s4] %v5
    %v7 = vld [vmem:[#allocation0] sm:$0xf]
    %vm8 = vcmask 7168
    %9 = vst.msk [vmem:[%s1] ss:$16 sm:$0x3] %vm8, %v7
    %10 = vst.msk [vmem:[%s1] ss:$16 sm:$0xc] %vm8, %v7
    %v11 = vld [vmem:[#allocation0] sm:$0xf]
    %12 = vrot.lane.b32.xlu0 %v11, 127
    %v13 = vpop.permute.xlu0 %12
    %vm14 = vcmask 7168
    %s15 = scalar_lea.vmem %s1, 1
    %16 = vst.msk [vmem:[%s15] ss:$16 sm:$0x3] %vm14, %v13
    %s17 = scalar_lea.vmem %s1, 1
    %18 = vst.msk [vmem:[%s17] ss:$16 sm:$0xc] %vm14, %v13
    %v19 = vld [vmem:[#allocation0] sm:$0xf]
    %20 = vrot.lane.b32.xlu0 %v19, 126
    %v21 = vpop.permute.xlu0 %20
    %vm22 = vcmask 7168
    %s23 = scalar_lea.vmem %s1, 2
    %24 = vst.msk [vmem:[%s23] ss:$16 sm:$0x3] %vm22, %v21
    %s25 = scalar_lea.vmem %s1, 2
    %26 = vst.msk [vmem:[%s25] ss:$16 sm:$0xc] %vm22, %v21
    %v27 = vld [vmem:[#allocation0] sm:$0xf]
    %28 = vrot.lane.b32.xlu0 %v27, 125
    %v29 = vpop.permute.xlu0 %28
    %vm30 = vcmask 7168
    %s31 = scalar_lea.vmem %s1, 3
    %32 = vst.msk [vmem:[%s31] ss:$16 sm:$0x3] %vm30, %v29
    %s33 = scalar_lea.vmem %s1, 3
    %34 = vst.msk [vmem:[%s33] ss:$16 sm:$0xc] %vm30, %v29
    %v35 = vld [vmem:[#allocation0] sm:$0xf]
    %36 = vrot.lane.b32.xlu0 %v35, 124
    %v37 = vpop.permute.xlu0 %36
    %vm38 = vcmask 7168
    %s39 = scalar_lea.vmem %s1, 4
    %40 = vst.msk [vmem:[%s39] ss:$16 sm:$0x3] %vm38, %v37
    %s41 = scalar_lea.vmem %s1, 4
    %42 = vst.msk [vmem:[%s41] ss:$16 sm:$0xc] %vm38, %v37
    %v43 = vld [vmem:[#allocation0] sm:$0xf]
    %44 = vrot.lane.b32.xlu0 %v43, 123
    %v45 = vpop.permute.xlu0 %44
    %vm46 = vcmask 7168
    %s47 = scalar_lea.vmem %s1, 5
    %48 = vst.msk [vmem:[%s47] ss:$16 sm:$0x3] %vm46, %v45
    %s49 = scalar_lea.vmem %s1, 5
    %50 = vst.msk [vmem:[%s49] ss:$16 sm:$0xc] %vm46, %v45
    %v51 = vld [vmem:[#allocation0] sm:$0xf]
    %52 = vrot.lane.b32.xlu0 %v51, 122
    %v53 = vpop.permute.xlu0 %52
    %vm54 = vcmask 7168
    %s55 = scalar_lea.vmem %s1, 6
    %56 = vst.msk [vmem:[%s55] ss:$16 sm:$0x3] %vm54, %v53
    %s57 = scalar_lea.vmem %s1, 6
    %58 = vst.msk [vmem:[%s57] ss:$16 sm:$0xc] %vm54, %v53
    %v59 = vld [vmem:[#allocation0] sm:$0xf]
    %60 = vrot.lane.b32.xlu0 %v59, 121
    %v61 = vpop.permute.xlu0 %60
    %vm62 = vcmask 7168
    %s63 = scalar_lea.vmem %s1, 7
    %64 = vst.msk [vmem:[%s63] ss:$16 sm:$0x3] %vm62, %v61
    %s65 = scalar_lea.vmem %s1, 7
    %66 = vst.msk [vmem:[%s65] ss:$16 sm:$0xc] %vm62, %v61
    %v67 = vld [vmem:[#allocation0] sm:$0xf]
    %68 = vrot.lane.b32.xlu0 %v67, 120
    %v69 = vpop.permute.xlu0 %68
    %vm70 = vcmask 7168
    %s71 = scalar_lea.vmem %s1, 8
    %72 = vst.msk [vmem:[%s71] ss:$16 sm:$0x3] %vm70, %v69
    %s73 = scalar_lea.vmem %s1, 8
    %74 = vst.msk [vmem:[%s73] ss:$16 sm:$0xc] %vm70, %v69
    %v75 = vld [vmem:[#allocation0] sm:$0xf]
    %76 = vrot.lane.b32.xlu0 %v75, 119
    %v77 = vpop.permute.xlu0 %76
    %vm78 = vcmask 7168
    %s79 = scalar_lea.vmem %s1, 9
    %80 = vst.msk [vmem:[%s79] ss:$16 sm:$0x3] %vm78, %v77
    %s81 = scalar_lea.vmem %s1, 9
    %82 = vst.msk [vmem:[%s81] ss:$16 sm:$0xc] %vm78, %v77
    %v83 = vld [vmem:[#allocation0] sm:$0xf]
    %84 = vrot.lane.b32.xlu0 %v83, 118
    %v85 = vpop.permute.xlu0 %84
    %vm86 = vcmask 7168
    %s87 = scalar_lea.vmem %s1, 10
    %88 = vst.msk [vmem:[%s87] ss:$16 sm:$0x3] %vm86, %v85
    %s89 = scalar_lea.vmem %s1, 10
    %90 = vst.msk [vmem:[%s89] ss:$16 sm:$0xc] %vm86, %v85
    %v91 = vld [vmem:[#allocation0] sm:$0xf]
    %92 = vrot.lane.b32.xlu0 %v91, 117
    %v93 = vpop.permute.xlu0 %92
    %vm94 = vcmask 7168
    %s95 = scalar_lea.vmem %s1, 11
    %96 = vst.msk [vmem:[%s95] ss:$16 sm:$0x3] %vm94, %v93
    %s97 = scalar_lea.vmem %s1, 11
    %98 = vst.msk [vmem:[%s97] ss:$16 sm:$0xc] %vm94, %v93
    %v99 = vld [vmem:[#allocation0] sm:$0xf]
    %100 = vrot.lane.b32.xlu0 %v99, 116
    %v101 = vpop.permute.xlu0 %100
    %vm102 = vcmask 7168
    %s103 = scalar_lea.vmem %s1, 12
    %104 = vst.msk [vmem:[%s103] ss:$16 sm:$0x3] %vm102, %v101
    %s105 = scalar_lea.vmem %s1, 12
    %106 = vst.msk [vmem:[%s105] ss:$16 sm:$0xc] %vm102, %v101
    %v107 = vld [vmem:[#allocation0] sm:$0xf]
    %108 = vrot.lane.b32.xlu0 %v107, 115
    %v109 = vpop.permute.xlu0 %108
    %vm110 = vcmask 7168
    %s111 = scalar_lea.vmem %s1, 13
    %112 = vst.msk [vmem:[%s111] ss:$16 sm:$0x3] %vm110, %v109
    %s113 = scalar_lea.vmem %s1, 13
    %114 = vst.msk [vmem:[%s113] ss:$16 sm:$0xc] %vm110, %v109
    %v115 = vld [vmem:[#allocation0] sm:$0xf]
    %116 = vrot.lane.b32.xlu0 %v115, 114
    %v117 = vpop.permute.xlu0 %116
    %vm118 = vcmask 7168
    %s119 = scalar_lea.vmem %s1, 14
    %120 = vst.msk [vmem:[%s119] ss:$16 sm:$0x3] %vm118, %v117
    %s121 = scalar_lea.vmem %s1, 14
    %122 = vst.msk [vmem:[%s121] ss:$16 sm:$0xc] %vm118, %v117
    %v123 = vld [vmem:[#allocation0] sm:$0xf]
    %124 = vrot.lane.b32.xlu0 %v123, 113
    %v125 = vpop.permute.xlu0 %124
    %vm126 = vcmask 7168
    %s127 = scalar_lea.vmem %s1, 15
    %128 = vst.msk [vmem:[%s127] ss:$16 sm:$0x3] %vm126, %v125
    %s129 = scalar_lea.vmem %s1, 15
    %130 = vst.msk [vmem:[%s129] ss:$16 sm:$0xc] %vm126, %v125

// kernel: enhanced_climate_unet.36
$region0: #{enhanced_climate_unet.36}
  #allocation0 [shape = 'u32[]', space=smem, size = 0x4, offset = 0x4, fixed_abs, tag = 'smem constant byte address 0x4 - core index']
  #allocation1 [shape = 'u32[144,128]{1,0:T(1,128)}', space=vmem, size = 0x12000, scoped, tag = 'internal scratch']
  %s0 = inlined_call_operand.vmem [shape: bf16[2,64,128], index: 0, kind: input, shape index: {}]
  %s1 = inlined_call_operand.vmem [shape: bf16[32,64], index: 1, kind: input, shape index: {}]
  %s2 = inlined_call_operand.vmem [shape: f32[32,1], index: 2, kind: input, shape index: {}]
  %s3 = inlined_call_operand.vmem [shape: f32[2,32,128], index: 3, kind: output, shape index: {}]
  %s4 = sld [smem:[#allocation0]]
  $region45: #{enhanced_climate_unet.36} parent=0
    _
  %s6 = ssub.s32 1, %s4
  %s7 = scalar_select 0, %s6, %s4
  loop: start=0, step=1, limit=4
  $region2: #{enhanced_climate_unet.36} parent=0 // loop_pre_header
    _
  $region3: #{enhanced_climate_unet.36} parent=0 // loop_header
    %s9 = sphi 0, %s13
    %p10 = scmp.ge.s32.totalorder %s9, 4
    %s16 = sphi 0, %s28
    %s17 = sphi 0, %s24
    %s18 = sphi 0, %s16
    %s19 = sphi 0, %s17
    %s20 = sphi 0, %s18
    %s21 = sphi 0, %s19
    %s31 = sphi 0, %s33
    %s34 = sphi 0, %s31
    %s35 = sphi 0, %s34
    %s51 = sphi 0, %s35
    %s55 = sphi 0, %s55
    %s57 = sphi 0, %s55
    %s58 = sphi 0, %s57
    %s72 = sphi 0, %s58
    %s76 = sphi 0, %s76
    %s78 = sphi 0, %s76
    %s79 = sphi 0, %s78
    %s93 = sphi 0, %s79
    %s101 = sphi 0, %s103
    %s104 = sphi 0, %s101
    %s105 = sphi 0, %s104
    %s121 = sphi 0, %s105
  $region4: #{enhanced_climate_unet.36} parent=0 // loop_header_branch
    %12 = sbr.rel (%p10) target = $region8
  $region5: #{enhanced_climate_unet.36} parent=0 // loop_body
    %s14 = ssub.s32 %s9, 1
    %s15 = ssub.s32 %s9, 2
    %s22 = sadd.s32 1, %s17
    %p23 = scmp.ge.s32.totalorder %s22, 1
    %s24 = scalar_select %p23, 0, %s22
    %s25 = sadd.s32 1, %s16
    %s26 = scalar_select %p23, %s25, %s16
    %p27 = scmp.ge.s32.totalorder %s26, 2
    %s28 = scalar_select %p27, 0, %s26
    %s29 = ssub.s32 %s16, %s28
    %p30 = scmp.eq.s32.totalorder %s29, 0
    %s32 = sadd.s32 %s31, 1
    %s33 = scalar_select %p30, %s31, %s32
    %p36 = pneg %p30
    %p37 = scmp.eq.s32.totalorder %s9, 1
    %p38 = por %p36, %p37
    %p39 = scmp.ne.s32.totalorder %s31, %s34
    %p40 = scmp.eq.s32.totalorder %s9, 0
    %p41 = por %p39, %p40
    %p42 = scmp.ne.s32.totalorder %s31, %s34
    %p43 = scmp.eq.s32.totalorder %s14, 1
    %p44 = por %p42, %p43
    %p45 = scmp.ne.s32.totalorder %s34, %s35
    %p46 = scmp.eq.s32.totalorder %s14, 0
    %p47 = por %p45, %p46
    %p48 = scmp.ne.s32.totalorder %s34, %s35
    %p49 = scmp.eq.s32.totalorder %s15, 1
    %p50 = por %p48, %p49
    %p52 = scmp.ne.s32.totalorder %s35, %s51
    %p53 = scmp.eq.s32.totalorder %s15, 0
    %p54 = por %p52, %p53
    %s56 = sadd.s32 %s55, 1
    %p59 = scmp.eq.s32.totalorder %s9, 1
    %p60 = scmp.ne.s32.totalorder %s55, %s57
    %p61 = scmp.eq.s32.totalorder %s9, 0
    %p62 = por %p60, %p61
    %p63 = scmp.ne.s32.totalorder %s55, %s57
    %p64 = scmp.eq.s32.totalorder %s14, 1
    %p65 = por %p63, %p64
    %p66 = scmp.ne.s32.totalorder %s57, %s58
    %p67 = scmp.eq.s32.totalorder %s14, 0
    %p68 = por %p66, %p67
    %p69 = scmp.ne.s32.totalorder %s57, %s58
    %p70 = scmp.eq.s32.totalorder %s15, 1
    %p71 = por %p69, %p70
    %p73 = scmp.ne.s32.totalorder %s58, %s72
    %p74 = scmp.eq.s32.totalorder %s15, 0
    %p75 = por %p73, %p74
    %s77 = sadd.s32 %s76, 1
    %p80 = scmp.eq.s32.totalorder %s9, 1
    %p81 = scmp.ne.s32.totalorder %s76, %s78
    %p82 = scmp.eq.s32.totalorder %s9, 0
    %p83 = por %p81, %p82
    %p84 = scmp.ne.s32.totalorder %s76, %s78
    %p85 = scmp.eq.s32.totalorder %s14, 1
    %p86 = por %p84, %p85
    %p87 = scmp.ne.s32.totalorder %s78, %s79
    %p88 = scmp.eq.s32.totalorder %s14, 0
    %p89 = por %p87, %p88
    %p90 = scmp.ne.s32.totalorder %s78, %s79
    %p91 = scmp.eq.s32.totalorder %s15, 1
    %p92 = por %p90, %p91
    %p94 = scmp.ne.s32.totalorder %s79, %s93
    %p95 = scmp.eq.s32.totalorder %s15, 0
    %p96 = por %p94, %p95
    %s97 = ssub.s32 %s16, %s28
    %s98 = ssub.s32 %s17, %s24
    %s99 = sor.u32 %s97, %s98
    %p100 = scmp.eq.s32.totalorder %s99, 0
    %s102 = sadd.s32 %s101, 1
    %s103 = scalar_select %p100, %s101, %s102
    %p106 = pneg %p100
    %p107 = scmp.eq.s32.totalorder %s9, 1
    %p108 = por %p106, %p107
    %p109 = scmp.ne.s32.totalorder %s101, %s104
    %p110 = scmp.eq.s32.totalorder %s9, 0
    %p111 = por %p109, %p110
    %p112 = scmp.ne.s32.totalorder %s101, %s104
    %p113 = scmp.eq.s32.totalorder %s14, 1
    %p114 = por %p112, %p113
    %p115 = scmp.ne.s32.totalorder %s104, %s105
    %p116 = scmp.eq.s32.totalorder %s14, 0
    %p117 = por %p115, %p116
    %p118 = scmp.ne.s32.totalorder %s104, %s105
    %p119 = scmp.eq.s32.totalorder %s15, 1
    %p120 = por %p118, %p119
    %p122 = scmp.ne.s32.totalorder %s105, %s121
    %p123 = scmp.eq.s32.totalorder %s15, 0
    %p124 = por %p122, %p123
    %p125 = scmp.le.s32.totalorder 1, %s9
    %p126 = scmp.lt.s32.totalorder %s9, 3
    %p127 = pnand %p125, %p126
    %p128 = pneg %p127
    // Predicated region
    $region9: #{enhanced_climate_unet.36} parent=5 // pred_check
      _
    $region10: #{enhanced_climate_unet.36} parent=5 // pred_check_branch
      %130 = sbr.rel (%p127) target = $region12
    $region11: #{enhanced_climate_unet.36} parent=5 // pred_region
      %s131 = ssub.s32 %s9, 1
      // Predicated region
      $region13: #{enhanced_climate_unet.36} parent=11 // pred_check
        %p132 = pneg %p68
      $region14: #{enhanced_climate_unet.36} parent=11 // pred_check_branch
        %134 = sbr.rel (%p132) target = $region16
      $region15: #{enhanced_climate_unet.36} parent=11 // pred_region
        _
      $region16: #{enhanced_climate_unet.36} parent=11 // pred_fallthru
        _
      // Predicated region
      $region17: #{enhanced_climate_unet.36} parent=11 // pred_check
        %p135 = pneg %p89
      $region18: #{enhanced_climate_unet.36} parent=11 // pred_check_branch
        %137 = sbr.rel (%p135) target = $region20
      $region19: #{enhanced_climate_unet.36} parent=11 // pred_region
        _
      $region20: #{enhanced_climate_unet.36} parent=11 // pred_fallthru
        _
    $region12: #{enhanced_climate_unet.36} parent=5 // pred_fallthru
      _
    %p138 = scmp.lt.s32.totalorder %s9, 2
    // Predicated region
    $region21: #{enhanced_climate_unet.36} parent=5 // pred_check
      %p139 = pneg %p138
    $region22: #{enhanced_climate_unet.36} parent=5 // pred_check_branch
      %141 = sbr.rel (%p139) target = $region24
    $region23: #{enhanced_climate_unet.36} parent=5 // pred_region
      // Predicated region
      $region25: #{enhanced_climate_unet.36} parent=23 // pred_check
        %p142 = pneg %p41
      $region26: #{enhanced_climate_unet.36} parent=23 // pred_check_branch
        %144 = sbr.rel (%p142) target = $region28
      $region27: #{enhanced_climate_unet.36} parent=23 // pred_region
        %p145 = scmp.lt.s32.totalorder %s16, 1
        %s146 = scalar_select %p145, %s16, 1
        %s147 = smul.addr %s146, 8
        %s148 = smul.addr %s147, 4
        %s149 = scalar_lea.vmem %s0, %s148
      $region28: #{enhanced_climate_unet.36} parent=23 // pred_fallthru
        _
    $region24: #{enhanced_climate_unet.36} parent=5 // pred_fallthru
      _
    %p150 = scmp.le.s32.totalorder 1, %s9
    %p151 = scmp.lt.s32.totalorder %s9, 3
    %p152 = pnand %p150, %p151
    %p153 = pneg %p152
    // Predicated region
    $region29: #{enhanced_climate_unet.36} parent=5 // pred_check
      _
    $region30: #{enhanced_climate_unet.36} parent=5 // pred_check_branch
      %155 = sbr.rel (%p152) target = $region32
    $region31: #{enhanced_climate_unet.36} parent=5 // pred_region
      %s156 = ssub.s32 %s9, 1
      %p157 = scmp.lt.s32.totalorder %s18, 1
      %s158 = scalar_select %p157, %s18, 1
      %s159 = smul.addr %s158, 8
      %s160 = smul.addr %s159, 4
      %s161 = scalar_lea.vmem %s0, %s160
      %p162 = pneg %p47
      %p163 = pneg %p44
      %p164 = pneg %p68
      %p165 = pneg %p65
      %p166 = pneg %p89
      %p167 = pneg %p86
      %p168 = pneg %p117
      %p169 = pneg %p114
      %p170 = scmp.lt.s32.totalorder %s18, 1
      %s171 = scalar_select %p170, %s18, 1
      %p172 = scmp.lt.s32.totalorder %s19, 0
      %s173 = scalar_select %p172, %s19, 0
      %s174 = smul.addr %s171, 4
      %s175 = sadd.s32 %s173, %s174
      %s176 = smul.addr %s175, 8
      %s177 = scalar_lea.vmem %s3, %s176
      %p178 = scmp.lt.s32.totalorder %s18, 1
      %s179 = scalar_select %p178, %s18, 1
      %s180 = smul.addr %s179, 8
      %s181 = smul.addr %s180, 4
      %s182 = scalar_lea.vmem %s0, %s181
      %p183 = scmp.lt.s32.totalorder %s18, 1
      %s184 = scalar_select %p183, %s18, 1
      %p185 = scmp.lt.s32.totalorder %s19, 0
      %s186 = scalar_select %p185, %s19, 0
      %s187 = smul.addr %s184, 4
      %s188 = sadd.s32 %s186, %s187
      %s189 = smul.addr %s188, 8
      %s190 = scalar_lea.vmem %s3, %s189
      %v192 = vld [vmem:[%s182] sm:$0xf]
      %v193 = vld [vmem:[%s182 + $0x4] sm:$0xf]
      %v194 = vld [vmem:[%s182 + $0x8] sm:$0xf]
      %v195 = vld [vmem:[%s182 + $0xc] sm:$0xf]
      %v196 = vld [vmem:[%s182 + $0x10] sm:$0xf]
      %v197 = vld [vmem:[%s182 + $0x14] sm:$0xf]
      %v198 = vld [vmem:[%s182 + $0x18] sm:$0xf]
      %v199 = vld [vmem:[%s182 + $0x1c] sm:$0xf]
      %v200 = vld [vmem:[%s1] sm:$0xf]
      %v201 = vld [vmem:[%s1 + $0x4] sm:$0xf]
      %v202 = vld [vmem:[%s1 + $0x8] sm:$0xf]
      %v203 = vld [vmem:[%s1 + $0xc] sm:$0xf]
      %v204 = vld [vmem:[%s2] sm:$0xff]
      %v205 = vld [vmem:[%s2 + $0x8] sm:$0xff]
      %v206 = vld [vmem:[%s2 + $0x10] sm:$0xff]
      %v207 = vld [vmem:[%s2 + $0x18] sm:$0xff]
      %209 = vset.pattern.permute.xlu0 0
      %210 = vperm.xlu0 %209, %v204
      %v211 = vpop.permute.xlu0 %210
      %214 = vset.pattern.permute.xlu0 0
      %215 = vperm.xlu0 %214, %v205
      %v216 = vpop.permute.xlu0 %215
      %219 = vset.pattern.permute.xlu0 0
      %220 = vperm.xlu0 %219, %v206
      %v221 = vpop.permute.xlu0 %220
      %224 = vset.pattern.permute.xlu0 0
      %225 = vperm.xlu0 %224, %v207
      %v226 = vpop.permute.xlu0 %225
      %v232 = vunpack.c.l.b16 %v200
      %v233 = vunpack.c.l.b16 %v201
      %v234 = vunpack.c.l.b16 %v202
      %v235 = vunpack.c.l.b16 %v203
      %v236 = vpack.c.b16 %v233, %v232
      %v237 = vpack.c.b16 %v235, %v234
      %v246 = vunpack.c.l.b16 %v192
      %v247 = vunpack.c.l.b16 %v193
      %v248 = vunpack.c.l.b16 %v194
      %v249 = vunpack.c.l.b16 %v195
      %v250 = vunpack.c.l.b16 %v196
      %v251 = vunpack.c.l.b16 %v197
      %v252 = vunpack.c.l.b16 %v198
      %v253 = vunpack.c.l.b16 %v199
      %v254 = vpack.c.b16 %v247, %v246
      %v255 = vpack.c.b16 %v249, %v248
      %v256 = vpack.c.b16 %v251, %v250
      %v257 = vpack.c.b16 %v253, %v252
      %vm262 = vcmask 523264
      %v264 = vsel %vm262, %v236, 0
      %v267 = vsel %vm262, %v237, 0
      %269 = vmatprep.subr.bf16.mxu0 0
      %270 = vmatpush1.bf16.msra.mxu0 0
      %271 = vmatprep.subr.bf16.mxu0 0
      %272 = vmatpush1.bf16.msra.mxu0 0
      %273 = vmatprep.subr.bf16.mxu0 0
      %274 = vmatpush1.bf16.msra.mxu0 0
      %275 = vmatprep.subr.bf16.mxu0 0
      %276 = vmatpush1.bf16.msra.mxu0 0
      %277 = vmatprep.subr.bf16.mxu0 0
      %278 = vmatpush1.bf16.msra.mxu0 %v257
      %279 = vmatprep.subr.bf16.mxu0 0
      %280 = vmatpush1.bf16.msra.mxu0 %v256
      %281 = vmatprep.subr.bf16.mxu0 0
      %282 = vmatpush1.bf16.msra.mxu0 %v255
      %283 = vmatprep.subr.bf16.mxu0 0
      %284 = vmatpush1.bf16.msra.mxu0 %v254
      %285 = vmatprep.subr.bf16.mxu0 0
      %286 = vmatpush2.bf16.msra.mxu0 0
      %287 = vmatprep.subr.bf16.mxu0 0
      %288 = vmatpush2.bf16.msra.mxu0 0
      %289 = vmatprep.subr.bf16.mxu0 0
      %290 = vmatpush2.bf16.msra.mxu0 0
      %291 = vmatprep.subr.bf16.mxu0 0
      %292 = vmatpush2.bf16.msra.mxu0 0
      %293 = vmatprep.subr.bf16.mxu0 0
      %294 = vmatpush2.bf16.msra.mxu0 0
      %295 = vmatprep.subr.bf16.mxu0 0
      %296 = vmatpush2.bf16.msra.mxu0 0
      %297 = vmatprep.subr.bf16.mxu0 0
      %298 = vmatpush2.bf16.msra.mxu0 0
      %299 = vmatprep.subr.bf16.mxu0 0
      %300 = vmatpush2.bf16.msra.mxu0 0
      %301 = vmatprep.mubr.bf16.mxu0 0
      %302 = vmatmul.mubr.bf16.gmra.mxu0 %v264
      %v303 = vpop.f32.mrf.mxu0
      %v304 = vadd.f32 %v211, %v303
      %v305 = vpop.f32.mrf.mxu0
      %v306 = vpop.f32.mrf.mxu0
      %v307 = vadd.f32 %v216, %v306
      %v308 = vpop.f32.mrf.mxu0
      %309 = vmatprep.mubr.bf16.mxu0 0
      %310 = vmatmul.mubr.bf16.gmra.mxu0 %v267
      %v311 = vpop.f32.mrf.mxu0
      %v312 = vadd.f32 %v221, %v311
      %v313 = vpop.f32.mrf.mxu0
      %v314 = vpop.f32.mrf.mxu0
      %v315 = vadd.f32 %v226, %v314
      %v316 = vpop.f32.mrf.mxu0
      %317 = vdwg.mxu0
      %318 = vst [vmem:[%s190] sm:$0xff] %v304
      %319 = vst [vmem:[%s190 + $0x8] sm:$0xff] %v307
      %320 = vst [vmem:[%s190 + $0x10] sm:$0xff] %v312
      %321 = vst [vmem:[%s190 + $0x18] sm:$0xff] %v315
      %p322 = scmp.lt.s32.totalorder %s18, 1
      %s323 = scalar_select %p322, %s18, 1
      %p324 = scmp.lt.s32.totalorder %s19, 0
      %s325 = scalar_select %p324, %s19, 0
      %s326 = smul.addr %s323, 4
      %s327 = sadd.s32 %s325, %s326
      %s328 = smul.addr %s327, 8
      %s329 = scalar_lea.vmem %s3, %s328
      // Predicated region
      $region33: #{enhanced_climate_unet.36} parent=31 // pred_check
        %p330 = pneg %p114
      $region34: #{enhanced_climate_unet.36} parent=31 // pred_check_branch
        %332 = sbr.rel (%p330) target = $region36
      $region35: #{enhanced_climate_unet.36} parent=31 // pred_region
        _
      $region36: #{enhanced_climate_unet.36} parent=31 // pred_fallthru
        _
    $region32: #{enhanced_climate_unet.36} parent=5 // pred_fallthru
      _
    %p333 = scmp.le.s32.totalorder 2, %s9
    // Predicated region
    $region37: #{enhanced_climate_unet.36} parent=5 // pred_check
      %p334 = pneg %p333
    $region38: #{enhanced_climate_unet.36} parent=5 // pred_check_branch
      %336 = sbr.rel (%p334) target = $region40
    $region39: #{enhanced_climate_unet.36} parent=5 // pred_region
      %s337 = ssub.s32 %s9, 2
      // Predicated region
      $region41: #{enhanced_climate_unet.36} parent=39 // pred_check
        %p338 = pneg %p120
      $region42: #{enhanced_climate_unet.36} parent=39 // pred_check_branch
        %340 = sbr.rel (%p338) target = $region44
      $region43: #{enhanced_climate_unet.36} parent=39 // pred_region
        %p341 = scmp.lt.s32.totalorder %s20, 1
        %s342 = scalar_select %p341, %s20, 1
        %p343 = scmp.lt.s32.totalorder %s21, 0
        %s344 = scalar_select %p343, %s21, 0
        %s345 = smul.addr %s342, 4
        %s346 = sadd.s32 %s344, %s345
        %s347 = smul.addr %s346, 8
        %s348 = scalar_lea.vmem %s3, %s347
      $region44: #{enhanced_climate_unet.36} parent=39 // pred_fallthru
        _
    $region40: #{enhanced_climate_unet.36} parent=5 // pred_fallthru
      _
  $region6: #{enhanced_climate_unet.36} parent=0 // loop_footer
    %s13 = sadd.s32 1, %s9
  $region7: #{enhanced_climate_unet.36} parent=0 // loop_footer_branch
    %8 = sbr.rel target = $region3
  $region8: #{enhanced_climate_unet.36} parent=0 // loop_exit
    _

// kernel: enhanced_climate_unet.37
$region0: #{enhanced_climate_unet.37}
  #allocation0 [shape = 'u32[]', space=smem, size = 0x4, offset = 0x4, fixed_abs, tag = 'smem constant byte address 0x4 - core index']
  #allocation1 [shape = 'u32[144,128]{1,0:T(1,128)}', space=vmem, size = 0x12000, scoped, tag = 'internal scratch']
  %s0 = inlined_call_operand.vmem [shape: bf16[2,64,150], index: 0, kind: input, shape index: {}]
  %s1 = inlined_call_operand.vmem [shape: bf16[32,576], index: 1, kind: input, shape index: {}]
  %s2 = inlined_call_operand.vmem [shape: f32[32,1], index: 2, kind: input, shape index: {}]
  %s3 = inlined_call_operand.vmem [shape: f32[2,32,128], index: 3, kind: output, shape index: {}]
  %s4 = sld [smem:[#allocation0]]
  $region45: #{enhanced_climate_unet.37} parent=0
    _
  %s6 = ssub.s32 1, %s4
  %s7 = scalar_select 0, %s6, %s4
  loop: start=0, step=1, limit=4
  $region2: #{enhanced_climate_unet.37} parent=0 // loop_pre_header
    _
  $region3: #{enhanced_climate_unet.37} parent=0 // loop_header
    %s9 = sphi 0, %s13
    %p10 = scmp.ge.s32.totalorder %s9, 4
    %s16 = sphi 0, %s28
    %s17 = sphi 0, %s24
    %s18 = sphi 0, %s16
    %s19 = sphi 0, %s17
    %s20 = sphi 0, %s18
    %s21 = sphi 0, %s19
    %s31 = sphi 0, %s33
    %s34 = sphi 0, %s31
    %s35 = sphi 0, %s34
    %s51 = sphi 0, %s35
    %s55 = sphi 0, %s55
    %s57 = sphi 0, %s55
    %s58 = sphi 0, %s57
    %s72 = sphi 0, %s58
    %s76 = sphi 0, %s76
    %s78 = sphi 0, %s76
    %s79 = sphi 0, %s78
    %s93 = sphi 0, %s79
    %s101 = sphi 0, %s103
    %s104 = sphi 0, %s101
    %s105 = sphi 0, %s104
    %s121 = sphi 0, %s105
  $region4: #{enhanced_climate_unet.37} parent=0 // loop_header_branch
    %12 = sbr.rel (%p10) target = $region8
  $region5: #{enhanced_climate_unet.37} parent=0 // loop_body
    %s14 = ssub.s32 %s9, 1
    %s15 = ssub.s32 %s9, 2
    %s22 = sadd.s32 1, %s17
    %p23 = scmp.ge.s32.totalorder %s22, 1
    %s24 = scalar_select %p23, 0, %s22
    %s25 = sadd.s32 1, %s16
    %s26 = scalar_select %p23, %s25, %s16
    %p27 = scmp.ge.s32.totalorder %s26, 2
    %s28 = scalar_select %p27, 0, %s26
    %s29 = ssub.s32 %s16, %s28
    %p30 = scmp.eq.s32.totalorder %s29, 0
    %s32 = sadd.s32 %s31, 1
    %s33 = scalar_select %p30, %s31, %s32
    %p36 = pneg %p30
    %p37 = scmp.eq.s32.totalorder %s9, 1
    %p38 = por %p36, %p37
    %p39 = scmp.ne.s32.totalorder %s31, %s34
    %p40 = scmp.eq.s32.totalorder %s9, 0
    %p41 = por %p39, %p40
    %p42 = scmp.ne.s32.totalorder %s31, %s34
    %p43 = scmp.eq.s32.totalorder %s14, 1
    %p44 = por %p42, %p43
    %p45 = scmp.ne.s32.totalorder %s34, %s35
    %p46 = scmp.eq.s32.totalorder %s14, 0
    %p47 = por %p45, %p46
    %p48 = scmp.ne.s32.totalorder %s34, %s35
    %p49 = scmp.eq.s32.totalorder %s15, 1
    %p50 = por %p48, %p49
    %p52 = scmp.ne.s32.totalorder %s35, %s51
    %p53 = scmp.eq.s32.totalorder %s15, 0
    %p54 = por %p52, %p53
    %s56 = sadd.s32 %s55, 1
    %p59 = scmp.eq.s32.totalorder %s9, 1
    %p60 = scmp.ne.s32.totalorder %s55, %s57
    %p61 = scmp.eq.s32.totalorder %s9, 0
    %p62 = por %p60, %p61
    %p63 = scmp.ne.s32.totalorder %s55, %s57
    %p64 = scmp.eq.s32.totalorder %s14, 1
    %p65 = por %p63, %p64
    %p66 = scmp.ne.s32.totalorder %s57, %s58
    %p67 = scmp.eq.s32.totalorder %s14, 0
    %p68 = por %p66, %p67
    %p69 = scmp.ne.s32.totalorder %s57, %s58
    %p70 = scmp.eq.s32.totalorder %s15, 1
    %p71 = por %p69, %p70
    %p73 = scmp.ne.s32.totalorder %s58, %s72
    %p74 = scmp.eq.s32.totalorder %s15, 0
    %p75 = por %p73, %p74
    %s77 = sadd.s32 %s76, 1
    %p80 = scmp.eq.s32.totalorder %s9, 1
    %p81 = scmp.ne.s32.totalorder %s76, %s78
    %p82 = scmp.eq.s32.totalorder %s9, 0
    %p83 = por %p81, %p82
    %p84 = scmp.ne.s32.totalorder %s76, %s78
    %p85 = scmp.eq.s32.totalorder %s14, 1
    %p86 = por %p84, %p85
    %p87 = scmp.ne.s32.totalorder %s78, %s79
    %p88 = scmp.eq.s32.totalorder %s14, 0
    %p89 = por %p87, %p88
    %p90 = scmp.ne.s32.totalorder %s78, %s79
    %p91 = scmp.eq.s32.totalorder %s15, 1
    %p92 = por %p90, %p91
    %p94 = scmp.ne.s32.totalorder %s79, %s93
    %p95 = scmp.eq.s32.totalorder %s15, 0
    %p96 = por %p94, %p95
    %s97 = ssub.s32 %s16, %s28
    %s98 = ssub.s32 %s17, %s24
    %s99 = sor.u32 %s97, %s98
    %p100 = scmp.eq.s32.totalorder %s99, 0
    %s102 = sadd.s32 %s101, 1
    %s103 = scalar_select %p100, %s101, %s102
    %p106 = pneg %p100
    %p107 = scmp.eq.s32.totalorder %s9, 1
    %p108 = por %p106, %p107
    %p109 = scmp.ne.s32.totalorder %s101, %s104
    %p110 = scmp.eq.s32.totalorder %s9, 0
    %p111 = por %p109, %p110
    %p112 = scmp.ne.s32.totalorder %s101, %s104
    %p113 = scmp.eq.s32.totalorder %s14, 1
    %p114 = por %p112, %p113
    %p115 = scmp.ne.s32.totalorder %s104, %s105
    %p116 = scmp.eq.s32.totalorder %s14, 0
    %p117 = por %p115, %p116
    %p118 = scmp.ne.s32.totalorder %s104, %s105
    %p119 = scmp.eq.s32.totalorder %s15, 1
    %p120 = por %p118, %p119
    %p122 = scmp.ne.s32.totalorder %s105, %s121
    %p123 = scmp.eq.s32.totalorder %s15, 0
    %p124 = por %p122, %p123
    %p125 = scmp.le.s32.totalorder 1, %s9
    %p126 = scmp.lt.s32.totalorder %s9, 3
    %p127 = pnand %p125, %p126
    %p128 = pneg %p127
    // Predicated region
    $region9: #{enhanced_climate_unet.37} parent=5 // pred_check
      _
    $region10: #{enhanced_climate_unet.37} parent=5 // pred_check_branch
      %130 = sbr.rel (%p127) target = $region12
    $region11: #{enhanced_climate_unet.37} parent=5 // pred_region
      %s131 = ssub.s32 %s9, 1
      // Predicated region
      $region13: #{enhanced_climate_unet.37} parent=11 // pred_check
        %p132 = pneg %p68
      $region14: #{enhanced_climate_unet.37} parent=11 // pred_check_branch
        %134 = sbr.rel (%p132) target = $region16
      $region15: #{enhanced_climate_unet.37} parent=11 // pred_region
        _
      $region16: #{enhanced_climate_unet.37} parent=11 // pred_fallthru
        _
      // Predicated region
      $region17: #{enhanced_climate_unet.37} parent=11 // pred_check
        %p135 = pneg %p89
      $region18: #{enhanced_climate_unet.37} parent=11 // pred_check_branch
        %137 = sbr.rel (%p135) target = $region20
      $region19: #{enhanced_climate_unet.37} parent=11 // pred_region
        _
      $region20: #{enhanced_climate_unet.37} parent=11 // pred_fallthru
        _
    $region12: #{enhanced_climate_unet.37} parent=5 // pred_fallthru
      _
    %p138 = scmp.lt.s32.totalorder %s9, 2
    // Predicated region
    $region21: #{enhanced_climate_unet.37} parent=5 // pred_check
      %p139 = pneg %p138
    $region22: #{enhanced_climate_unet.37} parent=5 // pred_check_branch
      %141 = sbr.rel (%p139) target = $region24
    $region23: #{enhanced_climate_unet.37} parent=5 // pred_region
      // Predicated region
      $region25: #{enhanced_climate_unet.37} parent=23 // pred_check
        %p142 = pneg %p41
      $region26: #{enhanced_climate_unet.37} parent=23 // pred_check_branch
        %144 = sbr.rel (%p142) target = $region28
      $region27: #{enhanced_climate_unet.37} parent=23 // pred_region
        %p145 = scmp.lt.s32.totalorder %s16, 1
        %s146 = scalar_select %p145, %s16, 1
        %s147 = smul.addr %s146, 16
        %s148 = smul.addr %s147, 4
        %s149 = scalar_lea.vmem %s0, %s148
      $region28: #{enhanced_climate_unet.37} parent=23 // pred_fallthru
        _
    $region24: #{enhanced_climate_unet.37} parent=5 // pred_fallthru
      _
    %p150 = scmp.le.s32.totalorder 1, %s9
    %p151 = scmp.lt.s32.totalorder %s9, 3
    %p152 = pnand %p150, %p151
    %p153 = pneg %p152
    // Predicated region
    $region29: #{enhanced_climate_unet.37} parent=5 // pred_check
      _
    $region30: #{enhanced_climate_unet.37} parent=5 // pred_check_branch
      %155 = sbr.rel (%p152) target = $region32
    $region31: #{enhanced_climate_unet.37} parent=5 // pred_region
      %s156 = ssub.s32 %s9, 1
      %p157 = scmp.lt.s32.totalorder %s18, 1
      %s158 = scalar_select %p157, %s18, 1
      %s159 = smul.addr %s158, 16
      %s160 = smul.addr %s159, 4
      %s161 = scalar_lea.vmem %s0, %s160
      %p162 = pneg %p47
      %p163 = pneg %p44
      %p164 = pneg %p68
      %p165 = pneg %p65
      %p166 = pneg %p89
      %p167 = pneg %p86
      %p168 = pneg %p117
      %p169 = pneg %p114
      %p170 = scmp.lt.s32.totalorder %s18, 1
      %s171 = scalar_select %p170, %s18, 1
      %p172 = scmp.lt.s32.totalorder %s19, 0
      %s173 = scalar_select %p172, %s19, 0
      %s174 = smul.addr %s171, 4
      %s175 = sadd.s32 %s173, %s174
      %s176 = smul.addr %s175, 8
      %s177 = scalar_lea.vmem %s3, %s176
      %p178 = scmp.lt.s32.totalorder %s18, 1
      %s179 = scalar_select %p178, %s18, 1
      %s180 = smul.addr %s179, 16
      %s181 = smul.addr %s180, 4
      %s182 = scalar_lea.vmem %s0, %s181
      %p183 = scmp.lt.s32.totalorder %s18, 1
      %s184 = scalar_select %p183, %s18, 1
      %p185 = scmp.lt.s32.totalorder %s19, 0
      %s186 = scalar_select %p185, %s19, 0
      %s187 = smul.addr %s184, 4
      %s188 = sadd.s32 %s186, %s187
      %s189 = smul.addr %s188, 8
      %s190 = scalar_lea.vmem %s3, %s189
      %v192 = vld [vmem:[%s182] sm:$0xf]
      %v193 = vld [vmem:[%s182 + $0x8] sm:$0xf]
      %v194 = vld [vmem:[%s182 + $0x10] sm:$0xf]
      %v195 = vld [vmem:[%s182 + $0x18] sm:$0xf]
      %v196 = vld [vmem:[%s182 + $0x20] sm:$0xf]
      %v197 = vld [vmem:[%s182 + $0x28] sm:$0xf]
      %v198 = vld [vmem:[%s182 + $0x30] sm:$0xf]
      %v199 = vld [vmem:[%s182 + $0x38] sm:$0xf]
      %v200 = vld [vmem:[%s182] sm:$0xff]
      %v201 = vld [vmem:[%s182 + $0x8] sm:$0xff]
      %v202 = vld [vmem:[%s182 + $0x10] sm:$0xff]
      %v203 = vld [vmem:[%s182 + $0x18] sm:$0xff]
      %v204 = vld [vmem:[%s182 + $0x20] sm:$0xff]
      %v205 = vld [vmem:[%s182 + $0x28] sm:$0xff]
      %v206 = vld [vmem:[%s182 + $0x30] sm:$0xff]
      %v207 = vld [vmem:[%s182 + $0x38] sm:$0xff]
      %v216 = vunpack.c.l.b16 %v192
      %v217 = vunpack.c.l.b16 %v193
      %v218 = vunpack.c.l.b16 %v194
      %v219 = vunpack.c.l.b16 %v195
      %v220 = vunpack.c.l.b16 %v196
      %v221 = vunpack.c.l.b16 %v197
      %v222 = vunpack.c.l.b16 %v198
      %v223 = vunpack.c.l.b16 %v199
      %v224 = vpack.c.b16 %v217, %v216
      %v225 = vpack.c.b16 %v219, %v218
      %v226 = vpack.c.b16 %v221, %v220
      %v227 = vpack.c.b16 %v223, %v222
      %v240 = vunpack.c.l.b16 %v200
      %v241 = vunpack.c.h.b16 %v200
      %v242 = vunpack.c.l.b16 %v201
      %v243 = vunpack.c.h.b16 %v201
      %v244 = vunpack.c.l.b16 %v202
      %v245 = vunpack.c.h.b16 %v202
      %v246 = vunpack.c.l.b16 %v203
      %v247 = vunpack.c.h.b16 %v203
      %v248 = vunpack.c.l.b16 %v204
      %v249 = vunpack.c.h.b16 %v204
      %v250 = vunpack.c.l.b16 %v205
      %v251 = vunpack.c.h.b16 %v205
      %v252 = vunpack.c.l.b16 %v206
      %v253 = vunpack.c.h.b16 %v206
      %v254 = vunpack.c.l.b16 %v207
      %v255 = vunpack.c.h.b16 %v207
      %v256 = vpack.c.b16 %v242, %v240
      %v257 = vpack.c.b16 %v243, %v241
      %v258 = vpack.c.b16 %v246, %v244
      %v259 = vpack.c.b16 %v247, %v245
      %v260 = vpack.c.b16 %v250, %v248
      %v261 = vpack.c.b16 %v251, %v249
      %v262 = vpack.c.b16 %v254, %v252
      %v263 = vpack.c.b16 %v255, %v253
      %264 = vrot.lane.b32.xlu0 %v256, 127
      %v265 = vpop.permute.xlu0 %264
      %266 = vrot.lane.b32.xlu0 %v257, 127
      %v267 = vpop.permute.xlu0 %266
      %268 = vrot.lane.b32.xlu0 %v258, 127
      %v269 = vpop.permute.xlu0 %268
      %270 = vrot.lane.b32.xlu0 %v259, 127
      %v271 = vpop.permute.xlu0 %270
      %272 = vrot.lane.b32.xlu0 %v260, 127
      %v273 = vpop.permute.xlu0 %272
      %274 = vrot.lane.b32.xlu0 %v261, 127
      %v275 = vpop.permute.xlu0 %274
      %276 = vrot.lane.b32.xlu0 %v262, 127
      %v277 = vpop.permute.xlu0 %276
      %278 = vrot.lane.b32.xlu0 %v263, 127
      %v279 = vpop.permute.xlu0 %278
      %vm280 = vcmask 1039360
      %v281 = vsel %vm280, %v265, %v267
      %v282 = vsel %vm280, %v269, %v271
      %v283 = vsel %vm280, %v273, %v275
      %v284 = vsel %vm280, %v277, %v279
      %289 = vrot.lane.b32.xlu0 %v256, 126
      %v290 = vpop.permute.xlu0 %289
      %291 = vrot.lane.b32.xlu0 %v257, 126
      %v292 = vpop.permute.xlu0 %291
      %293 = vrot.lane.b32.xlu0 %v258, 126
      %v294 = vpop.permute.xlu0 %293
      %295 = vrot.lane.b32.xlu0 %v259, 126
      %v296 = vpop.permute.xlu0 %295
      %297 = vrot.lane.b32.xlu0 %v260, 126
      %v298 = vpop.permute.xlu0 %297
      %299 = vrot.lane.b32.xlu0 %v261, 126
      %v300 = vpop.permute.xlu0 %299
      %301 = vrot.lane.b32.xlu0 %v262, 126
      %v302 = vpop.permute.xlu0 %301
      %303 = vrot.lane.b32.xlu0 %v263, 126
      %v304 = vpop.permute.xlu0 %303
      %vm305 = vcmask 1031168
      %v306 = vsel %vm305, %v290, %v292
      %v307 = vsel %vm305, %v294, %v296
      %v308 = vsel %vm305, %v298, %v300
      %v309 = vsel %vm305, %v302, %v304
      %314 = vrot.lane.b32.xlu0 %v256, 118
      %v315 = vpop.permute.xlu0 %314
      %316 = vrot.lane.b32.xlu0 %v257, 118
      %v317 = vpop.permute.xlu0 %316
      %318 = vrot.lane.b32.xlu0 %v258, 118
      %v319 = vpop.permute.xlu0 %318
      %320 = vrot.lane.b32.xlu0 %v259, 118
      %v321 = vpop.permute.xlu0 %320
      %322 = vrot.lane.b32.xlu0 %v260, 118
      %v323 = vpop.permute.xlu0 %322
      %324 = vrot.lane.b32.xlu0 %v261, 118
      %v325 = vpop.permute.xlu0 %324
      %326 = vrot.lane.b32.xlu0 %v262, 118
      %v327 = vpop.permute.xlu0 %326
      %328 = vrot.lane.b32.xlu0 %v263, 118
      %v329 = vpop.permute.xlu0 %328
      %vm330 = vcmask 965632
      %v331 = vsel %vm330, %v315, %v317
      %v332 = vsel %vm330, %v319, %v321
      %v333 = vsel %vm330, %v323, %v325
      %v334 = vsel %vm330, %v327, %v329
      %339 = vrot.lane.b32.xlu0 %v256, 117
      %v340 = vpop.permute.xlu0 %339
      %341 = vrot.lane.b32.xlu0 %v257, 117
      %v342 = vpop.permute.xlu0 %341
      %343 = vrot.lane.b32.xlu0 %v258, 117
      %v344 = vpop.permute.xlu0 %343
      %345 = vrot.lane.b32.xlu0 %v259, 117
      %v346 = vpop.permute.xlu0 %345
      %347 = vrot.lane.b32.xlu0 %v260, 117
      %v348 = vpop.permute.xlu0 %347
      %349 = vrot.lane.b32.xlu0 %v261, 117
      %v350 = vpop.permute.xlu0 %349
      %351 = vrot.lane.b32.xlu0 %v262, 117
      %v352 = vpop.permute.xlu0 %351
      %353 = vrot.lane.b32.xlu0 %v263, 117
      %v354 = vpop.permute.xlu0 %353
      %vm355 = vcmask 957440
      %v356 = vsel %vm355, %v340, %v342
      %v357 = vsel %vm355, %v344, %v346
      %v358 = vsel %vm355, %v348, %v350
      %v359 = vsel %vm355, %v352, %v354
      %364 = vrot.lane.b32.xlu0 %v256, 116
      %v365 = vpop.permute.xlu0 %364
      %366 = vrot.lane.b32.xlu0 %v257, 116
      %v367 = vpop.permute.xlu0 %366
      %368 = vrot.lane.b32.xlu0 %v258, 116
      %v369 = vpop.permute.xlu0 %368
      %370 = vrot.lane.b32.xlu0 %v259, 116
      %v371 = vpop.permute.xlu0 %370
      %372 = vrot.lane.b32.xlu0 %v260, 116
      %v373 = vpop.permute.xlu0 %372
      %374 = vrot.lane.b32.xlu0 %v261, 116
      %v375 = vpop.permute.xlu0 %374
      %376 = vrot.lane.b32.xlu0 %v262, 116
      %v377 = vpop.permute.xlu0 %376
      %378 = vrot.lane.b32.xlu0 %v263, 116
      %v379 = vpop.permute.xlu0 %378
      %vm380 = vcmask 949248
      %v381 = vsel %vm380, %v365, %v367
      %v382 = vsel %vm380, %v369, %v371
      %v383 = vsel %vm380, %v373, %v375
      %v384 = vsel %vm380, %v377, %v379
      %389 = vrot.lane.b32.xlu0 %v256, 108
      %v390 = vpop.permute.xlu0 %389
      %391 = vrot.lane.b32.xlu0 %v257, 108
      %v392 = vpop.permute.xlu0 %391
      %393 = vrot.lane.b32.xlu0 %v258, 108
      %v394 = vpop.permute.xlu0 %393
      %395 = vrot.lane.b32.xlu0 %v259, 108
      %v396 = vpop.permute.xlu0 %395
      %397 = vrot.lane.b32.xlu0 %v260, 108
      %v398 = vpop.permute.xlu0 %397
      %399 = vrot.lane.b32.xlu0 %v261, 108
      %v400 = vpop.permute.xlu0 %399
      %401 = vrot.lane.b32.xlu0 %v262, 108
      %v402 = vpop.permute.xlu0 %401
      %403 = vrot.lane.b32.xlu0 %v263, 108
      %v404 = vpop.permute.xlu0 %403
      %vm405 = vcmask 883712
      %v406 = vsel %vm405, %v390, %v392
      %v407 = vsel %vm405, %v394, %v396
      %v408 = vsel %vm405, %v398, %v400
      %v409 = vsel %vm405, %v402, %v404
      %414 = vrot.lane.b32.xlu0 %v256, 107
      %v415 = vpop.permute.xlu0 %414
      %416 = vrot.lane.b32.xlu0 %v257, 107
      %v417 = vpop.permute.xlu0 %416
      %418 = vrot.lane.b32.xlu0 %v258, 107
      %v419 = vpop.permute.xlu0 %418
      %420 = vrot.lane.b32.xlu0 %v259, 107
      %v421 = vpop.permute.xlu0 %420
      %422 = vrot.lane.b32.xlu0 %v260, 107
      %v423 = vpop.permute.xlu0 %422
      %424 = vrot.lane.b32.xlu0 %v261, 107
      %v425 = vpop.permute.xlu0 %424
      %426 = vrot.lane.b32.xlu0 %v262, 107
      %v427 = vpop.permute.xlu0 %426
      %428 = vrot.lane.b32.xlu0 %v263, 107
      %v429 = vpop.permute.xlu0 %428
      %vm430 = vcmask 875520
      %v431 = vsel %vm430, %v415, %v417
      %v432 = vsel %vm430, %v419, %v421
      %v433 = vsel %vm430, %v423, %v425
      %v434 = vsel %vm430, %v427, %v429
      %439 = vrot.lane.b32.xlu0 %v256, 106
      %v440 = vpop.permute.xlu0 %439
      %441 = vrot.lane.b32.xlu0 %v257, 106
      %v442 = vpop.permute.xlu0 %441
      %443 = vrot.lane.b32.xlu0 %v258, 106
      %v444 = vpop.permute.xlu0 %443
      %445 = vrot.lane.b32.xlu0 %v259, 106
      %v446 = vpop.permute.xlu0 %445
      %447 = vrot.lane.b32.xlu0 %v260, 106
      %v448 = vpop.permute.xlu0 %447
      %449 = vrot.lane.b32.xlu0 %v261, 106
      %v450 = vpop.permute.xlu0 %449
      %451 = vrot.lane.b32.xlu0 %v262, 106
      %v452 = vpop.permute.xlu0 %451
      %453 = vrot.lane.b32.xlu0 %v263, 106
      %v454 = vpop.permute.xlu0 %453
      %vm455 = vcmask 867328
      %v456 = vsel %vm455, %v440, %v442
      %v457 = vsel %vm455, %v444, %v446
      %v458 = vsel %vm455, %v448, %v450
      %v459 = vsel %vm455, %v452, %v454
      %v464 = vld [vmem:[%s1] sm:$0xff]
      %v465 = vld [vmem:[%s1 + $0x8] sm:$0xff]
      %v466 = vld [vmem:[%s1 + $0x10] sm:$0xf]
      %v467 = vld [vmem:[%s1 + $0x14] sm:$0xff]
      %v468 = vld [vmem:[%s1 + $0x1c] sm:$0xff]
      %v469 = vld [vmem:[%s1 + $0x24] sm:$0xf]
      %v470 = vld [vmem:[%s1 + $0x28] sm:$0xff]
      %v471 = vld [vmem:[%s1 + $0x30] sm:$0xff]
      %v472 = vld [vmem:[%s1 + $0x38] sm:$0xf]
      %v473 = vld [vmem:[%s1 + $0x3c] sm:$0xff]
      %v474 = vld [vmem:[%s1 + $0x44] sm:$0xff]
      %v475 = vld [vmem:[%s1 + $0x4c] sm:$0xf]
      %v476 = vld [vmem:[%s2] sm:$0xff]
      %v477 = vld [vmem:[%s2 + $0x8] sm:$0xff]
      %v478 = vld [vmem:[%s2 + $0x10] sm:$0xff]
      %v479 = vld [vmem:[%s2 + $0x18] sm:$0xff]
      %481 = vset.pattern.permute.xlu0 0
      %482 = vperm.xlu0 %481, %v476
      %v483 = vpop.permute.xlu0 %482
      %486 = vset.pattern.permute.xlu0 0
      %487 = vperm.xlu0 %486, %v477
      %v488 = vpop.permute.xlu0 %487
      %491 = vset.pattern.permute.xlu0 0
      %492 = vperm.xlu0 %491, %v478
      %v493 = vpop.permute.xlu0 %492
      %496 = vset.pattern.permute.xlu0 0
      %497 = vperm.xlu0 %496, %v479
      %v498 = vpop.permute.xlu0 %497
      %v512 = vunpack.c.l.b16 %v464
      %v513 = vunpack.c.h.b16 %v464
      %v514 = vunpack.c.l.b16 %v465
      %v515 = vunpack.c.h.b16 %v465
      %v516 = vunpack.c.l.b16 %v466
      %v517 = vunpack.c.l.b16 %v467
      %v518 = vunpack.c.h.b16 %v467
      %v519 = vunpack.c.l.b16 %v468
      %v520 = vunpack.c.h.b16 %v468
      %v521 = vunpack.c.l.b16 %v469
      %v522 = vunpack.c.l.b16 %v470
      %v523 = vunpack.c.h.b16 %v470
      %v524 = vunpack.c.l.b16 %v471
      %v525 = vunpack.c.h.b16 %v471
      %v526 = vunpack.c.l.b16 %v472
      %v527 = vunpack.c.l.b16 %v473
      %v528 = vunpack.c.h.b16 %v473
      %v529 = vunpack.c.l.b16 %v474
      %v530 = vunpack.c.h.b16 %v474
      %v531 = vunpack.c.l.b16 %v475
      %v532 = vpack.c.b16 %v517, %v512
      %v533 = vpack.c.b16 %v518, %v513
      %v534 = vpack.c.b16 %v519, %v514
      %v535 = vpack.c.b16 %v520, %v515
      %v536 = vpack.c.b16 %v521, %v516
      %v537 = vpack.c.b16 %v527, %v522
      %v538 = vpack.c.b16 %v528, %v523
      %v539 = vpack.c.b16 %v529, %v524
      %v540 = vpack.c.b16 %v530, %v525
      %v541 = vpack.c.b16 %v531, %v526
      %vm550 = vcmask 523264
      %v552 = vsel %vm550, %v536, 0
      %v555 = vsel %vm550, %v541, 0
      %557 = vmatprep.subr.bf16.mxu0 0
      %558 = vmatpush1.bf16.msra.mxu0 %v284
      %559 = vmatprep.subr.bf16.mxu0 0
      %560 = vmatpush1.bf16.msra.mxu0 %v283
      %561 = vmatprep.subr.bf16.mxu0 0
      %562 = vmatpush1.bf16.msra.mxu0 %v282
      %563 = vmatprep.subr.bf16.mxu0 0
      %564 = vmatpush1.bf16.msra.mxu0 %v281
      %565 = vmatprep.subr.bf16.mxu0 0
      %566 = vmatpush1.bf16.msra.mxu0 %v227
      %567 = vmatprep.subr.bf16.mxu0 0
      %568 = vmatpush1.bf16.msra.mxu0 %v226
      %569 = vmatprep.subr.bf16.mxu0 0
      %570 = vmatpush1.bf16.msra.mxu0 %v225
      %571 = vmatprep.subr.bf16.mxu0 0
      %572 = vmatpush1.bf16.msra.mxu0 %v224
      %573 = vmatprep.subr.bf16.mxu0 0
      %574 = vmatpush2.bf16.msra.mxu0 %v334
      %575 = vmatprep.subr.bf16.mxu0 0
      %576 = vmatpush2.bf16.msra.mxu0 %v333
      %577 = vmatprep.subr.bf16.mxu0 0
      %578 = vmatpush2.bf16.msra.mxu0 %v332
      %579 = vmatprep.subr.bf16.mxu0 0
      %580 = vmatpush2.bf16.msra.mxu0 %v331
      %581 = vmatprep.subr.bf16.mxu0 0
      %582 = vmatpush2.bf16.msra.mxu0 %v309
      %583 = vmatprep.subr.bf16.mxu0 0
      %584 = vmatpush2.bf16.msra.mxu0 %v308
      %585 = vmatprep.subr.bf16.mxu0 0
      %586 = vmatpush2.bf16.msra.mxu0 %v307
      %587 = vmatprep.subr.bf16.mxu0 0
      %588 = vmatpush2.bf16.msra.mxu0 %v306
      %589 = vmatprep.mubr.bf16.mxu0 %v533
      %590 = vmatmul.mubr.bf16.gmra.mxu0 %v532
      %v591 = vpop.f32.mrf.mxu0
      %v592 = vadd.f32 %v483, %v591
      %v593 = vpop.f32.mrf.mxu0
      %v594 = vpop.f32.mrf.mxu0
      %v595 = vadd.f32 %v488, %v594
      %v596 = vpop.f32.mrf.mxu0
      %597 = vmatprep.mubr.bf16.mxu0 %v538
      %598 = vmatmul.mubr.bf16.gmra.mxu0 %v537
      %v599 = vpop.f32.mrf.mxu0
      %v600 = vadd.f32 %v493, %v599
      %v601 = vpop.f32.mrf.mxu0
      %v602 = vpop.f32.mrf.mxu0
      %v603 = vadd.f32 %v498, %v602
      %v604 = vpop.f32.mrf.mxu0
      %605 = vdwg.mxu0
      %606 = vmatprep.subr.bf16.mxu0 0
      %607 = vmatpush1.bf16.msra.mxu0 %v384
      %608 = vmatprep.subr.bf16.mxu0 0
      %609 = vmatpush1.bf16.msra.mxu0 %v383
      %610 = vmatprep.subr.bf16.mxu0 0
      %611 = vmatpush1.bf16.msra.mxu0 %v382
      %612 = vmatprep.subr.bf16.mxu0 0
      %613 = vmatpush1.bf16.msra.mxu0 %v381
      %614 = vmatprep.subr.bf16.mxu0 0
      %615 = vmatpush1.bf16.msra.mxu0 %v359
      %616 = vmatprep.subr.bf16.mxu0 0
      %617 = vmatpush1.bf16.msra.mxu0 %v358
      %618 = vmatprep.subr.bf16.mxu0 0
      %619 = vmatpush1.bf16.msra.mxu0 %v357
      %620 = vmatprep.subr.bf16.mxu0 0
      %621 = vmatpush1.bf16.msra.mxu0 %v356
      %622 = vmatprep.subr.bf16.mxu0 0
      %623 = vmatpush2.bf16.msra.mxu0 %v434
      %624 = vmatprep.subr.bf16.mxu0 0
      %625 = vmatpush2.bf16.msra.mxu0 %v433
      %626 = vmatprep.subr.bf16.mxu0 0
      %627 = vmatpush2.bf16.msra.mxu0 %v432
      %628 = vmatprep.subr.bf16.mxu0 0
      %629 = vmatpush2.bf16.msra.mxu0 %v431
      %630 = vmatprep.subr.bf16.mxu0 0
      %631 = vmatpush2.bf16.msra.mxu0 %v409
      %632 = vmatprep.subr.bf16.mxu0 0
      %633 = vmatpush2.bf16.msra.mxu0 %v408
      %634 = vmatprep.subr.bf16.mxu0 0
      %635 = vmatpush2.bf16.msra.mxu0 %v407
      %636 = vmatprep.subr.bf16.mxu0 0
      %637 = vmatpush2.bf16.msra.mxu0 %v406
      %638 = vmatprep.mubr.bf16.mxu0 %v535
      %639 = vmatmul.mubr.bf16.gmra.mxu0 %v534
      %v640 = vpop.f32.mrf.mxu0
      %v641 = vadd.f32 %v592, %v640
      %v642 = vpop.f32.mrf.mxu0
      %v643 = vpop.f32.mrf.mxu0
      %v644 = vadd.f32 %v595, %v643
      %v645 = vpop.f32.mrf.mxu0
      %646 = vmatprep.mubr.bf16.mxu0 %v540
      %647 = vmatmul.mubr.bf16.gmra.mxu0 %v539
      %v648 = vpop.f32.mrf.mxu0
      %v649 = vadd.f32 %v600, %v648
      %v650 = vpop.f32.mrf.mxu0
      %v651 = vpop.f32.mrf.mxu0
      %v652 = vadd.f32 %v603, %v651
      %v653 = vpop.f32.mrf.mxu0
      %654 = vdwg.mxu0
      %655 = vmatprep.subr.bf16.mxu0 0
      %656 = vmatpush1.bf16.msra.mxu0 0
      %657 = vmatprep.subr.bf16.mxu0 0
      %658 = vmatpush1.bf16.msra.mxu0 0
      %659 = vmatprep.subr.bf16.mxu0 0
      %660 = vmatpush1.bf16.msra.mxu0 0
      %661 = vmatprep.subr.bf16.mxu0 0
      %662 = vmatpush1.bf16.msra.mxu0 0
      %663 = vmatprep.subr.bf16.mxu0 0
      %664 = vmatpush1.bf16.msra.mxu0 %v459
      %665 = vmatprep.subr.bf16.mxu0 0
      %666 = vmatpush1.bf16.msra.mxu0 %v458
      %667 = vmatprep.subr.bf16.mxu0 0
      %668 = vmatpush1.bf16.msra.mxu0 %v457
      %669 = vmatprep.subr.bf16.mxu0 0
      %670 = vmatpush1.bf16.msra.mxu0 %v456
      %671 = vmatprep.subr.bf16.mxu0 0
      %672 = vmatpush2.bf16.msra.mxu0 0
      %673 = vmatprep.subr.bf16.mxu0 0
      %674 = vmatpush2.bf16.msra.mxu0 0
      %675 = vmatprep.subr.bf16.mxu0 0
      %676 = vmatpush2.bf16.msra.mxu0 0
      %677 = vmatprep.subr.bf16.mxu0 0
      %678 = vmatpush2.bf16.msra.mxu0 0
      %679 = vmatprep.subr.bf16.mxu0 0
      %680 = vmatpush2.bf16.msra.mxu0 0
      %681 = vmatprep.subr.bf16.mxu0 0
      %682 = vmatpush2.bf16.msra.mxu0 0
      %683 = vmatprep.subr.bf16.mxu0 0
      %684 = vmatpush2.bf16.msra.mxu0 0
      %685 = vmatprep.subr.bf16.mxu0 0
      %686 = vmatpush2.bf16.msra.mxu0 0
      %687 = vmatprep.mubr.bf16.mxu0 0
      %688 = vmatmul.mubr.bf16.gmra.mxu0 %v552
      %v689 = vpop.f32.mrf.mxu0
      %v690 = vadd.f32 %v641, %v689
      %v691 = vpop.f32.mrf.mxu0
      %v692 = vpop.f32.mrf.mxu0
      %v693 = vadd.f32 %v644, %v692
      %v694 = vpop.f32.mrf.mxu0
      %695 = vmatprep.mubr.bf16.mxu0 0
      %696 = vmatmul.mubr.bf16.gmra.mxu0 %v555
      %v697 = vpop.f32.mrf.mxu0
      %v698 = vadd.f32 %v649, %v697
      %v699 = vpop.f32.mrf.mxu0
      %v700 = vpop.f32.mrf.mxu0
      %v701 = vadd.f32 %v652, %v700
      %v702 = vpop.f32.mrf.mxu0
      %703 = vdwg.mxu0
      %704 = vst [vmem:[%s190] sm:$0xff] %v690
      %705 = vst [vmem:[%s190 + $0x8] sm:$0xff] %v693
      %706 = vst [vmem:[%s190 + $0x10] sm:$0xff] %v698
      %707 = vst [vmem:[%s190 + $0x18] sm:$0xff] %v701
      %p708 = scmp.lt.s32.totalorder %s18, 1
      %s709 = scalar_select %p708, %s18, 1
      %p710 = scmp.lt.s32.totalorder %s19, 0
      %s711 = scalar_select %p710, %s19, 0
      %s712 = smul.addr %s709, 4
      %s713 = sadd.s32 %s711, %s712
      %s714 = smul.addr %s713, 8
      %s715 = scalar_lea.vmem %s3, %s714
      // Predicated region
      $region33: #{enhanced_climate_unet.37} parent=31 // pred_check
        %p716 = pneg %p114
      $region34: #{enhanced_climate_unet.37} parent=31 // pred_check_branch
        %718 = sbr.rel (%p716) target = $region36
      $region35: #{enhanced_climate_unet.37} parent=31 // pred_region
        _
      $region36: #{enhanced_climate_unet.37} parent=31 // pred_fallthru
        _
    $region32: #{enhanced_climate_unet.37} parent=5 // pred_fallthru
      _
    %p719 = scmp.le.s32.totalorder 2, %s9
    // Predicated region
    $region37: #{enhanced_climate_unet.37} parent=5 // pred_check
      %p720 = pneg %p719
    $region38: #{enhanced_climate_unet.37} parent=5 // pred_check_branch
      %722 = sbr.rel (%p720) target = $region40
    $region39: #{enhanced_climate_unet.37} parent=5 // pred_region
      %s723 = ssub.s32 %s9, 2
      // Predicated region
      $region41: #{enhanced_climate_unet.37} parent=39 // pred_check
        %p724 = pneg %p120
      $region42: #{enhanced_climate_unet.37} parent=39 // pred_check_branch
        %726 = sbr.rel (%p724) target = $region44
      $region43: #{enhanced_climate_unet.37} parent=39 // pred_region
        %p727 = scmp.lt.s32.totalorder %s20, 1
        %s728 = scalar_select %p727, %s20, 1
        %p729 = scmp.lt.s32.totalorder %s21, 0
        %s730 = scalar_select %p729, %s21, 0
        %s731 = smul.addr %s728, 4
        %s732 = sadd.s32 %s730, %s731
        %s733 = smul.addr %s732, 8
        %s734 = scalar_lea.vmem %s3, %s733
      $region44: #{enhanced_climate_unet.37} parent=39 // pred_fallthru
        _
    $region40: #{enhanced_climate_unet.37} parent=5 // pred_fallthru
      _
  $region6: #{enhanced_climate_unet.37} parent=0 // loop_footer
    %s13 = sadd.s32 1, %s9
  $region7: #{enhanced_climate_unet.37} parent=0 // loop_footer_branch
    %8 = sbr.rel target = $region3
  $region8: #{enhanced_climate_unet.37} parent=0 // loop_exit
    _

// kernel: enhanced_climate_unet.40
$region0: #{enhanced_climate_unet.40}
  #allocation0 [shape = 'u32[]', space=smem, size = 0x4, offset = 0x4, fixed_abs, tag = 'smem constant byte address 0x4 - core index']
  #allocation1 [shape = 'u32[144,128]{1,0:T(1,128)}', space=vmem, size = 0x12000, scoped, tag = 'internal scratch']
  %s0 = inlined_call_operand.vmem [shape: bf16[2,32,256], index: 0, kind: input, shape index: {}]
  %s1 = inlined_call_operand.vmem [shape: bf16[16,32], index: 1, kind: input, shape index: {}]
  %s2 = inlined_call_operand.vmem [shape: f32[16,1], index: 2, kind: input, shape index: {}]
  %s3 = inlined_call_operand.vmem [shape: f32[2,16,256], index: 3, kind: output, shape index: {}]
  %s4 = sld [smem:[#allocation0]]
  $region45: #{enhanced_climate_unet.40} parent=0
    _
  %s6 = ssub.s32 1, %s4
  %s7 = scalar_select 0, %s6, %s4
  loop: start=0, step=1, limit=4
  $region2: #{enhanced_climate_unet.40} parent=0 // loop_pre_header
    _
  $region3: #{enhanced_climate_unet.40} parent=0 // loop_header
    %s9 = sphi 0, %s13
    %p10 = scmp.ge.s32.totalorder %s9, 4
    %s16 = sphi 0, %s28
    %s17 = sphi 0, %s24
    %s18 = sphi 0, %s16
    %s19 = sphi 0, %s17
    %s20 = sphi 0, %s18
    %s21 = sphi 0, %s19
    %s31 = sphi 0, %s33
    %s34 = sphi 0, %s31
    %s35 = sphi 0, %s34
    %s51 = sphi 0, %s35
    %s55 = sphi 0, %s55
    %s57 = sphi 0, %s55
    %s58 = sphi 0, %s57
    %s72 = sphi 0, %s58
    %s76 = sphi 0, %s76
    %s78 = sphi 0, %s76
    %s79 = sphi 0, %s78
    %s93 = sphi 0, %s79
    %s101 = sphi 0, %s103
    %s104 = sphi 0, %s101
    %s105 = sphi 0, %s104
    %s121 = sphi 0, %s105
  $region4: #{enhanced_climate_unet.40} parent=0 // loop_header_branch
    %12 = sbr.rel (%p10) target = $region8
  $region5: #{enhanced_climate_unet.40} parent=0 // loop_body
    %s14 = ssub.s32 %s9, 1
    %s15 = ssub.s32 %s9, 2
    %s22 = sadd.s32 1, %s17
    %p23 = scmp.ge.s32.totalorder %s22, 1
    %s24 = scalar_select %p23, 0, %s22
    %s25 = sadd.s32 1, %s16
    %s26 = scalar_select %p23, %s25, %s16
    %p27 = scmp.ge.s32.totalorder %s26, 2
    %s28 = scalar_select %p27, 0, %s26
    %s29 = ssub.s32 %s16, %s28
    %p30 = scmp.eq.s32.totalorder %s29, 0
    %s32 = sadd.s32 %s31, 1
    %s33 = scalar_select %p30, %s31, %s32
    %p36 = pneg %p30
    %p37 = scmp.eq.s32.totalorder %s9, 1
    %p38 = por %p36, %p37
    %p39 = scmp.ne.s32.totalorder %s31, %s34
    %p40 = scmp.eq.s32.totalorder %s9, 0
    %p41 = por %p39, %p40
    %p42 = scmp.ne.s32.totalorder %s31, %s34
    %p43 = scmp.eq.s32.totalorder %s14, 1
    %p44 = por %p42, %p43
    %p45 = scmp.ne.s32.totalorder %s34, %s35
    %p46 = scmp.eq.s32.totalorder %s14, 0
    %p47 = por %p45, %p46
    %p48 = scmp.ne.s32.totalorder %s34, %s35
    %p49 = scmp.eq.s32.totalorder %s15, 1
    %p50 = por %p48, %p49
    %p52 = scmp.ne.s32.totalorder %s35, %s51
    %p53 = scmp.eq.s32.totalorder %s15, 0
    %p54 = por %p52, %p53
    %s56 = sadd.s32 %s55, 1
    %p59 = scmp.eq.s32.totalorder %s9, 1
    %p60 = scmp.ne.s32.totalorder %s55, %s57
    %p61 = scmp.eq.s32.totalorder %s9, 0
    %p62 = por %p60, %p61
    %p63 = scmp.ne.s32.totalorder %s55, %s57
    %p64 = scmp.eq.s32.totalorder %s14, 1
    %p65 = por %p63, %p64
    %p66 = scmp.ne.s32.totalorder %s57, %s58
    %p67 = scmp.eq.s32.totalorder %s14, 0
    %p68 = por %p66, %p67
    %p69 = scmp.ne.s32.totalorder %s57, %s58
    %p70 = scmp.eq.s32.totalorder %s15, 1
    %p71 = por %p69, %p70
    %p73 = scmp.ne.s32.totalorder %s58, %s72
    %p74 = scmp.eq.s32.totalorder %s15, 0
    %p75 = por %p73, %p74
    %s77 = sadd.s32 %s76, 1
    %p80 = scmp.eq.s32.totalorder %s9, 1
    %p81 = scmp.ne.s32.totalorder %s76, %s78
    %p82 = scmp.eq.s32.totalorder %s9, 0
    %p83 = por %p81, %p82
    %p84 = scmp.ne.s32.totalorder %s76, %s78
    %p85 = scmp.eq.s32.totalorder %s14, 1
    %p86 = por %p84, %p85
    %p87 = scmp.ne.s32.totalorder %s78, %s79
    %p88 = scmp.eq.s32.totalorder %s14, 0
    %p89 = por %p87, %p88
    %p90 = scmp.ne.s32.totalorder %s78, %s79
    %p91 = scmp.eq.s32.totalorder %s15, 1
    %p92 = por %p90, %p91
    %p94 = scmp.ne.s32.totalorder %s79, %s93
    %p95 = scmp.eq.s32.totalorder %s15, 0
    %p96 = por %p94, %p95
    %s97 = ssub.s32 %s16, %s28
    %s98 = ssub.s32 %s17, %s24
    %s99 = sor.u32 %s97, %s98
    %p100 = scmp.eq.s32.totalorder %s99, 0
    %s102 = sadd.s32 %s101, 1
    %s103 = scalar_select %p100, %s101, %s102
    %p106 = pneg %p100
    %p107 = scmp.eq.s32.totalorder %s9, 1
    %p108 = por %p106, %p107
    %p109 = scmp.ne.s32.totalorder %s101, %s104
    %p110 = scmp.eq.s32.totalorder %s9, 0
    %p111 = por %p109, %p110
    %p112 = scmp.ne.s32.totalorder %s101, %s104
    %p113 = scmp.eq.s32.totalorder %s14, 1
    %p114 = por %p112, %p113
    %p115 = scmp.ne.s32.totalorder %s104, %s105
    %p116 = scmp.eq.s32.totalorder %s14, 0
    %p117 = por %p115, %p116
    %p118 = scmp.ne.s32.totalorder %s104, %s105
    %p119 = scmp.eq.s32.totalorder %s15, 1
    %p120 = por %p118, %p119
    %p122 = scmp.ne.s32.totalorder %s105, %s121
    %p123 = scmp.eq.s32.totalorder %s15, 0
    %p124 = por %p122, %p123
    %p125 = scmp.le.s32.totalorder 1, %s9
    %p126 = scmp.lt.s32.totalorder %s9, 3
    %p127 = pnand %p125, %p126
    %p128 = pneg %p127
    // Predicated region
    $region9: #{enhanced_climate_unet.40} parent=5 // pred_check
      _
    $region10: #{enhanced_climate_unet.40} parent=5 // pred_check_branch
      %130 = sbr.rel (%p127) target = $region12
    $region11: #{enhanced_climate_unet.40} parent=5 // pred_region
      %s131 = ssub.s32 %s9, 1
      // Predicated region
      $region13: #{enhanced_climate_unet.40} parent=11 // pred_check
        %p132 = pneg %p68
      $region14: #{enhanced_climate_unet.40} parent=11 // pred_check_branch
        %134 = sbr.rel (%p132) target = $region16
      $region15: #{enhanced_climate_unet.40} parent=11 // pred_region
        _
      $region16: #{enhanced_climate_unet.40} parent=11 // pred_fallthru
        _
      // Predicated region
      $region17: #{enhanced_climate_unet.40} parent=11 // pred_check
        %p135 = pneg %p89
      $region18: #{enhanced_climate_unet.40} parent=11 // pred_check_branch
        %137 = sbr.rel (%p135) target = $region20
      $region19: #{enhanced_climate_unet.40} parent=11 // pred_region
        _
      $region20: #{enhanced_climate_unet.40} parent=11 // pred_fallthru
        _
    $region12: #{enhanced_climate_unet.40} parent=5 // pred_fallthru
      _
    %p138 = scmp.lt.s32.totalorder %s9, 2
    // Predicated region
    $region21: #{enhanced_climate_unet.40} parent=5 // pred_check
      %p139 = pneg %p138
    $region22: #{enhanced_climate_unet.40} parent=5 // pred_check_branch
      %141 = sbr.rel (%p139) target = $region24
    $region23: #{enhanced_climate_unet.40} parent=5 // pred_region
      // Predicated region
      $region25: #{enhanced_climate_unet.40} parent=23 // pred_check
        %p142 = pneg %p41
      $region26: #{enhanced_climate_unet.40} parent=23 // pred_check_branch
        %144 = sbr.rel (%p142) target = $region28
      $region27: #{enhanced_climate_unet.40} parent=23 // pred_region
        %p145 = scmp.lt.s32.totalorder %s16, 1
        %s146 = scalar_select %p145, %s16, 1
        %s147 = smul.addr %s146, 8
        %s148 = smul.addr %s147, 4
        %s149 = scalar_lea.vmem %s0, %s148
      $region28: #{enhanced_climate_unet.40} parent=23 // pred_fallthru
        _
    $region24: #{enhanced_climate_unet.40} parent=5 // pred_fallthru
      _
    %p150 = scmp.le.s32.totalorder 1, %s9
    %p151 = scmp.lt.s32.totalorder %s9, 3
    %p152 = pnand %p150, %p151
    %p153 = pneg %p152
    // Predicated region
    $region29: #{enhanced_climate_unet.40} parent=5 // pred_check
      _
    $region30: #{enhanced_climate_unet.40} parent=5 // pred_check_branch
      %155 = sbr.rel (%p152) target = $region32
    $region31: #{enhanced_climate_unet.40} parent=5 // pred_region
      %s156 = ssub.s32 %s9, 1
      %p157 = scmp.lt.s32.totalorder %s18, 1
      %s158 = scalar_select %p157, %s18, 1
      %s159 = smul.addr %s158, 8
      %s160 = smul.addr %s159, 4
      %s161 = scalar_lea.vmem %s0, %s160
      %p162 = pneg %p47
      %p163 = pneg %p44
      %p164 = pneg %p68
      %p165 = pneg %p65
      %p166 = pneg %p89
      %p167 = pneg %p86
      %p168 = pneg %p117
      %p169 = pneg %p114
      %s170 = smul.u32 2, %s19
      %p171 = scmp.lt.s32.totalorder %s18, 1
      %s172 = scalar_select %p171, %s18, 1
      %p173 = scmp.lt.s32.totalorder %s170, 1
      %s174 = scalar_select %p173, %s170, 1
      %s175 = smul.addr %s172, 4
      %s176 = sadd.s32 %s174, %s175
      %s177 = smul.addr %s176, 8
      %s178 = scalar_lea.vmem %s3, %s177
      %p179 = scmp.lt.s32.totalorder %s18, 1
      %s180 = scalar_select %p179, %s18, 1
      %s181 = smul.addr %s180, 8
      %s182 = smul.addr %s181, 4
      %s183 = scalar_lea.vmem %s0, %s182
      %s184 = smul.u32 2, %s19
      %p185 = scmp.lt.s32.totalorder %s18, 1
      %s186 = scalar_select %p185, %s18, 1
      %p187 = scmp.lt.s32.totalorder %s184, 1
      %s188 = scalar_select %p187, %s184, 1
      %s189 = smul.addr %s186, 4
      %s190 = sadd.s32 %s188, %s189
      %s191 = smul.addr %s190, 8
      %s192 = scalar_lea.vmem %s3, %s191
      %s193 = smul.u32 2, %s19
      %v195 = vld [vmem:[%s183] sm:$0xff]
      %v196 = vld [vmem:[%s183 + $0x8] sm:$0xff]
      %v197 = vld [vmem:[%s183 + $0x10] sm:$0xff]
      %v198 = vld [vmem:[%s183 + $0x18] sm:$0xff]
      %v199 = vld [vmem:[%s1] sm:$0xf]
      %v200 = vld [vmem:[%s1 + $0x4] sm:$0xf]
      %v201 = vld [vmem:[%s2] sm:$0xff]
      %v202 = vld [vmem:[%s2 + $0x8] sm:$0xff]
      %204 = vset.pattern.permute.xlu0 0
      %205 = vperm.xlu0 %204, %v201
      %v206 = vpop.permute.xlu0 %205
      %209 = vset.pattern.permute.xlu0 0
      %210 = vperm.xlu0 %209, %v202
      %v211 = vpop.permute.xlu0 %210
      %v215 = vunpack.c.l.b16 %v199
      %v216 = vunpack.c.l.b16 %v200
      %v217 = vpack.c.b16 %v216, %v215
      %v222 = vunpack.c.l.b16 %v195
      %v223 = vunpack.c.h.b16 %v195
      %v224 = vunpack.c.l.b16 %v196
      %v225 = vunpack.c.h.b16 %v196
      %v226 = vunpack.c.l.b16 %v197
      %v227 = vunpack.c.h.b16 %v197
      %v228 = vunpack.c.l.b16 %v198
      %v229 = vunpack.c.h.b16 %v198
      %v230 = vpack.c.b16 %v224, %v222
      %v231 = vpack.c.b16 %v225, %v223
      %v232 = vpack.c.b16 %v228, %v226
      %v233 = vpack.c.b16 %v229, %v227
      %vm238 = vcmask 261120
      %v240 = vsel %vm238, %v217, 0
      %242 = vmatprep.subr.bf16.mxu0 0
      %243 = vmatpush1.bf16.msra.mxu0 0
      %244 = vmatprep.subr.bf16.mxu0 0
      %245 = vmatpush1.bf16.msra.mxu0 0
      %246 = vmatprep.subr.bf16.mxu0 0
      %247 = vmatpush1.bf16.msra.mxu0 0
      %248 = vmatprep.subr.bf16.mxu0 0
      %249 = vmatpush1.bf16.msra.mxu0 0
      %250 = vmatprep.subr.bf16.mxu0 0
      %251 = vmatpush1.bf16.msra.mxu0 0
      %252 = vmatprep.subr.bf16.mxu0 0
      %253 = vmatpush1.bf16.msra.mxu0 0
      %254 = vmatprep.subr.bf16.mxu0 %v233
      %255 = vmatpush1.bf16.msra.mxu0 %v232
      %256 = vmatprep.subr.bf16.mxu0 %v231
      %257 = vmatpush1.bf16.msra.mxu0 %v230
      %258 = vmatprep.subr.bf16.mxu0 0
      %259 = vmatpush2.bf16.msra.mxu0 0
      %260 = vmatprep.subr.bf16.mxu0 0
      %261 = vmatpush2.bf16.msra.mxu0 0
      %262 = vmatprep.subr.bf16.mxu0 0
      %263 = vmatpush2.bf16.msra.mxu0 0
      %264 = vmatprep.subr.bf16.mxu0 0
      %265 = vmatpush2.bf16.msra.mxu0 0
      %266 = vmatprep.subr.bf16.mxu0 0
      %267 = vmatpush2.bf16.msra.mxu0 0
      %268 = vmatprep.subr.bf16.mxu0 0
      %269 = vmatpush2.bf16.msra.mxu0 0
      %270 = vmatprep.subr.bf16.mxu0 0
      %271 = vmatpush2.bf16.msra.mxu0 0
      %272 = vmatprep.subr.bf16.mxu0 0
      %273 = vmatpush2.bf16.msra.mxu0 0
      %274 = vmatprep.mubr.bf16.mxu0 0
      %275 = vmatmul.mubr.bf16.gmra.mxu0 %v240
      %v276 = vpop.f32.mrf.mxu0
      %v277 = vadd.f32 %v206, %v276
      %v278 = vpop.f32.mrf.mxu0
      %v279 = vadd.f32 %v206, %v278
      %v280 = vpop.f32.mrf.mxu0
      %v281 = vadd.f32 %v211, %v280
      %v282 = vpop.f32.mrf.mxu0
      %v283 = vadd.f32 %v211, %v282
      %284 = vdwg.mxu0
      %285 = vst [vmem:[%s192] sm:$0xff] %v277
      %286 = vst [vmem:[%s192 + $0x8] sm:$0xff] %v279
      %287 = vst [vmem:[%s192 + $0x10] sm:$0xff] %v281
      %288 = vst [vmem:[%s192 + $0x18] sm:$0xff] %v283
      %s289 = smul.u32 2, %s19
      %p290 = scmp.lt.s32.totalorder %s18, 1
      %s291 = scalar_select %p290, %s18, 1
      %p292 = scmp.lt.s32.totalorder %s289, 1
      %s293 = scalar_select %p292, %s289, 1
      %s294 = smul.addr %s291, 4
      %s295 = sadd.s32 %s293, %s294
      %s296 = smul.addr %s295, 8
      %s297 = scalar_lea.vmem %s3, %s296
      // Predicated region
      $region33: #{enhanced_climate_unet.40} parent=31 // pred_check
        %p298 = pneg %p114
      $region34: #{enhanced_climate_unet.40} parent=31 // pred_check_branch
        %300 = sbr.rel (%p298) target = $region36
      $region35: #{enhanced_climate_unet.40} parent=31 // pred_region
        %s301 = smul.u32 2, %s19
      $region36: #{enhanced_climate_unet.40} parent=31 // pred_fallthru
        _
    $region32: #{enhanced_climate_unet.40} parent=5 // pred_fallthru
      _
    %p302 = scmp.le.s32.totalorder 2, %s9
    // Predicated region
    $region37: #{enhanced_climate_unet.40} parent=5 // pred_check
      %p303 = pneg %p302
    $region38: #{enhanced_climate_unet.40} parent=5 // pred_check_branch
      %305 = sbr.rel (%p303) target = $region40
    $region39: #{enhanced_climate_unet.40} parent=5 // pred_region
      %s306 = ssub.s32 %s9, 2
      // Predicated region
      $region41: #{enhanced_climate_unet.40} parent=39 // pred_check
        %p307 = pneg %p120
      $region42: #{enhanced_climate_unet.40} parent=39 // pred_check_branch
        %309 = sbr.rel (%p307) target = $region44
      $region43: #{enhanced_climate_unet.40} parent=39 // pred_region
        %s310 = smul.u32 2, %s21
        %p311 = scmp.lt.s32.totalorder %s20, 1
        %s312 = scalar_select %p311, %s20, 1
        %p313 = scmp.lt.s32.totalorder %s310, 1
        %s314 = scalar_select %p313, %s310, 1
        %s315 = smul.addr %s312, 4
        %s316 = sadd.s32 %s314, %s315
        %s317 = smul.addr %s316, 8
        %s318 = scalar_lea.vmem %s3, %s317
      $region44: #{enhanced_climate_unet.40} parent=39 // pred_fallthru
        _
    $region40: #{enhanced_climate_unet.40} parent=5 // pred_fallthru
      _
  $region6: #{enhanced_climate_unet.40} parent=0 // loop_footer
    %s13 = sadd.s32 1, %s9
  $region7: #{enhanced_climate_unet.40} parent=0 // loop_footer_branch
    %8 = sbr.rel target = $region3
  $region8: #{enhanced_climate_unet.40} parent=0 // loop_exit
    _

// kernel: enhanced_climate_unet.41
$region0: #{enhanced_climate_unet.41}
  #allocation0 [shape = 'u32[]', space=smem, size = 0x4, offset = 0x4, fixed_abs, tag = 'smem constant byte address 0x4 - core index']
  #allocation1 [shape = 'u32[144,128]{1,0:T(1,128)}', space=vmem, size = 0x12000, scoped, tag = 'internal scratch']
  %s0 = inlined_call_operand.vmem [shape: bf16[2,32,432], index: 0, kind: input, shape index: {}]
  %s1 = inlined_call_operand.vmem [shape: bf16[16,288], index: 1, kind: input, shape index: {}]
  %s2 = inlined_call_operand.vmem [shape: f32[16,1], index: 2, kind: input, shape index: {}]
  %s3 = inlined_call_operand.vmem [shape: f32[2,16,384], index: 3, kind: output, shape index: {}]
  %s4 = sld [smem:[#allocation0]]
  $region45: #{enhanced_climate_unet.41} parent=0
    _
  %s6 = ssub.s32 1, %s4
  %s7 = scalar_select 0, %s6, %s4
  loop: start=0, step=1, limit=4
  $region2: #{enhanced_climate_unet.41} parent=0 // loop_pre_header
    _
  $region3: #{enhanced_climate_unet.41} parent=0 // loop_header
    %s9 = sphi 0, %s13
    %p10 = scmp.ge.s32.totalorder %s9, 4
    %s16 = sphi 0, %s28
    %s17 = sphi 0, %s24
    %s18 = sphi 0, %s16
    %s19 = sphi 0, %s17
    %s20 = sphi 0, %s18
    %s21 = sphi 0, %s19
    %s31 = sphi 0, %s33
    %s34 = sphi 0, %s31
    %s35 = sphi 0, %s34
    %s51 = sphi 0, %s35
    %s55 = sphi 0, %s55
    %s57 = sphi 0, %s55
    %s58 = sphi 0, %s57
    %s72 = sphi 0, %s58
    %s76 = sphi 0, %s76
    %s78 = sphi 0, %s76
    %s79 = sphi 0, %s78
    %s93 = sphi 0, %s79
    %s101 = sphi 0, %s103
    %s104 = sphi 0, %s101
    %s105 = sphi 0, %s104
    %s121 = sphi 0, %s105
  $region4: #{enhanced_climate_unet.41} parent=0 // loop_header_branch
    %12 = sbr.rel (%p10) target = $region8
  $region5: #{enhanced_climate_unet.41} parent=0 // loop_body
    %s14 = ssub.s32 %s9, 1
    %s15 = ssub.s32 %s9, 2
    %s22 = sadd.s32 1, %s17
    %p23 = scmp.ge.s32.totalorder %s22, 1
    %s24 = scalar_select %p23, 0, %s22
    %s25 = sadd.s32 1, %s16
    %s26 = scalar_select %p23, %s25, %s16
    %p27 = scmp.ge.s32.totalorder %s26, 2
    %s28 = scalar_select %p27, 0, %s26
    %s29 = ssub.s32 %s16, %s28
    %p30 = scmp.eq.s32.totalorder %s29, 0
    %s32 = sadd.s32 %s31, 1
    %s33 = scalar_select %p30, %s31, %s32
    %p36 = pneg %p30
    %p37 = scmp.eq.s32.totalorder %s9, 1
    %p38 = por %p36, %p37
    %p39 = scmp.ne.s32.totalorder %s31, %s34
    %p40 = scmp.eq.s32.totalorder %s9, 0
    %p41 = por %p39, %p40
    %p42 = scmp.ne.s32.totalorder %s31, %s34
    %p43 = scmp.eq.s32.totalorder %s14, 1
    %p44 = por %p42, %p43
    %p45 = scmp.ne.s32.totalorder %s34, %s35
    %p46 = scmp.eq.s32.totalorder %s14, 0
    %p47 = por %p45, %p46
    %p48 = scmp.ne.s32.totalorder %s34, %s35
    %p49 = scmp.eq.s32.totalorder %s15, 1
    %p50 = por %p48, %p49
    %p52 = scmp.ne.s32.totalorder %s35, %s51
    %p53 = scmp.eq.s32.totalorder %s15, 0
    %p54 = por %p52, %p53
    %s56 = sadd.s32 %s55, 1
    %p59 = scmp.eq.s32.totalorder %s9, 1
    %p60 = scmp.ne.s32.totalorder %s55, %s57
    %p61 = scmp.eq.s32.totalorder %s9, 0
    %p62 = por %p60, %p61
    %p63 = scmp.ne.s32.totalorder %s55, %s57
    %p64 = scmp.eq.s32.totalorder %s14, 1
    %p65 = por %p63, %p64
    %p66 = scmp.ne.s32.totalorder %s57, %s58
    %p67 = scmp.eq.s32.totalorder %s14, 0
    %p68 = por %p66, %p67
    %p69 = scmp.ne.s32.totalorder %s57, %s58
    %p70 = scmp.eq.s32.totalorder %s15, 1
    %p71 = por %p69, %p70
    %p73 = scmp.ne.s32.totalorder %s58, %s72
    %p74 = scmp.eq.s32.totalorder %s15, 0
    %p75 = por %p73, %p74
    %s77 = sadd.s32 %s76, 1
    %p80 = scmp.eq.s32.totalorder %s9, 1
    %p81 = scmp.ne.s32.totalorder %s76, %s78
    %p82 = scmp.eq.s32.totalorder %s9, 0
    %p83 = por %p81, %p82
    %p84 = scmp.ne.s32.totalorder %s76, %s78
    %p85 = scmp.eq.s32.totalorder %s14, 1
    %p86 = por %p84, %p85
    %p87 = scmp.ne.s32.totalorder %s78, %s79
    %p88 = scmp.eq.s32.totalorder %s14, 0
    %p89 = por %p87, %p88
    %p90 = scmp.ne.s32.totalorder %s78, %s79
    %p91 = scmp.eq.s32.totalorder %s15, 1
    %p92 = por %p90, %p91
    %p94 = scmp.ne.s32.totalorder %s79, %s93
    %p95 = scmp.eq.s32.totalorder %s15, 0
    %p96 = por %p94, %p95
    %s97 = ssub.s32 %s16, %s28
    %s98 = ssub.s32 %s17, %s24
    %s99 = sor.u32 %s97, %s98
    %p100 = scmp.eq.s32.totalorder %s99, 0
    %s102 = sadd.s32 %s101, 1
    %s103 = scalar_select %p100, %s101, %s102
    %p106 = pneg %p100
    %p107 = scmp.eq.s32.totalorder %s9, 1
    %p108 = por %p106, %p107
    %p109 = scmp.ne.s32.totalorder %s101, %s104
    %p110 = scmp.eq.s32.totalorder %s9, 0
    %p111 = por %p109, %p110
    %p112 = scmp.ne.s32.totalorder %s101, %s104
    %p113 = scmp.eq.s32.totalorder %s14, 1
    %p114 = por %p112, %p113
    %p115 = scmp.ne.s32.totalorder %s104, %s105
    %p116 = scmp.eq.s32.totalorder %s14, 0
    %p117 = por %p115, %p116
    %p118 = scmp.ne.s32.totalorder %s104, %s105
    %p119 = scmp.eq.s32.totalorder %s15, 1
    %p120 = por %p118, %p119
    %p122 = scmp.ne.s32.totalorder %s105, %s121
    %p123 = scmp.eq.s32.totalorder %s15, 0
    %p124 = por %p122, %p123
    %p125 = scmp.le.s32.totalorder 1, %s9
    %p126 = scmp.lt.s32.totalorder %s9, 3
    %p127 = pnand %p125, %p126
    %p128 = pneg %p127
    // Predicated region
    $region9: #{enhanced_climate_unet.41} parent=5 // pred_check
      _
    $region10: #{enhanced_climate_unet.41} parent=5 // pred_check_branch
      %130 = sbr.rel (%p127) target = $region12
    $region11: #{enhanced_climate_unet.41} parent=5 // pred_region
      %s131 = ssub.s32 %s9, 1
      // Predicated region
      $region13: #{enhanced_climate_unet.41} parent=11 // pred_check
        %p132 = pneg %p68
      $region14: #{enhanced_climate_unet.41} parent=11 // pred_check_branch
        %134 = sbr.rel (%p132) target = $region16
      $region15: #{enhanced_climate_unet.41} parent=11 // pred_region
        _
      $region16: #{enhanced_climate_unet.41} parent=11 // pred_fallthru
        _
      // Predicated region
      $region17: #{enhanced_climate_unet.41} parent=11 // pred_check
        %p135 = pneg %p89
      $region18: #{enhanced_climate_unet.41} parent=11 // pred_check_branch
        %137 = sbr.rel (%p135) target = $region20
      $region19: #{enhanced_climate_unet.41} parent=11 // pred_region
        _
      $region20: #{enhanced_climate_unet.41} parent=11 // pred_fallthru
        _
    $region12: #{enhanced_climate_unet.41} parent=5 // pred_fallthru
      _
    %p138 = scmp.lt.s32.totalorder %s9, 2
    // Predicated region
    $region21: #{enhanced_climate_unet.41} parent=5 // pred_check
      %p139 = pneg %p138
    $region22: #{enhanced_climate_unet.41} parent=5 // pred_check_branch
      %141 = sbr.rel (%p139) target = $region24
    $region23: #{enhanced_climate_unet.41} parent=5 // pred_region
      // Predicated region
      $region25: #{enhanced_climate_unet.41} parent=23 // pred_check
        %p142 = pneg %p41
      $region26: #{enhanced_climate_unet.41} parent=23 // pred_check_branch
        %144 = sbr.rel (%p142) target = $region28
      $region27: #{enhanced_climate_unet.41} parent=23 // pred_region
        %p145 = scmp.lt.s32.totalorder %s16, 1
        %s146 = scalar_select %p145, %s16, 1
        %s147 = smul.addr %s146, 16
        %s148 = smul.addr %s147, 4
        %s149 = scalar_lea.vmem %s0, %s148
      $region28: #{enhanced_climate_unet.41} parent=23 // pred_fallthru
        _
    $region24: #{enhanced_climate_unet.41} parent=5 // pred_fallthru
      _
    %p150 = scmp.le.s32.totalorder 1, %s9
    %p151 = scmp.lt.s32.totalorder %s9, 3
    %p152 = pnand %p150, %p151
    %p153 = pneg %p152
    // Predicated region
    $region29: #{enhanced_climate_unet.41} parent=5 // pred_check
      _
    $region30: #{enhanced_climate_unet.41} parent=5 // pred_check_branch
      %155 = sbr.rel (%p152) target = $region32
    $region31: #{enhanced_climate_unet.41} parent=5 // pred_region
      %s156 = ssub.s32 %s9, 1
      %p157 = scmp.lt.s32.totalorder %s18, 1
      %s158 = scalar_select %p157, %s18, 1
      %s159 = smul.addr %s158, 16
      %s160 = smul.addr %s159, 4
      %s161 = scalar_lea.vmem %s0, %s160
      %p162 = pneg %p47
      %p163 = pneg %p44
      %p164 = pneg %p68
      %p165 = pneg %p65
      %p166 = pneg %p89
      %p167 = pneg %p86
      %p168 = pneg %p117
      %p169 = pneg %p114
      %s170 = smul.u32 3, %s19
      %p171 = scmp.lt.s32.totalorder %s18, 1
      %s172 = scalar_select %p171, %s18, 1
      %p173 = scmp.lt.s32.totalorder %s170, 2
      %s174 = scalar_select %p173, %s170, 2
      %s175 = smul.addr %s172, 6
      %s176 = sadd.s32 %s174, %s175
      %s177 = smul.addr %s176, 8
      %s178 = scalar_lea.vmem %s3, %s177
      %p179 = scmp.lt.s32.totalorder %s18, 1
      %s180 = scalar_select %p179, %s18, 1
      %s181 = smul.addr %s180, 16
      %s182 = smul.addr %s181, 4
      %s183 = scalar_lea.vmem %s0, %s182
      %s184 = smul.u32 3, %s19
      %p185 = scmp.lt.s32.totalorder %s18, 1
      %s186 = scalar_select %p185, %s18, 1
      %p187 = scmp.lt.s32.totalorder %s184, 2
      %s188 = scalar_select %p187, %s184, 2
      %s189 = smul.addr %s186, 6
      %s190 = sadd.s32 %s188, %s189
      %s191 = smul.addr %s190, 8
      %s192 = scalar_lea.vmem %s3, %s191
      %s193 = smul.u32 3, %s19
      %v195 = vld [vmem:[%s183] sm:$0xff]
      %v196 = vld [vmem:[%s183 + $0x8] sm:$0xf]
      %v197 = vld [vmem:[%s183 + $0x10] sm:$0xff]
      %v198 = vld [vmem:[%s183 + $0x18] sm:$0xf]
      %v199 = vld [vmem:[%s183 + $0x20] sm:$0xff]
      %v200 = vld [vmem:[%s183 + $0x28] sm:$0xf]
      %v201 = vld [vmem:[%s183 + $0x30] sm:$0xff]
      %v202 = vld [vmem:[%s183 + $0x38] sm:$0xf]
      %v203 = vld [vmem:[%s183 + $0x8] sm:$0xff]
      %v204 = vld [vmem:[%s183 + $0x18] sm:$0xff]
      %v205 = vld [vmem:[%s183 + $0x28] sm:$0xff]
      %v206 = vld [vmem:[%s183 + $0x38] sm:$0xff]
      %v215 = vunpack.c.l.b16 %v195
      %v216 = vunpack.c.h.b16 %v195
      %v217 = vunpack.c.l.b16 %v196
      %v218 = vunpack.c.l.b16 %v197
      %v219 = vunpack.c.h.b16 %v197
      %v220 = vunpack.c.l.b16 %v198
      %v221 = vunpack.c.l.b16 %v199
      %v222 = vunpack.c.h.b16 %v199
      %v223 = vunpack.c.l.b16 %v200
      %v224 = vunpack.c.l.b16 %v201
      %v225 = vunpack.c.h.b16 %v201
      %v226 = vunpack.c.l.b16 %v202
      %v227 = vpack.c.b16 %v218, %v215
      %v228 = vpack.c.b16 %v219, %v216
      %v229 = vpack.c.b16 %v220, %v217
      %v230 = vpack.c.b16 %v224, %v221
      %v231 = vpack.c.b16 %v225, %v222
      %v232 = vpack.c.b16 %v226, %v223
      %v243 = vunpack.c.l.b16 %v203
      %v244 = vunpack.c.h.b16 %v203
      %v245 = vunpack.c.l.b16 %v204
      %v246 = vunpack.c.h.b16 %v204
      %v247 = vunpack.c.l.b16 %v205
      %v248 = vunpack.c.h.b16 %v205
      %v249 = vunpack.c.l.b16 %v206
      %v250 = vunpack.c.h.b16 %v206
      %v251 = vpack.c.b16 %v245, %v243
      %v252 = vpack.c.b16 %v246, %v244
      %v253 = vpack.c.b16 %v249, %v247
      %v254 = vpack.c.b16 %v250, %v248
      %255 = vrot.lane.b32.xlu0 %v227, 127
      %v256 = vpop.permute.xlu0 %255
      %257 = vrot.lane.b32.xlu0 %v228, 127
      %v258 = vpop.permute.xlu0 %257
      %259 = vrot.lane.b32.xlu0 %v251, 127
      %v260 = vpop.permute.xlu0 %259
      %261 = vrot.lane.b32.xlu0 %v252, 127
      %v262 = vpop.permute.xlu0 %261
      %263 = vrot.lane.b32.xlu0 %v230, 127
      %v264 = vpop.permute.xlu0 %263
      %265 = vrot.lane.b32.xlu0 %v231, 127
      %v266 = vpop.permute.xlu0 %265
      %267 = vrot.lane.b32.xlu0 %v253, 127
      %v268 = vpop.permute.xlu0 %267
      %269 = vrot.lane.b32.xlu0 %v254, 127
      %v270 = vpop.permute.xlu0 %269
      %vm271 = vcmask 1039360
      %v272 = vsel %vm271, %v256, %v258
      %v273 = vsel %vm271, %v258, %v260
      %v274 = vsel %vm271, %v260, %v262
      %v275 = vsel %vm271, %v264, %v266
      %v276 = vsel %vm271, %v266, %v268
      %v277 = vsel %vm271, %v268, %v270
      %284 = vrot.lane.b32.xlu0 %v227, 126
      %v285 = vpop.permute.xlu0 %284
      %286 = vrot.lane.b32.xlu0 %v228, 126
      %v287 = vpop.permute.xlu0 %286
      %288 = vrot.lane.b32.xlu0 %v251, 126
      %v289 = vpop.permute.xlu0 %288
      %290 = vrot.lane.b32.xlu0 %v252, 126
      %v291 = vpop.permute.xlu0 %290
      %292 = vrot.lane.b32.xlu0 %v230, 126
      %v293 = vpop.permute.xlu0 %292
      %294 = vrot.lane.b32.xlu0 %v231, 126
      %v295 = vpop.permute.xlu0 %294
      %296 = vrot.lane.b32.xlu0 %v253, 126
      %v297 = vpop.permute.xlu0 %296
      %298 = vrot.lane.b32.xlu0 %v254, 126
      %v299 = vpop.permute.xlu0 %298
      %vm300 = vcmask 1031168
      %v301 = vsel %vm300, %v285, %v287
      %v302 = vsel %vm300, %v287, %v289
      %v303 = vsel %vm300, %v289, %v291
      %v304 = vsel %vm300, %v293, %v295
      %v305 = vsel %vm300, %v295, %v297
      %v306 = vsel %vm300, %v297, %v299
      %313 = vrot.lane.b32.xlu0 %v227, 110
      %v314 = vpop.permute.xlu0 %313
      %315 = vrot.lane.b32.xlu0 %v228, 110
      %v316 = vpop.permute.xlu0 %315
      %317 = vrot.lane.b32.xlu0 %v251, 110
      %v318 = vpop.permute.xlu0 %317
      %319 = vrot.lane.b32.xlu0 %v252, 110
      %v320 = vpop.permute.xlu0 %319
      %321 = vrot.lane.b32.xlu0 %v230, 110
      %v322 = vpop.permute.xlu0 %321
      %323 = vrot.lane.b32.xlu0 %v231, 110
      %v324 = vpop.permute.xlu0 %323
      %325 = vrot.lane.b32.xlu0 %v253, 110
      %v326 = vpop.permute.xlu0 %325
      %327 = vrot.lane.b32.xlu0 %v254, 110
      %v328 = vpop.permute.xlu0 %327
      %vm329 = vcmask 900096
      %v330 = vsel %vm329, %v314, %v316
      %v331 = vsel %vm329, %v316, %v318
      %v332 = vsel %vm329, %v318, %v320
      %v333 = vsel %vm329, %v322, %v324
      %v334 = vsel %vm329, %v324, %v326
      %v335 = vsel %vm329, %v326, %v328
      %342 = vrot.lane.b32.xlu0 %v227, 109
      %v343 = vpop.permute.xlu0 %342
      %344 = vrot.lane.b32.xlu0 %v228, 109
      %v345 = vpop.permute.xlu0 %344
      %346 = vrot.lane.b32.xlu0 %v251, 109
      %v347 = vpop.permute.xlu0 %346
      %348 = vrot.lane.b32.xlu0 %v252, 109
      %v349 = vpop.permute.xlu0 %348
      %350 = vrot.lane.b32.xlu0 %v230, 109
      %v351 = vpop.permute.xlu0 %350
      %352 = vrot.lane.b32.xlu0 %v231, 109
      %v353 = vpop.permute.xlu0 %352
      %354 = vrot.lane.b32.xlu0 %v253, 109
      %v355 = vpop.permute.xlu0 %354
      %356 = vrot.lane.b32.xlu0 %v254, 109
      %v357 = vpop.permute.xlu0 %356
      %vm358 = vcmask 891904
      %v359 = vsel %vm358, %v343, %v345
      %v360 = vsel %vm358, %v345, %v347
      %v361 = vsel %vm358, %v347, %v349
      %v362 = vsel %vm358, %v351, %v353
      %v363 = vsel %vm358, %v353, %v355
      %v364 = vsel %vm358, %v355, %v357
      %371 = vrot.lane.b32.xlu0 %v227, 108
      %v372 = vpop.permute.xlu0 %371
      %373 = vrot.lane.b32.xlu0 %v228, 108
      %v374 = vpop.permute.xlu0 %373
      %375 = vrot.lane.b32.xlu0 %v251, 108
      %v376 = vpop.permute.xlu0 %375
      %377 = vrot.lane.b32.xlu0 %v252, 108
      %v378 = vpop.permute.xlu0 %377
      %379 = vrot.lane.b32.xlu0 %v230, 108
      %v380 = vpop.permute.xlu0 %379
      %381 = vrot.lane.b32.xlu0 %v231, 108
      %v382 = vpop.permute.xlu0 %381
      %383 = vrot.lane.b32.xlu0 %v253, 108
      %v384 = vpop.permute.xlu0 %383
      %385 = vrot.lane.b32.xlu0 %v254, 108
      %v386 = vpop.permute.xlu0 %385
      %vm387 = vcmask 883712
      %v388 = vsel %vm387, %v372, %v374
      %v389 = vsel %vm387, %v374, %v376
      %v390 = vsel %vm387, %v376, %v378
      %v391 = vsel %vm387, %v380, %v382
      %v392 = vsel %vm387, %v382, %v384
      %v393 = vsel %vm387, %v384, %v386
      %400 = vrot.lane.b32.xlu0 %v227, 92
      %v401 = vpop.permute.xlu0 %400
      %402 = vrot.lane.b32.xlu0 %v228, 92
      %v403 = vpop.permute.xlu0 %402
      %404 = vrot.lane.b32.xlu0 %v251, 92
      %v405 = vpop.permute.xlu0 %404
      %406 = vrot.lane.b32.xlu0 %v252, 92
      %v407 = vpop.permute.xlu0 %406
      %408 = vrot.lane.b32.xlu0 %v230, 92
      %v409 = vpop.permute.xlu0 %408
      %410 = vrot.lane.b32.xlu0 %v231, 92
      %v411 = vpop.permute.xlu0 %410
      %412 = vrot.lane.b32.xlu0 %v253, 92
      %v413 = vpop.permute.xlu0 %412
      %414 = vrot.lane.b32.xlu0 %v254, 92
      %v415 = vpop.permute.xlu0 %414
      %vm416 = vcmask 752640
      %v417 = vsel %vm416, %v401, %v403
      %v418 = vsel %vm416, %v403, %v405
      %v419 = vsel %vm416, %v405, %v407
      %v420 = vsel %vm416, %v409, %v411
      %v421 = vsel %vm416, %v411, %v413
      %v422 = vsel %vm416, %v413, %v415
      %429 = vrot.lane.b32.xlu0 %v227, 91
      %v430 = vpop.permute.xlu0 %429
      %431 = vrot.lane.b32.xlu0 %v228, 91
      %v432 = vpop.permute.xlu0 %431
      %433 = vrot.lane.b32.xlu0 %v251, 91
      %v434 = vpop.permute.xlu0 %433
      %435 = vrot.lane.b32.xlu0 %v252, 91
      %v436 = vpop.permute.xlu0 %435
      %437 = vrot.lane.b32.xlu0 %v230, 91
      %v438 = vpop.permute.xlu0 %437
      %439 = vrot.lane.b32.xlu0 %v231, 91
      %v440 = vpop.permute.xlu0 %439
      %441 = vrot.lane.b32.xlu0 %v253, 91
      %v442 = vpop.permute.xlu0 %441
      %443 = vrot.lane.b32.xlu0 %v254, 91
      %v444 = vpop.permute.xlu0 %443
      %vm445 = vcmask 744448
      %v446 = vsel %vm445, %v430, %v432
      %v447 = vsel %vm445, %v432, %v434
      %v448 = vsel %vm445, %v434, %v436
      %v449 = vsel %vm445, %v438, %v440
      %v450 = vsel %vm445, %v440, %v442
      %v451 = vsel %vm445, %v442, %v444
      %458 = vrot.lane.b32.xlu0 %v227, 90
      %v459 = vpop.permute.xlu0 %458
      %460 = vrot.lane.b32.xlu0 %v228, 90
      %v461 = vpop.permute.xlu0 %460
      %462 = vrot.lane.b32.xlu0 %v251, 90
      %v463 = vpop.permute.xlu0 %462
      %464 = vrot.lane.b32.xlu0 %v252, 90
      %v465 = vpop.permute.xlu0 %464
      %466 = vrot.lane.b32.xlu0 %v230, 90
      %v467 = vpop.permute.xlu0 %466
      %468 = vrot.lane.b32.xlu0 %v231, 90
      %v469 = vpop.permute.xlu0 %468
      %470 = vrot.lane.b32.xlu0 %v253, 90
      %v471 = vpop.permute.xlu0 %470
      %472 = vrot.lane.b32.xlu0 %v254, 90
      %v473 = vpop.permute.xlu0 %472
      %vm474 = vcmask 736256
      %v475 = vsel %vm474, %v459, %v461
      %v476 = vsel %vm474, %v461, %v463
      %v477 = vsel %vm474, %v463, %v465
      %v478 = vsel %vm474, %v467, %v469
      %v479 = vsel %vm474, %v469, %v471
      %v480 = vsel %vm474, %v471, %v473
      %v487 = vld [vmem:[%s1] sm:$0xff]
      %v488 = vld [vmem:[%s1 + $0x8] sm:$0xf]
      %v489 = vld [vmem:[%s1 + $0xc] sm:$0xff]
      %v490 = vld [vmem:[%s1 + $0x14] sm:$0xf]
      %v491 = vld [vmem:[%s2] sm:$0xff]
      %v492 = vld [vmem:[%s2 + $0x8] sm:$0xff]
      %494 = vset.pattern.permute.xlu0 0
      %495 = vperm.xlu0 %494, %v491
      %v496 = vpop.permute.xlu0 %495
      %499 = vset.pattern.permute.xlu0 0
      %500 = vperm.xlu0 %499, %v492
      %v501 = vpop.permute.xlu0 %500
      %v507 = vunpack.c.l.b16 %v487
      %v508 = vunpack.c.h.b16 %v487
      %v509 = vunpack.c.l.b16 %v488
      %v510 = vunpack.c.l.b16 %v489
      %v511 = vunpack.c.h.b16 %v489
      %v512 = vunpack.c.l.b16 %v490
      %v513 = vpack.c.b16 %v510, %v507
      %v514 = vpack.c.b16 %v511, %v508
      %v515 = vpack.c.b16 %v512, %v509
      %vm518 = vcmask 261120
      %v520 = vsel %vm518, %v515, 0
      %522 = vmatprep.subr.bf16.mxu0 %v334
      %523 = vmatpush1.bf16.msra.mxu0 %v333
      %524 = vmatprep.subr.bf16.mxu0 %v331
      %525 = vmatpush1.bf16.msra.mxu0 %v330
      %526 = vmatprep.subr.bf16.mxu0 %v305
      %527 = vmatpush1.bf16.msra.mxu0 %v304
      %528 = vmatprep.subr.bf16.mxu0 %v302
      %529 = vmatpush1.bf16.msra.mxu0 %v301
      %530 = vmatprep.subr.bf16.mxu0 %v276
      %531 = vmatpush1.bf16.msra.mxu0 %v275
      %532 = vmatprep.subr.bf16.mxu0 %v273
      %533 = vmatpush1.bf16.msra.mxu0 %v272
      %534 = vmatprep.subr.bf16.mxu0 %v231
      %535 = vmatpush1.bf16.msra.mxu0 %v230
      %536 = vmatprep.subr.bf16.mxu0 %v228
      %537 = vmatpush1.bf16.msra.mxu0 %v227
      %538 = vmatprep.subr.bf16.mxu0 %v450
      %539 = vmatpush2.bf16.msra.mxu0 %v449
      %540 = vmatprep.subr.bf16.mxu0 %v447
      %541 = vmatpush2.bf16.msra.mxu0 %v446
      %542 = vmatprep.subr.bf16.mxu0 %v421
      %543 = vmatpush2.bf16.msra.mxu0 %v420
      %544 = vmatprep.subr.bf16.mxu0 %v418
      %545 = vmatpush2.bf16.msra.mxu0 %v417
      %546 = vmatprep.subr.bf16.mxu0 %v392
      %547 = vmatpush2.bf16.msra.mxu0 %v391
      %548 = vmatprep.subr.bf16.mxu0 %v389
      %549 = vmatpush2.bf16.msra.mxu0 %v388
      %550 = vmatprep.subr.bf16.mxu0 %v363
      %551 = vmatpush2.bf16.msra.mxu0 %v362
      %552 = vmatprep.subr.bf16.mxu0 %v360
      %553 = vmatpush2.bf16.msra.mxu0 %v359
      %554 = vmatprep.mubr.bf16.mxu0 %v514
      %555 = vmatmul.mubr.bf16.gmra.mxu0 %v513
      %v556 = vpop.f32.mrf.mxu0
      %v557 = vadd.f32 %v496, %v556
      %v558 = vpop.f32.mrf.mxu0
      %v559 = vadd.f32 %v496, %v558
      %v560 = vpop.f32.mrf.mxu0
      %v561 = vadd.f32 %v501, %v560
      %v562 = vpop.f32.mrf.mxu0
      %v563 = vadd.f32 %v501, %v562
      %564 = vdwg.mxu0
      %565 = vmatprep.subr.bf16.mxu0 0
      %566 = vmatpush1.bf16.msra.mxu0 0
      %567 = vmatprep.subr.bf16.mxu0 0
      %568 = vmatpush1.bf16.msra.mxu0 0
      %569 = vmatprep.subr.bf16.mxu0 0
      %570 = vmatpush1.bf16.msra.mxu0 0
      %571 = vmatprep.subr.bf16.mxu0 0
      %572 = vmatpush1.bf16.msra.mxu0 0
      %573 = vmatprep.subr.bf16.mxu0 0
      %574 = vmatpush1.bf16.msra.mxu0 0
      %575 = vmatprep.subr.bf16.mxu0 0
      %576 = vmatpush1.bf16.msra.mxu0 0
      %577 = vmatprep.subr.bf16.mxu0 %v479
      %578 = vmatpush1.bf16.msra.mxu0 %v478
      %579 = vmatprep.subr.bf16.mxu0 %v476
      %580 = vmatpush1.bf16.msra.mxu0 %v475
      %581 = vmatprep.subr.bf16.mxu0 0
      %582 = vmatpush2.bf16.msra.mxu0 0
      %583 = vmatprep.subr.bf16.mxu0 0
      %584 = vmatpush2.bf16.msra.mxu0 0
      %585 = vmatprep.subr.bf16.mxu0 0
      %586 = vmatpush2.bf16.msra.mxu0 0
      %587 = vmatprep.subr.bf16.mxu0 0
      %588 = vmatpush2.bf16.msra.mxu0 0
      %589 = vmatprep.subr.bf16.mxu0 0
      %590 = vmatpush2.bf16.msra.mxu0 0
      %591 = vmatprep.subr.bf16.mxu0 0
      %592 = vmatpush2.bf16.msra.mxu0 0
      %593 = vmatprep.subr.bf16.mxu0 0
      %594 = vmatpush2.bf16.msra.mxu0 0
      %595 = vmatprep.subr.bf16.mxu0 0
      %596 = vmatpush2.bf16.msra.mxu0 0
      %597 = vmatprep.mubr.bf16.mxu0 0
      %598 = vmatmul.mubr.bf16.gmra.mxu0 %v520
      %v599 = vpop.f32.mrf.mxu0
      %v600 = vadd.f32 %v557, %v599
      %v601 = vpop.f32.mrf.mxu0
      %v602 = vadd.f32 %v559, %v601
      %v603 = vpop.f32.mrf.mxu0
      %v604 = vadd.f32 %v561, %v603
      %v605 = vpop.f32.mrf.mxu0
      %v606 = vadd.f32 %v563, %v605
      %607 = vdwg.mxu0
      %608 = vmatprep.subr.bf16.mxu0 0
      %609 = vmatpush1.bf16.msra.mxu0 %v335
      %610 = vmatprep.subr.bf16.mxu0 0
      %611 = vmatpush1.bf16.msra.mxu0 %v332
      %612 = vmatprep.subr.bf16.mxu0 0
      %613 = vmatpush1.bf16.msra.mxu0 %v306
      %614 = vmatprep.subr.bf16.mxu0 0
      %615 = vmatpush1.bf16.msra.mxu0 %v303
      %616 = vmatprep.subr.bf16.mxu0 0
      %617 = vmatpush1.bf16.msra.mxu0 %v277
      %618 = vmatprep.subr.bf16.mxu0 0
      %619 = vmatpush1.bf16.msra.mxu0 %v274
      %620 = vmatprep.subr.bf16.mxu0 0
      %621 = vmatpush1.bf16.msra.mxu0 %v232
      %622 = vmatprep.subr.bf16.mxu0 0
      %623 = vmatpush1.bf16.msra.mxu0 %v229
      %624 = vmatprep.subr.bf16.mxu0 0
      %625 = vmatpush2.bf16.msra.mxu0 %v451
      %626 = vmatprep.subr.bf16.mxu0 0
      %627 = vmatpush2.bf16.msra.mxu0 %v448
      %628 = vmatprep.subr.bf16.mxu0 0
      %629 = vmatpush2.bf16.msra.mxu0 %v422
      %630 = vmatprep.subr.bf16.mxu0 0
      %631 = vmatpush2.bf16.msra.mxu0 %v419
      %632 = vmatprep.subr.bf16.mxu0 0
      %633 = vmatpush2.bf16.msra.mxu0 %v393
      %634 = vmatprep.subr.bf16.mxu0 0
      %635 = vmatpush2.bf16.msra.mxu0 %v390
      %636 = vmatprep.subr.bf16.mxu0 0
      %637 = vmatpush2.bf16.msra.mxu0 %v364
      %638 = vmatprep.subr.bf16.mxu0 0
      %639 = vmatpush2.bf16.msra.mxu0 %v361
      %640 = vmatprep.mubr.bf16.mxu0 %v514
      %641 = vmatmul.mubr.bf16.gmra.mxu0 %v513
      %v642 = vpop.f32.mrf.mxu0
      %v643 = vadd.f32 %v496, %v642
      %v644 = vpop.f32.mrf.mxu0
      %v645 = vpop.f32.mrf.mxu0
      %v646 = vadd.f32 %v501, %v645
      %v647 = vpop.f32.mrf.mxu0
      %648 = vdwg.mxu0
      %649 = vmatprep.subr.bf16.mxu0 0
      %650 = vmatpush1.bf16.msra.mxu0 0
      %651 = vmatprep.subr.bf16.mxu0 0
      %652 = vmatpush1.bf16.msra.mxu0 0
      %653 = vmatprep.subr.bf16.mxu0 0
      %654 = vmatpush1.bf16.msra.mxu0 0
      %655 = vmatprep.subr.bf16.mxu0 0
      %656 = vmatpush1.bf16.msra.mxu0 0
      %657 = vmatprep.subr.bf16.mxu0 0
      %658 = vmatpush1.bf16.msra.mxu0 0
      %659 = vmatprep.subr.bf16.mxu0 0
      %660 = vmatpush1.bf16.msra.mxu0 0
      %661 = vmatprep.subr.bf16.mxu0 0
      %662 = vmatpush1.bf16.msra.mxu0 %v480
      %663 = vmatprep.subr.bf16.mxu0 0
      %664 = vmatpush1.bf16.msra.mxu0 %v477
      %665 = vmatprep.subr.bf16.mxu0 0
      %666 = vmatpush2.bf16.msra.mxu0 0
      %667 = vmatprep.subr.bf16.mxu0 0
      %668 = vmatpush2.bf16.msra.mxu0 0
      %669 = vmatprep.subr.bf16.mxu0 0
      %670 = vmatpush2.bf16.msra.mxu0 0
      %671 = vmatprep.subr.bf16.mxu0 0
      %672 = vmatpush2.bf16.msra.mxu0 0
      %673 = vmatprep.subr.bf16.mxu0 0
      %674 = vmatpush2.bf16.msra.mxu0 0
      %675 = vmatprep.subr.bf16.mxu0 0
      %676 = vmatpush2.bf16.msra.mxu0 0
      %677 = vmatprep.subr.bf16.mxu0 0
      %678 = vmatpush2.bf16.msra.mxu0 0
      %679 = vmatprep.subr.bf16.mxu0 0
      %680 = vmatpush2.bf16.msra.mxu0 0
      %681 = vmatprep.mubr.bf16.mxu0 0
      %682 = vmatmul.mubr.bf16.gmra.mxu0 %v520
      %v683 = vpop.f32.mrf.mxu0
      %v684 = vadd.f32 %v643, %v683
      %v685 = vpop.f32.mrf.mxu0
      %v686 = vpop.f32.mrf.mxu0
      %v687 = vadd.f32 %v646, %v686
      %v688 = vpop.f32.mrf.mxu0
      %689 = vdwg.mxu0
      %690 = vst [vmem:[%s192] sm:$0xff] %v600
      %691 = vst [vmem:[%s192 + $0x8] sm:$0xff] %v602
      %692 = vst [vmem:[%s192 + $0x10] sm:$0xff] %v684
      %693 = vst [vmem:[%s192 + $0x18] sm:$0xff] %v604
      %694 = vst [vmem:[%s192 + $0x20] sm:$0xff] %v606
      %695 = vst [vmem:[%s192 + $0x28] sm:$0xff] %v687
      %s696 = smul.u32 3, %s19
      %p697 = scmp.lt.s32.totalorder %s18, 1
      %s698 = scalar_select %p697, %s18, 1
      %p699 = scmp.lt.s32.totalorder %s696, 2
      %s700 = scalar_select %p699, %s696, 2
      %s701 = smul.addr %s698, 6
      %s702 = sadd.s32 %s700, %s701
      %s703 = smul.addr %s702, 8
      %s704 = scalar_lea.vmem %s3, %s703
      // Predicated region
      $region33: #{enhanced_climate_unet.41} parent=31 // pred_check
        %p705 = pneg %p114
      $region34: #{enhanced_climate_unet.41} parent=31 // pred_check_branch
        %707 = sbr.rel (%p705) target = $region36
      $region35: #{enhanced_climate_unet.41} parent=31 // pred_region
        %s708 = smul.u32 3, %s19
      $region36: #{enhanced_climate_unet.41} parent=31 // pred_fallthru
        _
    $region32: #{enhanced_climate_unet.41} parent=5 // pred_fallthru
      _
    %p709 = scmp.le.s32.totalorder 2, %s9
    // Predicated region
    $region37: #{enhanced_climate_unet.41} parent=5 // pred_check
      %p710 = pneg %p709
    $region38: #{enhanced_climate_unet.41} parent=5 // pred_check_branch
      %712 = sbr.rel (%p710) target = $region40
    $region39: #{enhanced_climate_unet.41} parent=5 // pred_region
      %s713 = ssub.s32 %s9, 2
      // Predicated region
      $region41: #{enhanced_climate_unet.41} parent=39 // pred_check
        %p714 = pneg %p120
      $region42: #{enhanced_climate_unet.41} parent=39 // pred_check_branch
        %716 = sbr.rel (%p714) target = $region44
      $region43: #{enhanced_climate_unet.41} parent=39 // pred_region
        %s717 = smul.u32 3, %s21
        %p718 = scmp.lt.s32.totalorder %s20, 1
        %s719 = scalar_select %p718, %s20, 1
        %p720 = scmp.lt.s32.totalorder %s717, 2
        %s721 = scalar_select %p720, %s717, 2
        %s722 = smul.addr %s719, 6
        %s723 = sadd.s32 %s721, %s722
        %s724 = smul.addr %s723, 8
        %s725 = scalar_lea.vmem %s3, %s724
      $region44: #{enhanced_climate_unet.41} parent=39 // pred_fallthru
        _
    $region40: #{enhanced_climate_unet.41} parent=5 // pred_fallthru
      _
  $region6: #{enhanced_climate_unet.41} parent=0 // loop_footer
    %s13 = sadd.s32 1, %s9
  $region7: #{enhanced_climate_unet.41} parent=0 // loop_footer_branch
    %8 = sbr.rel target = $region3
  $region8: #{enhanced_climate_unet.41} parent=0 // loop_exit
    _

// kernel: enhanced_climate_unet.43
$region0: #{enhanced_climate_unet.43}
  #allocation0 [shape = 'u32[]', space=smem, size = 0x4, offset = 0x4, fixed_abs, tag = 'smem constant byte address 0x4 - core index']
  #allocation1 [shape = 'u32[144,128]{1,0:T(1,128)}', space=vmem, size = 0x12000, scoped, tag = 'internal scratch']
  %s0 = inlined_call_operand.vmem [shape: bf16[2,16,256], index: 0, kind: input, shape index: {}]
  %s1 = inlined_call_operand.vmem [shape: bf16[3,16], index: 1, kind: input, shape index: {}]
  %s2 = inlined_call_operand.vmem [shape: f32[3,1], index: 2, kind: input, shape index: {}]
  %s3 = inlined_call_operand.vmem [shape: f32[2,3,256], index: 3, kind: output, shape index: {}]
  %s4 = sld [smem:[#allocation0]]
  $region45: #{enhanced_climate_unet.43} parent=0
    _
  %s6 = ssub.s32 1, %s4
  %s7 = scalar_select 0, %s6, %s4
  loop: start=0, step=1, limit=4
  $region2: #{enhanced_climate_unet.43} parent=0 // loop_pre_header
    _
  $region3: #{enhanced_climate_unet.43} parent=0 // loop_header
    %s9 = sphi 0, %s13
    %p10 = scmp.ge.s32.totalorder %s9, 4
    %s16 = sphi 0, %s28
    %s17 = sphi 0, %s24
    %s18 = sphi 0, %s16
    %s19 = sphi 0, %s17
    %s20 = sphi 0, %s18
    %s21 = sphi 0, %s19
    %s31 = sphi 0, %s33
    %s34 = sphi 0, %s31
    %s35 = sphi 0, %s34
    %s51 = sphi 0, %s35
    %s55 = sphi 0, %s55
    %s57 = sphi 0, %s55
    %s58 = sphi 0, %s57
    %s72 = sphi 0, %s58
    %s76 = sphi 0, %s76
    %s78 = sphi 0, %s76
    %s79 = sphi 0, %s78
    %s93 = sphi 0, %s79
    %s101 = sphi 0, %s103
    %s104 = sphi 0, %s101
    %s105 = sphi 0, %s104
    %s121 = sphi 0, %s105
  $region4: #{enhanced_climate_unet.43} parent=0 // loop_header_branch
    %12 = sbr.rel (%p10) target = $region8
  $region5: #{enhanced_climate_unet.43} parent=0 // loop_body
    %s14 = ssub.s32 %s9, 1
    %s15 = ssub.s32 %s9, 2
    %s22 = sadd.s32 1, %s17
    %p23 = scmp.ge.s32.totalorder %s22, 1
    %s24 = scalar_select %p23, 0, %s22
    %s25 = sadd.s32 1, %s16
    %s26 = scalar_select %p23, %s25, %s16
    %p27 = scmp.ge.s32.totalorder %s26, 2
    %s28 = scalar_select %p27, 0, %s26
    %s29 = ssub.s32 %s16, %s28
    %p30 = scmp.eq.s32.totalorder %s29, 0
    %s32 = sadd.s32 %s31, 1
    %s33 = scalar_select %p30, %s31, %s32
    %p36 = pneg %p30
    %p37 = scmp.eq.s32.totalorder %s9, 1
    %p38 = por %p36, %p37
    %p39 = scmp.ne.s32.totalorder %s31, %s34
    %p40 = scmp.eq.s32.totalorder %s9, 0
    %p41 = por %p39, %p40
    %p42 = scmp.ne.s32.totalorder %s31, %s34
    %p43 = scmp.eq.s32.totalorder %s14, 1
    %p44 = por %p42, %p43
    %p45 = scmp.ne.s32.totalorder %s34, %s35
    %p46 = scmp.eq.s32.totalorder %s14, 0
    %p47 = por %p45, %p46
    %p48 = scmp.ne.s32.totalorder %s34, %s35
    %p49 = scmp.eq.s32.totalorder %s15, 1
    %p50 = por %p48, %p49
    %p52 = scmp.ne.s32.totalorder %s35, %s51
    %p53 = scmp.eq.s32.totalorder %s15, 0
    %p54 = por %p52, %p53
    %s56 = sadd.s32 %s55, 1
    %p59 = scmp.eq.s32.totalorder %s9, 1
    %p60 = scmp.ne.s32.totalorder %s55, %s57
    %p61 = scmp.eq.s32.totalorder %s9, 0
    %p62 = por %p60, %p61
    %p63 = scmp.ne.s32.totalorder %s55, %s57
    %p64 = scmp.eq.s32.totalorder %s14, 1
    %p65 = por %p63, %p64
    %p66 = scmp.ne.s32.totalorder %s57, %s58
    %p67 = scmp.eq.s32.totalorder %s14, 0
    %p68 = por %p66, %p67
    %p69 = scmp.ne.s32.totalorder %s57, %s58
    %p70 = scmp.eq.s32.totalorder %s15, 1
    %p71 = por %p69, %p70
    %p73 = scmp.ne.s32.totalorder %s58, %s72
    %p74 = scmp.eq.s32.totalorder %s15, 0
    %p75 = por %p73, %p74
    %s77 = sadd.s32 %s76, 1
    %p80 = scmp.eq.s32.totalorder %s9, 1
    %p81 = scmp.ne.s32.totalorder %s76, %s78
    %p82 = scmp.eq.s32.totalorder %s9, 0
    %p83 = por %p81, %p82
    %p84 = scmp.ne.s32.totalorder %s76, %s78
    %p85 = scmp.eq.s32.totalorder %s14, 1
    %p86 = por %p84, %p85
    %p87 = scmp.ne.s32.totalorder %s78, %s79
    %p88 = scmp.eq.s32.totalorder %s14, 0
    %p89 = por %p87, %p88
    %p90 = scmp.ne.s32.totalorder %s78, %s79
    %p91 = scmp.eq.s32.totalorder %s15, 1
    %p92 = por %p90, %p91
    %p94 = scmp.ne.s32.totalorder %s79, %s93
    %p95 = scmp.eq.s32.totalorder %s15, 0
    %p96 = por %p94, %p95
    %s97 = ssub.s32 %s16, %s28
    %s98 = ssub.s32 %s17, %s24
    %s99 = sor.u32 %s97, %s98
    %p100 = scmp.eq.s32.totalorder %s99, 0
    %s102 = sadd.s32 %s101, 1
    %s103 = scalar_select %p100, %s101, %s102
    %p106 = pneg %p100
    %p107 = scmp.eq.s32.totalorder %s9, 1
    %p108 = por %p106, %p107
    %p109 = scmp.ne.s32.totalorder %s101, %s104
    %p110 = scmp.eq.s32.totalorder %s9, 0
    %p111 = por %p109, %p110
    %p112 = scmp.ne.s32.totalorder %s101, %s104
    %p113 = scmp.eq.s32.totalorder %s14, 1
    %p114 = por %p112, %p113
    %p115 = scmp.ne.s32.totalorder %s104, %s105
    %p116 = scmp.eq.s32.totalorder %s14, 0
    %p117 = por %p115, %p116
    %p118 = scmp.ne.s32.totalorder %s104, %s105
    %p119 = scmp.eq.s32.totalorder %s15, 1
    %p120 = por %p118, %p119
    %p122 = scmp.ne.s32.totalorder %s105, %s121
    %p123 = scmp.eq.s32.totalorder %s15, 0
    %p124 = por %p122, %p123
    %p125 = scmp.le.s32.totalorder 1, %s9
    %p126 = scmp.lt.s32.totalorder %s9, 3
    %p127 = pnand %p125, %p126
    %p128 = pneg %p127
    // Predicated region
    $region9: #{enhanced_climate_unet.43} parent=5 // pred_check
      _
    $region10: #{enhanced_climate_unet.43} parent=5 // pred_check_branch
      %130 = sbr.rel (%p127) target = $region12
    $region11: #{enhanced_climate_unet.43} parent=5 // pred_region
      %s131 = ssub.s32 %s9, 1
      // Predicated region
      $region13: #{enhanced_climate_unet.43} parent=11 // pred_check
        %p132 = pneg %p68
      $region14: #{enhanced_climate_unet.43} parent=11 // pred_check_branch
        %134 = sbr.rel (%p132) target = $region16
      $region15: #{enhanced_climate_unet.43} parent=11 // pred_region
        _
      $region16: #{enhanced_climate_unet.43} parent=11 // pred_fallthru
        _
      // Predicated region
      $region17: #{enhanced_climate_unet.43} parent=11 // pred_check
        %p135 = pneg %p89
      $region18: #{enhanced_climate_unet.43} parent=11 // pred_check_branch
        %137 = sbr.rel (%p135) target = $region20
      $region19: #{enhanced_climate_unet.43} parent=11 // pred_region
        _
      $region20: #{enhanced_climate_unet.43} parent=11 // pred_fallthru
        _
    $region12: #{enhanced_climate_unet.43} parent=5 // pred_fallthru
      _
    %p138 = scmp.lt.s32.totalorder %s9, 2
    // Predicated region
    $region21: #{enhanced_climate_unet.43} parent=5 // pred_check
      %p139 = pneg %p138
    $region22: #{enhanced_climate_unet.43} parent=5 // pred_check_branch
      %141 = sbr.rel (%p139) target = $region24
    $region23: #{enhanced_climate_unet.43} parent=5 // pred_region
      // Predicated region
      $region25: #{enhanced_climate_unet.43} parent=23 // pred_check
        %p142 = pneg %p41
      $region26: #{enhanced_climate_unet.43} parent=23 // pred_check_branch
        %144 = sbr.rel (%p142) target = $region28
      $region27: #{enhanced_climate_unet.43} parent=23 // pred_region
        %p145 = scmp.lt.s32.totalorder %s16, 1
        %s146 = scalar_select %p145, %s16, 1
        %s147 = smul.addr %s146, 4
        %s148 = smul.addr %s147, 4
        %s149 = scalar_lea.vmem %s0, %s148
      $region28: #{enhanced_climate_unet.43} parent=23 // pred_fallthru
        _
    $region24: #{enhanced_climate_unet.43} parent=5 // pred_fallthru
      _
    %p150 = scmp.le.s32.totalorder 1, %s9
    %p151 = scmp.lt.s32.totalorder %s9, 3
    %p152 = pnand %p150, %p151
    %p153 = pneg %p152
    // Predicated region
    $region29: #{enhanced_climate_unet.43} parent=5 // pred_check
      _
    $region30: #{enhanced_climate_unet.43} parent=5 // pred_check_branch
      %155 = sbr.rel (%p152) target = $region32
    $region31: #{enhanced_climate_unet.43} parent=5 // pred_region
      %s156 = ssub.s32 %s9, 1
      %p157 = scmp.lt.s32.totalorder %s18, 1
      %s158 = scalar_select %p157, %s18, 1
      %s159 = smul.addr %s158, 4
      %s160 = smul.addr %s159, 4
      %s161 = scalar_lea.vmem %s0, %s160
      %p162 = pneg %p47
      %p163 = pneg %p44
      %p164 = pneg %p68
      %p165 = pneg %p65
      %p166 = pneg %p89
      %p167 = pneg %p86
      %p168 = pneg %p117
      %p169 = pneg %p114
      %s170 = smul.u32 2, %s19
      %p171 = scmp.lt.s32.totalorder %s18, 1
      %s172 = scalar_select %p171, %s18, 1
      %p173 = scmp.lt.s32.totalorder %s170, 1
      %s174 = scalar_select %p173, %s170, 1
      %s175 = smul.addr %s172, 2
      %s176 = sadd.s32 %s174, %s175
      %s177 = smul.addr %s176, 4
      %s178 = scalar_lea.vmem %s3, %s177
      %p179 = scmp.lt.s32.totalorder %s18, 1
      %s180 = scalar_select %p179, %s18, 1
      %s181 = smul.addr %s180, 4
      %s182 = smul.addr %s181, 4
      %s183 = scalar_lea.vmem %s0, %s182
      %s184 = smul.u32 2, %s19
      %p185 = scmp.lt.s32.totalorder %s18, 1
      %s186 = scalar_select %p185, %s18, 1
      %p187 = scmp.lt.s32.totalorder %s184, 1
      %s188 = scalar_select %p187, %s184, 1
      %s189 = smul.addr %s186, 2
      %s190 = sadd.s32 %s188, %s189
      %s191 = smul.addr %s190, 4
      %s192 = scalar_lea.vmem %s3, %s191
      %s193 = smul.u32 2, %s19
      %v195 = vld [vmem:[%s183] sm:$0xff]
      %v196 = vld [vmem:[%s183 + $0x8] sm:$0xff]
      %v197 = vld [vmem:[%s1] sm:$0x3]
      %v198 = vld [vmem:[%s2] sm:$0x7]
      %200 = vset.pattern.permute.xlu0 0
      %201 = vperm.xlu0 %200, %v198
      %v202 = vpop.permute.xlu0 %201
      %v206 = vunpack.c.l.b16 %v195
      %v207 = vunpack.c.h.b16 %v195
      %v208 = vunpack.c.l.b16 %v196
      %v209 = vunpack.c.h.b16 %v196
      %v210 = vpack.c.b16 %v208, %v206
      %v211 = vpack.c.b16 %v209, %v207
      %vm214 = vcmask 130048
      %v216 = vsel %vm214, %v197, 0
      %218 = vmatprep.subr.bf16.mxu0 0
      %219 = vmatpush1.bf16.msra.mxu0 0
      %220 = vmatprep.subr.bf16.mxu0 0
      %221 = vmatpush1.bf16.msra.mxu0 0
      %222 = vmatprep.subr.bf16.mxu0 0
      %223 = vmatpush1.bf16.msra.mxu0 0
      %224 = vmatprep.subr.bf16.mxu0 0
      %225 = vmatpush1.bf16.msra.mxu0 0
      %226 = vmatprep.subr.bf16.mxu0 0
      %227 = vmatpush1.bf16.msra.mxu0 0
      %228 = vmatprep.subr.bf16.mxu0 0
      %229 = vmatpush1.bf16.msra.mxu0 0
      %230 = vmatprep.subr.bf16.mxu0 0
      %231 = vmatpush1.bf16.msra.mxu0 0
      %232 = vmatprep.subr.bf16.mxu0 %v211
      %233 = vmatpush1.bf16.msra.mxu0 %v210
      %234 = vmatprep.subr.bf16.mxu0 0
      %235 = vmatpush2.bf16.msra.mxu0 0
      %236 = vmatprep.subr.bf16.mxu0 0
      %237 = vmatpush2.bf16.msra.mxu0 0
      %238 = vmatprep.subr.bf16.mxu0 0
      %239 = vmatpush2.bf16.msra.mxu0 0
      %240 = vmatprep.subr.bf16.mxu0 0
      %241 = vmatpush2.bf16.msra.mxu0 0
      %242 = vmatprep.subr.bf16.mxu0 0
      %243 = vmatpush2.bf16.msra.mxu0 0
      %244 = vmatprep.subr.bf16.mxu0 0
      %245 = vmatpush2.bf16.msra.mxu0 0
      %246 = vmatprep.subr.bf16.mxu0 0
      %247 = vmatpush2.bf16.msra.mxu0 0
      %248 = vmatprep.subr.bf16.mxu0 0
      %249 = vmatpush2.bf16.msra.mxu0 0
      %250 = vmatprep.mubr.bf16.mxu0 0
      %251 = vmatmul.mubr.bf16.gmra.mxu0 %v216
      %v252 = vpop.f32.mrf.mxu0
      %v253 = vadd.f32 %v202, %v252
      %v254 = vpop.f32.mrf.mxu0
      %v255 = vadd.f32 %v202, %v254
      %v256 = vpop.f32.mrf.mxu0
      %v257 = vpop.f32.mrf.mxu0
      %258 = vdwg.mxu0
      %v261 = vcombine.low %v253, %v255
      %263 = vst [vmem:[%s192] sm:$0x77] %v261
      %s264 = smul.u32 2, %s19
      %p265 = scmp.lt.s32.totalorder %s18, 1
      %s266 = scalar_select %p265, %s18, 1
      %p267 = scmp.lt.s32.totalorder %s264, 1
      %s268 = scalar_select %p267, %s264, 1
      %s269 = smul.addr %s266, 2
      %s270 = sadd.s32 %s268, %s269
      %s271 = smul.addr %s270, 4
      %s272 = scalar_lea.vmem %s3, %s271
      // Predicated region
      $region33: #{enhanced_climate_unet.43} parent=31 // pred_check
        %p273 = pneg %p114
      $region34: #{enhanced_climate_unet.43} parent=31 // pred_check_branch
        %275 = sbr.rel (%p273) target = $region36
      $region35: #{enhanced_climate_unet.43} parent=31 // pred_region
        %s276 = smul.u32 2, %s19
      $region36: #{enhanced_climate_unet.43} parent=31 // pred_fallthru
        _
    $region32: #{enhanced_climate_unet.43} parent=5 // pred_fallthru
      _
    %p277 = scmp.le.s32.totalorder 2, %s9
    // Predicated region
    $region37: #{enhanced_climate_unet.43} parent=5 // pred_check
      %p278 = pneg %p277
    $region38: #{enhanced_climate_unet.43} parent=5 // pred_check_branch
      %280 = sbr.rel (%p278) target = $region40
    $region39: #{enhanced_climate_unet.43} parent=5 // pred_region
      %s281 = ssub.s32 %s9, 2
      // Predicated region
      $region41: #{enhanced_climate_unet.43} parent=39 // pred_check
        %p282 = pneg %p120
      $region42: #{enhanced_climate_unet.43} parent=39 // pred_check_branch
        %284 = sbr.rel (%p282) target = $region44
      $region43: #{enhanced_climate_unet.43} parent=39 // pred_region
        %s285 = smul.u32 2, %s21
        %p286 = scmp.lt.s32.totalorder %s20, 1
        %s287 = scalar_select %p286, %s20, 1
        %p288 = scmp.lt.s32.totalorder %s285, 1
        %s289 = scalar_select %p288, %s285, 1
        %s290 = smul.addr %s287, 2
        %s291 = sadd.s32 %s289, %s290
        %s292 = smul.addr %s291, 4
        %s293 = scalar_lea.vmem %s3, %s292
      $region44: #{enhanced_climate_unet.43} parent=39 // pred_fallthru
        _
    $region40: #{enhanced_climate_unet.43} parent=5 // pred_fallthru
      _
  $region6: #{enhanced_climate_unet.43} parent=0 // loop_footer
    %s13 = sadd.s32 1, %s9
  $region7: #{enhanced_climate_unet.43} parent=0 // loop_footer_branch
    %8 = sbr.rel target = $region3
  $region8: #{enhanced_climate_unet.43} parent=0 // loop_exit
    _

</llo_original>
